<compile_context>
chip_gen: v7x
topology: tpu7x:2x2x1
jax: 0.10.0
libtpu: 0.0.40
codegen_flags: <defaults>
</compile_context>

<pallas_src>
import numpy as np
import jax
import jax.numpy as jnp
from jax import lax
from jax.experimental import pallas as pl
from jax.experimental.pallas import tpu as pltpu


def _round_up(x, m):
    return ((x + m - 1) // m) * m


# ------------------------------ fused kernel --------------------------------
def _make_backbone_kernel(G, oh0, ow0, oh1, ow1, ow1e, oh2, ow2e):
    """Fused backbone kernel; all sizes are static Python ints."""
    f32 = jnp.float32
    M0 = G * oh0 * ow0
    M1 = G * oh1 * ow1e
    M2 = G * oh2 * ow2e

    def kernel(x0_ref, w0_ref, b0_ref, w1_ref, b1_ref, w2_ref, b2_ref,
               w3_ref, b3_ref, w4_ref, b4_ref, w5_ref, b5_ref,
               out_ref, s1_ref, s2_ref, fold_ref):
        # -------- conv0 (4x4, stride 3) -- input pre-im2col'ed in JAX -------
        x0 = x0_ref[...].reshape(M0, -1)                    # (G*oh0*ow0, K0p)
        a0 = jnp.dot(x0, w0_ref[...], preferred_element_type=f32)
        a0 = jnp.maximum(a0 + b0_ref[...], 0.0)

        # interior write (fully overwritten every grid step) ...
        s1_ref[:, 0:oh0, 0:ow0, :] = a0.reshape(G, oh0, ow0, 128)
        # ... plus only the ConstantPad2d((0,2,0,2)) strips that valid conv1
        # outputs read (columns beyond them only feed discarded ow1e slots).
        s1_ref[:, oh0:oh0 + 2, 0:ow0 + 2, :] = jnp.zeros(
            (G, 2, ow0 + 2, 128), f32)
        s1_ref[:, 0:oh0, ow0:ow0 + 2, :] = jnp.zeros(
            (G, oh0, 2, 128), f32)

        # -------- 4x4 stride-2 conv via kw-fold: 4 dots with K=512 ----------
        def conv44(src_ref, w_ref, b_ref, oh, owe, M):
            acc = None
            for kh in range(4):
                for kw in range(4):
                    # direct stride-2 on rows (outer dim) and cols (sublanes)
                    v = src_ref[:, pl.ds(kh, oh, stride=2),
                                pl.ds(kw, owe, stride=2), :]
                    fold_ref[0:M, kw * 128:(kw + 1) * 128] = v.reshape(M, 128)
                t = jnp.dot(fold_ref[0:M, :], w_ref[kh],
                            preferred_element_type=f32)
                acc = t if acc is None else acc + t         # init from tap 0
            return jnp.maximum(acc + b_ref[...], 0.0)

        # -------- conv1 ------------------------------------------------------
        a1 = conv44(s1_ref, w1_ref, b1_ref, oh1, ow1e, M1)  # (M1, 128)

        s2_ref[:, 0:oh1, 0:ow1, :] = (
            a1.reshape(G, oh1, ow1e, 128)[:, :, 0:ow1, :])
        s2_ref[:, oh1:oh1 + 2, 0:ow1 + 2, :] = jnp.zeros(
            (G, 2, ow1 + 2, 128), f32)
        s2_ref[:, 0:oh1, ow1:ow1 + 2, :] = jnp.zeros(
            (G, oh1, 2, 128), f32)

        # -------- conv2 ------------------------------------------------------
        a2 = conv44(s2_ref, w2_ref, b2_ref, oh2, ow2e, M2)  # (M2, 128)

        # -------- conv3 / conv4 / conv5 (1x1), chained in vregs --------------
        a3 = jnp.maximum(
            jnp.dot(a2, w3_ref[...], preferred_element_type=f32) + b3_ref[...],
            0.0)
        a4 = jnp.maximum(
            jnp.dot(a3, w4_ref[...], preferred_element_type=f32) + b4_ref[...],
            0.0)
        a5 = jnp.maximum(
            jnp.dot(a4, w5_ref[...], preferred_element_type=f32) + b5_ref[...],
            0.0)

        out_ref[...] = a5.reshape(G, oh2, ow2e, 128).astype(out_ref.dtype)

    return kernel


# ------------------------------ Backbone forward ----------------------------
def backbone_forward(x_nchw, params, block_n=4):
    N, C, H, W = x_nchw.shape
    x = jnp.transpose(x_nchw, (0, 2, 3, 1)).astype(jnp.float32)   # NCHW->NHWC
    x = jnp.pad(x, ((0, 0), (0, 1), (0, 1), (0, 0)))              # pad1
    Hp, Wp = H + 1, W + 1

    oh0, ow0 = (Hp - 4) // 3 + 1, (Wp - 4) // 3 + 1
    oh1, ow1 = (oh0 - 2) // 2 + 1, (ow0 - 2) // 2 + 1
    oh2, ow2 = (oh1 - 2) // 2 + 1, (ow1 - 2) // 2 + 1
    ow1e, ow2e = _round_up(ow1, 8), _round_up(ow2, 8)
    assert ow0 % 8 == 0, "fused kernel assumes conv0 output width % 8 == 0"
    # TODO(synk): pad conv0's im2col grid to support ow0 % 8 != 0 inputs.

    # batch blocking: G images per grid step (keep N/G even on v7x if possible)
    G = max(1, min(block_n, N))
    Ng = _round_up(N, G)
    NB = Ng // G

    # conv0 im2col as cheap JAX glue (input only has `inc` channels, tiny).
    K0 = 16 * C
    K0p = _round_up(K0, 128)                      # lane-dense x0 last dim
    patches = []
    for i in range(4):
        for j in range(4):
            patches.append(x[:, i:i + 3 * oh0:3, j:j + 3 * ow0:3, :])
    x0 = jnp.concatenate(patches, axis=-1).reshape(N, oh0 * ow0, K0)
    x0 = jnp.pad(x0, ((0, Ng - N), (0, 0), (0, K0p - K0)))

    w0 = jnp.pad(params["w0"].reshape(K0, 128), ((0, K0p - K0), (0, 0)))
    w1 = params["w1"].reshape(4, 4 * 128, 128)    # (kh, kw*in, out) kw-fold
    w2 = params["w2"].reshape(4, 4 * 128, 128)
    w3 = params["w3"].reshape(128, 128)
    w4 = params["w4"].reshape(128, 128)
    w5 = jnp.pad(params["w5"].reshape(128, 100), ((0, 0), (0, 28)))
    b0 = params["b0"].reshape(1, 128)
    b1 = params["b1"].reshape(1, 128)
    b2 = params["b2"].reshape(1, 128)
    b3 = params["b3"].reshape(1, 128)
    b4 = params["b4"].reshape(1, 128)
    b5 = jnp.pad(params["b5"], (0, 28)).reshape(1, 128)

    # scratch sizing: covers the pad2 strips and the strided tap windows
    # (extra cols stay garbage but only feed discarded ow*e positions).
    s1_cols = max(ow0 + 2, 2 * ow1e + 2)
    s2_cols = max(ow1 + 2, 2 * ow2e + 2)
    m_fold = G * max(oh1 * ow1e, oh2 * ow2e)

    kernel = _make_backbone_kernel(G, oh0, ow0, oh1, ow1, ow1e, oh2, ow2e)

    wspec_kh = pl.BlockSpec((4, 512, 128), lambda n: (0, 0, 0))
    wspec = pl.BlockSpec((128, 128), lambda n: (0, 0))
    bspec = pl.BlockSpec((1, 128), lambda n: (0, 0))

    y = pl.pallas_call(
        kernel,
        out_shape=jax.ShapeDtypeStruct((Ng, oh2, ow2e, 128), jnp.float32),
        grid_spec=pltpu.PrefetchScalarGridSpec(
            num_scalar_prefetch=0,
            grid=(NB,),
            in_specs=[
                pl.BlockSpec((G, oh0 * ow0, K0p), lambda n: (n, 0, 0)),  # x0
                pl.BlockSpec((K0p, 128), lambda n: (0, 0)), bspec,       # conv0
                wspec_kh, bspec,                                         # conv1
                wspec_kh, bspec,                                         # conv2
                wspec, bspec,                                            # conv3
                wspec, bspec,                                            # conv4
                wspec, bspec,                                            # conv5
            ],
            out_specs=pl.BlockSpec((G, oh2, ow2e, 128),
                                   lambda n: (n, 0, 0, 0)),
            scratch_shapes=[
                pltpu.VMEM((G, oh0 + 2, s1_cols, 128), jnp.float32),  # s1
                pltpu.VMEM((G, oh1 + 2, s2_cols, 128), jnp.float32),  # s2
                pltpu.VMEM((m_fold, 512), jnp.float32),               # kw-fold
            ],
        ),
        compiler_params=pltpu.CompilerParams(
            dimension_semantics=("parallel",)),
    )(x0, w0, b0, w1, b1, w2, b2, w3, b3, w4, b4, w5, b5)

    y = y[:N, :, :ow2, :100]               # drop batch pad / eff-cols / chans
    return jnp.transpose(y, (0, 3, 1, 2))  # NHWC -> NCHW


# ------------------------- deterministic parameter init ---------------------
def init_params(key, inc):
    shapes = [
        (4, 4, inc, 128),   # conv0
        (4, 4, 128, 128),   # conv1
        (4, 4, 128, 128),   # conv2
        (1, 1, 128, 128),   # conv3
        (1, 1, 128, 128),   # conv4
        (1, 1, 128, 100),   # conv5
    ]
    params = {}
    for idx, s in enumerate(shapes):
        key, kw, kb = jax.random.split(key, 3)
        fan_in = s[0] * s[1] * s[2]
        bound = 1.0 / np.sqrt(fan_in)
        params[f"w{idx}"] = jax.random.uniform(kw, s, jnp.float32, -bound, bound)
        params[f"b{idx}"] = jax.random.uniform(kb, (s[3],), jnp.float32,
                                               -bound, bound)
    return params


# --------------------------- pure-JAX reference ------------------------------
def reference_forward(x_nchw, params):
    x = jnp.transpose(x_nchw, (0, 2, 3, 1))

    def conv(x, w, b, s, pad):
        if pad:
            x = jnp.pad(x, ((0, 0), (0, pad), (0, pad), (0, 0)))
        y = lax.conv_general_dilated(
            x, w, (s, s), "VALID", dimension_numbers=("NHWC", "HWIO", "NHWC"))
        return jax.nn.relu(y + b)

    x = conv(x, params["w0"], params["b0"], 3, 1)
    x = conv(x, params["w1"], params["b1"], 2, 2)
    x = conv(x, params["w2"], params["b2"], 2, 2)
    x = conv(x, params["w3"], params["b3"], 1, 0)
    x = conv(x, params["w4"], params["b4"], 1, 0)
    x = conv(x, params["w5"], params["b5"], 1, 0)
    return jnp.transpose(x, (0, 3, 1, 2))


if __name__ == "__main__":
    key = jax.random.PRNGKey(0)
    kx, kp = jax.random.split(key)
    inc = 3
    N, H = 8, 48
    # Input 48x48 -> pad1 49 -> conv0 16 -> pad2 18 -> conv1 8 -> pad2 10
    #   -> conv2 4 -> 1x1 convs keep 4x4 ; output [N, 100, 4, 4]
    # block_n=4 -> grid=(2,) (even, so both v7x TensorCores get a block).
    x = jax.random.normal(kx, (N, inc, H, H), jnp.float32)
    params = init_params(kp, inc)

    fwd = jax.jit(lambda xx, pp: backbone_forward(xx, pp, block_n=4))
    out = jax.block_until_ready(fwd(x, params))
    assert out.shape == (N, 100, 4, 4), out.shape

    ref = reference_forward(x, params)
    np.testing.assert_allclose(np.asarray(out), np.asarray(ref),
                               rtol=2e-4, atol=2e-4)
    print("KERNEL_OK")
</pallas_src>

<mosaic_0001>
module attributes {stable_mosaic.version = 11 : i64} {
  func.func @kernel(%arg0: i32, %arg1: memref<4x256x128xf32, #tpu.memory_space<vmem>>, %arg2: memref<128x128xf32, #tpu.memory_space<vmem>>, %arg3: memref<1x128xf32, #tpu.memory_space<vmem>>, %arg4: memref<4x512x128xf32, #tpu.memory_space<vmem>>, %arg5: memref<1x128xf32, #tpu.memory_space<vmem>>, %arg6: memref<4x512x128xf32, #tpu.memory_space<vmem>>, %arg7: memref<1x128xf32, #tpu.memory_space<vmem>>, %arg8: memref<128x128xf32, #tpu.memory_space<vmem>>, %arg9: memref<1x128xf32, #tpu.memory_space<vmem>>, %arg10: memref<128x128xf32, #tpu.memory_space<vmem>>, %arg11: memref<1x128xf32, #tpu.memory_space<vmem>>, %arg12: memref<128x128xf32, #tpu.memory_space<vmem>>, %arg13: memref<1x128xf32, #tpu.memory_space<vmem>>, %arg14: memref<4x4x8x128xf32, #tpu.memory_space<vmem>>, %arg15: memref<4x18x18x128xf32, #tpu.memory_space<vmem>>, %arg16: memref<4x10x18x128xf32, #tpu.memory_space<vmem>>, %arg17: memref<256x512xf32, #tpu.memory_space<vmem>>) attributes {dimension_semantics = [#tpu.dimension_semantics<parallel>], iteration_bounds = array<i64: 2>, scalar_prefetch = 0 : i64, scratch_operands = 3 : i64, tpu.core_type = #tpu.core_type<tc>, window_params = [{transform_indices = @transform_0, window_bounds = array<i64: 4, 256, 128>}, {pipeline_mode = #tpu.pipeline_mode<synchronous>, transform_indices = @transform_1, window_bounds = array<i64: 128, 128>}, {pipeline_mode = #tpu.pipeline_mode<synchronous>, transform_indices = @transform_2, window_bounds = array<i64: 1, 128>}, {pipeline_mode = #tpu.pipeline_mode<synchronous>, transform_indices = @transform_3, window_bounds = array<i64: 4, 512, 128>}, {pipeline_mode = #tpu.pipeline_mode<synchronous>, transform_indices = @transform_4, window_bounds = array<i64: 1, 128>}, {pipeline_mode = #tpu.pipeline_mode<synchronous>, transform_indices = @transform_5, window_bounds = array<i64: 4, 512, 128>}, {pipeline_mode = #tpu.pipeline_mode<synchronous>, transform_indices = @transform_6, window_bounds = array<i64: 1, 128>}, {pipeline_mode = #tpu.pipeline_mode<synchronous>, transform_indices = @transform_7, window_bounds = array<i64: 128, 128>}, {pipeline_mode = #tpu.pipeline_mode<synchronous>, transform_indices = @transform_8, window_bounds = array<i64: 1, 128>}, {pipeline_mode = #tpu.pipeline_mode<synchronous>, transform_indices = @transform_9, window_bounds = array<i64: 128, 128>}, {pipeline_mode = #tpu.pipeline_mode<synchronous>, transform_indices = @transform_10, window_bounds = array<i64: 1, 128>}, {pipeline_mode = #tpu.pipeline_mode<synchronous>, transform_indices = @transform_11, window_bounds = array<i64: 128, 128>}, {pipeline_mode = #tpu.pipeline_mode<synchronous>, transform_indices = @transform_12, window_bounds = array<i64: 1, 128>}, {transform_indices = @transform_13, window_bounds = array<i64: 4, 4, 8, 128>}]} {
    %c0 = arith.constant 0 : index
    %c0_0 = arith.constant 0 : index
    %c0_1 = arith.constant 0 : index
    %0 = vector.load %arg1[%c0, %c0_0, %c0_1] : memref<4x256x128xf32, #tpu.memory_space<vmem>>, vector<4x256x128xf32>
    %1 = vector.shape_cast %0 : vector<4x256x128xf32> to vector<1024x128xf32>
    %c0_2 = arith.constant 0 : index
    %c0_3 = arith.constant 0 : index
    %2 = vector.load %arg2[%c0_2, %c0_3] : memref<128x128xf32, #tpu.memory_space<vmem>>, vector<128x128xf32>
    %cst = arith.constant dense<0.000000e+00> : vector<1024x128xf32>
    %3 = tpu.matmul %1, %2, %cst {dimension_numbers = #tpu.dot_dimension_numbers<[1], [0], [0], [1], [0, 0, 1, 1], [], []>} : vector<1024x128xf32>, vector<128x128xf32>, vector<1024x128xf32> -> vector<1024x128xf32>
    %c0_4 = arith.constant 0 : index
    %c0_5 = arith.constant 0 : index
    %4 = vector.load %arg3[%c0_4, %c0_5] : memref<1x128xf32, #tpu.memory_space<vmem>>, vector<1x128xf32>
    %5 = vector.broadcast %4 : vector<1x128xf32> to vector<1024x128xf32>
    %6 = arith.addf %3, %5 : vector<1024x128xf32>
    %cst_6 = arith.constant 0.000000e+00 : f32
    %7 = vector.broadcast %cst_6 : f32 to vector<1024x128xf32>
    %8 = arith.maximumf %6, %7 : vector<1024x128xf32>
    %9 = vector.shape_cast %8 : vector<1024x128xf32> to vector<4x16x16x128xf32>
    %c0_7 = arith.constant 0 : index
    %c0_8 = arith.constant 0 : index
    %c0_9 = arith.constant 0 : index
    %c0_10 = arith.constant 0 : index
    %10 = vector.load %arg15[%c0_7, %c0_8, %c0_9, %c0_10] : memref<4x18x18x128xf32, #tpu.memory_space<vmem>>, vector<4x16x16x128xf32>
    tpu.vector_store %arg15[%c0_7, %c0_8, %c0_9, %c0_10], %9 {strides = array<i32>} : memref<4x18x18x128xf32, #tpu.memory_space<vmem>>, vector<4x16x16x128xf32>,
    %cst_11 = arith.constant 0.000000e+00 : f32
    %11 = vector.broadcast %cst_11 : f32 to vector<4x2x18x128xf32>
    %c0_12 = arith.constant 0 : index
    %c16 = arith.constant 16 : index
    %c0_13 = arith.constant 0 : index
    %c0_14 = arith.constant 0 : index
    %12 = vector.load %arg15[%c0_12, %c16, %c0_13, %c0_14] : memref<4x18x18x128xf32, #tpu.memory_space<vmem>>, vector<4x2x18x128xf32>
    tpu.vector_store %arg15[%c0_12, %c16, %c0_13, %c0_14], %11 {strides = array<i32>} : memref<4x18x18x128xf32, #tpu.memory_space<vmem>>, vector<4x2x18x128xf32>,
    %cst_15 = arith.constant 0.000000e+00 : f32
    %13 = vector.broadcast %cst_15 : f32 to vector<4x16x2x128xf32>
    %c0_16 = arith.constant 0 : index
    %c0_17 = arith.constant 0 : index
    %c16_18 = arith.constant 16 : index
    %c0_19 = arith.constant 0 : index
    %14 = vector.load %arg15[%c0_16, %c0_17, %c16_18, %c0_19] : memref<4x18x18x128xf32, #tpu.memory_space<vmem>>, vector<4x16x2x128xf32>
    tpu.vector_store %arg15[%c0_16, %c0_17, %c16_18, %c0_19], %13 {strides = array<i32>} : memref<4x18x18x128xf32, #tpu.memory_space<vmem>>, vector<4x16x2x128xf32>,
    %c0_20 = arith.constant 0 : index
    %c0_21 = arith.constant 0 : index
    %c0_22 = arith.constant 0 : index
    %c0_23 = arith.constant 0 : index
    %15 = tpu.strided_load %arg15[%c0_20, %c0_21, %c0_22, %c0_23] {strides = array<i32: 1, 2, 2, 1>} : memref<4x18x18x128xf32, #tpu.memory_space<vmem>>, vector<4x8x8x128xf32>
    %16 = vector.shape_cast %15 : vector<4x8x8x128xf32> to vector<256x128xf32>
    %c0_24 = arith.constant 0 : index
    %c0_25 = arith.constant 0 : index
    %17 = vector.load %arg17[%c0_24, %c0_25] : memref<256x512xf32, #tpu.memory_space<vmem>>, vector<256x128xf32>
    tpu.vector_store %arg17[%c0_24, %c0_25], %16 {strides = array<i32>} : memref<256x512xf32, #tpu.memory_space<vmem>>, vector<256x128xf32>,
    %c0_26 = arith.constant 0 : index
    %c0_27 = arith.constant 0 : index
    %c1 = arith.constant 1 : index
    %c0_28 = arith.constant 0 : index
    %18 = tpu.strided_load %arg15[%c0_26, %c0_27, %c1, %c0_28] {strides = array<i32: 1, 2, 2, 1>} : memref<4x18x18x128xf32, #tpu.memory_space<vmem>>, vector<4x8x8x128xf32>
    %19 = vector.shape_cast %18 : vector<4x8x8x128xf32> to vector<256x128xf32>
    %c0_29 = arith.constant 0 : index
    %c128 = arith.constant 128 : index
    %20 = vector.load %arg17[%c0_29, %c128] : memref<256x512xf32, #tpu.memory_space<vmem>>, vector<256x128xf32>
    tpu.vector_store %arg17[%c0_29, %c128], %19 {strides = array<i32>} : memref<256x512xf32, #tpu.memory_space<vmem>>, vector<256x128xf32>,
    %c0_30 = arith.constant 0 : index
    %c0_31 = arith.constant 0 : index
    %c2 = arith.constant 2 : index
    %c0_32 = arith.constant 0 : index
    %21 = tpu.strided_load %arg15[%c0_30, %c0_31, %c2, %c0_32] {strides = array<i32: 1, 2, 2, 1>} : memref<4x18x18x128xf32, #tpu.memory_space<vmem>>, vector<4x8x8x128xf32>
    %22 = vector.shape_cast %21 : vector<4x8x8x128xf32> to vector<256x128xf32>
    %c0_33 = arith.constant 0 : index
    %c256 = arith.constant 256 : index
    %23 = vector.load %arg17[%c0_33, %c256] : memref<256x512xf32, #tpu.memory_space<vmem>>, vector<256x128xf32>
    tpu.vector_store %arg17[%c0_33, %c256], %22 {strides = array<i32>} : memref<256x512xf32, #tpu.memory_space<vmem>>, vector<256x128xf32>,
    %c0_34 = arith.constant 0 : index
    %c0_35 = arith.constant 0 : index
    %c3 = arith.constant 3 : index
    %c0_36 = arith.constant 0 : index
    %24 = tpu.strided_load %arg15[%c0_34, %c0_35, %c3, %c0_36] {strides = array<i32: 1, 2, 2, 1>} : memref<4x18x18x128xf32, #tpu.memory_space<vmem>>, vector<4x8x8x128xf32>
    %25 = vector.shape_cast %24 : vector<4x8x8x128xf32> to vector<256x128xf32>
    %c0_37 = arith.constant 0 : index
    %c384 = arith.constant 384 : index
    %26 = vector.load %arg17[%c0_37, %c384] : memref<256x512xf32, #tpu.memory_space<vmem>>, vector<256x128xf32>
    tpu.vector_store %arg17[%c0_37, %c384], %25 {strides = array<i32>} : memref<256x512xf32, #tpu.memory_space<vmem>>, vector<256x128xf32>,
    %c0_38 = arith.constant 0 : index
    %c0_39 = arith.constant 0 : index
    %27 = vector.load %arg17[%c0_38, %c0_39] : memref<256x512xf32, #tpu.memory_space<vmem>>, vector<256x512xf32>
    %c0_40 = arith.constant 0 : index
    %c0_41 = arith.constant 0 : index
    %c0_42 = arith.constant 0 : index
    %28 = vector.load %arg4[%c0_40, %c0_41, %c0_42] : memref<4x512x128xf32, #tpu.memory_space<vmem>>, vector<1x512x128xf32>
    %29 = vector.shape_cast %28 : vector<1x512x128xf32> to vector<512x128xf32>
    %cst_43 = arith.constant dense<0.000000e+00> : vector<256x128xf32>
    %30 = tpu.matmul %27, %29, %cst_43 {dimension_numbers = #tpu.dot_dimension_numbers<[1], [0], [0], [1], [0, 0, 1, 1], [], []>} : vector<256x512xf32>, vector<512x128xf32>, vector<256x128xf32> -> vector<256x128xf32>
    %c0_44 = arith.constant 0 : index
    %c1_45 = arith.constant 1 : index
    %c0_46 = arith.constant 0 : index
    %c0_47 = arith.constant 0 : index
    %31 = tpu.strided_load %arg15[%c0_44, %c1_45, %c0_46, %c0_47] {strides = array<i32: 1, 2, 2, 1>} : memref<4x18x18x128xf32, #tpu.memory_space<vmem>>, vector<4x8x8x128xf32>
    %32 = vector.shape_cast %31 : vector<4x8x8x128xf32> to vector<256x128xf32>
    %c0_48 = arith.constant 0 : index
    %c0_49 = arith.constant 0 : index
    %33 = vector.load %arg17[%c0_48, %c0_49] : memref<256x512xf32, #tpu.memory_space<vmem>>, vector<256x128xf32>
    tpu.vector_store %arg17[%c0_48, %c0_49], %32 {strides = array<i32>} : memref<256x512xf32, #tpu.memory_space<vmem>>, vector<256x128xf32>,
    %c0_50 = arith.constant 0 : index
    %c1_51 = arith.constant 1 : index
    %c1_52 = arith.constant 1 : index
    %c0_53 = arith.constant 0 : index
    %34 = tpu.strided_load %arg15[%c0_50, %c1_51, %c1_52, %c0_53] {strides = array<i32: 1, 2, 2, 1>} : memref<4x18x18x128xf32, #tpu.memory_space<vmem>>, vector<4x8x8x128xf32>
    %35 = vector.shape_cast %34 : vector<4x8x8x128xf32> to vector<256x128xf32>
    %c0_54 = arith.constant 0 : index
    %c128_55 = arith.constant 128 : index
    %36 = vector.load %arg17[%c0_54, %c128_55] : memref<256x512xf32, #tpu.memory_space<vmem>>, vector<256x128xf32>
    tpu.vector_store %arg17[%c0_54, %c128_55], %35 {strides = array<i32>} : memref<256x512xf32, #tpu.memory_space<vmem>>, vector<256x128xf32>,
    %c0_56 = arith.constant 0 : index
    %c1_57 = arith.constant 1 : index
    %c2_58 = arith.constant 2 : index
    %c0_59 = arith.constant 0 : index
    %37 = tpu.strided_load %arg15[%c0_56, %c1_57, %c2_58, %c0_59] {strides = array<i32: 1, 2, 2, 1>} : memref<4x18x18x128xf32, #tpu.memory_space<vmem>>, vector<4x8x8x128xf32>
    %38 = vector.shape_cast %37 : vector<4x8x8x128xf32> to vector<256x128xf32>
    %c0_60 = arith.constant 0 : index
    %c256_61 = arith.constant 256 : index
    %39 = vector.load %arg17[%c0_60, %c256_61] : memref<256x512xf32, #tpu.memory_space<vmem>>, vector<256x128xf32>
    tpu.vector_store %arg17[%c0_60, %c256_61], %38 {strides = array<i32>} : memref<256x512xf32, #tpu.memory_space<vmem>>, vector<256x128xf32>,
    %c0_62 = arith.constant 0 : index
    %c1_63 = arith.constant 1 : index
    %c3_64 = arith.constant 3 : index
    %c0_65 = arith.constant 0 : index
    %40 = tpu.strided_load %arg15[%c0_62, %c1_63, %c3_64, %c0_65] {strides = array<i32: 1, 2, 2, 1>} : memref<4x18x18x128xf32, #tpu.memory_space<vmem>>, vector<4x8x8x128xf32>
    %41 = vector.shape_cast %40 : vector<4x8x8x128xf32> to vector<256x128xf32>
    %c0_66 = arith.constant 0 : index
    %c384_67 = arith.constant 384 : index
    %42 = vector.load %arg17[%c0_66, %c384_67] : memref<256x512xf32, #tpu.memory_space<vmem>>, vector<256x128xf32>
    tpu.vector_store %arg17[%c0_66, %c384_67], %41 {strides = array<i32>} : memref<256x512xf32, #tpu.memory_space<vmem>>, vector<256x128xf32>,
    %c0_68 = arith.constant 0 : index
    %c0_69 = arith.constant 0 : index
    %43 = vector.load %arg17[%c0_68, %c0_69] : memref<256x512xf32, #tpu.memory_space<vmem>>, vector<256x512xf32>
    %c1_70 = arith.constant 1 : index
    %c0_71 = arith.constant 0 : index
    %c0_72 = arith.constant 0 : index
    %44 = vector.load %arg4[%c1_70, %c0_71, %c0_72] : memref<4x512x128xf32, #tpu.memory_space<vmem>>, vector<1x512x128xf32>
    %45 = vector.shape_cast %44 : vector<1x512x128xf32> to vector<512x128xf32>
    %cst_73 = arith.constant dense<0.000000e+00> : vector<256x128xf32>
    %46 = tpu.matmul %43, %45, %cst_73 {dimension_numbers = #tpu.dot_dimension_numbers<[1], [0], [0], [1], [0, 0, 1, 1], [], []>} : vector<256x512xf32>, vector<512x128xf32>, vector<256x128xf32> -> vector<256x128xf32>
    %47 = arith.addf %30, %46 : vector<256x128xf32>
    %c0_74 = arith.constant 0 : index
    %c2_75 = arith.constant 2 : index
    %c0_76 = arith.constant 0 : index
    %c0_77 = arith.constant 0 : index
    %48 = tpu.strided_load %arg15[%c0_74, %c2_75, %c0_76, %c0_77] {strides = array<i32: 1, 2, 2, 1>} : memref<4x18x18x128xf32, #tpu.memory_space<vmem>>, vector<4x8x8x128xf32>
    %49 = vector.shape_cast %48 : vector<4x8x8x128xf32> to vector<256x128xf32>
    %c0_78 = arith.constant 0 : index
    %c0_79 = arith.constant 0 : index
    %50 = vector.load %arg17[%c0_78, %c0_79] : memref<256x512xf32, #tpu.memory_space<vmem>>, vector<256x128xf32>
    tpu.vector_store %arg17[%c0_78, %c0_79], %49 {strides = array<i32>} : memref<256x512xf32, #tpu.memory_space<vmem>>, vector<256x128xf32>,
    %c0_80 = arith.constant 0 : index
    %c2_81 = arith.constant 2 : index
    %c1_82 = arith.constant 1 : index
    %c0_83 = arith.constant 0 : index
    %51 = tpu.strided_load %arg15[%c0_80, %c2_81, %c1_82, %c0_83] {strides = array<i32: 1, 2, 2, 1>} : memref<4x18x18x128xf32, #tpu.memory_space<vmem>>, vector<4x8x8x128xf32>
    %52 = vector.shape_cast %51 : vector<4x8x8x128xf32> to vector<256x128xf32>
    %c0_84 = arith.constant 0 : index
    %c128_85 = arith.constant 128 : index
    %53 = vector.load %arg17[%c0_84, %c128_85] : memref<256x512xf32, #tpu.memory_space<vmem>>, vector<256x128xf32>
    tpu.vector_store %arg17[%c0_84, %c128_85], %52 {strides = array<i32>} : memref<256x512xf32, #tpu.memory_space<vmem>>, vector<256x128xf32>,
    %c0_86 = arith.constant 0 : index
    %c2_87 = arith.constant 2 : index
    %c2_88 = arith.constant 2 : index
    %c0_89 = arith.constant 0 : index
    %54 = tpu.strided_load %arg15[%c0_86, %c2_87, %c2_88, %c0_89] {strides = array<i32: 1, 2, 2, 1>} : memref<4x18x18x128xf32, #tpu.memory_space<vmem>>, vector<4x8x8x128xf32>
    %55 = vector.shape_cast %54 : vector<4x8x8x128xf32> to vector<256x128xf32>
    %c0_90 = arith.constant 0 : index
    %c256_91 = arith.constant 256 : index
    %56 = vector.load %arg17[%c0_90, %c256_91] : memref<256x512xf32, #tpu.memory_space<vmem>>, vector<256x128xf32>
    tpu.vector_store %arg17[%c0_90, %c256_91], %55 {strides = array<i32>} : memref<256x512xf32, #tpu.memory_space<vmem>>, vector<256x128xf32>,
    %c0_92 = arith.constant 0 : index
    %c2_93 = arith.constant 2 : index
    %c3_94 = arith.constant 3 : index
    %c0_95 = arith.constant 0 : index
    %57 = tpu.strided_load %arg15[%c0_92, %c2_93, %c3_94, %c0_95] {strides = array<i32: 1, 2, 2, 1>} : memref<4x18x18x128xf32, #tpu.memory_space<vmem>>, vector<4x8x8x128xf32>
    %58 = vector.shape_cast %57 : vector<4x8x8x128xf32> to vector<256x128xf32>
    %c0_96 = arith.constant 0 : index
    %c384_97 = arith.constant 384 : index
    %59 = vector.load %arg17[%c0_96, %c384_97] : memref<256x512xf32, #tpu.memory_space<vmem>>, vector<256x128xf32>
    tpu.vector_store %arg17[%c0_96, %c384_97], %58 {strides = array<i32>} : memref<256x512xf32, #tpu.memory_space<vmem>>, vector<256x128xf32>,
    %c0_98 = arith.constant 0 : index
    %c0_99 = arith.constant 0 : index
    %60 = vector.load %arg17[%c0_98, %c0_99] : memref<256x512xf32, #tpu.memory_space<vmem>>, vector<256x512xf32>
    %c2_100 = arith.constant 2 : index
    %c0_101 = arith.constant 0 : index
    %c0_102 = arith.constant 0 : index
    %61 = vector.load %arg4[%c2_100, %c0_101, %c0_102] : memref<4x512x128xf32, #tpu.memory_space<vmem>>, vector<1x512x128xf32>
    %62 = vector.shape_cast %61 : vector<1x512x128xf32> to vector<512x128xf32>
    %cst_103 = arith.constant dense<0.000000e+00> : vector<256x128xf32>
    %63 = tpu.matmul %60, %62, %cst_103 {dimension_numbers = #tpu.dot_dimension_numbers<[1], [0], [0], [1], [0, 0, 1, 1], [], []>} : vector<256x512xf32>, vector<512x128xf32>, vector<256x128xf32> -> vector<256x128xf32>
    %64 = arith.addf %47, %63 : vector<256x128xf32>
    %c0_104 = arith.constant 0 : index
    %c3_105 = arith.constant 3 : index
    %c0_106 = arith.constant 0 : index
    %c0_107 = arith.constant 0 : index
    %65 = tpu.strided_load %arg15[%c0_104, %c3_105, %c0_106, %c0_107] {strides = array<i32: 1, 2, 2, 1>} : memref<4x18x18x128xf32, #tpu.memory_space<vmem>>, vector<4x8x8x128xf32>
    %66 = vector.shape_cast %65 : vector<4x8x8x128xf32> to vector<256x128xf32>
    %c0_108 = arith.constant 0 : index
    %c0_109 = arith.constant 0 : index
    %67 = vector.load %arg17[%c0_108, %c0_109] : memref<256x512xf32, #tpu.memory_space<vmem>>, vector<256x128xf32>
    tpu.vector_store %arg17[%c0_108, %c0_109], %66 {strides = array<i32>} : memref<256x512xf32, #tpu.memory_space<vmem>>, vector<256x128xf32>,
    %c0_110 = arith.constant 0 : index
    %c3_111 = arith.constant 3 : index
    %c1_112 = arith.constant 1 : index
    %c0_113 = arith.constant 0 : index
    %68 = tpu.strided_load %arg15[%c0_110, %c3_111, %c1_112, %c0_113] {strides = array<i32: 1, 2, 2, 1>} : memref<4x18x18x128xf32, #tpu.memory_space<vmem>>, vector<4x8x8x128xf32>
    %69 = vector.shape_cast %68 : vector<4x8x8x128xf32> to vector<256x128xf32>
    %c0_114 = arith.constant 0 : index
    %c128_115 = arith.constant 128 : index
    %70 = vector.load %arg17[%c0_114, %c128_115] : memref<256x512xf32, #tpu.memory_space<vmem>>, vector<256x128xf32>
    tpu.vector_store %arg17[%c0_114, %c128_115], %69 {strides = array<i32>} : memref<256x512xf32, #tpu.memory_space<vmem>>, vector<256x128xf32>,
    %c0_116 = arith.constant 0 : index
    %c3_117 = arith.constant 3 : index
    %c2_118 = arith.constant 2 : index
    %c0_119 = arith.constant 0 : index
    %71 = tpu.strided_load %arg15[%c0_116, %c3_117, %c2_118, %c0_119] {strides = array<i32: 1, 2, 2, 1>} : memref<4x18x18x128xf32, #tpu.memory_space<vmem>>, vector<4x8x8x128xf32>
    %72 = vector.shape_cast %71 : vector<4x8x8x128xf32> to vector<256x128xf32>
    %c0_120 = arith.constant 0 : index
    %c256_121 = arith.constant 256 : index
    %73 = vector.load %arg17[%c0_120, %c256_121] : memref<256x512xf32, #tpu.memory_space<vmem>>, vector<256x128xf32>
    tpu.vector_store %arg17[%c0_120, %c256_121], %72 {strides = array<i32>} : memref<256x512xf32, #tpu.memory_space<vmem>>, vector<256x128xf32>,
    %c0_122 = arith.constant 0 : index
    %c3_123 = arith.constant 3 : index
    %c3_124 = arith.constant 3 : index
    %c0_125 = arith.constant 0 : index
    %74 = tpu.strided_load %arg15[%c0_122, %c3_123, %c3_124, %c0_125] {strides = array<i32: 1, 2, 2, 1>} : memref<4x18x18x128xf32, #tpu.memory_space<vmem>>, vector<4x8x8x128xf32>
    %75 = vector.shape_cast %74 : vector<4x8x8x128xf32> to vector<256x128xf32>
    %c0_126 = arith.constant 0 : index
    %c384_127 = arith.constant 384 : index
    %76 = vector.load %arg17[%c0_126, %c384_127] : memref<256x512xf32, #tpu.memory_space<vmem>>, vector<256x128xf32>
    tpu.vector_store %arg17[%c0_126, %c384_127], %75 {strides = array<i32>} : memref<256x512xf32, #tpu.memory_space<vmem>>, vector<256x128xf32>,
    %c0_128 = arith.constant 0 : index
    %c0_129 = arith.constant 0 : index
    %77 = vector.load %arg17[%c0_128, %c0_129] : memref<256x512xf32, #tpu.memory_space<vmem>>, vector<256x512xf32>
    %c3_130 = arith.constant 3 : index
    %c0_131 = arith.constant 0 : index
    %c0_132 = arith.constant 0 : index
    %78 = vector.load %arg4[%c3_130, %c0_131, %c0_132] : memref<4x512x128xf32, #tpu.memory_space<vmem>>, vector<1x512x128xf32>
    %79 = vector.shape_cast %78 : vector<1x512x128xf32> to vector<512x128xf32>
    %cst_133 = arith.constant dense<0.000000e+00> : vector<256x128xf32>
    %80 = tpu.matmul %77, %79, %cst_133 {dimension_numbers = #tpu.dot_dimension_numbers<[1], [0], [0], [1], [0, 0, 1, 1], [], []>} : vector<256x512xf32>, vector<512x128xf32>, vector<256x128xf32> -> vector<256x128xf32>
    %81 = arith.addf %64, %80 : vector<256x128xf32>
    %c0_134 = arith.constant 0 : index
    %c0_135 = arith.constant 0 : index
    %82 = vector.load %arg5[%c0_134, %c0_135] : memref<1x128xf32, #tpu.memory_space<vmem>>, vector<1x128xf32>
    %83 = vector.broadcast %82 : vector<1x128xf32> to vector<256x128xf32>
    %84 = arith.addf %81, %83 : vector<256x128xf32>
    %cst_136 = arith.constant 0.000000e+00 : f32
    %85 = vector.broadcast %cst_136 : f32 to vector<256x128xf32>
    %86 = arith.maximumf %84, %85 : vector<256x128xf32>
    %87 = vector.shape_cast %86 : vector<256x128xf32> to vector<4x8x8x128xf32>
    %c0_137 = arith.constant 0 : index
    %c0_138 = arith.constant 0 : index
    %c0_139 = arith.constant 0 : index
    %c0_140 = arith.constant 0 : index
    %88 = vector.load %arg16[%c0_137, %c0_138, %c0_139, %c0_140] : memref<4x10x18x128xf32, #tpu.memory_space<vmem>>, vector<4x8x8x128xf32>
    tpu.vector_store %arg16[%c0_137, %c0_138, %c0_139, %c0_140], %87 {strides = array<i32>} : memref<4x10x18x128xf32, #tpu.memory_space<vmem>>, vector<4x8x8x128xf32>,
    %cst_141 = arith.constant 0.000000e+00 : f32
    %89 = vector.broadcast %cst_141 : f32 to vector<4x2x10x128xf32>
    %c0_142 = arith.constant 0 : index
    %c8 = arith.constant 8 : index
    %c0_143 = arith.constant 0 : index
    %c0_144 = arith.constant 0 : index
    %90 = vector.load %arg16[%c0_142, %c8, %c0_143, %c0_144] : memref<4x10x18x128xf32, #tpu.memory_space<vmem>>, vector<4x2x10x128xf32>
    tpu.vector_store %arg16[%c0_142, %c8, %c0_143, %c0_144], %89 {strides = array<i32>} : memref<4x10x18x128xf32, #tpu.memory_space<vmem>>, vector<4x2x10x128xf32>,
    %cst_145 = arith.constant 0.000000e+00 : f32
    %91 = vector.broadcast %cst_145 : f32 to vector<4x8x2x128xf32>
    %c0_146 = arith.constant 0 : index
    %c0_147 = arith.constant 0 : index
    %c8_148 = arith.constant 8 : index
    %c0_149 = arith.constant 0 : index
    %92 = vector.load %arg16[%c0_146, %c0_147, %c8_148, %c0_149] : memref<4x10x18x128xf32, #tpu.memory_space<vmem>>, vector<4x8x2x128xf32>
    tpu.vector_store %arg16[%c0_146, %c0_147, %c8_148, %c0_149], %91 {strides = array<i32>} : memref<4x10x18x128xf32, #tpu.memory_space<vmem>>, vector<4x8x2x128xf32>,
    %c0_150 = arith.constant 0 : index
    %c0_151 = arith.constant 0 : index
    %c0_152 = arith.constant 0 : index
    %c0_153 = arith.constant 0 : index
    %93 = tpu.strided_load %arg16[%c0_150, %c0_151, %c0_152, %c0_153] {strides = array<i32: 1, 2, 2, 1>} : memref<4x10x18x128xf32, #tpu.memory_space<vmem>>, vector<4x4x8x128xf32>
    %94 = vector.shape_cast %93 : vector<4x4x8x128xf32> to vector<128x128xf32>
    %c0_154 = arith.constant 0 : index
    %c0_155 = arith.constant 0 : index
    %95 = vector.load %arg17[%c0_154, %c0_155] : memref<256x512xf32, #tpu.memory_space<vmem>>, vector<128x128xf32>
    tpu.vector_store %arg17[%c0_154, %c0_155], %94 {strides = array<i32>} : memref<256x512xf32, #tpu.memory_space<vmem>>, vector<128x128xf32>,
    %c0_156 = arith.constant 0 : index
    %c0_157 = arith.constant 0 : index
    %c1_158 = arith.constant 1 : index
    %c0_159 = arith.constant 0 : index
    %96 = tpu.strided_load %arg16[%c0_156, %c0_157, %c1_158, %c0_159] {strides = array<i32: 1, 2, 2, 1>} : memref<4x10x18x128xf32, #tpu.memory_space<vmem>>, vector<4x4x8x128xf32>
    %97 = vector.shape_cast %96 : vector<4x4x8x128xf32> to vector<128x128xf32>
    %c0_160 = arith.constant 0 : index
    %c128_161 = arith.constant 128 : index
    %98 = vector.load %arg17[%c0_160, %c128_161] : memref<256x512xf32, #tpu.memory_space<vmem>>, vector<128x128xf32>
    tpu.vector_store %arg17[%c0_160, %c128_161], %97 {strides = array<i32>} : memref<256x512xf32, #tpu.memory_space<vmem>>, vector<128x128xf32>,
    %c0_162 = arith.constant 0 : index
    %c0_163 = arith.constant 0 : index
    %c2_164 = arith.constant 2 : index
    %c0_165 = arith.constant 0 : index
    %99 = tpu.strided_load %arg16[%c0_162, %c0_163, %c2_164, %c0_165] {strides = array<i32: 1, 2, 2, 1>} : memref<4x10x18x128xf32, #tpu.memory_space<vmem>>, vector<4x4x8x128xf32>
    %100 = vector.shape_cast %99 : vector<4x4x8x128xf32> to vector<128x128xf32>
    %c0_166 = arith.constant 0 : index
    %c256_167 = arith.constant 256 : index
    %101 = vector.load %arg17[%c0_166, %c256_167] : memref<256x512xf32, #tpu.memory_space<vmem>>, vector<128x128xf32>
    tpu.vector_store %arg17[%c0_166, %c256_167], %100 {strides = array<i32>} : memref<256x512xf32, #tpu.memory_space<vmem>>, vector<128x128xf32>,
    %c0_168 = arith.constant 0 : index
    %c0_169 = arith.constant 0 : index
    %c3_170 = arith.constant 3 : index
    %c0_171 = arith.constant 0 : index
    %102 = tpu.strided_load %arg16[%c0_168, %c0_169, %c3_170, %c0_171] {strides = array<i32: 1, 2, 2, 1>} : memref<4x10x18x128xf32, #tpu.memory_space<vmem>>, vector<4x4x8x128xf32>
    %103 = vector.shape_cast %102 : vector<4x4x8x128xf32> to vector<128x128xf32>
    %c0_172 = arith.constant 0 : index
    %c384_173 = arith.constant 384 : index
    %104 = vector.load %arg17[%c0_172, %c384_173] : memref<256x512xf32, #tpu.memory_space<vmem>>, vector<128x128xf32>
    tpu.vector_store %arg17[%c0_172, %c384_173], %103 {strides = array<i32>} : memref<256x512xf32, #tpu.memory_space<vmem>>, vector<128x128xf32>,
    %c0_174 = arith.constant 0 : index
    %c0_175 = arith.constant 0 : index
    %105 = vector.load %arg17[%c0_174, %c0_175] : memref<256x512xf32, #tpu.memory_space<vmem>>, vector<128x512xf32>
    %c0_176 = arith.constant 0 : index
    %c0_177 = arith.constant 0 : index
    %c0_178 = arith.constant 0 : index
    %106 = vector.load %arg6[%c0_176, %c0_177, %c0_178] : memref<4x512x128xf32, #tpu.memory_space<vmem>>, vector<1x512x128xf32>
    %107 = vector.shape_cast %106 : vector<1x512x128xf32> to vector<512x128xf32>
    %cst_179 = arith.constant dense<0.000000e+00> : vector<128x128xf32>
    %108 = tpu.matmul %105, %107, %cst_179 {dimension_numbers = #tpu.dot_dimension_numbers<[1], [0], [0], [1], [0, 0, 1, 1], [], []>} : vector<128x512xf32>, vector<512x128xf32>, vector<128x128xf32> -> vector<128x128xf32>
    %c0_180 = arith.constant 0 : index
    %c1_181 = arith.constant 1 : index
    %c0_182 = arith.constant 0 : index
    %c0_183 = arith.constant 0 : index
    %109 = tpu.strided_load %arg16[%c0_180, %c1_181, %c0_182, %c0_183] {strides = array<i32: 1, 2, 2, 1>} : memref<4x10x18x128xf32, #tpu.memory_space<vmem>>, vector<4x4x8x128xf32>
    %110 = vector.shape_cast %109 : vector<4x4x8x128xf32> to vector<128x128xf32>
    %c0_184 = arith.constant 0 : index
    %c0_185 = arith.constant 0 : index
    %111 = vector.load %arg17[%c0_184, %c0_185] : memref<256x512xf32, #tpu.memory_space<vmem>>, vector<128x128xf32>
    tpu.vector_store %arg17[%c0_184, %c0_185], %110 {strides = array<i32>} : memref<256x512xf32, #tpu.memory_space<vmem>>, vector<128x128xf32>,
    %c0_186 = arith.constant 0 : index
    %c1_187 = arith.constant 1 : index
    %c1_188 = arith.constant 1 : index
    %c0_189 = arith.constant 0 : index
    %112 = tpu.strided_load %arg16[%c0_186, %c1_187, %c1_188, %c0_189] {strides = array<i32: 1, 2, 2, 1>} : memref<4x10x18x128xf32, #tpu.memory_space<vmem>>, vector<4x4x8x128xf32>
    %113 = vector.shape_cast %112 : vector<4x4x8x128xf32> to vector<128x128xf32>
    %c0_190 = arith.constant 0 : index
    %c128_191 = arith.constant 128 : index
    %114 = vector.load %arg17[%c0_190, %c128_191] : memref<256x512xf32, #tpu.memory_space<vmem>>, vector<128x128xf32>
    tpu.vector_store %arg17[%c0_190, %c128_191], %113 {strides = array<i32>} : memref<256x512xf32, #tpu.memory_space<vmem>>, vector<128x128xf32>,
    %c0_192 = arith.constant 0 : index
    %c1_193 = arith.constant 1 : index
    %c2_194 = arith.constant 2 : index
    %c0_195 = arith.constant 0 : index
    %115 = tpu.strided_load %arg16[%c0_192, %c1_193, %c2_194, %c0_195] {strides = array<i32: 1, 2, 2, 1>} : memref<4x10x18x128xf32, #tpu.memory_space<vmem>>, vector<4x4x8x128xf32>
    %116 = vector.shape_cast %115 : vector<4x4x8x128xf32> to vector<128x128xf32>
    %c0_196 = arith.constant 0 : index
    %c256_197 = arith.constant 256 : index
    %117 = vector.load %arg17[%c0_196, %c256_197] : memref<256x512xf32, #tpu.memory_space<vmem>>, vector<128x128xf32>
    tpu.vector_store %arg17[%c0_196, %c256_197], %116 {strides = array<i32>} : memref<256x512xf32, #tpu.memory_space<vmem>>, vector<128x128xf32>,
    %c0_198 = arith.constant 0 : index
    %c1_199 = arith.constant 1 : index
    %c3_200 = arith.constant 3 : index
    %c0_201 = arith.constant 0 : index
    %118 = tpu.strided_load %arg16[%c0_198, %c1_199, %c3_200, %c0_201] {strides = array<i32: 1, 2, 2, 1>} : memref<4x10x18x128xf32, #tpu.memory_space<vmem>>, vector<4x4x8x128xf32>
    %119 = vector.shape_cast %118 : vector<4x4x8x128xf32> to vector<128x128xf32>
    %c0_202 = arith.constant 0 : index
    %c384_203 = arith.constant 384 : index
    %120 = vector.load %arg17[%c0_202, %c384_203] : memref<256x512xf32, #tpu.memory_space<vmem>>, vector<128x128xf32>
    tpu.vector_store %arg17[%c0_202, %c384_203], %119 {strides = array<i32>} : memref<256x512xf32, #tpu.memory_space<vmem>>, vector<128x128xf32>,
    %c0_204 = arith.constant 0 : index
    %c0_205 = arith.constant 0 : index
    %121 = vector.load %arg17[%c0_204, %c0_205] : memref<256x512xf32, #tpu.memory_space<vmem>>, vector<128x512xf32>
    %c1_206 = arith.constant 1 : index
    %c0_207 = arith.constant 0 : index
    %c0_208 = arith.constant 0 : index
    %122 = vector.load %arg6[%c1_206, %c0_207, %c0_208] : memref<4x512x128xf32, #tpu.memory_space<vmem>>, vector<1x512x128xf32>
    %123 = vector.shape_cast %122 : vector<1x512x128xf32> to vector<512x128xf32>
    %cst_209 = arith.constant dense<0.000000e+00> : vector<128x128xf32>
    %124 = tpu.matmul %121, %123, %cst_209 {dimension_numbers = #tpu.dot_dimension_numbers<[1], [0], [0], [1], [0, 0, 1, 1], [], []>} : vector<128x512xf32>, vector<512x128xf32>, vector<128x128xf32> -> vector<128x128xf32>
    %125 = arith.addf %108, %124 : vector<128x128xf32>
    %c0_210 = arith.constant 0 : index
    %c2_211 = arith.constant 2 : index
    %c0_212 = arith.constant 0 : index
    %c0_213 = arith.constant 0 : index
    %126 = tpu.strided_load %arg16[%c0_210, %c2_211, %c0_212, %c0_213] {strides = array<i32: 1, 2, 2, 1>} : memref<4x10x18x128xf32, #tpu.memory_space<vmem>>, vector<4x4x8x128xf32>
    %127 = vector.shape_cast %126 : vector<4x4x8x128xf32> to vector<128x128xf32>
    %c0_214 = arith.constant 0 : index
    %c0_215 = arith.constant 0 : index
    %128 = vector.load %arg17[%c0_214, %c0_215] : memref<256x512xf32, #tpu.memory_space<vmem>>, vector<128x128xf32>
    tpu.vector_store %arg17[%c0_214, %c0_215], %127 {strides = array<i32>} : memref<256x512xf32, #tpu.memory_space<vmem>>, vector<128x128xf32>,
    %c0_216 = arith.constant 0 : index
    %c2_217 = arith.constant 2 : index
    %c1_218 = arith.constant 1 : index
    %c0_219 = arith.constant 0 : index
    %129 = tpu.strided_load %arg16[%c0_216, %c2_217, %c1_218, %c0_219] {strides = array<i32: 1, 2, 2, 1>} : memref<4x10x18x128xf32, #tpu.memory_space<vmem>>, vector<4x4x8x128xf32>
    %130 = vector.shape_cast %129 : vector<4x4x8x128xf32> to vector<128x128xf32>
    %c0_220 = arith.constant 0 : index
    %c128_221 = arith.constant 128 : index
    %131 = vector.load %arg17[%c0_220, %c128_221] : memref<256x512xf32, #tpu.memory_space<vmem>>, vector<128x128xf32>
    tpu.vector_store %arg17[%c0_220, %c128_221], %130 {strides = array<i32>} : memref<256x512xf32, #tpu.memory_space<vmem>>, vector<128x128xf32>,
    %c0_222 = arith.constant 0 : index
    %c2_223 = arith.constant 2 : index
    %c2_224 = arith.constant 2 : index
    %c0_225 = arith.constant 0 : index
    %132 = tpu.strided_load %arg16[%c0_222, %c2_223, %c2_224, %c0_225] {strides = array<i32: 1, 2, 2, 1>} : memref<4x10x18x128xf32, #tpu.memory_space<vmem>>, vector<4x4x8x128xf32>
    %133 = vector.shape_cast %132 : vector<4x4x8x128xf32> to vector<128x128xf32>
    %c0_226 = arith.constant 0 : index
    %c256_227 = arith.constant 256 : index
    %134 = vector.load %arg17[%c0_226, %c256_227] : memref<256x512xf32, #tpu.memory_space<vmem>>, vector<128x128xf32>
    tpu.vector_store %arg17[%c0_226, %c256_227], %133 {strides = array<i32>} : memref<256x512xf32, #tpu.memory_space<vmem>>, vector<128x128xf32>,
    %c0_228 = arith.constant 0 : index
    %c2_229 = arith.constant 2 : index
    %c3_230 = arith.constant 3 : index
    %c0_231 = arith.constant 0 : index
    %135 = tpu.strided_load %arg16[%c0_228, %c2_229, %c3_230, %c0_231] {strides = array<i32: 1, 2, 2, 1>} : memref<4x10x18x128xf32, #tpu.memory_space<vmem>>, vector<4x4x8x128xf32>
    %136 = vector.shape_cast %135 : vector<4x4x8x128xf32> to vector<128x128xf32>
    %c0_232 = arith.constant 0 : index
    %c384_233 = arith.constant 384 : index
    %137 = vector.load %arg17[%c0_232, %c384_233] : memref<256x512xf32, #tpu.memory_space<vmem>>, vector<128x128xf32>
    tpu.vector_store %arg17[%c0_232, %c384_233], %136 {strides = array<i32>} : memref<256x512xf32, #tpu.memory_space<vmem>>, vector<128x128xf32>,
    %c0_234 = arith.constant 0 : index
    %c0_235 = arith.constant 0 : index
    %138 = vector.load %arg17[%c0_234, %c0_235] : memref<256x512xf32, #tpu.memory_space<vmem>>, vector<128x512xf32>
    %c2_236 = arith.constant 2 : index
    %c0_237 = arith.constant 0 : index
    %c0_238 = arith.constant 0 : index
    %139 = vector.load %arg6[%c2_236, %c0_237, %c0_238] : memref<4x512x128xf32, #tpu.memory_space<vmem>>, vector<1x512x128xf32>
    %140 = vector.shape_cast %139 : vector<1x512x128xf32> to vector<512x128xf32>
    %cst_239 = arith.constant dense<0.000000e+00> : vector<128x128xf32>
    %141 = tpu.matmul %138, %140, %cst_239 {dimension_numbers = #tpu.dot_dimension_numbers<[1], [0], [0], [1], [0, 0, 1, 1], [], []>} : vector<128x512xf32>, vector<512x128xf32>, vector<128x128xf32> -> vector<128x128xf32>
    %142 = arith.addf %125, %141 : vector<128x128xf32>
    %c0_240 = arith.constant 0 : index
    %c3_241 = arith.constant 3 : index
    %c0_242 = arith.constant 0 : index
    %c0_243 = arith.constant 0 : index
    %143 = tpu.strided_load %arg16[%c0_240, %c3_241, %c0_242, %c0_243] {strides = array<i32: 1, 2, 2, 1>} : memref<4x10x18x128xf32, #tpu.memory_space<vmem>>, vector<4x4x8x128xf32>
    %144 = vector.shape_cast %143 : vector<4x4x8x128xf32> to vector<128x128xf32>
    %c0_244 = arith.constant 0 : index
    %c0_245 = arith.constant 0 : index
    %145 = vector.load %arg17[%c0_244, %c0_245] : memref<256x512xf32, #tpu.memory_space<vmem>>, vector<128x128xf32>
    tpu.vector_store %arg17[%c0_244, %c0_245], %144 {strides = array<i32>} : memref<256x512xf32, #tpu.memory_space<vmem>>, vector<128x128xf32>,
    %c0_246 = arith.constant 0 : index
    %c3_247 = arith.constant 3 : index
    %c1_248 = arith.constant 1 : index
    %c0_249 = arith.constant 0 : index
    %146 = tpu.strided_load %arg16[%c0_246, %c3_247, %c1_248, %c0_249] {strides = array<i32: 1, 2, 2, 1>} : memref<4x10x18x128xf32, #tpu.memory_space<vmem>>, vector<4x4x8x128xf32>
    %147 = vector.shape_cast %146 : vector<4x4x8x128xf32> to vector<128x128xf32>
    %c0_250 = arith.constant 0 : index
    %c128_251 = arith.constant 128 : index
    %148 = vector.load %arg17[%c0_250, %c128_251] : memref<256x512xf32, #tpu.memory_space<vmem>>, vector<128x128xf32>
    tpu.vector_store %arg17[%c0_250, %c128_251], %147 {strides = array<i32>} : memref<256x512xf32, #tpu.memory_space<vmem>>, vector<128x128xf32>,
    %c0_252 = arith.constant 0 : index
    %c3_253 = arith.constant 3 : index
    %c2_254 = arith.constant 2 : index
    %c0_255 = arith.constant 0 : index
    %149 = tpu.strided_load %arg16[%c0_252, %c3_253, %c2_254, %c0_255] {strides = array<i32: 1, 2, 2, 1>} : memref<4x10x18x128xf32, #tpu.memory_space<vmem>>, vector<4x4x8x128xf32>
    %150 = vector.shape_cast %149 : vector<4x4x8x128xf32> to vector<128x128xf32>
    %c0_256 = arith.constant 0 : index
    %c256_257 = arith.constant 256 : index
    %151 = vector.load %arg17[%c0_256, %c256_257] : memref<256x512xf32, #tpu.memory_space<vmem>>, vector<128x128xf32>
    tpu.vector_store %arg17[%c0_256, %c256_257], %150 {strides = array<i32>} : memref<256x512xf32, #tpu.memory_space<vmem>>, vector<128x128xf32>,
    %c0_258 = arith.constant 0 : index
    %c3_259 = arith.constant 3 : index
    %c3_260 = arith.constant 3 : index
    %c0_261 = arith.constant 0 : index
    %152 = tpu.strided_load %arg16[%c0_258, %c3_259, %c3_260, %c0_261] {strides = array<i32: 1, 2, 2, 1>} : memref<4x10x18x128xf32, #tpu.memory_space<vmem>>, vector<4x4x8x128xf32>
    %153 = vector.shape_cast %152 : vector<4x4x8x128xf32> to vector<128x128xf32>
    %c0_262 = arith.constant 0 : index
    %c384_263 = arith.constant 384 : index
    %154 = vector.load %arg17[%c0_262, %c384_263] : memref<256x512xf32, #tpu.memory_space<vmem>>, vector<128x128xf32>
    tpu.vector_store %arg17[%c0_262, %c384_263], %153 {strides = array<i32>} : memref<256x512xf32, #tpu.memory_space<vmem>>, vector<128x128xf32>,
    %c0_264 = arith.constant 0 : index
    %c0_265 = arith.constant 0 : index
    %155 = vector.load %arg17[%c0_264, %c0_265] : memref<256x512xf32, #tpu.memory_space<vmem>>, vector<128x512xf32>
    %c3_266 = arith.constant 3 : index
    %c0_267 = arith.constant 0 : index
    %c0_268 = arith.constant 0 : index
    %156 = vector.load %arg6[%c3_266, %c0_267, %c0_268] : memref<4x512x128xf32, #tpu.memory_space<vmem>>, vector<1x512x128xf32>
    %157 = vector.shape_cast %156 : vector<1x512x128xf32> to vector<512x128xf32>
    %cst_269 = arith.constant dense<0.000000e+00> : vector<128x128xf32>
    %158 = tpu.matmul %155, %157, %cst_269 {dimension_numbers = #tpu.dot_dimension_numbers<[1], [0], [0], [1], [0, 0, 1, 1], [], []>} : vector<128x512xf32>, vector<512x128xf32>, vector<128x128xf32> -> vector<128x128xf32>
    %159 = arith.addf %142, %158 : vector<128x128xf32>
    %c0_270 = arith.constant 0 : index
    %c0_271 = arith.constant 0 : index
    %160 = vector.load %arg7[%c0_270, %c0_271] : memref<1x128xf32, #tpu.memory_space<vmem>>, vector<1x128xf32>
    %161 = vector.broadcast %160 : vector<1x128xf32> to vector<128x128xf32>
    %162 = arith.addf %159, %161 : vector<128x128xf32>
    %cst_272 = arith.constant 0.000000e+00 : f32
    %163 = vector.broadcast %cst_272 : f32 to vector<128x128xf32>
    %164 = arith.maximumf %162, %163 : vector<128x128xf32>
    %c0_273 = arith.constant 0 : index
    %c0_274 = arith.constant 0 : index
    %165 = vector.load %arg8[%c0_273, %c0_274] : memref<128x128xf32, #tpu.memory_space<vmem>>, vector<128x128xf32>
    %cst_275 = arith.constant dense<0.000000e+00> : vector<128x128xf32>
    %166 = tpu.matmul %164, %165, %cst_275 {dimension_numbers = #tpu.dot_dimension_numbers<[1], [0], [0], [1], [0, 0, 1, 1], [], []>} : vector<128x128xf32>, vector<128x128xf32>, vector<128x128xf32> -> vector<128x128xf32>
    %c0_276 = arith.constant 0 : index
    %c0_277 = arith.constant 0 : index
    %167 = vector.load %arg9[%c0_276, %c0_277] : memref<1x128xf32, #tpu.memory_space<vmem>>, vector<1x128xf32>
    %168 = vector.broadcast %167 : vector<1x128xf32> to vector<128x128xf32>
    %169 = arith.addf %166, %168 : vector<128x128xf32>
    %cst_278 = arith.constant 0.000000e+00 : f32
    %170 = vector.broadcast %cst_278 : f32 to vector<128x128xf32>
    %171 = arith.maximumf %169, %170 : vector<128x128xf32>
    %c0_279 = arith.constant 0 : index
    %c0_280 = arith.constant 0 : index
    %172 = vector.load %arg10[%c0_279, %c0_280] : memref<128x128xf32, #tpu.memory_space<vmem>>, vector<128x128xf32>
    %cst_281 = arith.constant dense<0.000000e+00> : vector<128x128xf32>
    %173 = tpu.matmul %171, %172, %cst_281 {dimension_numbers = #tpu.dot_dimension_numbers<[1], [0], [0], [1], [0, 0, 1, 1], [], []>} : vector<128x128xf32>, vector<128x128xf32>, vector<128x128xf32> -> vector<128x128xf32>
    %c0_282 = arith.constant 0 : index
    %c0_283 = arith.constant 0 : index
    %174 = vector.load %arg11[%c0_282, %c0_283] : memref<1x128xf32, #tpu.memory_space<vmem>>, vector<1x128xf32>
    %175 = vector.broadcast %174 : vector<1x128xf32> to vector<128x128xf32>
    %176 = arith.addf %173, %175 : vector<128x128xf32>
    %cst_284 = arith.constant 0.000000e+00 : f32
    %177 = vector.broadcast %cst_284 : f32 to vector<128x128xf32>
    %178 = arith.maximumf %176, %177 : vector<128x128xf32>
    %c0_285 = arith.constant 0 : index
    %c0_286 = arith.constant 0 : index
    %179 = vector.load %arg12[%c0_285, %c0_286] : memref<128x128xf32, #tpu.memory_space<vmem>>, vector<128x128xf32>
    %cst_287 = arith.constant dense<0.000000e+00> : vector<128x128xf32>
    %180 = tpu.matmul %178, %179, %cst_287 {dimension_numbers = #tpu.dot_dimension_numbers<[1], [0], [0], [1], [0, 0, 1, 1], [], []>} : vector<128x128xf32>, vector<128x128xf32>, vector<128x128xf32> -> vector<128x128xf32>
    %c0_288 = arith.constant 0 : index
    %c0_289 = arith.constant 0 : index
    %181 = vector.load %arg13[%c0_288, %c0_289] : memref<1x128xf32, #tpu.memory_space<vmem>>, vector<1x128xf32>
    %182 = vector.broadcast %181 : vector<1x128xf32> to vector<128x128xf32>
    %183 = arith.addf %180, %182 : vector<128x128xf32>
    %cst_290 = arith.constant 0.000000e+00 : f32
    %184 = vector.broadcast %cst_290 : f32 to vector<128x128xf32>
    %185 = arith.maximumf %183, %184 : vector<128x128xf32>
    %186 = vector.shape_cast %185 : vector<128x128xf32> to vector<4x4x8x128xf32>
    %c0_291 = arith.constant 0 : index
    %c0_292 = arith.constant 0 : index
    %c0_293 = arith.constant 0 : index
    %c0_294 = arith.constant 0 : index
    %187 = vector.load %arg14[%c0_291, %c0_292, %c0_293, %c0_294] : memref<4x4x8x128xf32, #tpu.memory_space<vmem>>, vector<4x4x8x128xf32>
    tpu.vector_store %arg14[%c0_291, %c0_292, %c0_293, %c0_294], %186 {strides = array<i32>} : memref<4x4x8x128xf32, #tpu.memory_space<vmem>>, vector<4x4x8x128xf32>,
    return
  }
  func.func @transform_0(%arg0: i32) -> (i32, i32, i32) {
    %c0_i32 = arith.constant 0 : i32
    %c0_i32_0 = arith.constant 0 : i32
    %c0_i32_1 = arith.constant 0 : i32
    return %arg0, %c0_i32, %c0_i32_0 : i32, i32, i32
  }
  func.func @transform_1(%arg0: i32) -> (i32, i32) {
    %c0_i32 = arith.constant 0 : i32
    %c0_i32_0 = arith.constant 0 : i32
    %c0_i32_1 = arith.constant 0 : i32
    return %c0_i32, %c0_i32_0 : i32, i32
  }
  func.func @transform_2(%arg0: i32) -> (i32, i32) {
    %c0_i32 = arith.constant 0 : i32
    %c0_i32_0 = arith.constant 0 : i32
    %c0_i32_1 = arith.constant 0 : i32
    return %c0_i32, %c0_i32_0 : i32, i32
  }
  func.func @transform_3(%arg0: i32) -> (i32, i32, i32) {
    %c0_i32 = arith.constant 0 : i32
    %c0_i32_0 = arith.constant 0 : i32
    %c0_i32_1 = arith.constant 0 : i32
    %c0_i32_2 = arith.constant 0 : i32
    return %c0_i32, %c0_i32_0, %c0_i32_1 : i32, i32, i32
  }
  func.func @transform_4(%arg0: i32) -> (i32, i32) {
    %c0_i32 = arith.constant 0 : i32
    %c0_i32_0 = arith.constant 0 : i32
    %c0_i32_1 = arith.constant 0 : i32
    return %c0_i32, %c0_i32_0 : i32, i32
  }
  func.func @transform_5(%arg0: i32) -> (i32, i32, i32) {
    %c0_i32 = arith.constant 0 : i32
    %c0_i32_0 = arith.constant 0 : i32
    %c0_i32_1 = arith.constant 0 : i32
    %c0_i32_2 = arith.constant 0 : i32
    return %c0_i32, %c0_i32_0, %c0_i32_1 : i32, i32, i32
  }
  func.func @transform_6(%arg0: i32) -> (i32, i32) {
    %c0_i32 = arith.constant 0 : i32
    %c0_i32_0 = arith.constant 0 : i32
    %c0_i32_1 = arith.constant 0 : i32
    return %c0_i32, %c0_i32_0 : i32, i32
  }
  func.func @transform_7(%arg0: i32) -> (i32, i32) {
    %c0_i32 = arith.constant 0 : i32
    %c0_i32_0 = arith.constant 0 : i32
    %c0_i32_1 = arith.constant 0 : i32
    return %c0_i32, %c0_i32_0 : i32, i32
  }
  func.func @transform_8(%arg0: i32) -> (i32, i32) {
    %c0_i32 = arith.constant 0 : i32
    %c0_i32_0 = arith.constant 0 : i32
    %c0_i32_1 = arith.constant 0 : i32
    return %c0_i32, %c0_i32_0 : i32, i32
  }
  func.func @transform_9(%arg0: i32) -> (i32, i32) {
    %c0_i32 = arith.constant 0 : i32
    %c0_i32_0 = arith.constant 0 : i32
    %c0_i32_1 = arith.constant 0 : i32
    return %c0_i32, %c0_i32_0 : i32, i32
  }
  func.func @transform_10(%arg0: i32) -> (i32, i32) {
    %c0_i32 = arith.constant 0 : i32
    %c0_i32_0 = arith.constant 0 : i32
    %c0_i32_1 = arith.constant 0 : i32
    return %c0_i32, %c0_i32_0 : i32, i32
  }
  func.func @transform_11(%arg0: i32) -> (i32, i32) {
    %c0_i32 = arith.constant 0 : i32
    %c0_i32_0 = arith.constant 0 : i32
    %c0_i32_1 = arith.constant 0 : i32
    return %c0_i32, %c0_i32_0 : i32, i32
  }
  func.func @transform_12(%arg0: i32) -> (i32, i32) {
    %c0_i32 = arith.constant 0 : i32
    %c0_i32_0 = arith.constant 0 : i32
    %c0_i32_1 = arith.constant 0 : i32
    return %c0_i32, %c0_i32_0 : i32, i32
  }
  func.func @transform_13(%arg0: i32) -> (i32, i32, i32, i32) {
    %c0_i32 = arith.constant 0 : i32
    %c0_i32_0 = arith.constant 0 : i32
    %c0_i32_1 = arith.constant 0 : i32
    %c0_i32_2 = arith.constant 0 : i32
    return %arg0, %c0_i32, %c0_i32_0, %c0_i32_1 : i32, i32, i32, i32
  }
}

</mosaic_0001>

<llo_original>
// kernel: _lambda_.1
$region0: #{_lambda_.1}
  #allocation0 [shape = 'u32[]', space=smem, size = 0x4, offset = 0x4, fixed_abs, tag = 'smem constant byte address 0x4 - core index']
  #allocation1 [shape = 'u32[144,128]{1,0:T(1,128)}', space=vmem, size = 0x12000, scoped, tag = 'internal scratch']
  #allocation2 [shape = 'f32[4,18,18,128]{3,2,1,0:T(8,128)}', space=vmem, size = 0xd8000, scoped, tag = 'scratch operand']
  #allocation3 [shape = 'f32[4,10,18,128]{3,2,1,0:T(8,128)}', space=vmem, size = 0x78000, scoped, tag = 'scratch operand']
  #allocation4 [shape = 'f32[256,512]{1,0:T(8,128)}', space=vmem, size = 0x80000, scoped, tag = 'scratch operand']
  %s0 = inlined_call_operand.vmem [shape: f32[8,256,128], index: 0, kind: input, shape index: {}]
  %s1 = inlined_call_operand.vmem [shape: f32[128,128], index: 1, kind: input, shape index: {}]
  %s2 = inlined_call_operand.vmem [shape: f32[1,128], index: 2, kind: input, shape index: {}]
  %s3 = inlined_call_operand.vmem [shape: f32[4,512,128], index: 3, kind: input, shape index: {}]
  %s4 = inlined_call_operand.vmem [shape: f32[1,128], index: 4, kind: input, shape index: {}]
  %s5 = inlined_call_operand.vmem [shape: f32[4,512,128], index: 5, kind: input, shape index: {}]
  %s6 = inlined_call_operand.vmem [shape: f32[1,128], index: 6, kind: input, shape index: {}]
  %s7 = inlined_call_operand.vmem [shape: f32[128,128], index: 7, kind: input, shape index: {}]
  %s8 = inlined_call_operand.vmem [shape: f32[1,128], index: 8, kind: input, shape index: {}]
  %s9 = inlined_call_operand.vmem [shape: f32[128,128], index: 9, kind: input, shape index: {}]
  %s10 = inlined_call_operand.vmem [shape: f32[1,128], index: 10, kind: input, shape index: {}]
  %s11 = inlined_call_operand.vmem [shape: f32[128,128], index: 11, kind: input, shape index: {}]
  %s12 = inlined_call_operand.vmem [shape: f32[1,128], index: 12, kind: input, shape index: {}]
  %s13 = inlined_call_operand.vmem [shape: f32[8,4,8,128], index: 13, kind: output, shape index: {}]
  %s14 = sld [smem:[#allocation0]]
  $region85: #{_lambda_.1} parent=0
    _
  %s16 = ssub.s32 1, %s14
  %s17 = scalar_select 0, %s16, %s14
  loop: start=0, step=1, limit=4
  $region2: #{_lambda_.1} parent=0 // loop_pre_header
    _
  $region3: #{_lambda_.1} parent=0 // loop_header
    %s19 = sphi 0, %s23
    %p20 = scmp.ge.s32.totalorder %s19, 4
    %s29 = sphi 0, %s31
    %s32 = sphi 0, %s29
    %s33 = sphi 0, %s32
    %s49 = sphi 0, %s33
    %s53 = sphi 0, %s53
    %s55 = sphi 0, %s53
    %s56 = sphi 0, %s55
    %s70 = sphi 0, %s56
    %s74 = sphi 0, %s74
    %s76 = sphi 0, %s74
    %s77 = sphi 0, %s76
    %s91 = sphi 0, %s77
    %s95 = sphi 0, %s95
    %s97 = sphi 0, %s95
    %s98 = sphi 0, %s97
    %s112 = sphi 0, %s98
    %s116 = sphi 0, %s116
    %s118 = sphi 0, %s116
    %s119 = sphi 0, %s118
    %s133 = sphi 0, %s119
    %s137 = sphi 0, %s137
    %s139 = sphi 0, %s137
    %s140 = sphi 0, %s139
    %s154 = sphi 0, %s140
    %s158 = sphi 0, %s158
    %s160 = sphi 0, %s158
    %s161 = sphi 0, %s160
    %s175 = sphi 0, %s161
    %s179 = sphi 0, %s179
    %s181 = sphi 0, %s179
    %s182 = sphi 0, %s181
    %s196 = sphi 0, %s182
    %s200 = sphi 0, %s200
    %s202 = sphi 0, %s200
    %s203 = sphi 0, %s202
    %s217 = sphi 0, %s203
    %s221 = sphi 0, %s221
    %s223 = sphi 0, %s221
    %s224 = sphi 0, %s223
    %s238 = sphi 0, %s224
    %s242 = sphi 0, %s242
    %s244 = sphi 0, %s242
    %s245 = sphi 0, %s244
    %s259 = sphi 0, %s245
    %s263 = sphi 0, %s263
    %s265 = sphi 0, %s263
    %s266 = sphi 0, %s265
    %s280 = sphi 0, %s266
    %s284 = sphi 0, %s284
    %s286 = sphi 0, %s284
    %s287 = sphi 0, %s286
    %s301 = sphi 0, %s287
    %s307 = sphi 0, %s309
    %s310 = sphi 0, %s307
    %s311 = sphi 0, %s310
    %s327 = sphi 0, %s311
  $region4: #{_lambda_.1} parent=0 // loop_header_branch
    %22 = sbr.rel (%p20) target = $region8
  $region5: #{_lambda_.1} parent=0 // loop_body
    %s24 = ssub.s32 %s19, 1
    %s25 = ssub.s32 %s19, 2
    %s26 = sadd.s32 %s19, 1
    %s27 = ssub.s32 %s19, %s26
    %p28 = scmp.eq.s32.totalorder %s27, 0
    %s30 = sadd.s32 %s29, 1
    %s31 = scalar_select %p28, %s29, %s30
    %p34 = pneg %p28
    %p35 = scmp.eq.s32.totalorder %s19, 1
    %p36 = por %p34, %p35
    %p37 = scmp.ne.s32.totalorder %s29, %s32
    %p38 = scmp.eq.s32.totalorder %s19, 0
    %p39 = por %p37, %p38
    %p40 = scmp.ne.s32.totalorder %s29, %s32
    %p41 = scmp.eq.s32.totalorder %s24, 1
    %p42 = por %p40, %p41
    %p43 = scmp.ne.s32.totalorder %s32, %s33
    %p44 = scmp.eq.s32.totalorder %s24, 0
    %p45 = por %p43, %p44
    %p46 = scmp.ne.s32.totalorder %s32, %s33
    %p47 = scmp.eq.s32.totalorder %s25, 1
    %p48 = por %p46, %p47
    %p50 = scmp.ne.s32.totalorder %s33, %s49
    %p51 = scmp.eq.s32.totalorder %s25, 0
    %p52 = por %p50, %p51
    %s54 = sadd.s32 %s53, 1
    %p57 = scmp.eq.s32.totalorder %s19, 1
    %p58 = scmp.ne.s32.totalorder %s53, %s55
    %p59 = scmp.eq.s32.totalorder %s19, 0
    %p60 = por %p58, %p59
    %p61 = scmp.ne.s32.totalorder %s53, %s55
    %p62 = scmp.eq.s32.totalorder %s24, 1
    %p63 = por %p61, %p62
    %p64 = scmp.ne.s32.totalorder %s55, %s56
    %p65 = scmp.eq.s32.totalorder %s24, 0
    %p66 = por %p64, %p65
    %p67 = scmp.ne.s32.totalorder %s55, %s56
    %p68 = scmp.eq.s32.totalorder %s25, 1
    %p69 = por %p67, %p68
    %p71 = scmp.ne.s32.totalorder %s56, %s70
    %p72 = scmp.eq.s32.totalorder %s25, 0
    %p73 = por %p71, %p72
    %s75 = sadd.s32 %s74, 1
    %p78 = scmp.eq.s32.totalorder %s19, 1
    %p79 = scmp.ne.s32.totalorder %s74, %s76
    %p80 = scmp.eq.s32.totalorder %s19, 0
    %p81 = por %p79, %p80
    %p82 = scmp.ne.s32.totalorder %s74, %s76
    %p83 = scmp.eq.s32.totalorder %s24, 1
    %p84 = por %p82, %p83
    %p85 = scmp.ne.s32.totalorder %s76, %s77
    %p86 = scmp.eq.s32.totalorder %s24, 0
    %p87 = por %p85, %p86
    %p88 = scmp.ne.s32.totalorder %s76, %s77
    %p89 = scmp.eq.s32.totalorder %s25, 1
    %p90 = por %p88, %p89
    %p92 = scmp.ne.s32.totalorder %s77, %s91
    %p93 = scmp.eq.s32.totalorder %s25, 0
    %p94 = por %p92, %p93
    %s96 = sadd.s32 %s95, 1
    %p99 = scmp.eq.s32.totalorder %s19, 1
    %p100 = scmp.ne.s32.totalorder %s95, %s97
    %p101 = scmp.eq.s32.totalorder %s19, 0
    %p102 = por %p100, %p101
    %p103 = scmp.ne.s32.totalorder %s95, %s97
    %p104 = scmp.eq.s32.totalorder %s24, 1
    %p105 = por %p103, %p104
    %p106 = scmp.ne.s32.totalorder %s97, %s98
    %p107 = scmp.eq.s32.totalorder %s24, 0
    %p108 = por %p106, %p107
    %p109 = scmp.ne.s32.totalorder %s97, %s98
    %p110 = scmp.eq.s32.totalorder %s25, 1
    %p111 = por %p109, %p110
    %p113 = scmp.ne.s32.totalorder %s98, %s112
    %p114 = scmp.eq.s32.totalorder %s25, 0
    %p115 = por %p113, %p114
    %s117 = sadd.s32 %s116, 1
    %p120 = scmp.eq.s32.totalorder %s19, 1
    %p121 = scmp.ne.s32.totalorder %s116, %s118
    %p122 = scmp.eq.s32.totalorder %s19, 0
    %p123 = por %p121, %p122
    %p124 = scmp.ne.s32.totalorder %s116, %s118
    %p125 = scmp.eq.s32.totalorder %s24, 1
    %p126 = por %p124, %p125
    %p127 = scmp.ne.s32.totalorder %s118, %s119
    %p128 = scmp.eq.s32.totalorder %s24, 0
    %p129 = por %p127, %p128
    %p130 = scmp.ne.s32.totalorder %s118, %s119
    %p131 = scmp.eq.s32.totalorder %s25, 1
    %p132 = por %p130, %p131
    %p134 = scmp.ne.s32.totalorder %s119, %s133
    %p135 = scmp.eq.s32.totalorder %s25, 0
    %p136 = por %p134, %p135
    %s138 = sadd.s32 %s137, 1
    %p141 = scmp.eq.s32.totalorder %s19, 1
    %p142 = scmp.ne.s32.totalorder %s137, %s139
    %p143 = scmp.eq.s32.totalorder %s19, 0
    %p144 = por %p142, %p143
    %p145 = scmp.ne.s32.totalorder %s137, %s139
    %p146 = scmp.eq.s32.totalorder %s24, 1
    %p147 = por %p145, %p146
    %p148 = scmp.ne.s32.totalorder %s139, %s140
    %p149 = scmp.eq.s32.totalorder %s24, 0
    %p150 = por %p148, %p149
    %p151 = scmp.ne.s32.totalorder %s139, %s140
    %p152 = scmp.eq.s32.totalorder %s25, 1
    %p153 = por %p151, %p152
    %p155 = scmp.ne.s32.totalorder %s140, %s154
    %p156 = scmp.eq.s32.totalorder %s25, 0
    %p157 = por %p155, %p156
    %s159 = sadd.s32 %s158, 1
    %p162 = scmp.eq.s32.totalorder %s19, 1
    %p163 = scmp.ne.s32.totalorder %s158, %s160
    %p164 = scmp.eq.s32.totalorder %s19, 0
    %p165 = por %p163, %p164
    %p166 = scmp.ne.s32.totalorder %s158, %s160
    %p167 = scmp.eq.s32.totalorder %s24, 1
    %p168 = por %p166, %p167
    %p169 = scmp.ne.s32.totalorder %s160, %s161
    %p170 = scmp.eq.s32.totalorder %s24, 0
    %p171 = por %p169, %p170
    %p172 = scmp.ne.s32.totalorder %s160, %s161
    %p173 = scmp.eq.s32.totalorder %s25, 1
    %p174 = por %p172, %p173
    %p176 = scmp.ne.s32.totalorder %s161, %s175
    %p177 = scmp.eq.s32.totalorder %s25, 0
    %p178 = por %p176, %p177
    %s180 = sadd.s32 %s179, 1
    %p183 = scmp.eq.s32.totalorder %s19, 1
    %p184 = scmp.ne.s32.totalorder %s179, %s181
    %p185 = scmp.eq.s32.totalorder %s19, 0
    %p186 = por %p184, %p185
    %p187 = scmp.ne.s32.totalorder %s179, %s181
    %p188 = scmp.eq.s32.totalorder %s24, 1
    %p189 = por %p187, %p188
    %p190 = scmp.ne.s32.totalorder %s181, %s182
    %p191 = scmp.eq.s32.totalorder %s24, 0
    %p192 = por %p190, %p191
    %p193 = scmp.ne.s32.totalorder %s181, %s182
    %p194 = scmp.eq.s32.totalorder %s25, 1
    %p195 = por %p193, %p194
    %p197 = scmp.ne.s32.totalorder %s182, %s196
    %p198 = scmp.eq.s32.totalorder %s25, 0
    %p199 = por %p197, %p198
    %s201 = sadd.s32 %s200, 1
    %p204 = scmp.eq.s32.totalorder %s19, 1
    %p205 = scmp.ne.s32.totalorder %s200, %s202
    %p206 = scmp.eq.s32.totalorder %s19, 0
    %p207 = por %p205, %p206
    %p208 = scmp.ne.s32.totalorder %s200, %s202
    %p209 = scmp.eq.s32.totalorder %s24, 1
    %p210 = por %p208, %p209
    %p211 = scmp.ne.s32.totalorder %s202, %s203
    %p212 = scmp.eq.s32.totalorder %s24, 0
    %p213 = por %p211, %p212
    %p214 = scmp.ne.s32.totalorder %s202, %s203
    %p215 = scmp.eq.s32.totalorder %s25, 1
    %p216 = por %p214, %p215
    %p218 = scmp.ne.s32.totalorder %s203, %s217
    %p219 = scmp.eq.s32.totalorder %s25, 0
    %p220 = por %p218, %p219
    %s222 = sadd.s32 %s221, 1
    %p225 = scmp.eq.s32.totalorder %s19, 1
    %p226 = scmp.ne.s32.totalorder %s221, %s223
    %p227 = scmp.eq.s32.totalorder %s19, 0
    %p228 = por %p226, %p227
    %p229 = scmp.ne.s32.totalorder %s221, %s223
    %p230 = scmp.eq.s32.totalorder %s24, 1
    %p231 = por %p229, %p230
    %p232 = scmp.ne.s32.totalorder %s223, %s224
    %p233 = scmp.eq.s32.totalorder %s24, 0
    %p234 = por %p232, %p233
    %p235 = scmp.ne.s32.totalorder %s223, %s224
    %p236 = scmp.eq.s32.totalorder %s25, 1
    %p237 = por %p235, %p236
    %p239 = scmp.ne.s32.totalorder %s224, %s238
    %p240 = scmp.eq.s32.totalorder %s25, 0
    %p241 = por %p239, %p240
    %s243 = sadd.s32 %s242, 1
    %p246 = scmp.eq.s32.totalorder %s19, 1
    %p247 = scmp.ne.s32.totalorder %s242, %s244
    %p248 = scmp.eq.s32.totalorder %s19, 0
    %p249 = por %p247, %p248
    %p250 = scmp.ne.s32.totalorder %s242, %s244
    %p251 = scmp.eq.s32.totalorder %s24, 1
    %p252 = por %p250, %p251
    %p253 = scmp.ne.s32.totalorder %s244, %s245
    %p254 = scmp.eq.s32.totalorder %s24, 0
    %p255 = por %p253, %p254
    %p256 = scmp.ne.s32.totalorder %s244, %s245
    %p257 = scmp.eq.s32.totalorder %s25, 1
    %p258 = por %p256, %p257
    %p260 = scmp.ne.s32.totalorder %s245, %s259
    %p261 = scmp.eq.s32.totalorder %s25, 0
    %p262 = por %p260, %p261
    %s264 = sadd.s32 %s263, 1
    %p267 = scmp.eq.s32.totalorder %s19, 1
    %p268 = scmp.ne.s32.totalorder %s263, %s265
    %p269 = scmp.eq.s32.totalorder %s19, 0
    %p270 = por %p268, %p269
    %p271 = scmp.ne.s32.totalorder %s263, %s265
    %p272 = scmp.eq.s32.totalorder %s24, 1
    %p273 = por %p271, %p272
    %p274 = scmp.ne.s32.totalorder %s265, %s266
    %p275 = scmp.eq.s32.totalorder %s24, 0
    %p276 = por %p274, %p275
    %p277 = scmp.ne.s32.totalorder %s265, %s266
    %p278 = scmp.eq.s32.totalorder %s25, 1
    %p279 = por %p277, %p278
    %p281 = scmp.ne.s32.totalorder %s266, %s280
    %p282 = scmp.eq.s32.totalorder %s25, 0
    %p283 = por %p281, %p282
    %s285 = sadd.s32 %s284, 1
    %p288 = scmp.eq.s32.totalorder %s19, 1
    %p289 = scmp.ne.s32.totalorder %s284, %s286
    %p290 = scmp.eq.s32.totalorder %s19, 0
    %p291 = por %p289, %p290
    %p292 = scmp.ne.s32.totalorder %s284, %s286
    %p293 = scmp.eq.s32.totalorder %s24, 1
    %p294 = por %p292, %p293
    %p295 = scmp.ne.s32.totalorder %s286, %s287
    %p296 = scmp.eq.s32.totalorder %s24, 0
    %p297 = por %p295, %p296
    %p298 = scmp.ne.s32.totalorder %s286, %s287
    %p299 = scmp.eq.s32.totalorder %s25, 1
    %p300 = por %p298, %p299
    %p302 = scmp.ne.s32.totalorder %s287, %s301
    %p303 = scmp.eq.s32.totalorder %s25, 0
    %p304 = por %p302, %p303
    %s305 = ssub.s32 %s19, %s26
    %p306 = scmp.eq.s32.totalorder %s305, 0
    %s308 = sadd.s32 %s307, 1
    %s309 = scalar_select %p306, %s307, %s308
    %p312 = pneg %p306
    %p313 = scmp.eq.s32.totalorder %s19, 1
    %p314 = por %p312, %p313
    %p315 = scmp.ne.s32.totalorder %s307, %s310
    %p316 = scmp.eq.s32.totalorder %s19, 0
    %p317 = por %p315, %p316
    %p318 = scmp.ne.s32.totalorder %s307, %s310
    %p319 = scmp.eq.s32.totalorder %s24, 1
    %p320 = por %p318, %p319
    %p321 = scmp.ne.s32.totalorder %s310, %s311
    %p322 = scmp.eq.s32.totalorder %s24, 0
    %p323 = por %p321, %p322
    %p324 = scmp.ne.s32.totalorder %s310, %s311
    %p325 = scmp.eq.s32.totalorder %s25, 1
    %p326 = por %p324, %p325
    %p328 = scmp.ne.s32.totalorder %s311, %s327
    %p329 = scmp.eq.s32.totalorder %s25, 0
    %p330 = por %p328, %p329
    %p331 = scmp.le.s32.totalorder 1, %s19
    %p332 = scmp.lt.s32.totalorder %s19, 3
    %p333 = pnand %p331, %p332
    %p334 = pneg %p333
    // Predicated region
    $region9: #{_lambda_.1} parent=5 // pred_check
      _
    $region10: #{_lambda_.1} parent=5 // pred_check_branch
      %336 = sbr.rel (%p333) target = $region12
    $region11: #{_lambda_.1} parent=5 // pred_region
      %s337 = ssub.s32 %s19, 1
      // Predicated region
      $region13: #{_lambda_.1} parent=11 // pred_check
        %p338 = pneg %p66
      $region14: #{_lambda_.1} parent=11 // pred_check_branch
        %340 = sbr.rel (%p338) target = $region16
      $region15: #{_lambda_.1} parent=11 // pred_region
        _
      $region16: #{_lambda_.1} parent=11 // pred_fallthru
        _
      // Predicated region
      $region17: #{_lambda_.1} parent=11 // pred_check
        %p341 = pneg %p87
      $region18: #{_lambda_.1} parent=11 // pred_check_branch
        %343 = sbr.rel (%p341) target = $region20
      $region19: #{_lambda_.1} parent=11 // pred_region
        _
      $region20: #{_lambda_.1} parent=11 // pred_fallthru
        _
      // Predicated region
      $region21: #{_lambda_.1} parent=11 // pred_check
        %p344 = pneg %p108
      $region22: #{_lambda_.1} parent=11 // pred_check_branch
        %346 = sbr.rel (%p344) target = $region24
      $region23: #{_lambda_.1} parent=11 // pred_region
        _
      $region24: #{_lambda_.1} parent=11 // pred_fallthru
        _
      // Predicated region
      $region25: #{_lambda_.1} parent=11 // pred_check
        %p347 = pneg %p129
      $region26: #{_lambda_.1} parent=11 // pred_check_branch
        %349 = sbr.rel (%p347) target = $region28
      $region27: #{_lambda_.1} parent=11 // pred_region
        _
      $region28: #{_lambda_.1} parent=11 // pred_fallthru
        _
      // Predicated region
      $region29: #{_lambda_.1} parent=11 // pred_check
        %p350 = pneg %p150
      $region30: #{_lambda_.1} parent=11 // pred_check_branch
        %352 = sbr.rel (%p350) target = $region32
      $region31: #{_lambda_.1} parent=11 // pred_region
        _
      $region32: #{_lambda_.1} parent=11 // pred_fallthru
        _
      // Predicated region
      $region33: #{_lambda_.1} parent=11 // pred_check
        %p353 = pneg %p171
      $region34: #{_lambda_.1} parent=11 // pred_check_branch
        %355 = sbr.rel (%p353) target = $region36
      $region35: #{_lambda_.1} parent=11 // pred_region
        _
      $region36: #{_lambda_.1} parent=11 // pred_fallthru
        _
      // Predicated region
      $region37: #{_lambda_.1} parent=11 // pred_check
        %p356 = pneg %p192
      $region38: #{_lambda_.1} parent=11 // pred_check_branch
        %358 = sbr.rel (%p356) target = $region40
      $region39: #{_lambda_.1} parent=11 // pred_region
        _
      $region40: #{_lambda_.1} parent=11 // pred_fallthru
        _
      // Predicated region
      $region41: #{_lambda_.1} parent=11 // pred_check
        %p359 = pneg %p213
      $region42: #{_lambda_.1} parent=11 // pred_check_branch
        %361 = sbr.rel (%p359) target = $region44
      $region43: #{_lambda_.1} parent=11 // pred_region
        _
      $region44: #{_lambda_.1} parent=11 // pred_fallthru
        _
      // Predicated region
      $region45: #{_lambda_.1} parent=11 // pred_check
        %p362 = pneg %p234
      $region46: #{_lambda_.1} parent=11 // pred_check_branch
        %364 = sbr.rel (%p362) target = $region48
      $region47: #{_lambda_.1} parent=11 // pred_region
        _
      $region48: #{_lambda_.1} parent=11 // pred_fallthru
        _
      // Predicated region
      $region49: #{_lambda_.1} parent=11 // pred_check
        %p365 = pneg %p255
      $region50: #{_lambda_.1} parent=11 // pred_check_branch
        %367 = sbr.rel (%p365) target = $region52
      $region51: #{_lambda_.1} parent=11 // pred_region
        _
      $region52: #{_lambda_.1} parent=11 // pred_fallthru
        _
      // Predicated region
      $region53: #{_lambda_.1} parent=11 // pred_check
        %p368 = pneg %p276
      $region54: #{_lambda_.1} parent=11 // pred_check_branch
        %370 = sbr.rel (%p368) target = $region56
      $region55: #{_lambda_.1} parent=11 // pred_region
        _
      $region56: #{_lambda_.1} parent=11 // pred_fallthru
        _
      // Predicated region
      $region57: #{_lambda_.1} parent=11 // pred_check
        %p371 = pneg %p297
      $region58: #{_lambda_.1} parent=11 // pred_check_branch
        %373 = sbr.rel (%p371) target = $region60
      $region59: #{_lambda_.1} parent=11 // pred_region
        _
      $region60: #{_lambda_.1} parent=11 // pred_fallthru
        _
    $region12: #{_lambda_.1} parent=5 // pred_fallthru
      _
    %p374 = scmp.lt.s32.totalorder %s19, 2
    // Predicated region
    $region61: #{_lambda_.1} parent=5 // pred_check
      %p375 = pneg %p374
    $region62: #{_lambda_.1} parent=5 // pred_check_branch
      %377 = sbr.rel (%p375) target = $region64
    $region63: #{_lambda_.1} parent=5 // pred_region
      // Predicated region
      $region65: #{_lambda_.1} parent=63 // pred_check
        %p378 = pneg %p39
      $region66: #{_lambda_.1} parent=63 // pred_check_branch
        %380 = sbr.rel (%p378) target = $region68
      $region67: #{_lambda_.1} parent=63 // pred_region
        %s381 = smul.u32 4, %s19
        %p382 = scmp.lt.s32.totalorder %s381, 7
        %s383 = scalar_select %p382, %s381, 7
        %s384 = smul.addr %s383, 32
        %s385 = smul.addr %s384, 8
        %s386 = scalar_lea.vmem %s0, %s385
        %s387 = smul.u32 4, %s19
      $region68: #{_lambda_.1} parent=63 // pred_fallthru
        _
    $region64: #{_lambda_.1} parent=5 // pred_fallthru
      _
    %p388 = scmp.le.s32.totalorder 1, %s19
    %p389 = scmp.lt.s32.totalorder %s19, 3
    %p390 = pnand %p388, %p389
    %p391 = pneg %p390
    // Predicated region
    $region69: #{_lambda_.1} parent=5 // pred_check
      _
    $region70: #{_lambda_.1} parent=5 // pred_check_branch
      %393 = sbr.rel (%p390) target = $region72
    $region71: #{_lambda_.1} parent=5 // pred_region
      %s394 = ssub.s32 %s19, 1
      %s395 = smul.u32 4, %s24
      %p396 = scmp.lt.s32.totalorder %s395, 7
      %s397 = scalar_select %p396, %s395, 7
      %s398 = smul.addr %s397, 32
      %s399 = smul.addr %s398, 8
      %s400 = scalar_lea.vmem %s0, %s399
      %p401 = pneg %p45
      %p402 = pneg %p42
      %p403 = pneg %p66
      %p404 = pneg %p63
      %p405 = pneg %p87
      %p406 = pneg %p84
      %p407 = pneg %p108
      %p408 = pneg %p105
      %p409 = pneg %p129
      %p410 = pneg %p126
      %p411 = pneg %p150
      %p412 = pneg %p147
      %p413 = pneg %p171
      %p414 = pneg %p168
      %p415 = pneg %p192
      %p416 = pneg %p189
      %p417 = pneg %p213
      %p418 = pneg %p210
      %p419 = pneg %p234
      %p420 = pneg %p231
      %p421 = pneg %p255
      %p422 = pneg %p252
      %p423 = pneg %p276
      %p424 = pneg %p273
      %p425 = pneg %p297
      %p426 = pneg %p294
      %p427 = pneg %p323
      %p428 = pneg %p320
      %s429 = smul.u32 4, %s24
      %p430 = scmp.lt.s32.totalorder %s429, 7
      %s431 = scalar_select %p430, %s429, 7
      %s432 = smul.addr %s431, 4
      %s433 = smul.addr %s432, 8
      %s434 = scalar_lea.vmem %s13, %s433
      %s435 = smul.u32 4, %s24
      %p436 = scmp.lt.s32.totalorder %s435, 7
      %s437 = scalar_select %p436, %s435, 7
      %s438 = smul.addr %s437, 32
      %s439 = smul.addr %s438, 8
      %s440 = scalar_lea.vmem %s0, %s439
      %s441 = smul.u32 4, %s24
      %s442 = smul.u32 4, %s24
      %p443 = scmp.lt.s32.totalorder %s442, 7
      %s444 = scalar_select %p443, %s442, 7
      %s445 = smul.addr %s444, 4
      %s446 = smul.addr %s445, 8
      %s447 = scalar_lea.vmem %s13, %s446
      %s448 = smul.u32 4, %s24
      %v449 = vld [vmem:[%s440] sm:$0xff]
      %v450 = vld [vmem:[%s440 + $0x8] sm:$0xff]
      %v451 = vld [vmem:[%s440 + $0x10] sm:$0xff]
      %v452 = vld [vmem:[%s440 + $0x18] sm:$0xff]
      %v453 = vld [vmem:[%s440 + $0x20] sm:$0xff]
      %v454 = vld [vmem:[%s440 + $0x28] sm:$0xff]
      %v455 = vld [vmem:[%s440 + $0x30] sm:$0xff]
      %v456 = vld [vmem:[%s440 + $0x38] sm:$0xff]
      %v457 = vld [vmem:[%s440 + $0x40] sm:$0xff]
      %v458 = vld [vmem:[%s440 + $0x48] sm:$0xff]
      %v459 = vld [vmem:[%s440 + $0x50] sm:$0xff]
      %v460 = vld [vmem:[%s440 + $0x58] sm:$0xff]
      %v461 = vld [vmem:[%s440 + $0x60] sm:$0xff]
      %v462 = vld [vmem:[%s440 + $0x68] sm:$0xff]
      %v463 = vld [vmem:[%s440 + $0x70] sm:$0xff]
      %v464 = vld [vmem:[%s440 + $0x78] sm:$0xff]
      %v465 = vld [vmem:[%s440 + $0x80] sm:$0xff]
      %v466 = vld [vmem:[%s440 + $0x88] sm:$0xff]
      %v467 = vld [vmem:[%s440 + $0x90] sm:$0xff]
      %v468 = vld [vmem:[%s440 + $0x98] sm:$0xff]
      %v469 = vld [vmem:[%s440 + $0xa0] sm:$0xff]
      %v470 = vld [vmem:[%s440 + $0xa8] sm:$0xff]
      %v471 = vld [vmem:[%s440 + $0xb0] sm:$0xff]
      %v472 = vld [vmem:[%s440 + $0xb8] sm:$0xff]
      %v473 = vld [vmem:[%s440 + $0xc0] sm:$0xff]
      %v474 = vld [vmem:[%s440 + $0xc8] sm:$0xff]
      %v475 = vld [vmem:[%s440 + $0xd0] sm:$0xff]
      %v476 = vld [vmem:[%s440 + $0xd8] sm:$0xff]
      %v477 = vld [vmem:[%s440 + $0xe0] sm:$0xff]
      %v478 = vld [vmem:[%s440 + $0xe8] sm:$0xff]
      %v479 = vld [vmem:[%s440 + $0xf0] sm:$0xff]
      %v480 = vld [vmem:[%s440 + $0xf8] sm:$0xff]
      %v481 = vld [vmem:[%s440 + $0x100] sm:$0xff]
      %v482 = vld [vmem:[%s440 + $0x108] sm:$0xff]
      %v483 = vld [vmem:[%s440 + $0x110] sm:$0xff]
      %v484 = vld [vmem:[%s440 + $0x118] sm:$0xff]
      %v485 = vld [vmem:[%s440 + $0x120] sm:$0xff]
      %v486 = vld [vmem:[%s440 + $0x128] sm:$0xff]
      %v487 = vld [vmem:[%s440 + $0x130] sm:$0xff]
      %v488 = vld [vmem:[%s440 + $0x138] sm:$0xff]
      %v489 = vld [vmem:[%s440 + $0x140] sm:$0xff]
      %v490 = vld [vmem:[%s440 + $0x148] sm:$0xff]
      %v491 = vld [vmem:[%s440 + $0x150] sm:$0xff]
      %v492 = vld [vmem:[%s440 + $0x158] sm:$0xff]
      %v493 = vld [vmem:[%s440 + $0x160] sm:$0xff]
      %v494 = vld [vmem:[%s440 + $0x168] sm:$0xff]
      %v495 = vld [vmem:[%s440 + $0x170] sm:$0xff]
      %v496 = vld [vmem:[%s440 + $0x178] sm:$0xff]
      %v497 = vld [vmem:[%s440 + $0x180] sm:$0xff]
      %v498 = vld [vmem:[%s440 + $0x188] sm:$0xff]
      %v499 = vld [vmem:[%s440 + $0x190] sm:$0xff]
      %v500 = vld [vmem:[%s440 + $0x198] sm:$0xff]
      %v501 = vld [vmem:[%s440 + $0x1a0] sm:$0xff]
      %v502 = vld [vmem:[%s440 + $0x1a8] sm:$0xff]
      %v503 = vld [vmem:[%s440 + $0x1b0] sm:$0xff]
      %v504 = vld [vmem:[%s440 + $0x1b8] sm:$0xff]
      %v505 = vld [vmem:[%s440 + $0x1c0] sm:$0xff]
      %v506 = vld [vmem:[%s440 + $0x1c8] sm:$0xff]
      %v507 = vld [vmem:[%s440 + $0x1d0] sm:$0xff]
      %v508 = vld [vmem:[%s440 + $0x1d8] sm:$0xff]
      %v509 = vld [vmem:[%s440 + $0x1e0] sm:$0xff]
      %v510 = vld [vmem:[%s440 + $0x1e8] sm:$0xff]
      %v511 = vld [vmem:[%s440 + $0x1f0] sm:$0xff]
      %v512 = vld [vmem:[%s440 + $0x1f8] sm:$0xff]
      %v513 = vld [vmem:[%s440 + $0x200] sm:$0xff]
      %v514 = vld [vmem:[%s440 + $0x208] sm:$0xff]
      %v515 = vld [vmem:[%s440 + $0x210] sm:$0xff]
      %v516 = vld [vmem:[%s440 + $0x218] sm:$0xff]
      %v517 = vld [vmem:[%s440 + $0x220] sm:$0xff]
      %v518 = vld [vmem:[%s440 + $0x228] sm:$0xff]
      %v519 = vld [vmem:[%s440 + $0x230] sm:$0xff]
      %v520 = vld [vmem:[%s440 + $0x238] sm:$0xff]
      %v521 = vld [vmem:[%s440 + $0x240] sm:$0xff]
      %v522 = vld [vmem:[%s440 + $0x248] sm:$0xff]
      %v523 = vld [vmem:[%s440 + $0x250] sm:$0xff]
      %v524 = vld [vmem:[%s440 + $0x258] sm:$0xff]
      %v525 = vld [vmem:[%s440 + $0x260] sm:$0xff]
      %v526 = vld [vmem:[%s440 + $0x268] sm:$0xff]
      %v527 = vld [vmem:[%s440 + $0x270] sm:$0xff]
      %v528 = vld [vmem:[%s440 + $0x278] sm:$0xff]
      %v529 = vld [vmem:[%s440 + $0x280] sm:$0xff]
      %v530 = vld [vmem:[%s440 + $0x288] sm:$0xff]
      %v531 = vld [vmem:[%s440 + $0x290] sm:$0xff]
      %v532 = vld [vmem:[%s440 + $0x298] sm:$0xff]
      %v533 = vld [vmem:[%s440 + $0x2a0] sm:$0xff]
      %v534 = vld [vmem:[%s440 + $0x2a8] sm:$0xff]
      %v535 = vld [vmem:[%s440 + $0x2b0] sm:$0xff]
      %v536 = vld [vmem:[%s440 + $0x2b8] sm:$0xff]
      %v537 = vld [vmem:[%s440 + $0x2c0] sm:$0xff]
      %v538 = vld [vmem:[%s440 + $0x2c8] sm:$0xff]
      %v539 = vld [vmem:[%s440 + $0x2d0] sm:$0xff]
      %v540 = vld [vmem:[%s440 + $0x2d8] sm:$0xff]
      %v541 = vld [vmem:[%s440 + $0x2e0] sm:$0xff]
      %v542 = vld [vmem:[%s440 + $0x2e8] sm:$0xff]
      %v543 = vld [vmem:[%s440 + $0x2f0] sm:$0xff]
      %v544 = vld [vmem:[%s440 + $0x2f8] sm:$0xff]
      %v545 = vld [vmem:[%s440 + $0x300] sm:$0xff]
      %v546 = vld [vmem:[%s440 + $0x308] sm:$0xff]
      %v547 = vld [vmem:[%s440 + $0x310] sm:$0xff]
      %v548 = vld [vmem:[%s440 + $0x318] sm:$0xff]
      %v549 = vld [vmem:[%s440 + $0x320] sm:$0xff]
      %v550 = vld [vmem:[%s440 + $0x328] sm:$0xff]
      %v551 = vld [vmem:[%s440 + $0x330] sm:$0xff]
      %v552 = vld [vmem:[%s440 + $0x338] sm:$0xff]
      %v553 = vld [vmem:[%s440 + $0x340] sm:$0xff]
      %v554 = vld [vmem:[%s440 + $0x348] sm:$0xff]
      %v555 = vld [vmem:[%s440 + $0x350] sm:$0xff]
      %v556 = vld [vmem:[%s440 + $0x358] sm:$0xff]
      %v557 = vld [vmem:[%s440 + $0x360] sm:$0xff]
      %v558 = vld [vmem:[%s440 + $0x368] sm:$0xff]
      %v559 = vld [vmem:[%s440 + $0x370] sm:$0xff]
      %v560 = vld [vmem:[%s440 + $0x378] sm:$0xff]
      %v561 = vld [vmem:[%s440 + $0x380] sm:$0xff]
      %v562 = vld [vmem:[%s440 + $0x388] sm:$0xff]
      %v563 = vld [vmem:[%s440 + $0x390] sm:$0xff]
      %v564 = vld [vmem:[%s440 + $0x398] sm:$0xff]
      %v565 = vld [vmem:[%s440 + $0x3a0] sm:$0xff]
      %v566 = vld [vmem:[%s440 + $0x3a8] sm:$0xff]
      %v567 = vld [vmem:[%s440 + $0x3b0] sm:$0xff]
      %v568 = vld [vmem:[%s440 + $0x3b8] sm:$0xff]
      %v569 = vld [vmem:[%s440 + $0x3c0] sm:$0xff]
      %v570 = vld [vmem:[%s440 + $0x3c8] sm:$0xff]
      %v571 = vld [vmem:[%s440 + $0x3d0] sm:$0xff]
      %v572 = vld [vmem:[%s440 + $0x3d8] sm:$0xff]
      %v573 = vld [vmem:[%s440 + $0x3e0] sm:$0xff]
      %v574 = vld [vmem:[%s440 + $0x3e8] sm:$0xff]
      %v575 = vld [vmem:[%s440 + $0x3f0] sm:$0xff]
      %v576 = vld [vmem:[%s440 + $0x3f8] sm:$0xff]
      %v577 = vld [vmem:[%s1] sm:$0xff]
      %v578 = vld [vmem:[%s1 + $0x8] sm:$0xff]
      %v579 = vld [vmem:[%s1 + $0x10] sm:$0xff]
      %v580 = vld [vmem:[%s1 + $0x18] sm:$0xff]
      %v581 = vld [vmem:[%s1 + $0x20] sm:$0xff]
      %v582 = vld [vmem:[%s1 + $0x28] sm:$0xff]
      %v583 = vld [vmem:[%s1 + $0x30] sm:$0xff]
      %v584 = vld [vmem:[%s1 + $0x38] sm:$0xff]
      %v585 = vld [vmem:[%s1 + $0x40] sm:$0xff]
      %v586 = vld [vmem:[%s1 + $0x48] sm:$0xff]
      %v587 = vld [vmem:[%s1 + $0x50] sm:$0xff]
      %v588 = vld [vmem:[%s1 + $0x58] sm:$0xff]
      %v589 = vld [vmem:[%s1 + $0x60] sm:$0xff]
      %v590 = vld [vmem:[%s1 + $0x68] sm:$0xff]
      %v591 = vld [vmem:[%s1 + $0x70] sm:$0xff]
      %v592 = vld [vmem:[%s1 + $0x78] sm:$0xff]
      %v593 = vld [vmem:[%s2] sm:$0x1]
      %v595 = vlaneseq
      %v596 = vshrl.u32 %v595, 7
      %v597 = vsub.s32 0, %v596
      %v598 = vrot.slane %v593, %v597
      %600 = vmatprep.subr.mxu0 0.0
      %601 = vmatpush1.msra.mxu0 %v577
      %602 = vmatprep.subr.mxu0 0.0
      %603 = vmatpush1.msra.mxu0 %v578
      %604 = vmatprep.subr.mxu0 0.0
      %605 = vmatpush1.msra.mxu0 %v579
      %606 = vmatprep.subr.mxu0 0.0
      %607 = vmatpush1.msra.mxu0 %v580
      %608 = vmatprep.subr.mxu0 0.0
      %609 = vmatpush1.msra.mxu0 %v581
      %610 = vmatprep.subr.mxu0 0.0
      %611 = vmatpush1.msra.mxu0 %v582
      %612 = vmatprep.subr.mxu0 0.0
      %613 = vmatpush1.msra.mxu0 %v583
      %614 = vmatprep.subr.mxu0 0.0
      %615 = vmatpush1.msra.mxu0 %v584
      %616 = vmatprep.subr.mxu0 0.0
      %617 = vmatpush1.msra.mxu0 %v585
      %618 = vmatprep.subr.mxu0 0.0
      %619 = vmatpush1.msra.mxu0 %v586
      %620 = vmatprep.subr.mxu0 0.0
      %621 = vmatpush1.msra.mxu0 %v587
      %622 = vmatprep.subr.mxu0 0.0
      %623 = vmatpush1.msra.mxu0 %v588
      %624 = vmatprep.subr.mxu0 0.0
      %625 = vmatpush1.msra.mxu0 %v589
      %626 = vmatprep.subr.mxu0 0.0
      %627 = vmatpush1.msra.mxu0 %v590
      %628 = vmatprep.subr.mxu0 0.0
      %629 = vmatpush1.msra.mxu0 %v591
      %630 = vmatprep.subr.mxu0 0.0
      %631 = vmatpush1.msra.mxu0 %v592
      %632 = vmatprep.subr.mxu0 0.0
      %633 = vmatpush1.msra.mxu0 0.0
      %634 = vmatprep.subr.mxu0 0.0
      %635 = vmatpush1.msra.mxu0 0.0
      %636 = vmatprep.subr.mxu0 0.0
      %637 = vmatpush1.msra.mxu0 0.0
      %638 = vmatprep.subr.mxu0 0.0
      %639 = vmatpush1.msra.mxu0 0.0
      %640 = vmatprep.subr.mxu0 0.0
      %641 = vmatpush1.msra.mxu0 0.0
      %642 = vmatprep.subr.mxu0 0.0
      %643 = vmatpush1.msra.mxu0 0.0
      %644 = vmatprep.subr.mxu0 0.0
      %645 = vmatpush1.msra.mxu0 0.0
      %646 = vmatprep.subr.mxu0 0.0
      %647 = vmatpush1.msra.mxu0 0.0
      %648 = vmatprep.subr.mxu0 0.0
      %649 = vmatpush1.msra.mxu0 0.0
      %650 = vmatprep.subr.mxu0 0.0
      %651 = vmatpush1.msra.mxu0 0.0
      %652 = vmatprep.subr.mxu0 0.0
      %653 = vmatpush1.msra.mxu0 0.0
      %654 = vmatprep.subr.mxu0 0.0
      %655 = vmatpush1.msra.mxu0 0.0
      %656 = vmatprep.subr.mxu0 0.0
      %657 = vmatpush1.msra.mxu0 0.0
      %658 = vmatprep.subr.mxu0 0.0
      %659 = vmatpush1.msra.mxu0 0.0
      %660 = vmatprep.subr.mxu0 0.0
      %661 = vmatpush1.msra.mxu0 0.0
      %662 = vmatprep.subr.mxu0 0.0
      %663 = vmatpush1.msra.mxu0 0.0
      %664 = vmatprep.mubr.f32.mxu0 0.0
      %665 = vmatmul.mubr.f32.gmra.mrb[0].mxu0 %v449
      %v666 = vpop.f32.mrb[0].mxu0
      %v667 = vadd.f32 %v598, %v666
      %v668 = vpop.f32.mrb[0].mxu0
      %669 = vmatprep.mubr.f32.mxu0 0.0
      %670 = vmatmul.mubr.f32.gmra.mrb[0].mxu0 %v450
      %v671 = vpop.f32.mrb[0].mxu0
      %v672 = vadd.f32 %v598, %v671
      %v673 = vpop.f32.mrb[0].mxu0
      %674 = vmatprep.mubr.f32.mxu0 0.0
      %675 = vmatmul.mubr.f32.gmra.mrb[0].mxu0 %v451
      %v676 = vpop.f32.mrb[0].mxu0
      %v677 = vadd.f32 %v598, %v676
      %v678 = vpop.f32.mrb[0].mxu0
      %679 = vmatprep.mubr.f32.mxu0 0.0
      %680 = vmatmul.mubr.f32.gmra.mrb[0].mxu0 %v452
      %v681 = vpop.f32.mrb[0].mxu0
      %v682 = vadd.f32 %v598, %v681
      %v683 = vpop.f32.mrb[0].mxu0
      %684 = vmatprep.mubr.f32.mxu0 0.0
      %685 = vmatmul.mubr.f32.gmra.mrb[0].mxu0 %v453
      %v686 = vpop.f32.mrb[0].mxu0
      %v687 = vadd.f32 %v598, %v686
      %v688 = vpop.f32.mrb[0].mxu0
      %689 = vmatprep.mubr.f32.mxu0 0.0
      %690 = vmatmul.mubr.f32.gmra.mrb[0].mxu0 %v454
      %v691 = vpop.f32.mrb[0].mxu0
      %v692 = vadd.f32 %v598, %v691
      %v693 = vpop.f32.mrb[0].mxu0
      %694 = vmatprep.mubr.f32.mxu0 0.0
      %695 = vmatmul.mubr.f32.gmra.mrb[0].mxu0 %v455
      %v696 = vpop.f32.mrb[0].mxu0
      %v697 = vadd.f32 %v598, %v696
      %v698 = vpop.f32.mrb[0].mxu0
      %699 = vmatprep.mubr.f32.mxu0 0.0
      %700 = vmatmul.mubr.f32.gmra.mrb[0].mxu0 %v456
      %v701 = vpop.f32.mrb[0].mxu0
      %v702 = vadd.f32 %v598, %v701
      %v703 = vpop.f32.mrb[0].mxu0
      %704 = vmatprep.mubr.f32.mxu0 0.0
      %705 = vmatmul.mubr.f32.gmra.mrb[0].mxu0 %v457
      %v706 = vpop.f32.mrb[0].mxu0
      %v707 = vadd.f32 %v598, %v706
      %v708 = vpop.f32.mrb[0].mxu0
      %709 = vmatprep.mubr.f32.mxu0 0.0
      %710 = vmatmul.mubr.f32.gmra.mrb[0].mxu0 %v458
      %v711 = vpop.f32.mrb[0].mxu0
      %v712 = vadd.f32 %v598, %v711
      %v713 = vpop.f32.mrb[0].mxu0
      %714 = vmatprep.mubr.f32.mxu0 0.0
      %715 = vmatmul.mubr.f32.gmra.mrb[0].mxu0 %v459
      %v716 = vpop.f32.mrb[0].mxu0
      %v717 = vadd.f32 %v598, %v716
      %v718 = vpop.f32.mrb[0].mxu0
      %719 = vmatprep.mubr.f32.mxu0 0.0
      %720 = vmatmul.mubr.f32.gmra.mrb[0].mxu0 %v460
      %v721 = vpop.f32.mrb[0].mxu0
      %v722 = vadd.f32 %v598, %v721
      %v723 = vpop.f32.mrb[0].mxu0
      %724 = vmatprep.mubr.f32.mxu0 0.0
      %725 = vmatmul.mubr.f32.gmra.mrb[0].mxu0 %v461
      %v726 = vpop.f32.mrb[0].mxu0
      %v727 = vadd.f32 %v598, %v726
      %v728 = vpop.f32.mrb[0].mxu0
      %729 = vmatprep.mubr.f32.mxu0 0.0
      %730 = vmatmul.mubr.f32.gmra.mrb[0].mxu0 %v462
      %v731 = vpop.f32.mrb[0].mxu0
      %v732 = vadd.f32 %v598, %v731
      %v733 = vpop.f32.mrb[0].mxu0
      %734 = vmatprep.mubr.f32.mxu0 0.0
      %735 = vmatmul.mubr.f32.gmra.mrb[0].mxu0 %v463
      %v736 = vpop.f32.mrb[0].mxu0
      %v737 = vadd.f32 %v598, %v736
      %v738 = vpop.f32.mrb[0].mxu0
      %739 = vmatprep.mubr.f32.mxu0 0.0
      %740 = vmatmul.mubr.f32.gmra.mrb[0].mxu0 %v464
      %v741 = vpop.f32.mrb[0].mxu0
      %v742 = vadd.f32 %v598, %v741
      %v743 = vpop.f32.mrb[0].mxu0
      %744 = vmatprep.mubr.f32.mxu0 0.0
      %745 = vmatmul.mubr.f32.gmra.mrb[0].mxu0 %v465
      %v746 = vpop.f32.mrb[0].mxu0
      %v747 = vadd.f32 %v598, %v746
      %v748 = vpop.f32.mrb[0].mxu0
      %749 = vmatprep.mubr.f32.mxu0 0.0
      %750 = vmatmul.mubr.f32.gmra.mrb[0].mxu0 %v466
      %v751 = vpop.f32.mrb[0].mxu0
      %v752 = vadd.f32 %v598, %v751
      %v753 = vpop.f32.mrb[0].mxu0
      %754 = vmatprep.mubr.f32.mxu0 0.0
      %755 = vmatmul.mubr.f32.gmra.mrb[0].mxu0 %v467
      %v756 = vpop.f32.mrb[0].mxu0
      %v757 = vadd.f32 %v598, %v756
      %v758 = vpop.f32.mrb[0].mxu0
      %759 = vmatprep.mubr.f32.mxu0 0.0
      %760 = vmatmul.mubr.f32.gmra.mrb[0].mxu0 %v468
      %v761 = vpop.f32.mrb[0].mxu0
      %v762 = vadd.f32 %v598, %v761
      %v763 = vpop.f32.mrb[0].mxu0
      %764 = vmatprep.mubr.f32.mxu0 0.0
      %765 = vmatmul.mubr.f32.gmra.mrb[0].mxu0 %v469
      %v766 = vpop.f32.mrb[0].mxu0
      %v767 = vadd.f32 %v598, %v766
      %v768 = vpop.f32.mrb[0].mxu0
      %769 = vmatprep.mubr.f32.mxu0 0.0
      %770 = vmatmul.mubr.f32.gmra.mrb[0].mxu0 %v470
      %v771 = vpop.f32.mrb[0].mxu0
      %v772 = vadd.f32 %v598, %v771
      %v773 = vpop.f32.mrb[0].mxu0
      %774 = vmatprep.mubr.f32.mxu0 0.0
      %775 = vmatmul.mubr.f32.gmra.mrb[0].mxu0 %v471
      %v776 = vpop.f32.mrb[0].mxu0
      %v777 = vadd.f32 %v598, %v776
      %v778 = vpop.f32.mrb[0].mxu0
      %779 = vmatprep.mubr.f32.mxu0 0.0
      %780 = vmatmul.mubr.f32.gmra.mrb[0].mxu0 %v472
      %v781 = vpop.f32.mrb[0].mxu0
      %v782 = vadd.f32 %v598, %v781
      %v783 = vpop.f32.mrb[0].mxu0
      %784 = vmatprep.mubr.f32.mxu0 0.0
      %785 = vmatmul.mubr.f32.gmra.mrb[0].mxu0 %v473
      %v786 = vpop.f32.mrb[0].mxu0
      %v787 = vadd.f32 %v598, %v786
      %v788 = vpop.f32.mrb[0].mxu0
      %789 = vmatprep.mubr.f32.mxu0 0.0
      %790 = vmatmul.mubr.f32.gmra.mrb[0].mxu0 %v474
      %v791 = vpop.f32.mrb[0].mxu0
      %v792 = vadd.f32 %v598, %v791
      %v793 = vpop.f32.mrb[0].mxu0
      %794 = vmatprep.mubr.f32.mxu0 0.0
      %795 = vmatmul.mubr.f32.gmra.mrb[0].mxu0 %v475
      %v796 = vpop.f32.mrb[0].mxu0
      %v797 = vadd.f32 %v598, %v796
      %v798 = vpop.f32.mrb[0].mxu0
      %799 = vmatprep.mubr.f32.mxu0 0.0
      %800 = vmatmul.mubr.f32.gmra.mrb[0].mxu0 %v476
      %v801 = vpop.f32.mrb[0].mxu0
      %v802 = vadd.f32 %v598, %v801
      %v803 = vpop.f32.mrb[0].mxu0
      %804 = vmatprep.mubr.f32.mxu0 0.0
      %805 = vmatmul.mubr.f32.gmra.mrb[0].mxu0 %v477
      %v806 = vpop.f32.mrb[0].mxu0
      %v807 = vadd.f32 %v598, %v806
      %v808 = vpop.f32.mrb[0].mxu0
      %809 = vmatprep.mubr.f32.mxu0 0.0
      %810 = vmatmul.mubr.f32.gmra.mrb[0].mxu0 %v478
      %v811 = vpop.f32.mrb[0].mxu0
      %v812 = vadd.f32 %v598, %v811
      %v813 = vpop.f32.mrb[0].mxu0
      %814 = vmatprep.mubr.f32.mxu0 0.0
      %815 = vmatmul.mubr.f32.gmra.mrb[0].mxu0 %v479
      %v816 = vpop.f32.mrb[0].mxu0
      %v817 = vadd.f32 %v598, %v816
      %v818 = vpop.f32.mrb[0].mxu0
      %819 = vmatprep.mubr.f32.mxu0 0.0
      %820 = vmatmul.mubr.f32.gmra.mrb[0].mxu0 %v480
      %v821 = vpop.f32.mrb[0].mxu0
      %v822 = vadd.f32 %v598, %v821
      %v823 = vpop.f32.mrb[0].mxu0
      %824 = vmatprep.mubr.f32.mxu0 0.0
      %825 = vmatmul.mubr.f32.gmra.mrb[0].mxu0 %v481
      %v826 = vpop.f32.mrb[0].mxu0
      %v827 = vadd.f32 %v598, %v826
      %v828 = vpop.f32.mrb[0].mxu0
      %829 = vmatprep.mubr.f32.mxu0 0.0
      %830 = vmatmul.mubr.f32.gmra.mrb[0].mxu0 %v482
      %v831 = vpop.f32.mrb[0].mxu0
      %v832 = vadd.f32 %v598, %v831
      %v833 = vpop.f32.mrb[0].mxu0
      %834 = vmatprep.mubr.f32.mxu0 0.0
      %835 = vmatmul.mubr.f32.gmra.mrb[0].mxu0 %v483
      %v836 = vpop.f32.mrb[0].mxu0
      %v837 = vadd.f32 %v598, %v836
      %v838 = vpop.f32.mrb[0].mxu0
      %839 = vmatprep.mubr.f32.mxu0 0.0
      %840 = vmatmul.mubr.f32.gmra.mrb[0].mxu0 %v484
      %v841 = vpop.f32.mrb[0].mxu0
      %v842 = vadd.f32 %v598, %v841
      %v843 = vpop.f32.mrb[0].mxu0
      %844 = vmatprep.mubr.f32.mxu0 0.0
      %845 = vmatmul.mubr.f32.gmra.mrb[0].mxu0 %v485
      %v846 = vpop.f32.mrb[0].mxu0
      %v847 = vadd.f32 %v598, %v846
      %v848 = vpop.f32.mrb[0].mxu0
      %849 = vmatprep.mubr.f32.mxu0 0.0
      %850 = vmatmul.mubr.f32.gmra.mrb[0].mxu0 %v486
      %v851 = vpop.f32.mrb[0].mxu0
      %v852 = vadd.f32 %v598, %v851
      %v853 = vpop.f32.mrb[0].mxu0
      %854 = vmatprep.mubr.f32.mxu0 0.0
      %855 = vmatmul.mubr.f32.gmra.mrb[0].mxu0 %v487
      %v856 = vpop.f32.mrb[0].mxu0
      %v857 = vadd.f32 %v598, %v856
      %v858 = vpop.f32.mrb[0].mxu0
      %859 = vmatprep.mubr.f32.mxu0 0.0
      %860 = vmatmul.mubr.f32.gmra.mrb[0].mxu0 %v488
      %v861 = vpop.f32.mrb[0].mxu0
      %v862 = vadd.f32 %v598, %v861
      %v863 = vpop.f32.mrb[0].mxu0
      %864 = vmatprep.mubr.f32.mxu0 0.0
      %865 = vmatmul.mubr.f32.gmra.mrb[0].mxu0 %v489
      %v866 = vpop.f32.mrb[0].mxu0
      %v867 = vadd.f32 %v598, %v866
      %v868 = vpop.f32.mrb[0].mxu0
      %869 = vmatprep.mubr.f32.mxu0 0.0
      %870 = vmatmul.mubr.f32.gmra.mrb[0].mxu0 %v490
      %v871 = vpop.f32.mrb[0].mxu0
      %v872 = vadd.f32 %v598, %v871
      %v873 = vpop.f32.mrb[0].mxu0
      %874 = vmatprep.mubr.f32.mxu0 0.0
      %875 = vmatmul.mubr.f32.gmra.mrb[0].mxu0 %v491
      %v876 = vpop.f32.mrb[0].mxu0
      %v877 = vadd.f32 %v598, %v876
      %v878 = vpop.f32.mrb[0].mxu0
      %879 = vmatprep.mubr.f32.mxu0 0.0
      %880 = vmatmul.mubr.f32.gmra.mrb[0].mxu0 %v492
      %v881 = vpop.f32.mrb[0].mxu0
      %v882 = vadd.f32 %v598, %v881
      %v883 = vpop.f32.mrb[0].mxu0
      %884 = vmatprep.mubr.f32.mxu0 0.0
      %885 = vmatmul.mubr.f32.gmra.mrb[0].mxu0 %v493
      %v886 = vpop.f32.mrb[0].mxu0
      %v887 = vadd.f32 %v598, %v886
      %v888 = vpop.f32.mrb[0].mxu0
      %889 = vmatprep.mubr.f32.mxu0 0.0
      %890 = vmatmul.mubr.f32.gmra.mrb[0].mxu0 %v494
      %v891 = vpop.f32.mrb[0].mxu0
      %v892 = vadd.f32 %v598, %v891
      %v893 = vpop.f32.mrb[0].mxu0
      %894 = vmatprep.mubr.f32.mxu0 0.0
      %895 = vmatmul.mubr.f32.gmra.mrb[0].mxu0 %v495
      %v896 = vpop.f32.mrb[0].mxu0
      %v897 = vadd.f32 %v598, %v896
      %v898 = vpop.f32.mrb[0].mxu0
      %899 = vmatprep.mubr.f32.mxu0 0.0
      %900 = vmatmul.mubr.f32.gmra.mrb[0].mxu0 %v496
      %v901 = vpop.f32.mrb[0].mxu0
      %v902 = vadd.f32 %v598, %v901
      %v903 = vpop.f32.mrb[0].mxu0
      %904 = vmatprep.mubr.f32.mxu0 0.0
      %905 = vmatmul.mubr.f32.gmra.mrb[0].mxu0 %v497
      %v906 = vpop.f32.mrb[0].mxu0
      %v907 = vadd.f32 %v598, %v906
      %v908 = vpop.f32.mrb[0].mxu0
      %909 = vmatprep.mubr.f32.mxu0 0.0
      %910 = vmatmul.mubr.f32.gmra.mrb[0].mxu0 %v498
      %v911 = vpop.f32.mrb[0].mxu0
      %v912 = vadd.f32 %v598, %v911
      %v913 = vpop.f32.mrb[0].mxu0
      %914 = vmatprep.mubr.f32.mxu0 0.0
      %915 = vmatmul.mubr.f32.gmra.mrb[0].mxu0 %v499
      %v916 = vpop.f32.mrb[0].mxu0
      %v917 = vadd.f32 %v598, %v916
      %v918 = vpop.f32.mrb[0].mxu0
      %919 = vmatprep.mubr.f32.mxu0 0.0
      %920 = vmatmul.mubr.f32.gmra.mrb[0].mxu0 %v500
      %v921 = vpop.f32.mrb[0].mxu0
      %v922 = vadd.f32 %v598, %v921
      %v923 = vpop.f32.mrb[0].mxu0
      %924 = vmatprep.mubr.f32.mxu0 0.0
      %925 = vmatmul.mubr.f32.gmra.mrb[0].mxu0 %v501
      %v926 = vpop.f32.mrb[0].mxu0
      %v927 = vadd.f32 %v598, %v926
      %v928 = vpop.f32.mrb[0].mxu0
      %929 = vmatprep.mubr.f32.mxu0 0.0
      %930 = vmatmul.mubr.f32.gmra.mrb[0].mxu0 %v502
      %v931 = vpop.f32.mrb[0].mxu0
      %v932 = vadd.f32 %v598, %v931
      %v933 = vpop.f32.mrb[0].mxu0
      %934 = vmatprep.mubr.f32.mxu0 0.0
      %935 = vmatmul.mubr.f32.gmra.mrb[0].mxu0 %v503
      %v936 = vpop.f32.mrb[0].mxu0
      %v937 = vadd.f32 %v598, %v936
      %v938 = vpop.f32.mrb[0].mxu0
      %939 = vmatprep.mubr.f32.mxu0 0.0
      %940 = vmatmul.mubr.f32.gmra.mrb[0].mxu0 %v504
      %v941 = vpop.f32.mrb[0].mxu0
      %v942 = vadd.f32 %v598, %v941
      %v943 = vpop.f32.mrb[0].mxu0
      %944 = vmatprep.mubr.f32.mxu0 0.0
      %945 = vmatmul.mubr.f32.gmra.mrb[0].mxu0 %v505
      %v946 = vpop.f32.mrb[0].mxu0
      %v947 = vadd.f32 %v598, %v946
      %v948 = vpop.f32.mrb[0].mxu0
      %949 = vmatprep.mubr.f32.mxu0 0.0
      %950 = vmatmul.mubr.f32.gmra.mrb[0].mxu0 %v506
      %v951 = vpop.f32.mrb[0].mxu0
      %v952 = vadd.f32 %v598, %v951
      %v953 = vpop.f32.mrb[0].mxu0
      %954 = vmatprep.mubr.f32.mxu0 0.0
      %955 = vmatmul.mubr.f32.gmra.mrb[0].mxu0 %v507
      %v956 = vpop.f32.mrb[0].mxu0
      %v957 = vadd.f32 %v598, %v956
      %v958 = vpop.f32.mrb[0].mxu0
      %959 = vmatprep.mubr.f32.mxu0 0.0
      %960 = vmatmul.mubr.f32.gmra.mrb[0].mxu0 %v508
      %v961 = vpop.f32.mrb[0].mxu0
      %v962 = vadd.f32 %v598, %v961
      %v963 = vpop.f32.mrb[0].mxu0
      %964 = vmatprep.mubr.f32.mxu0 0.0
      %965 = vmatmul.mubr.f32.gmra.mrb[0].mxu0 %v509
      %v966 = vpop.f32.mrb[0].mxu0
      %v967 = vadd.f32 %v598, %v966
      %v968 = vpop.f32.mrb[0].mxu0
      %969 = vmatprep.mubr.f32.mxu0 0.0
      %970 = vmatmul.mubr.f32.gmra.mrb[0].mxu0 %v510
      %v971 = vpop.f32.mrb[0].mxu0
      %v972 = vadd.f32 %v598, %v971
      %v973 = vpop.f32.mrb[0].mxu0
      %974 = vmatprep.mubr.f32.mxu0 0.0
      %975 = vmatmul.mubr.f32.gmra.mrb[0].mxu0 %v511
      %v976 = vpop.f32.mrb[0].mxu0
      %v977 = vadd.f32 %v598, %v976
      %v978 = vpop.f32.mrb[0].mxu0
      %979 = vmatprep.mubr.f32.mxu0 0.0
      %980 = vmatmul.mubr.f32.gmra.mrb[0].mxu0 %v512
      %v981 = vpop.f32.mrb[0].mxu0
      %v982 = vadd.f32 %v598, %v981
      %v983 = vpop.f32.mrb[0].mxu0
      %984 = vmatprep.mubr.f32.mxu0 0.0
      %985 = vmatmul.mubr.f32.gmra.mrb[0].mxu0 %v513
      %v986 = vpop.f32.mrb[0].mxu0
      %v987 = vadd.f32 %v598, %v986
      %v988 = vpop.f32.mrb[0].mxu0
      %989 = vmatprep.mubr.f32.mxu0 0.0
      %990 = vmatmul.mubr.f32.gmra.mrb[0].mxu0 %v514
      %v991 = vpop.f32.mrb[0].mxu0
      %v992 = vadd.f32 %v598, %v991
      %v993 = vpop.f32.mrb[0].mxu0
      %994 = vmatprep.mubr.f32.mxu0 0.0
      %995 = vmatmul.mubr.f32.gmra.mrb[0].mxu0 %v515
      %v996 = vpop.f32.mrb[0].mxu0
      %v997 = vadd.f32 %v598, %v996
      %v998 = vpop.f32.mrb[0].mxu0
      %999 = vmatprep.mubr.f32.mxu0 0.0
      %1000 = vmatmul.mubr.f32.gmra.mrb[0].mxu0 %v516
      %v1001 = vpop.f32.mrb[0].mxu0
      %v1002 = vadd.f32 %v598, %v1001
      %v1003 = vpop.f32.mrb[0].mxu0
      %1004 = vmatprep.mubr.f32.mxu0 0.0
      %1005 = vmatmul.mubr.f32.gmra.mrb[0].mxu0 %v517
      %v1006 = vpop.f32.mrb[0].mxu0
      %v1007 = vadd.f32 %v598, %v1006
      %v1008 = vpop.f32.mrb[0].mxu0
      %1009 = vmatprep.mubr.f32.mxu0 0.0
      %1010 = vmatmul.mubr.f32.gmra.mrb[0].mxu0 %v518
      %v1011 = vpop.f32.mrb[0].mxu0
      %v1012 = vadd.f32 %v598, %v1011
      %v1013 = vpop.f32.mrb[0].mxu0
      %1014 = vmatprep.mubr.f32.mxu0 0.0
      %1015 = vmatmul.mubr.f32.gmra.mrb[0].mxu0 %v519
      %v1016 = vpop.f32.mrb[0].mxu0
      %v1017 = vadd.f32 %v598, %v1016
      %v1018 = vpop.f32.mrb[0].mxu0
      %1019 = vmatprep.mubr.f32.mxu0 0.0
      %1020 = vmatmul.mubr.f32.gmra.mrb[0].mxu0 %v520
      %v1021 = vpop.f32.mrb[0].mxu0
      %v1022 = vadd.f32 %v598, %v1021
      %v1023 = vpop.f32.mrb[0].mxu0
      %1024 = vmatprep.mubr.f32.mxu0 0.0
      %1025 = vmatmul.mubr.f32.gmra.mrb[0].mxu0 %v521
      %v1026 = vpop.f32.mrb[0].mxu0
      %v1027 = vadd.f32 %v598, %v1026
      %v1028 = vpop.f32.mrb[0].mxu0
      %1029 = vmatprep.mubr.f32.mxu0 0.0
      %1030 = vmatmul.mubr.f32.gmra.mrb[0].mxu0 %v522
      %v1031 = vpop.f32.mrb[0].mxu0
      %v1032 = vadd.f32 %v598, %v1031
      %v1033 = vpop.f32.mrb[0].mxu0
      %1034 = vmatprep.mubr.f32.mxu0 0.0
      %1035 = vmatmul.mubr.f32.gmra.mrb[0].mxu0 %v523
      %v1036 = vpop.f32.mrb[0].mxu0
      %v1037 = vadd.f32 %v598, %v1036
      %v1038 = vpop.f32.mrb[0].mxu0
      %1039 = vmatprep.mubr.f32.mxu0 0.0
      %1040 = vmatmul.mubr.f32.gmra.mrb[0].mxu0 %v524
      %v1041 = vpop.f32.mrb[0].mxu0
      %v1042 = vadd.f32 %v598, %v1041
      %v1043 = vpop.f32.mrb[0].mxu0
      %1044 = vmatprep.mubr.f32.mxu0 0.0
      %1045 = vmatmul.mubr.f32.gmra.mrb[0].mxu0 %v525
      %v1046 = vpop.f32.mrb[0].mxu0
      %v1047 = vadd.f32 %v598, %v1046
      %v1048 = vpop.f32.mrb[0].mxu0
      %1049 = vmatprep.mubr.f32.mxu0 0.0
      %1050 = vmatmul.mubr.f32.gmra.mrb[0].mxu0 %v526
      %v1051 = vpop.f32.mrb[0].mxu0
      %v1052 = vadd.f32 %v598, %v1051
      %v1053 = vpop.f32.mrb[0].mxu0
      %1054 = vmatprep.mubr.f32.mxu0 0.0
      %1055 = vmatmul.mubr.f32.gmra.mrb[0].mxu0 %v527
      %v1056 = vpop.f32.mrb[0].mxu0
      %v1057 = vadd.f32 %v598, %v1056
      %v1058 = vpop.f32.mrb[0].mxu0
      %1059 = vmatprep.mubr.f32.mxu0 0.0
      %1060 = vmatmul.mubr.f32.gmra.mrb[0].mxu0 %v528
      %v1061 = vpop.f32.mrb[0].mxu0
      %v1062 = vadd.f32 %v598, %v1061
      %v1063 = vpop.f32.mrb[0].mxu0
      %1064 = vmatprep.mubr.f32.mxu0 0.0
      %1065 = vmatmul.mubr.f32.gmra.mrb[0].mxu0 %v529
      %v1066 = vpop.f32.mrb[0].mxu0
      %v1067 = vadd.f32 %v598, %v1066
      %v1068 = vpop.f32.mrb[0].mxu0
      %1069 = vmatprep.mubr.f32.mxu0 0.0
      %1070 = vmatmul.mubr.f32.gmra.mrb[0].mxu0 %v530
      %v1071 = vpop.f32.mrb[0].mxu0
      %v1072 = vadd.f32 %v598, %v1071
      %v1073 = vpop.f32.mrb[0].mxu0
      %1074 = vmatprep.mubr.f32.mxu0 0.0
      %1075 = vmatmul.mubr.f32.gmra.mrb[0].mxu0 %v531
      %v1076 = vpop.f32.mrb[0].mxu0
      %v1077 = vadd.f32 %v598, %v1076
      %v1078 = vpop.f32.mrb[0].mxu0
      %1079 = vmatprep.mubr.f32.mxu0 0.0
      %1080 = vmatmul.mubr.f32.gmra.mrb[0].mxu0 %v532
      %v1081 = vpop.f32.mrb[0].mxu0
      %v1082 = vadd.f32 %v598, %v1081
      %v1083 = vpop.f32.mrb[0].mxu0
      %1084 = vmatprep.mubr.f32.mxu0 0.0
      %1085 = vmatmul.mubr.f32.gmra.mrb[0].mxu0 %v533
      %v1086 = vpop.f32.mrb[0].mxu0
      %v1087 = vadd.f32 %v598, %v1086
      %v1088 = vpop.f32.mrb[0].mxu0
      %1089 = vmatprep.mubr.f32.mxu0 0.0
      %1090 = vmatmul.mubr.f32.gmra.mrb[0].mxu0 %v534
      %v1091 = vpop.f32.mrb[0].mxu0
      %v1092 = vadd.f32 %v598, %v1091
      %v1093 = vpop.f32.mrb[0].mxu0
      %1094 = vmatprep.mubr.f32.mxu0 0.0
      %1095 = vmatmul.mubr.f32.gmra.mrb[0].mxu0 %v535
      %v1096 = vpop.f32.mrb[0].mxu0
      %v1097 = vadd.f32 %v598, %v1096
      %v1098 = vpop.f32.mrb[0].mxu0
      %1099 = vmatprep.mubr.f32.mxu0 0.0
      %1100 = vmatmul.mubr.f32.gmra.mrb[0].mxu0 %v536
      %v1101 = vpop.f32.mrb[0].mxu0
      %v1102 = vadd.f32 %v598, %v1101
      %v1103 = vpop.f32.mrb[0].mxu0
      %1104 = vmatprep.mubr.f32.mxu0 0.0
      %1105 = vmatmul.mubr.f32.gmra.mrb[0].mxu0 %v537
      %v1106 = vpop.f32.mrb[0].mxu0
      %v1107 = vadd.f32 %v598, %v1106
      %v1108 = vpop.f32.mrb[0].mxu0
      %1109 = vmatprep.mubr.f32.mxu0 0.0
      %1110 = vmatmul.mubr.f32.gmra.mrb[0].mxu0 %v538
      %v1111 = vpop.f32.mrb[0].mxu0
      %v1112 = vadd.f32 %v598, %v1111
      %v1113 = vpop.f32.mrb[0].mxu0
      %1114 = vmatprep.mubr.f32.mxu0 0.0
      %1115 = vmatmul.mubr.f32.gmra.mrb[0].mxu0 %v539
      %v1116 = vpop.f32.mrb[0].mxu0
      %v1117 = vadd.f32 %v598, %v1116
      %v1118 = vpop.f32.mrb[0].mxu0
      %1119 = vmatprep.mubr.f32.mxu0 0.0
      %1120 = vmatmul.mubr.f32.gmra.mrb[0].mxu0 %v540
      %v1121 = vpop.f32.mrb[0].mxu0
      %v1122 = vadd.f32 %v598, %v1121
      %v1123 = vpop.f32.mrb[0].mxu0
      %1124 = vmatprep.mubr.f32.mxu0 0.0
      %1125 = vmatmul.mubr.f32.gmra.mrb[0].mxu0 %v541
      %v1126 = vpop.f32.mrb[0].mxu0
      %v1127 = vadd.f32 %v598, %v1126
      %v1128 = vpop.f32.mrb[0].mxu0
      %1129 = vmatprep.mubr.f32.mxu0 0.0
      %1130 = vmatmul.mubr.f32.gmra.mrb[0].mxu0 %v542
      %v1131 = vpop.f32.mrb[0].mxu0
      %v1132 = vadd.f32 %v598, %v1131
      %v1133 = vpop.f32.mrb[0].mxu0
      %1134 = vmatprep.mubr.f32.mxu0 0.0
      %1135 = vmatmul.mubr.f32.gmra.mrb[0].mxu0 %v543
      %v1136 = vpop.f32.mrb[0].mxu0
      %v1137 = vadd.f32 %v598, %v1136
      %v1138 = vpop.f32.mrb[0].mxu0
      %1139 = vmatprep.mubr.f32.mxu0 0.0
      %1140 = vmatmul.mubr.f32.gmra.mrb[0].mxu0 %v544
      %v1141 = vpop.f32.mrb[0].mxu0
      %v1142 = vadd.f32 %v598, %v1141
      %v1143 = vpop.f32.mrb[0].mxu0
      %1144 = vmatprep.mubr.f32.mxu0 0.0
      %1145 = vmatmul.mubr.f32.gmra.mrb[0].mxu0 %v545
      %v1146 = vpop.f32.mrb[0].mxu0
      %v1147 = vadd.f32 %v598, %v1146
      %v1148 = vpop.f32.mrb[0].mxu0
      %1149 = vmatprep.mubr.f32.mxu0 0.0
      %1150 = vmatmul.mubr.f32.gmra.mrb[0].mxu0 %v546
      %v1151 = vpop.f32.mrb[0].mxu0
      %v1152 = vadd.f32 %v598, %v1151
      %v1153 = vpop.f32.mrb[0].mxu0
      %1154 = vmatprep.mubr.f32.mxu0 0.0
      %1155 = vmatmul.mubr.f32.gmra.mrb[0].mxu0 %v547
      %v1156 = vpop.f32.mrb[0].mxu0
      %v1157 = vadd.f32 %v598, %v1156
      %v1158 = vpop.f32.mrb[0].mxu0
      %1159 = vmatprep.mubr.f32.mxu0 0.0
      %1160 = vmatmul.mubr.f32.gmra.mrb[0].mxu0 %v548
      %v1161 = vpop.f32.mrb[0].mxu0
      %v1162 = vadd.f32 %v598, %v1161
      %v1163 = vpop.f32.mrb[0].mxu0
      %1164 = vmatprep.mubr.f32.mxu0 0.0
      %1165 = vmatmul.mubr.f32.gmra.mrb[0].mxu0 %v549
      %v1166 = vpop.f32.mrb[0].mxu0
      %v1167 = vadd.f32 %v598, %v1166
      %v1168 = vpop.f32.mrb[0].mxu0
      %1169 = vmatprep.mubr.f32.mxu0 0.0
      %1170 = vmatmul.mubr.f32.gmra.mrb[0].mxu0 %v550
      %v1171 = vpop.f32.mrb[0].mxu0
      %v1172 = vadd.f32 %v598, %v1171
      %v1173 = vpop.f32.mrb[0].mxu0
      %1174 = vmatprep.mubr.f32.mxu0 0.0
      %1175 = vmatmul.mubr.f32.gmra.mrb[0].mxu0 %v551
      %v1176 = vpop.f32.mrb[0].mxu0
      %v1177 = vadd.f32 %v598, %v1176
      %v1178 = vpop.f32.mrb[0].mxu0
      %1179 = vmatprep.mubr.f32.mxu0 0.0
      %1180 = vmatmul.mubr.f32.gmra.mrb[0].mxu0 %v552
      %v1181 = vpop.f32.mrb[0].mxu0
      %v1182 = vadd.f32 %v598, %v1181
      %v1183 = vpop.f32.mrb[0].mxu0
      %1184 = vmatprep.mubr.f32.mxu0 0.0
      %1185 = vmatmul.mubr.f32.gmra.mrb[0].mxu0 %v553
      %v1186 = vpop.f32.mrb[0].mxu0
      %v1187 = vadd.f32 %v598, %v1186
      %v1188 = vpop.f32.mrb[0].mxu0
      %1189 = vmatprep.mubr.f32.mxu0 0.0
      %1190 = vmatmul.mubr.f32.gmra.mrb[0].mxu0 %v554
      %v1191 = vpop.f32.mrb[0].mxu0
      %v1192 = vadd.f32 %v598, %v1191
      %v1193 = vpop.f32.mrb[0].mxu0
      %1194 = vmatprep.mubr.f32.mxu0 0.0
      %1195 = vmatmul.mubr.f32.gmra.mrb[0].mxu0 %v555
      %v1196 = vpop.f32.mrb[0].mxu0
      %v1197 = vadd.f32 %v598, %v1196
      %v1198 = vpop.f32.mrb[0].mxu0
      %1199 = vmatprep.mubr.f32.mxu0 0.0
      %1200 = vmatmul.mubr.f32.gmra.mrb[0].mxu0 %v556
      %v1201 = vpop.f32.mrb[0].mxu0
      %v1202 = vadd.f32 %v598, %v1201
      %v1203 = vpop.f32.mrb[0].mxu0
      %1204 = vmatprep.mubr.f32.mxu0 0.0
      %1205 = vmatmul.mubr.f32.gmra.mrb[0].mxu0 %v557
      %v1206 = vpop.f32.mrb[0].mxu0
      %v1207 = vadd.f32 %v598, %v1206
      %v1208 = vpop.f32.mrb[0].mxu0
      %1209 = vmatprep.mubr.f32.mxu0 0.0
      %1210 = vmatmul.mubr.f32.gmra.mrb[0].mxu0 %v558
      %v1211 = vpop.f32.mrb[0].mxu0
      %v1212 = vadd.f32 %v598, %v1211
      %v1213 = vpop.f32.mrb[0].mxu0
      %1214 = vmatprep.mubr.f32.mxu0 0.0
      %1215 = vmatmul.mubr.f32.gmra.mrb[0].mxu0 %v559
      %v1216 = vpop.f32.mrb[0].mxu0
      %v1217 = vadd.f32 %v598, %v1216
      %v1218 = vpop.f32.mrb[0].mxu0
      %1219 = vmatprep.mubr.f32.mxu0 0.0
      %1220 = vmatmul.mubr.f32.gmra.mrb[0].mxu0 %v560
      %v1221 = vpop.f32.mrb[0].mxu0
      %v1222 = vadd.f32 %v598, %v1221
      %v1223 = vpop.f32.mrb[0].mxu0
      %1224 = vmatprep.mubr.f32.mxu0 0.0
      %1225 = vmatmul.mubr.f32.gmra.mrb[0].mxu0 %v561
      %v1226 = vpop.f32.mrb[0].mxu0
      %v1227 = vadd.f32 %v598, %v1226
      %v1228 = vpop.f32.mrb[0].mxu0
      %1229 = vmatprep.mubr.f32.mxu0 0.0
      %1230 = vmatmul.mubr.f32.gmra.mrb[0].mxu0 %v562
      %v1231 = vpop.f32.mrb[0].mxu0
      %v1232 = vadd.f32 %v598, %v1231
      %v1233 = vpop.f32.mrb[0].mxu0
      %1234 = vmatprep.mubr.f32.mxu0 0.0
      %1235 = vmatmul.mubr.f32.gmra.mrb[0].mxu0 %v563
      %v1236 = vpop.f32.mrb[0].mxu0
      %v1237 = vadd.f32 %v598, %v1236
      %v1238 = vpop.f32.mrb[0].mxu0
      %1239 = vmatprep.mubr.f32.mxu0 0.0
      %1240 = vmatmul.mubr.f32.gmra.mrb[0].mxu0 %v564
      %v1241 = vpop.f32.mrb[0].mxu0
      %v1242 = vadd.f32 %v598, %v1241
      %v1243 = vpop.f32.mrb[0].mxu0
      %1244 = vmatprep.mubr.f32.mxu0 0.0
      %1245 = vmatmul.mubr.f32.gmra.mrb[0].mxu0 %v565
      %v1246 = vpop.f32.mrb[0].mxu0
      %v1247 = vadd.f32 %v598, %v1246
      %v1248 = vpop.f32.mrb[0].mxu0
      %1249 = vmatprep.mubr.f32.mxu0 0.0
      %1250 = vmatmul.mubr.f32.gmra.mrb[0].mxu0 %v566
      %v1251 = vpop.f32.mrb[0].mxu0
      %v1252 = vadd.f32 %v598, %v1251
      %v1253 = vpop.f32.mrb[0].mxu0
      %1254 = vmatprep.mubr.f32.mxu0 0.0
      %1255 = vmatmul.mubr.f32.gmra.mrb[0].mxu0 %v567
      %v1256 = vpop.f32.mrb[0].mxu0
      %v1257 = vadd.f32 %v598, %v1256
      %v1258 = vpop.f32.mrb[0].mxu0
      %1259 = vmatprep.mubr.f32.mxu0 0.0
      %1260 = vmatmul.mubr.f32.gmra.mrb[0].mxu0 %v568
      %v1261 = vpop.f32.mrb[0].mxu0
      %v1262 = vadd.f32 %v598, %v1261
      %v1263 = vpop.f32.mrb[0].mxu0
      %1264 = vmatprep.mubr.f32.mxu0 0.0
      %1265 = vmatmul.mubr.f32.gmra.mrb[0].mxu0 %v569
      %v1266 = vpop.f32.mrb[0].mxu0
      %v1267 = vadd.f32 %v598, %v1266
      %v1268 = vpop.f32.mrb[0].mxu0
      %1269 = vmatprep.mubr.f32.mxu0 0.0
      %1270 = vmatmul.mubr.f32.gmra.mrb[0].mxu0 %v570
      %v1271 = vpop.f32.mrb[0].mxu0
      %v1272 = vadd.f32 %v598, %v1271
      %v1273 = vpop.f32.mrb[0].mxu0
      %1274 = vmatprep.mubr.f32.mxu0 0.0
      %1275 = vmatmul.mubr.f32.gmra.mrb[0].mxu0 %v571
      %v1276 = vpop.f32.mrb[0].mxu0
      %v1277 = vadd.f32 %v598, %v1276
      %v1278 = vpop.f32.mrb[0].mxu0
      %1279 = vmatprep.mubr.f32.mxu0 0.0
      %1280 = vmatmul.mubr.f32.gmra.mrb[0].mxu0 %v572
      %v1281 = vpop.f32.mrb[0].mxu0
      %v1282 = vadd.f32 %v598, %v1281
      %v1283 = vpop.f32.mrb[0].mxu0
      %1284 = vmatprep.mubr.f32.mxu0 0.0
      %1285 = vmatmul.mubr.f32.gmra.mrb[0].mxu0 %v573
      %v1286 = vpop.f32.mrb[0].mxu0
      %v1287 = vadd.f32 %v598, %v1286
      %v1288 = vpop.f32.mrb[0].mxu0
      %1289 = vmatprep.mubr.f32.mxu0 0.0
      %1290 = vmatmul.mubr.f32.gmra.mrb[0].mxu0 %v574
      %v1291 = vpop.f32.mrb[0].mxu0
      %v1292 = vadd.f32 %v598, %v1291
      %v1293 = vpop.f32.mrb[0].mxu0
      %1294 = vmatprep.mubr.f32.mxu0 0.0
      %1295 = vmatmul.mubr.f32.gmra.mrb[0].mxu0 %v575
      %v1296 = vpop.f32.mrb[0].mxu0
      %v1297 = vadd.f32 %v598, %v1296
      %v1298 = vpop.f32.mrb[0].mxu0
      %1299 = vmatprep.mubr.f32.mxu0 0.0
      %1300 = vmatmul.mubr.f32.gmra.mrb[0].mxu0 %v576
      %v1301 = vpop.f32.mrb[0].mxu0
      %v1302 = vadd.f32 %v598, %v1301
      %v1303 = vpop.f32.mrb[0].mxu0
      %1304 = vdwg.mxu0
      %v1305 = vmax.f32 %v667, 0.0
      %v1306 = vmax.f32 %v672, 0.0
      %v1307 = vmax.f32 %v677, 0.0
      %v1308 = vmax.f32 %v682, 0.0
      %v1309 = vmax.f32 %v687, 0.0
      %v1310 = vmax.f32 %v692, 0.0
      %v1311 = vmax.f32 %v697, 0.0
      %v1312 = vmax.f32 %v702, 0.0
      %v1313 = vmax.f32 %v707, 0.0
      %v1314 = vmax.f32 %v712, 0.0
      %v1315 = vmax.f32 %v717, 0.0
      %v1316 = vmax.f32 %v722, 0.0
      %v1317 = vmax.f32 %v727, 0.0
      %v1318 = vmax.f32 %v732, 0.0
      %v1319 = vmax.f32 %v737, 0.0
      %v1320 = vmax.f32 %v742, 0.0
      %v1321 = vmax.f32 %v747, 0.0
      %v1322 = vmax.f32 %v752, 0.0
      %v1323 = vmax.f32 %v757, 0.0
      %v1324 = vmax.f32 %v762, 0.0
      %v1325 = vmax.f32 %v767, 0.0
      %v1326 = vmax.f32 %v772, 0.0
      %v1327 = vmax.f32 %v777, 0.0
      %v1328 = vmax.f32 %v782, 0.0
      %v1329 = vmax.f32 %v787, 0.0
      %v1330 = vmax.f32 %v792, 0.0
      %v1331 = vmax.f32 %v797, 0.0
      %v1332 = vmax.f32 %v802, 0.0
      %v1333 = vmax.f32 %v807, 0.0
      %v1334 = vmax.f32 %v812, 0.0
      %v1335 = vmax.f32 %v817, 0.0
      %v1336 = vmax.f32 %v822, 0.0
      %v1337 = vmax.f32 %v827, 0.0
      %v1338 = vmax.f32 %v832, 0.0
      %v1339 = vmax.f32 %v837, 0.0
      %v1340 = vmax.f32 %v842, 0.0
      %v1341 = vmax.f32 %v847, 0.0
      %v1342 = vmax.f32 %v852, 0.0
      %v1343 = vmax.f32 %v857, 0.0
      %v1344 = vmax.f32 %v862, 0.0
      %v1345 = vmax.f32 %v867, 0.0
      %v1346 = vmax.f32 %v872, 0.0
      %v1347 = vmax.f32 %v877, 0.0
      %v1348 = vmax.f32 %v882, 0.0
      %v1349 = vmax.f32 %v887, 0.0
      %v1350 = vmax.f32 %v892, 0.0
      %v1351 = vmax.f32 %v897, 0.0
      %v1352 = vmax.f32 %v902, 0.0
      %v1353 = vmax.f32 %v907, 0.0
      %v1354 = vmax.f32 %v912, 0.0
      %v1355 = vmax.f32 %v917, 0.0
      %v1356 = vmax.f32 %v922, 0.0
      %v1357 = vmax.f32 %v927, 0.0
      %v1358 = vmax.f32 %v932, 0.0
      %v1359 = vmax.f32 %v937, 0.0
      %v1360 = vmax.f32 %v942, 0.0
      %v1361 = vmax.f32 %v947, 0.0
      %v1362 = vmax.f32 %v952, 0.0
      %v1363 = vmax.f32 %v957, 0.0
      %v1364 = vmax.f32 %v962, 0.0
      %v1365 = vmax.f32 %v967, 0.0
      %v1366 = vmax.f32 %v972, 0.0
      %v1367 = vmax.f32 %v977, 0.0
      %v1368 = vmax.f32 %v982, 0.0
      %v1369 = vmax.f32 %v987, 0.0
      %v1370 = vmax.f32 %v992, 0.0
      %v1371 = vmax.f32 %v997, 0.0
      %v1372 = vmax.f32 %v1002, 0.0
      %v1373 = vmax.f32 %v1007, 0.0
      %v1374 = vmax.f32 %v1012, 0.0
      %v1375 = vmax.f32 %v1017, 0.0
      %v1376 = vmax.f32 %v1022, 0.0
      %v1377 = vmax.f32 %v1027, 0.0
      %v1378 = vmax.f32 %v1032, 0.0
      %v1379 = vmax.f32 %v1037, 0.0
      %v1380 = vmax.f32 %v1042, 0.0
      %v1381 = vmax.f32 %v1047, 0.0
      %v1382 = vmax.f32 %v1052, 0.0
      %v1383 = vmax.f32 %v1057, 0.0
      %v1384 = vmax.f32 %v1062, 0.0
      %v1385 = vmax.f32 %v1067, 0.0
      %v1386 = vmax.f32 %v1072, 0.0
      %v1387 = vmax.f32 %v1077, 0.0
      %v1388 = vmax.f32 %v1082, 0.0
      %v1389 = vmax.f32 %v1087, 0.0
      %v1390 = vmax.f32 %v1092, 0.0
      %v1391 = vmax.f32 %v1097, 0.0
      %v1392 = vmax.f32 %v1102, 0.0
      %v1393 = vmax.f32 %v1107, 0.0
      %v1394 = vmax.f32 %v1112, 0.0
      %v1395 = vmax.f32 %v1117, 0.0
      %v1396 = vmax.f32 %v1122, 0.0
      %v1397 = vmax.f32 %v1127, 0.0
      %v1398 = vmax.f32 %v1132, 0.0
      %v1399 = vmax.f32 %v1137, 0.0
      %v1400 = vmax.f32 %v1142, 0.0
      %v1401 = vmax.f32 %v1147, 0.0
      %v1402 = vmax.f32 %v1152, 0.0
      %v1403 = vmax.f32 %v1157, 0.0
      %v1404 = vmax.f32 %v1162, 0.0
      %v1405 = vmax.f32 %v1167, 0.0
      %v1406 = vmax.f32 %v1172, 0.0
      %v1407 = vmax.f32 %v1177, 0.0
      %v1408 = vmax.f32 %v1182, 0.0
      %v1409 = vmax.f32 %v1187, 0.0
      %v1410 = vmax.f32 %v1192, 0.0
      %v1411 = vmax.f32 %v1197, 0.0
      %v1412 = vmax.f32 %v1202, 0.0
      %v1413 = vmax.f32 %v1207, 0.0
      %v1414 = vmax.f32 %v1212, 0.0
      %v1415 = vmax.f32 %v1217, 0.0
      %v1416 = vmax.f32 %v1222, 0.0
      %v1417 = vmax.f32 %v1227, 0.0
      %v1418 = vmax.f32 %v1232, 0.0
      %v1419 = vmax.f32 %v1237, 0.0
      %v1420 = vmax.f32 %v1242, 0.0
      %v1421 = vmax.f32 %v1247, 0.0
      %v1422 = vmax.f32 %v1252, 0.0
      %v1423 = vmax.f32 %v1257, 0.0
      %v1424 = vmax.f32 %v1262, 0.0
      %v1425 = vmax.f32 %v1267, 0.0
      %v1426 = vmax.f32 %v1272, 0.0
      %v1427 = vmax.f32 %v1277, 0.0
      %v1428 = vmax.f32 %v1282, 0.0
      %v1429 = vmax.f32 %v1287, 0.0
      %v1430 = vmax.f32 %v1292, 0.0
      %v1431 = vmax.f32 %v1297, 0.0
      %v1432 = vmax.f32 %v1302, 0.0
      %1433 = vst [vmem:[#allocation2] sm:$0xff] %v1305
      %1434 = vst [vmem:[#allocation2 + $0x8] sm:$0xff] %v1306
      %1435 = vst [vmem:[#allocation2 + $0x18] sm:$0xff] %v1307
      %1436 = vst [vmem:[#allocation2 + $0x20] sm:$0xff] %v1308
      %1437 = vst [vmem:[#allocation2 + $0x30] sm:$0xff] %v1309
      %1438 = vst [vmem:[#allocation2 + $0x38] sm:$0xff] %v1310
      %1439 = vst [vmem:[#allocation2 + $0x48] sm:$0xff] %v1311
      %1440 = vst [vmem:[#allocation2 + $0x50] sm:$0xff] %v1312
      %1441 = vst [vmem:[#allocation2 + $0x60] sm:$0xff] %v1313
      %1442 = vst [vmem:[#allocation2 + $0x68] sm:$0xff] %v1314
      %1443 = vst [vmem:[#allocation2 + $0x78] sm:$0xff] %v1315
      %1444 = vst [vmem:[#allocation2 + $0x80] sm:$0xff] %v1316
      %1445 = vst [vmem:[#allocation2 + $0x90] sm:$0xff] %v1317
      %1446 = vst [vmem:[#allocation2 + $0x98] sm:$0xff] %v1318
      %1447 = vst [vmem:[#allocation2 + $0xa8] sm:$0xff] %v1319
      %1448 = vst [vmem:[#allocation2 + $0xb0] sm:$0xff] %v1320
      %1449 = vst [vmem:[#allocation2 + $0xc0] sm:$0xff] %v1321
      %1450 = vst [vmem:[#allocation2 + $0xc8] sm:$0xff] %v1322
      %1451 = vst [vmem:[#allocation2 + $0xd8] sm:$0xff] %v1323
      %1452 = vst [vmem:[#allocation2 + $0xe0] sm:$0xff] %v1324
      %1453 = vst [vmem:[#allocation2 + $0xf0] sm:$0xff] %v1325
      %1454 = vst [vmem:[#allocation2 + $0xf8] sm:$0xff] %v1326
      %1455 = vst [vmem:[#allocation2 + $0x108] sm:$0xff] %v1327
      %1456 = vst [vmem:[#allocation2 + $0x110] sm:$0xff] %v1328
      %1457 = vst [vmem:[#allocation2 + $0x120] sm:$0xff] %v1329
      %1458 = vst [vmem:[#allocation2 + $0x128] sm:$0xff] %v1330
      %1459 = vst [vmem:[#allocation2 + $0x138] sm:$0xff] %v1331
      %1460 = vst [vmem:[#allocation2 + $0x140] sm:$0xff] %v1332
      %1461 = vst [vmem:[#allocation2 + $0x150] sm:$0xff] %v1333
      %1462 = vst [vmem:[#allocation2 + $0x158] sm:$0xff] %v1334
      %1463 = vst [vmem:[#allocation2 + $0x168] sm:$0xff] %v1335
      %1464 = vst [vmem:[#allocation2 + $0x170] sm:$0xff] %v1336
      %1465 = vst [vmem:[#allocation2 + $0x1b0] sm:$0xff] %v1337
      %1466 = vst [vmem:[#allocation2 + $0x1b8] sm:$0xff] %v1338
      %1467 = vst [vmem:[#allocation2 + $0x1c8] sm:$0xff] %v1339
      %1468 = vst [vmem:[#allocation2 + $0x1d0] sm:$0xff] %v1340
      %1469 = vst [vmem:[#allocation2 + $0x1e0] sm:$0xff] %v1341
      %1470 = vst [vmem:[#allocation2 + $0x1e8] sm:$0xff] %v1342
      %1471 = vst [vmem:[#allocation2 + $0x1f8] sm:$0xff] %v1343
      %1472 = vst [vmem:[#allocation2 + $0x200] sm:$0xff] %v1344
      %1473 = vst [vmem:[#allocation2 + $0x210] sm:$0xff] %v1345
      %1474 = vst [vmem:[#allocation2 + $0x218] sm:$0xff] %v1346
      %1475 = vst [vmem:[#allocation2 + $0x228] sm:$0xff] %v1347
      %1476 = vst [vmem:[#allocation2 + $0x230] sm:$0xff] %v1348
      %1477 = vst [vmem:[#allocation2 + $0x240] sm:$0xff] %v1349
      %1478 = vst [vmem:[#allocation2 + $0x248] sm:$0xff] %v1350
      %1479 = vst [vmem:[#allocation2 + $0x258] sm:$0xff] %v1351
      %1480 = vst [vmem:[#allocation2 + $0x260] sm:$0xff] %v1352
      %1481 = vst [vmem:[#allocation2 + $0x270] sm:$0xff] %v1353
      %1482 = vst [vmem:[#allocation2 + $0x278] sm:$0xff] %v1354
      %1483 = vst [vmem:[#allocation2 + $0x288] sm:$0xff] %v1355
      %1484 = vst [vmem:[#allocation2 + $0x290] sm:$0xff] %v1356
      %1485 = vst [vmem:[#allocation2 + $0x2a0] sm:$0xff] %v1357
      %1486 = vst [vmem:[#allocation2 + $0x2a8] sm:$0xff] %v1358
      %1487 = vst [vmem:[#allocation2 + $0x2b8] sm:$0xff] %v1359
      %1488 = vst [vmem:[#allocation2 + $0x2c0] sm:$0xff] %v1360
      %1489 = vst [vmem:[#allocation2 + $0x2d0] sm:$0xff] %v1361
      %1490 = vst [vmem:[#allocation2 + $0x2d8] sm:$0xff] %v1362
      %1491 = vst [vmem:[#allocation2 + $0x2e8] sm:$0xff] %v1363
      %1492 = vst [vmem:[#allocation2 + $0x2f0] sm:$0xff] %v1364
      %1493 = vst [vmem:[#allocation2 + $0x300] sm:$0xff] %v1365
      %1494 = vst [vmem:[#allocation2 + $0x308] sm:$0xff] %v1366
      %1495 = vst [vmem:[#allocation2 + $0x318] sm:$0xff] %v1367
      %1496 = vst [vmem:[#allocation2 + $0x320] sm:$0xff] %v1368
      %1497 = vst [vmem:[#allocation2 + $0x360] sm:$0xff] %v1369
      %1498 = vst [vmem:[#allocation2 + $0x368] sm:$0xff] %v1370
      %1499 = vst [vmem:[#allocation2 + $0x378] sm:$0xff] %v1371
      %1500 = vst [vmem:[#allocation2 + $0x380] sm:$0xff] %v1372
      %1501 = vst [vmem:[#allocation2 + $0x390] sm:$0xff] %v1373
      %1502 = vst [vmem:[#allocation2 + $0x398] sm:$0xff] %v1374
      %1503 = vst [vmem:[#allocation2 + $0x3a8] sm:$0xff] %v1375
      %1504 = vst [vmem:[#allocation2 + $0x3b0] sm:$0xff] %v1376
      %1505 = vst [vmem:[#allocation2 + $0x3c0] sm:$0xff] %v1377
      %1506 = vst [vmem:[#allocation2 + $0x3c8] sm:$0xff] %v1378
      %1507 = vst [vmem:[#allocation2 + $0x3d8] sm:$0xff] %v1379
      %1508 = vst [vmem:[#allocation2 + $0x3e0] sm:$0xff] %v1380
      %1509 = vst [vmem:[#allocation2 + $0x3f0] sm:$0xff] %v1381
      %1510 = vst [vmem:[#allocation2 + $0x3f8] sm:$0xff] %v1382
      %1511 = vst [vmem:[#allocation2 + $0x408] sm:$0xff] %v1383
      %1512 = vst [vmem:[#allocation2 + $0x410] sm:$0xff] %v1384
      %1513 = vst [vmem:[#allocation2 + $0x420] sm:$0xff] %v1385
      %1514 = vst [vmem:[#allocation2 + $0x428] sm:$0xff] %v1386
      %1515 = vst [vmem:[#allocation2 + $0x438] sm:$0xff] %v1387
      %1516 = vst [vmem:[#allocation2 + $0x440] sm:$0xff] %v1388
      %1517 = vst [vmem:[#allocation2 + $0x450] sm:$0xff] %v1389
      %1518 = vst [vmem:[#allocation2 + $0x458] sm:$0xff] %v1390
      %1519 = vst [vmem:[#allocation2 + $0x468] sm:$0xff] %v1391
      %1520 = vst [vmem:[#allocation2 + $0x470] sm:$0xff] %v1392
      %1521 = vst [vmem:[#allocation2 + $0x480] sm:$0xff] %v1393
      %1522 = vst [vmem:[#allocation2 + $0x488] sm:$0xff] %v1394
      %1523 = vst [vmem:[#allocation2 + $0x498] sm:$0xff] %v1395
      %1524 = vst [vmem:[#allocation2 + $0x4a0] sm:$0xff] %v1396
      %1525 = vst [vmem:[#allocation2 + $0x4b0] sm:$0xff] %v1397
      %1526 = vst [vmem:[#allocation2 + $0x4b8] sm:$0xff] %v1398
      %1527 = vst [vmem:[#allocation2 + $0x4c8] sm:$0xff] %v1399
      %1528 = vst [vmem:[#allocation2 + $0x4d0] sm:$0xff] %v1400
      %1529 = vst [vmem:[#allocation2 + $0x510] sm:$0xff] %v1401
      %1530 = vst [vmem:[#allocation2 + $0x518] sm:$0xff] %v1402
      %1531 = vst [vmem:[#allocation2 + $0x528] sm:$0xff] %v1403
      %1532 = vst [vmem:[#allocation2 + $0x530] sm:$0xff] %v1404
      %1533 = vst [vmem:[#allocation2 + $0x540] sm:$0xff] %v1405
      %1534 = vst [vmem:[#allocation2 + $0x548] sm:$0xff] %v1406
      %1535 = vst [vmem:[#allocation2 + $0x558] sm:$0xff] %v1407
      %1536 = vst [vmem:[#allocation2 + $0x560] sm:$0xff] %v1408
      %1537 = vst [vmem:[#allocation2 + $0x570] sm:$0xff] %v1409
      %1538 = vst [vmem:[#allocation2 + $0x578] sm:$0xff] %v1410
      %1539 = vst [vmem:[#allocation2 + $0x588] sm:$0xff] %v1411
      %1540 = vst [vmem:[#allocation2 + $0x590] sm:$0xff] %v1412
      %1541 = vst [vmem:[#allocation2 + $0x5a0] sm:$0xff] %v1413
      %1542 = vst [vmem:[#allocation2 + $0x5a8] sm:$0xff] %v1414
      %1543 = vst [vmem:[#allocation2 + $0x5b8] sm:$0xff] %v1415
      %1544 = vst [vmem:[#allocation2 + $0x5c0] sm:$0xff] %v1416
      %1545 = vst [vmem:[#allocation2 + $0x5d0] sm:$0xff] %v1417
      %1546 = vst [vmem:[#allocation2 + $0x5d8] sm:$0xff] %v1418
      %1547 = vst [vmem:[#allocation2 + $0x5e8] sm:$0xff] %v1419
      %1548 = vst [vmem:[#allocation2 + $0x5f0] sm:$0xff] %v1420
      %1549 = vst [vmem:[#allocation2 + $0x600] sm:$0xff] %v1421
      %1550 = vst [vmem:[#allocation2 + $0x608] sm:$0xff] %v1422
      %1551 = vst [vmem:[#allocation2 + $0x618] sm:$0xff] %v1423
      %1552 = vst [vmem:[#allocation2 + $0x620] sm:$0xff] %v1424
      %1553 = vst [vmem:[#allocation2 + $0x630] sm:$0xff] %v1425
      %1554 = vst [vmem:[#allocation2 + $0x638] sm:$0xff] %v1426
      %1555 = vst [vmem:[#allocation2 + $0x648] sm:$0xff] %v1427
      %1556 = vst [vmem:[#allocation2 + $0x650] sm:$0xff] %v1428
      %1557 = vst [vmem:[#allocation2 + $0x660] sm:$0xff] %v1429
      %1558 = vst [vmem:[#allocation2 + $0x668] sm:$0xff] %v1430
      %1559 = vst [vmem:[#allocation2 + $0x678] sm:$0xff] %v1431
      %1560 = vst [vmem:[#allocation2 + $0x680] sm:$0xff] %v1432
      %s1561 = scalar_lea.vmem [#allocation2], 384
      %1562 = vst [vmem:[%s1561] sm:$0xff] 0.0
      %1563 = vst [vmem:[%s1561 + $0x8] sm:$0xff] 0.0
      %1564 = vst [vmem:[%s1561 + $0x10] sm:$0x3] 0.0
      %1565 = vst [vmem:[%s1561 + $0x18] sm:$0xff] 0.0
      %1566 = vst [vmem:[%s1561 + $0x20] sm:$0xff] 0.0
      %1567 = vst [vmem:[%s1561 + $0x28] sm:$0x3] 0.0
      %1568 = vst [vmem:[%s1561 + $0x1b0] sm:$0xff] 0.0
      %1569 = vst [vmem:[%s1561 + $0x1b8] sm:$0xff] 0.0
      %1570 = vst [vmem:[%s1561 + $0x1c0] sm:$0x3] 0.0
      %1571 = vst [vmem:[%s1561 + $0x1c8] sm:$0xff] 0.0
      %1572 = vst [vmem:[%s1561 + $0x1d0] sm:$0xff] 0.0
      %1573 = vst [vmem:[%s1561 + $0x1d8] sm:$0x3] 0.0
      %1574 = vst [vmem:[%s1561 + $0x360] sm:$0xff] 0.0
      %1575 = vst [vmem:[%s1561 + $0x368] sm:$0xff] 0.0
      %1576 = vst [vmem:[%s1561 + $0x370] sm:$0x3] 0.0
      %1577 = vst [vmem:[%s1561 + $0x378] sm:$0xff] 0.0
      %1578 = vst [vmem:[%s1561 + $0x380] sm:$0xff] 0.0
      %1579 = vst [vmem:[%s1561 + $0x388] sm:$0x3] 0.0
      %1580 = vst [vmem:[%s1561 + $0x510] sm:$0xff] 0.0
      %1581 = vst [vmem:[%s1561 + $0x518] sm:$0xff] 0.0
      %1582 = vst [vmem:[%s1561 + $0x520] sm:$0x3] 0.0
      %1583 = vst [vmem:[%s1561 + $0x528] sm:$0xff] 0.0
      %1584 = vst [vmem:[%s1561 + $0x530] sm:$0xff] 0.0
      %1585 = vst [vmem:[%s1561 + $0x538] sm:$0x3] 0.0
      %1586 = vst [vmem:[#allocation2 + $0x10] sm:$0x3] 0.0
      %1587 = vst [vmem:[#allocation2 + $0x28] sm:$0x3] 0.0
      %1588 = vst [vmem:[#allocation2 + $0x40] sm:$0x3] 0.0
      %1589 = vst [vmem:[#allocation2 + $0x58] sm:$0x3] 0.0
      %1590 = vst [vmem:[#allocation2 + $0x70] sm:$0x3] 0.0
      %1591 = vst [vmem:[#allocation2 + $0x88] sm:$0x3] 0.0
      %1592 = vst [vmem:[#allocation2 + $0xa0] sm:$0x3] 0.0
      %1593 = vst [vmem:[#allocation2 + $0xb8] sm:$0x3] 0.0
      %1594 = vst [vmem:[#allocation2 + $0xd0] sm:$0x3] 0.0
      %1595 = vst [vmem:[#allocation2 + $0xe8] sm:$0x3] 0.0
      %1596 = vst [vmem:[#allocation2 + $0x100] sm:$0x3] 0.0
      %1597 = vst [vmem:[#allocation2 + $0x118] sm:$0x3] 0.0
      %1598 = vst [vmem:[#allocation2 + $0x130] sm:$0x3] 0.0
      %1599 = vst [vmem:[#allocation2 + $0x148] sm:$0x3] 0.0
      %1600 = vst [vmem:[#allocation2 + $0x160] sm:$0x3] 0.0
      %1601 = vst [vmem:[#allocation2 + $0x178] sm:$0x3] 0.0
      %1602 = vst [vmem:[#allocation2 + $0x1c0] sm:$0x3] 0.0
      %1603 = vst [vmem:[#allocation2 + $0x1d8] sm:$0x3] 0.0
      %1604 = vst [vmem:[#allocation2 + $0x1f0] sm:$0x3] 0.0
      %1605 = vst [vmem:[#allocation2 + $0x208] sm:$0x3] 0.0
      %1606 = vst [vmem:[#allocation2 + $0x220] sm:$0x3] 0.0
      %1607 = vst [vmem:[#allocation2 + $0x238] sm:$0x3] 0.0
      %1608 = vst [vmem:[#allocation2 + $0x250] sm:$0x3] 0.0
      %1609 = vst [vmem:[#allocation2 + $0x268] sm:$0x3] 0.0
      %1610 = vst [vmem:[#allocation2 + $0x280] sm:$0x3] 0.0
      %1611 = vst [vmem:[#allocation2 + $0x298] sm:$0x3] 0.0
      %1612 = vst [vmem:[#allocation2 + $0x2b0] sm:$0x3] 0.0
      %1613 = vst [vmem:[#allocation2 + $0x2c8] sm:$0x3] 0.0
      %1614 = vst [vmem:[#allocation2 + $0x2e0] sm:$0x3] 0.0
      %1615 = vst [vmem:[#allocation2 + $0x2f8] sm:$0x3] 0.0
      %1616 = vst [vmem:[#allocation2 + $0x310] sm:$0x3] 0.0
      %1617 = vst [vmem:[#allocation2 + $0x328] sm:$0x3] 0.0
      %1618 = vst [vmem:[#allocation2 + $0x370] sm:$0x3] 0.0
      %1619 = vst [vmem:[#allocation2 + $0x388] sm:$0x3] 0.0
      %1620 = vst [vmem:[#allocation2 + $0x3a0] sm:$0x3] 0.0
      %1621 = vst [vmem:[#allocation2 + $0x3b8] sm:$0x3] 0.0
      %1622 = vst [vmem:[#allocation2 + $0x3d0] sm:$0x3] 0.0
      %1623 = vst [vmem:[#allocation2 + $0x3e8] sm:$0x3] 0.0
      %1624 = vst [vmem:[#allocation2 + $0x400] sm:$0x3] 0.0
      %1625 = vst [vmem:[#allocation2 + $0x418] sm:$0x3] 0.0
      %1626 = vst [vmem:[#allocation2 + $0x430] sm:$0x3] 0.0
      %1627 = vst [vmem:[#allocation2 + $0x448] sm:$0x3] 0.0
      %1628 = vst [vmem:[#allocation2 + $0x460] sm:$0x3] 0.0
      %1629 = vst [vmem:[#allocation2 + $0x478] sm:$0x3] 0.0
      %1630 = vst [vmem:[#allocation2 + $0x490] sm:$0x3] 0.0
      %1631 = vst [vmem:[#allocation2 + $0x4a8] sm:$0x3] 0.0
      %1632 = vst [vmem:[#allocation2 + $0x4c0] sm:$0x3] 0.0
      %1633 = vst [vmem:[#allocation2 + $0x4d8] sm:$0x3] 0.0
      %1634 = vst [vmem:[#allocation2 + $0x520] sm:$0x3] 0.0
      %1635 = vst [vmem:[#allocation2 + $0x538] sm:$0x3] 0.0
      %1636 = vst [vmem:[#allocation2 + $0x550] sm:$0x3] 0.0
      %1637 = vst [vmem:[#allocation2 + $0x568] sm:$0x3] 0.0
      %1638 = vst [vmem:[#allocation2 + $0x580] sm:$0x3] 0.0
      %1639 = vst [vmem:[#allocation2 + $0x598] sm:$0x3] 0.0
      %1640 = vst [vmem:[#allocation2 + $0x5b0] sm:$0x3] 0.0
      %1641 = vst [vmem:[#allocation2 + $0x5c8] sm:$0x3] 0.0
      %1642 = vst [vmem:[#allocation2 + $0x5e0] sm:$0x3] 0.0
      %1643 = vst [vmem:[#allocation2 + $0x5f8] sm:$0x3] 0.0
      %1644 = vst [vmem:[#allocation2 + $0x610] sm:$0x3] 0.0
      %1645 = vst [vmem:[#allocation2 + $0x628] sm:$0x3] 0.0
      %1646 = vst [vmem:[#allocation2 + $0x640] sm:$0x3] 0.0
      %1647 = vst [vmem:[#allocation2 + $0x658] sm:$0x3] 0.0
      %1648 = vst [vmem:[#allocation2 + $0x670] sm:$0x3] 0.0
      %1649 = vst [vmem:[#allocation2 + $0x688] sm:$0x3] 0.0
      %v1650 = vld [vmem:[#allocation2] ss:$2 sm:$0xff]
      %s1651 = scalar_lea.vmem [#allocation2], 48
      %v1652 = vld [vmem:[%s1651] ss:$2 sm:$0xff]
      %s1653 = scalar_lea.vmem [#allocation2], 96
      %v1654 = vld [vmem:[%s1653] ss:$2 sm:$0xff]
      %s1655 = scalar_lea.vmem [#allocation2], 144
      %v1656 = vld [vmem:[%s1655] ss:$2 sm:$0xff]
      %s1657 = scalar_lea.vmem [#allocation2], 192
      %v1658 = vld [vmem:[%s1657] ss:$2 sm:$0xff]
      %s1659 = scalar_lea.vmem [#allocation2], 240
      %v1660 = vld [vmem:[%s1659] ss:$2 sm:$0xff]
      %s1661 = scalar_lea.vmem [#allocation2], 288
      %v1662 = vld [vmem:[%s1661] ss:$2 sm:$0xff]
      %s1663 = scalar_lea.vmem [#allocation2], 336
      %v1664 = vld [vmem:[%s1663] ss:$2 sm:$0xff]
      %s1665 = scalar_lea.vmem [#allocation2], 432
      %v1666 = vld [vmem:[%s1665] ss:$2 sm:$0xff]
      %s1667 = scalar_lea.vmem [#allocation2], 480
      %v1668 = vld [vmem:[%s1667] ss:$2 sm:$0xff]
      %s1669 = scalar_lea.vmem [#allocation2], 528
      %v1670 = vld [vmem:[%s1669] ss:$2 sm:$0xff]
      %s1671 = scalar_lea.vmem [#allocation2], 576
      %v1672 = vld [vmem:[%s1671] ss:$2 sm:$0xff]
      %s1673 = scalar_lea.vmem [#allocation2], 624
      %v1674 = vld [vmem:[%s1673] ss:$2 sm:$0xff]
      %s1675 = scalar_lea.vmem [#allocation2], 672
      %v1676 = vld [vmem:[%s1675] ss:$2 sm:$0xff]
      %s1677 = scalar_lea.vmem [#allocation2], 720
      %v1678 = vld [vmem:[%s1677] ss:$2 sm:$0xff]
      %s1679 = scalar_lea.vmem [#allocation2], 768
      %v1680 = vld [vmem:[%s1679] ss:$2 sm:$0xff]
      %s1681 = scalar_lea.vmem [#allocation2], 864
      %v1682 = vld [vmem:[%s1681] ss:$2 sm:$0xff]
      %s1683 = scalar_lea.vmem [#allocation2], 912
      %v1684 = vld [vmem:[%s1683] ss:$2 sm:$0xff]
      %s1685 = scalar_lea.vmem [#allocation2], 960
      %v1686 = vld [vmem:[%s1685] ss:$2 sm:$0xff]
      %s1687 = scalar_lea.vmem [#allocation2], 1008
      %v1688 = vld [vmem:[%s1687] ss:$2 sm:$0xff]
      %s1689 = scalar_lea.vmem [#allocation2], 1056
      %v1690 = vld [vmem:[%s1689] ss:$2 sm:$0xff]
      %s1691 = scalar_lea.vmem [#allocation2], 1104
      %v1692 = vld [vmem:[%s1691] ss:$2 sm:$0xff]
      %s1693 = scalar_lea.vmem [#allocation2], 1152
      %v1694 = vld [vmem:[%s1693] ss:$2 sm:$0xff]
      %s1695 = scalar_lea.vmem [#allocation2], 1200
      %v1696 = vld [vmem:[%s1695] ss:$2 sm:$0xff]
      %s1697 = scalar_lea.vmem [#allocation2], 1296
      %v1698 = vld [vmem:[%s1697] ss:$2 sm:$0xff]
      %s1699 = scalar_lea.vmem [#allocation2], 1344
      %v1700 = vld [vmem:[%s1699] ss:$2 sm:$0xff]
      %s1701 = scalar_lea.vmem [#allocation2], 1392
      %v1702 = vld [vmem:[%s1701] ss:$2 sm:$0xff]
      %s1703 = scalar_lea.vmem [#allocation2], 1440
      %v1704 = vld [vmem:[%s1703] ss:$2 sm:$0xff]
      %s1705 = scalar_lea.vmem [#allocation2], 1488
      %v1706 = vld [vmem:[%s1705] ss:$2 sm:$0xff]
      %s1707 = scalar_lea.vmem [#allocation2], 1536
      %v1708 = vld [vmem:[%s1707] ss:$2 sm:$0xff]
      %s1709 = scalar_lea.vmem [#allocation2], 1584
      %v1710 = vld [vmem:[%s1709] ss:$2 sm:$0xff]
      %s1711 = scalar_lea.vmem [#allocation2], 1632
      %v1712 = vld [vmem:[%s1711] ss:$2 sm:$0xff]
      %1713 = vst [vmem:[#allocation4] sm:$0xff] %v1650
      %1714 = vst [vmem:[#allocation4 + $0x20] sm:$0xff] %v1652
      %1715 = vst [vmem:[#allocation4 + $0x40] sm:$0xff] %v1654
      %1716 = vst [vmem:[#allocation4 + $0x60] sm:$0xff] %v1656
      %1717 = vst [vmem:[#allocation4 + $0x80] sm:$0xff] %v1658
      %1718 = vst [vmem:[#allocation4 + $0xa0] sm:$0xff] %v1660
      %1719 = vst [vmem:[#allocation4 + $0xc0] sm:$0xff] %v1662
      %1720 = vst [vmem:[#allocation4 + $0xe0] sm:$0xff] %v1664
      %1721 = vst [vmem:[#allocation4 + $0x100] sm:$0xff] %v1666
      %1722 = vst [vmem:[#allocation4 + $0x120] sm:$0xff] %v1668
      %1723 = vst [vmem:[#allocation4 + $0x140] sm:$0xff] %v1670
      %1724 = vst [vmem:[#allocation4 + $0x160] sm:$0xff] %v1672
      %1725 = vst [vmem:[#allocation4 + $0x180] sm:$0xff] %v1674
      %1726 = vst [vmem:[#allocation4 + $0x1a0] sm:$0xff] %v1676
      %1727 = vst [vmem:[#allocation4 + $0x1c0] sm:$0xff] %v1678
      %1728 = vst [vmem:[#allocation4 + $0x1e0] sm:$0xff] %v1680
      %1729 = vst [vmem:[#allocation4 + $0x200] sm:$0xff] %v1682
      %1730 = vst [vmem:[#allocation4 + $0x220] sm:$0xff] %v1684
      %1731 = vst [vmem:[#allocation4 + $0x240] sm:$0xff] %v1686
      %1732 = vst [vmem:[#allocation4 + $0x260] sm:$0xff] %v1688
      %1733 = vst [vmem:[#allocation4 + $0x280] sm:$0xff] %v1690
      %1734 = vst [vmem:[#allocation4 + $0x2a0] sm:$0xff] %v1692
      %1735 = vst [vmem:[#allocation4 + $0x2c0] sm:$0xff] %v1694
      %1736 = vst [vmem:[#allocation4 + $0x2e0] sm:$0xff] %v1696
      %1737 = vst [vmem:[#allocation4 + $0x300] sm:$0xff] %v1698
      %1738 = vst [vmem:[#allocation4 + $0x320] sm:$0xff] %v1700
      %1739 = vst [vmem:[#allocation4 + $0x340] sm:$0xff] %v1702
      %1740 = vst [vmem:[#allocation4 + $0x360] sm:$0xff] %v1704
      %1741 = vst [vmem:[#allocation4 + $0x380] sm:$0xff] %v1706
      %1742 = vst [vmem:[#allocation4 + $0x3a0] sm:$0xff] %v1708
      %1743 = vst [vmem:[#allocation4 + $0x3c0] sm:$0xff] %v1710
      %1744 = vst [vmem:[#allocation4 + $0x3e0] sm:$0xff] %v1712
      %s1745 = scalar_lea.vmem [#allocation2], 1
      %v1746 = vld [vmem:[%s1745] ss:$2 sm:$0xff]
      %s1747 = scalar_lea.vmem [#allocation2], 49
      %v1748 = vld [vmem:[%s1747] ss:$2 sm:$0xff]
      %s1749 = scalar_lea.vmem [#allocation2], 97
      %v1750 = vld [vmem:[%s1749] ss:$2 sm:$0xff]
      %s1751 = scalar_lea.vmem [#allocation2], 145
      %v1752 = vld [vmem:[%s1751] ss:$2 sm:$0xff]
      %s1753 = scalar_lea.vmem [#allocation2], 193
      %v1754 = vld [vmem:[%s1753] ss:$2 sm:$0xff]
      %s1755 = scalar_lea.vmem [#allocation2], 241
      %v1756 = vld [vmem:[%s1755] ss:$2 sm:$0xff]
      %s1757 = scalar_lea.vmem [#allocation2], 289
      %v1758 = vld [vmem:[%s1757] ss:$2 sm:$0xff]
      %s1759 = scalar_lea.vmem [#allocation2], 337
      %v1760 = vld [vmem:[%s1759] ss:$2 sm:$0xff]
      %s1761 = scalar_lea.vmem [#allocation2], 433
      %v1762 = vld [vmem:[%s1761] ss:$2 sm:$0xff]
      %s1763 = scalar_lea.vmem [#allocation2], 481
      %v1764 = vld [vmem:[%s1763] ss:$2 sm:$0xff]
      %s1765 = scalar_lea.vmem [#allocation2], 529
      %v1766 = vld [vmem:[%s1765] ss:$2 sm:$0xff]
      %s1767 = scalar_lea.vmem [#allocation2], 577
      %v1768 = vld [vmem:[%s1767] ss:$2 sm:$0xff]
      %s1769 = scalar_lea.vmem [#allocation2], 625
      %v1770 = vld [vmem:[%s1769] ss:$2 sm:$0xff]
      %s1771 = scalar_lea.vmem [#allocation2], 673
      %v1772 = vld [vmem:[%s1771] ss:$2 sm:$0xff]
      %s1773 = scalar_lea.vmem [#allocation2], 721
      %v1774 = vld [vmem:[%s1773] ss:$2 sm:$0xff]
      %s1775 = scalar_lea.vmem [#allocation2], 769
      %v1776 = vld [vmem:[%s1775] ss:$2 sm:$0xff]
      %s1777 = scalar_lea.vmem [#allocation2], 865
      %v1778 = vld [vmem:[%s1777] ss:$2 sm:$0xff]
      %s1779 = scalar_lea.vmem [#allocation2], 913
      %v1780 = vld [vmem:[%s1779] ss:$2 sm:$0xff]
      %s1781 = scalar_lea.vmem [#allocation2], 961
      %v1782 = vld [vmem:[%s1781] ss:$2 sm:$0xff]
      %s1783 = scalar_lea.vmem [#allocation2], 1009
      %v1784 = vld [vmem:[%s1783] ss:$2 sm:$0xff]
      %s1785 = scalar_lea.vmem [#allocation2], 1057
      %v1786 = vld [vmem:[%s1785] ss:$2 sm:$0xff]
      %s1787 = scalar_lea.vmem [#allocation2], 1105
      %v1788 = vld [vmem:[%s1787] ss:$2 sm:$0xff]
      %s1789 = scalar_lea.vmem [#allocation2], 1153
      %v1790 = vld [vmem:[%s1789] ss:$2 sm:$0xff]
      %s1791 = scalar_lea.vmem [#allocation2], 1201
      %v1792 = vld [vmem:[%s1791] ss:$2 sm:$0xff]
      %s1793 = scalar_lea.vmem [#allocation2], 1297
      %v1794 = vld [vmem:[%s1793] ss:$2 sm:$0xff]
      %s1795 = scalar_lea.vmem [#allocation2], 1345
      %v1796 = vld [vmem:[%s1795] ss:$2 sm:$0xff]
      %s1797 = scalar_lea.vmem [#allocation2], 1393
      %v1798 = vld [vmem:[%s1797] ss:$2 sm:$0xff]
      %s1799 = scalar_lea.vmem [#allocation2], 1441
      %v1800 = vld [vmem:[%s1799] ss:$2 sm:$0xff]
      %s1801 = scalar_lea.vmem [#allocation2], 1489
      %v1802 = vld [vmem:[%s1801] ss:$2 sm:$0xff]
      %s1803 = scalar_lea.vmem [#allocation2], 1537
      %v1804 = vld [vmem:[%s1803] ss:$2 sm:$0xff]
      %s1805 = scalar_lea.vmem [#allocation2], 1585
      %v1806 = vld [vmem:[%s1805] ss:$2 sm:$0xff]
      %s1807 = scalar_lea.vmem [#allocation2], 1633
      %v1808 = vld [vmem:[%s1807] ss:$2 sm:$0xff]
      %1809 = vst [vmem:[#allocation4 + $0x8] sm:$0xff] %v1746
      %1810 = vst [vmem:[#allocation4 + $0x28] sm:$0xff] %v1748
      %1811 = vst [vmem:[#allocation4 + $0x48] sm:$0xff] %v1750
      %1812 = vst [vmem:[#allocation4 + $0x68] sm:$0xff] %v1752
      %1813 = vst [vmem:[#allocation4 + $0x88] sm:$0xff] %v1754
      %1814 = vst [vmem:[#allocation4 + $0xa8] sm:$0xff] %v1756
      %1815 = vst [vmem:[#allocation4 + $0xc8] sm:$0xff] %v1758
      %1816 = vst [vmem:[#allocation4 + $0xe8] sm:$0xff] %v1760
      %1817 = vst [vmem:[#allocation4 + $0x108] sm:$0xff] %v1762
      %1818 = vst [vmem:[#allocation4 + $0x128] sm:$0xff] %v1764
      %1819 = vst [vmem:[#allocation4 + $0x148] sm:$0xff] %v1766
      %1820 = vst [vmem:[#allocation4 + $0x168] sm:$0xff] %v1768
      %1821 = vst [vmem:[#allocation4 + $0x188] sm:$0xff] %v1770
      %1822 = vst [vmem:[#allocation4 + $0x1a8] sm:$0xff] %v1772
      %1823 = vst [vmem:[#allocation4 + $0x1c8] sm:$0xff] %v1774
      %1824 = vst [vmem:[#allocation4 + $0x1e8] sm:$0xff] %v1776
      %1825 = vst [vmem:[#allocation4 + $0x208] sm:$0xff] %v1778
      %1826 = vst [vmem:[#allocation4 + $0x228] sm:$0xff] %v1780
      %1827 = vst [vmem:[#allocation4 + $0x248] sm:$0xff] %v1782
      %1828 = vst [vmem:[#allocation4 + $0x268] sm:$0xff] %v1784
      %1829 = vst [vmem:[#allocation4 + $0x288] sm:$0xff] %v1786
      %1830 = vst [vmem:[#allocation4 + $0x2a8] sm:$0xff] %v1788
      %1831 = vst [vmem:[#allocation4 + $0x2c8] sm:$0xff] %v1790
      %1832 = vst [vmem:[#allocation4 + $0x2e8] sm:$0xff] %v1792
      %1833 = vst [vmem:[#allocation4 + $0x308] sm:$0xff] %v1794
      %1834 = vst [vmem:[#allocation4 + $0x328] sm:$0xff] %v1796
      %1835 = vst [vmem:[#allocation4 + $0x348] sm:$0xff] %v1798
      %1836 = vst [vmem:[#allocation4 + $0x368] sm:$0xff] %v1800
      %1837 = vst [vmem:[#allocation4 + $0x388] sm:$0xff] %v1802
      %1838 = vst [vmem:[#allocation4 + $0x3a8] sm:$0xff] %v1804
      %1839 = vst [vmem:[#allocation4 + $0x3c8] sm:$0xff] %v1806
      %1840 = vst [vmem:[#allocation4 + $0x3e8] sm:$0xff] %v1808
      %s1841 = scalar_lea.vmem [#allocation2], 2
      %v1842 = vld [vmem:[%s1841] ss:$2 sm:$0xff]
      %s1843 = scalar_lea.vmem [#allocation2], 50
      %v1844 = vld [vmem:[%s1843] ss:$2 sm:$0xff]
      %s1845 = scalar_lea.vmem [#allocation2], 98
      %v1846 = vld [vmem:[%s1845] ss:$2 sm:$0xff]
      %s1847 = scalar_lea.vmem [#allocation2], 146
      %v1848 = vld [vmem:[%s1847] ss:$2 sm:$0xff]
      %s1849 = scalar_lea.vmem [#allocation2], 194
      %v1850 = vld [vmem:[%s1849] ss:$2 sm:$0xff]
      %s1851 = scalar_lea.vmem [#allocation2], 242
      %v1852 = vld [vmem:[%s1851] ss:$2 sm:$0xff]
      %s1853 = scalar_lea.vmem [#allocation2], 290
      %v1854 = vld [vmem:[%s1853] ss:$2 sm:$0xff]
      %s1855 = scalar_lea.vmem [#allocation2], 338
      %v1856 = vld [vmem:[%s1855] ss:$2 sm:$0xff]
      %s1857 = scalar_lea.vmem [#allocation2], 434
      %v1858 = vld [vmem:[%s1857] ss:$2 sm:$0xff]
      %s1859 = scalar_lea.vmem [#allocation2], 482
      %v1860 = vld [vmem:[%s1859] ss:$2 sm:$0xff]
      %s1861 = scalar_lea.vmem [#allocation2], 530
      %v1862 = vld [vmem:[%s1861] ss:$2 sm:$0xff]
      %s1863 = scalar_lea.vmem [#allocation2], 578
      %v1864 = vld [vmem:[%s1863] ss:$2 sm:$0xff]
      %s1865 = scalar_lea.vmem [#allocation2], 626
      %v1866 = vld [vmem:[%s1865] ss:$2 sm:$0xff]
      %s1867 = scalar_lea.vmem [#allocation2], 674
      %v1868 = vld [vmem:[%s1867] ss:$2 sm:$0xff]
      %s1869 = scalar_lea.vmem [#allocation2], 722
      %v1870 = vld [vmem:[%s1869] ss:$2 sm:$0xff]
      %s1871 = scalar_lea.vmem [#allocation2], 770
      %v1872 = vld [vmem:[%s1871] ss:$2 sm:$0xff]
      %s1873 = scalar_lea.vmem [#allocation2], 866
      %v1874 = vld [vmem:[%s1873] ss:$2 sm:$0xff]
      %s1875 = scalar_lea.vmem [#allocation2], 914
      %v1876 = vld [vmem:[%s1875] ss:$2 sm:$0xff]
      %s1877 = scalar_lea.vmem [#allocation2], 962
      %v1878 = vld [vmem:[%s1877] ss:$2 sm:$0xff]
      %s1879 = scalar_lea.vmem [#allocation2], 1010
      %v1880 = vld [vmem:[%s1879] ss:$2 sm:$0xff]
      %s1881 = scalar_lea.vmem [#allocation2], 1058
      %v1882 = vld [vmem:[%s1881] ss:$2 sm:$0xff]
      %s1883 = scalar_lea.vmem [#allocation2], 1106
      %v1884 = vld [vmem:[%s1883] ss:$2 sm:$0xff]
      %s1885 = scalar_lea.vmem [#allocation2], 1154
      %v1886 = vld [vmem:[%s1885] ss:$2 sm:$0xff]
      %s1887 = scalar_lea.vmem [#allocation2], 1202
      %v1888 = vld [vmem:[%s1887] ss:$2 sm:$0xff]
      %s1889 = scalar_lea.vmem [#allocation2], 1298
      %v1890 = vld [vmem:[%s1889] ss:$2 sm:$0xff]
      %s1891 = scalar_lea.vmem [#allocation2], 1346
      %v1892 = vld [vmem:[%s1891] ss:$2 sm:$0xff]
      %s1893 = scalar_lea.vmem [#allocation2], 1394
      %v1894 = vld [vmem:[%s1893] ss:$2 sm:$0xff]
      %s1895 = scalar_lea.vmem [#allocation2], 1442
      %v1896 = vld [vmem:[%s1895] ss:$2 sm:$0xff]
      %s1897 = scalar_lea.vmem [#allocation2], 1490
      %v1898 = vld [vmem:[%s1897] ss:$2 sm:$0xff]
      %s1899 = scalar_lea.vmem [#allocation2], 1538
      %v1900 = vld [vmem:[%s1899] ss:$2 sm:$0xff]
      %s1901 = scalar_lea.vmem [#allocation2], 1586
      %v1902 = vld [vmem:[%s1901] ss:$2 sm:$0xff]
      %s1903 = scalar_lea.vmem [#allocation2], 1634
      %v1904 = vld [vmem:[%s1903] ss:$2 sm:$0xff]
      %1905 = vst [vmem:[#allocation4 + $0x10] sm:$0xff] %v1842
      %1906 = vst [vmem:[#allocation4 + $0x30] sm:$0xff] %v1844
      %1907 = vst [vmem:[#allocation4 + $0x50] sm:$0xff] %v1846
      %1908 = vst [vmem:[#allocation4 + $0x70] sm:$0xff] %v1848
      %1909 = vst [vmem:[#allocation4 + $0x90] sm:$0xff] %v1850
      %1910 = vst [vmem:[#allocation4 + $0xb0] sm:$0xff] %v1852
      %1911 = vst [vmem:[#allocation4 + $0xd0] sm:$0xff] %v1854
      %1912 = vst [vmem:[#allocation4 + $0xf0] sm:$0xff] %v1856
      %1913 = vst [vmem:[#allocation4 + $0x110] sm:$0xff] %v1858
      %1914 = vst [vmem:[#allocation4 + $0x130] sm:$0xff] %v1860
      %1915 = vst [vmem:[#allocation4 + $0x150] sm:$0xff] %v1862
      %1916 = vst [vmem:[#allocation4 + $0x170] sm:$0xff] %v1864
      %1917 = vst [vmem:[#allocation4 + $0x190] sm:$0xff] %v1866
      %1918 = vst [vmem:[#allocation4 + $0x1b0] sm:$0xff] %v1868
      %1919 = vst [vmem:[#allocation4 + $0x1d0] sm:$0xff] %v1870
      %1920 = vst [vmem:[#allocation4 + $0x1f0] sm:$0xff] %v1872
      %1921 = vst [vmem:[#allocation4 + $0x210] sm:$0xff] %v1874
      %1922 = vst [vmem:[#allocation4 + $0x230] sm:$0xff] %v1876
      %1923 = vst [vmem:[#allocation4 + $0x250] sm:$0xff] %v1878
      %1924 = vst [vmem:[#allocation4 + $0x270] sm:$0xff] %v1880
      %1925 = vst [vmem:[#allocation4 + $0x290] sm:$0xff] %v1882
      %1926 = vst [vmem:[#allocation4 + $0x2b0] sm:$0xff] %v1884
      %1927 = vst [vmem:[#allocation4 + $0x2d0] sm:$0xff] %v1886
      %1928 = vst [vmem:[#allocation4 + $0x2f0] sm:$0xff] %v1888
      %1929 = vst [vmem:[#allocation4 + $0x310] sm:$0xff] %v1890
      %1930 = vst [vmem:[#allocation4 + $0x330] sm:$0xff] %v1892
      %1931 = vst [vmem:[#allocation4 + $0x350] sm:$0xff] %v1894
      %1932 = vst [vmem:[#allocation4 + $0x370] sm:$0xff] %v1896
      %1933 = vst [vmem:[#allocation4 + $0x390] sm:$0xff] %v1898
      %1934 = vst [vmem:[#allocation4 + $0x3b0] sm:$0xff] %v1900
      %1935 = vst [vmem:[#allocation4 + $0x3d0] sm:$0xff] %v1902
      %1936 = vst [vmem:[#allocation4 + $0x3f0] sm:$0xff] %v1904
      %s1937 = scalar_lea.vmem [#allocation2], 3
      %v1938 = vld [vmem:[%s1937] ss:$2 sm:$0xff]
      %s1939 = scalar_lea.vmem [#allocation2], 51
      %v1940 = vld [vmem:[%s1939] ss:$2 sm:$0xff]
      %s1941 = scalar_lea.vmem [#allocation2], 99
      %v1942 = vld [vmem:[%s1941] ss:$2 sm:$0xff]
      %s1943 = scalar_lea.vmem [#allocation2], 147
      %v1944 = vld [vmem:[%s1943] ss:$2 sm:$0xff]
      %s1945 = scalar_lea.vmem [#allocation2], 195
      %v1946 = vld [vmem:[%s1945] ss:$2 sm:$0xff]
      %s1947 = scalar_lea.vmem [#allocation2], 243
      %v1948 = vld [vmem:[%s1947] ss:$2 sm:$0xff]
      %s1949 = scalar_lea.vmem [#allocation2], 291
      %v1950 = vld [vmem:[%s1949] ss:$2 sm:$0xff]
      %s1951 = scalar_lea.vmem [#allocation2], 339
      %v1952 = vld [vmem:[%s1951] ss:$2 sm:$0xff]
      %s1953 = scalar_lea.vmem [#allocation2], 435
      %v1954 = vld [vmem:[%s1953] ss:$2 sm:$0xff]
      %s1955 = scalar_lea.vmem [#allocation2], 483
      %v1956 = vld [vmem:[%s1955] ss:$2 sm:$0xff]
      %s1957 = scalar_lea.vmem [#allocation2], 531
      %v1958 = vld [vmem:[%s1957] ss:$2 sm:$0xff]
      %s1959 = scalar_lea.vmem [#allocation2], 579
      %v1960 = vld [vmem:[%s1959] ss:$2 sm:$0xff]
      %s1961 = scalar_lea.vmem [#allocation2], 627
      %v1962 = vld [vmem:[%s1961] ss:$2 sm:$0xff]
      %s1963 = scalar_lea.vmem [#allocation2], 675
      %v1964 = vld [vmem:[%s1963] ss:$2 sm:$0xff]
      %s1965 = scalar_lea.vmem [#allocation2], 723
      %v1966 = vld [vmem:[%s1965] ss:$2 sm:$0xff]
      %s1967 = scalar_lea.vmem [#allocation2], 771
      %v1968 = vld [vmem:[%s1967] ss:$2 sm:$0xff]
      %s1969 = scalar_lea.vmem [#allocation2], 867
      %v1970 = vld [vmem:[%s1969] ss:$2 sm:$0xff]
      %s1971 = scalar_lea.vmem [#allocation2], 915
      %v1972 = vld [vmem:[%s1971] ss:$2 sm:$0xff]
      %s1973 = scalar_lea.vmem [#allocation2], 963
      %v1974 = vld [vmem:[%s1973] ss:$2 sm:$0xff]
      %s1975 = scalar_lea.vmem [#allocation2], 1011
      %v1976 = vld [vmem:[%s1975] ss:$2 sm:$0xff]
      %s1977 = scalar_lea.vmem [#allocation2], 1059
      %v1978 = vld [vmem:[%s1977] ss:$2 sm:$0xff]
      %s1979 = scalar_lea.vmem [#allocation2], 1107
      %v1980 = vld [vmem:[%s1979] ss:$2 sm:$0xff]
      %s1981 = scalar_lea.vmem [#allocation2], 1155
      %v1982 = vld [vmem:[%s1981] ss:$2 sm:$0xff]
      %s1983 = scalar_lea.vmem [#allocation2], 1203
      %v1984 = vld [vmem:[%s1983] ss:$2 sm:$0xff]
      %s1985 = scalar_lea.vmem [#allocation2], 1299
      %v1986 = vld [vmem:[%s1985] ss:$2 sm:$0xff]
      %s1987 = scalar_lea.vmem [#allocation2], 1347
      %v1988 = vld [vmem:[%s1987] ss:$2 sm:$0xff]
      %s1989 = scalar_lea.vmem [#allocation2], 1395
      %v1990 = vld [vmem:[%s1989] ss:$2 sm:$0xff]
      %s1991 = scalar_lea.vmem [#allocation2], 1443
      %v1992 = vld [vmem:[%s1991] ss:$2 sm:$0xff]
      %s1993 = scalar_lea.vmem [#allocation2], 1491
      %v1994 = vld [vmem:[%s1993] ss:$2 sm:$0xff]
      %s1995 = scalar_lea.vmem [#allocation2], 1539
      %v1996 = vld [vmem:[%s1995] ss:$2 sm:$0xff]
      %s1997 = scalar_lea.vmem [#allocation2], 1587
      %v1998 = vld [vmem:[%s1997] ss:$2 sm:$0xff]
      %s1999 = scalar_lea.vmem [#allocation2], 1635
      %v2000 = vld [vmem:[%s1999] ss:$2 sm:$0xff]
      %2001 = vst [vmem:[#allocation4 + $0x18] sm:$0xff] %v1938
      %2002 = vst [vmem:[#allocation4 + $0x38] sm:$0xff] %v1940
      %2003 = vst [vmem:[#allocation4 + $0x58] sm:$0xff] %v1942
      %2004 = vst [vmem:[#allocation4 + $0x78] sm:$0xff] %v1944
      %2005 = vst [vmem:[#allocation4 + $0x98] sm:$0xff] %v1946
      %2006 = vst [vmem:[#allocation4 + $0xb8] sm:$0xff] %v1948
      %2007 = vst [vmem:[#allocation4 + $0xd8] sm:$0xff] %v1950
      %2008 = vst [vmem:[#allocation4 + $0xf8] sm:$0xff] %v1952
      %2009 = vst [vmem:[#allocation4 + $0x118] sm:$0xff] %v1954
      %2010 = vst [vmem:[#allocation4 + $0x138] sm:$0xff] %v1956
      %2011 = vst [vmem:[#allocation4 + $0x158] sm:$0xff] %v1958
      %2012 = vst [vmem:[#allocation4 + $0x178] sm:$0xff] %v1960
      %2013 = vst [vmem:[#allocation4 + $0x198] sm:$0xff] %v1962
      %2014 = vst [vmem:[#allocation4 + $0x1b8] sm:$0xff] %v1964
      %2015 = vst [vmem:[#allocation4 + $0x1d8] sm:$0xff] %v1966
      %2016 = vst [vmem:[#allocation4 + $0x1f8] sm:$0xff] %v1968
      %2017 = vst [vmem:[#allocation4 + $0x218] sm:$0xff] %v1970
      %2018 = vst [vmem:[#allocation4 + $0x238] sm:$0xff] %v1972
      %2019 = vst [vmem:[#allocation4 + $0x258] sm:$0xff] %v1974
      %2020 = vst [vmem:[#allocation4 + $0x278] sm:$0xff] %v1976
      %2021 = vst [vmem:[#allocation4 + $0x298] sm:$0xff] %v1978
      %2022 = vst [vmem:[#allocation4 + $0x2b8] sm:$0xff] %v1980
      %2023 = vst [vmem:[#allocation4 + $0x2d8] sm:$0xff] %v1982
      %2024 = vst [vmem:[#allocation4 + $0x2f8] sm:$0xff] %v1984
      %2025 = vst [vmem:[#allocation4 + $0x318] sm:$0xff] %v1986
      %2026 = vst [vmem:[#allocation4 + $0x338] sm:$0xff] %v1988
      %2027 = vst [vmem:[#allocation4 + $0x358] sm:$0xff] %v1990
      %2028 = vst [vmem:[#allocation4 + $0x378] sm:$0xff] %v1992
      %2029 = vst [vmem:[#allocation4 + $0x398] sm:$0xff] %v1994
      %2030 = vst [vmem:[#allocation4 + $0x3b8] sm:$0xff] %v1996
      %2031 = vst [vmem:[#allocation4 + $0x3d8] sm:$0xff] %v1998
      %2032 = vst [vmem:[#allocation4 + $0x3f8] sm:$0xff] %v2000
      %v2033 = vld [vmem:[#allocation4] sm:$0xff]
      %v2034 = vld [vmem:[#allocation4 + $0x8] sm:$0xff]
      %v2035 = vld [vmem:[#allocation4 + $0x10] sm:$0xff]
      %v2036 = vld [vmem:[#allocation4 + $0x18] sm:$0xff]
      %v2037 = vld [vmem:[#allocation4 + $0x20] sm:$0xff]
      %v2038 = vld [vmem:[#allocation4 + $0x28] sm:$0xff]
      %v2039 = vld [vmem:[#allocation4 + $0x30] sm:$0xff]
      %v2040 = vld [vmem:[#allocation4 + $0x38] sm:$0xff]
      %v2041 = vld [vmem:[#allocation4 + $0x40] sm:$0xff]
      %v2042 = vld [vmem:[#allocation4 + $0x48] sm:$0xff]
      %v2043 = vld [vmem:[#allocation4 + $0x50] sm:$0xff]
      %v2044 = vld [vmem:[#allocation4 + $0x58] sm:$0xff]
      %v2045 = vld [vmem:[#allocation4 + $0x60] sm:$0xff]
      %v2046 = vld [vmem:[#allocation4 + $0x68] sm:$0xff]
      %v2047 = vld [vmem:[#allocation4 + $0x70] sm:$0xff]
      %v2048 = vld [vmem:[#allocation4 + $0x78] sm:$0xff]
      %v2049 = vld [vmem:[#allocation4 + $0x80] sm:$0xff]
      %v2050 = vld [vmem:[#allocation4 + $0x88] sm:$0xff]
      %v2051 = vld [vmem:[#allocation4 + $0x90] sm:$0xff]
      %v2052 = vld [vmem:[#allocation4 + $0x98] sm:$0xff]
      %v2053 = vld [vmem:[#allocation4 + $0xa0] sm:$0xff]
      %v2054 = vld [vmem:[#allocation4 + $0xa8] sm:$0xff]
      %v2055 = vld [vmem:[#allocation4 + $0xb0] sm:$0xff]
      %v2056 = vld [vmem:[#allocation4 + $0xb8] sm:$0xff]
      %v2057 = vld [vmem:[#allocation4 + $0xc0] sm:$0xff]
      %v2058 = vld [vmem:[#allocation4 + $0xc8] sm:$0xff]
      %v2059 = vld [vmem:[#allocation4 + $0xd0] sm:$0xff]
      %v2060 = vld [vmem:[#allocation4 + $0xd8] sm:$0xff]
      %v2061 = vld [vmem:[#allocation4 + $0xe0] sm:$0xff]
      %v2062 = vld [vmem:[#allocation4 + $0xe8] sm:$0xff]
      %v2063 = vld [vmem:[#allocation4 + $0xf0] sm:$0xff]
      %v2064 = vld [vmem:[#allocation4 + $0xf8] sm:$0xff]
      %v2065 = vld [vmem:[#allocation4 + $0x100] sm:$0xff]
      %v2066 = vld [vmem:[#allocation4 + $0x108] sm:$0xff]
      %v2067 = vld [vmem:[#allocation4 + $0x110] sm:$0xff]
      %v2068 = vld [vmem:[#allocation4 + $0x118] sm:$0xff]
      %v2069 = vld [vmem:[#allocation4 + $0x120] sm:$0xff]
      %v2070 = vld [vmem:[#allocation4 + $0x128] sm:$0xff]
      %v2071 = vld [vmem:[#allocation4 + $0x130] sm:$0xff]
      %v2072 = vld [vmem:[#allocation4 + $0x138] sm:$0xff]
      %v2073 = vld [vmem:[#allocation4 + $0x140] sm:$0xff]
      %v2074 = vld [vmem:[#allocation4 + $0x148] sm:$0xff]
      %v2075 = vld [vmem:[#allocation4 + $0x150] sm:$0xff]
      %v2076 = vld [vmem:[#allocation4 + $0x158] sm:$0xff]
      %v2077 = vld [vmem:[#allocation4 + $0x160] sm:$0xff]
      %v2078 = vld [vmem:[#allocation4 + $0x168] sm:$0xff]
      %v2079 = vld [vmem:[#allocation4 + $0x170] sm:$0xff]
      %v2080 = vld [vmem:[#allocation4 + $0x178] sm:$0xff]
      %v2081 = vld [vmem:[#allocation4 + $0x180] sm:$0xff]
      %v2082 = vld [vmem:[#allocation4 + $0x188] sm:$0xff]
      %v2083 = vld [vmem:[#allocation4 + $0x190] sm:$0xff]
      %v2084 = vld [vmem:[#allocation4 + $0x198] sm:$0xff]
      %v2085 = vld [vmem:[#allocation4 + $0x1a0] sm:$0xff]
      %v2086 = vld [vmem:[#allocation4 + $0x1a8] sm:$0xff]
      %v2087 = vld [vmem:[#allocation4 + $0x1b0] sm:$0xff]
      %v2088 = vld [vmem:[#allocation4 + $0x1b8] sm:$0xff]
      %v2089 = vld [vmem:[#allocation4 + $0x1c0] sm:$0xff]
      %v2090 = vld [vmem:[#allocation4 + $0x1c8] sm:$0xff]
      %v2091 = vld [vmem:[#allocation4 + $0x1d0] sm:$0xff]
      %v2092 = vld [vmem:[#allocation4 + $0x1d8] sm:$0xff]
      %v2093 = vld [vmem:[#allocation4 + $0x1e0] sm:$0xff]
      %v2094 = vld [vmem:[#allocation4 + $0x1e8] sm:$0xff]
      %v2095 = vld [vmem:[#allocation4 + $0x1f0] sm:$0xff]
      %v2096 = vld [vmem:[#allocation4 + $0x1f8] sm:$0xff]
      %v2097 = vld [vmem:[#allocation4 + $0x200] sm:$0xff]
      %v2098 = vld [vmem:[#allocation4 + $0x208] sm:$0xff]
      %v2099 = vld [vmem:[#allocation4 + $0x210] sm:$0xff]
      %v2100 = vld [vmem:[#allocation4 + $0x218] sm:$0xff]
      %v2101 = vld [vmem:[#allocation4 + $0x220] sm:$0xff]
      %v2102 = vld [vmem:[#allocation4 + $0x228] sm:$0xff]
      %v2103 = vld [vmem:[#allocation4 + $0x230] sm:$0xff]
      %v2104 = vld [vmem:[#allocation4 + $0x238] sm:$0xff]
      %v2105 = vld [vmem:[#allocation4 + $0x240] sm:$0xff]
      %v2106 = vld [vmem:[#allocation4 + $0x248] sm:$0xff]
      %v2107 = vld [vmem:[#allocation4 + $0x250] sm:$0xff]
      %v2108 = vld [vmem:[#allocation4 + $0x258] sm:$0xff]
      %v2109 = vld [vmem:[#allocation4 + $0x260] sm:$0xff]
      %v2110 = vld [vmem:[#allocation4 + $0x268] sm:$0xff]
      %v2111 = vld [vmem:[#allocation4 + $0x270] sm:$0xff]
      %v2112 = vld [vmem:[#allocation4 + $0x278] sm:$0xff]
      %v2113 = vld [vmem:[#allocation4 + $0x280] sm:$0xff]
      %v2114 = vld [vmem:[#allocation4 + $0x288] sm:$0xff]
      %v2115 = vld [vmem:[#allocation4 + $0x290] sm:$0xff]
      %v2116 = vld [vmem:[#allocation4 + $0x298] sm:$0xff]
      %v2117 = vld [vmem:[#allocation4 + $0x2a0] sm:$0xff]
      %v2118 = vld [vmem:[#allocation4 + $0x2a8] sm:$0xff]
      %v2119 = vld [vmem:[#allocation4 + $0x2b0] sm:$0xff]
      %v2120 = vld [vmem:[#allocation4 + $0x2b8] sm:$0xff]
      %v2121 = vld [vmem:[#allocation4 + $0x2c0] sm:$0xff]
      %v2122 = vld [vmem:[#allocation4 + $0x2c8] sm:$0xff]
      %v2123 = vld [vmem:[#allocation4 + $0x2d0] sm:$0xff]
      %v2124 = vld [vmem:[#allocation4 + $0x2d8] sm:$0xff]
      %v2125 = vld [vmem:[#allocation4 + $0x2e0] sm:$0xff]
      %v2126 = vld [vmem:[#allocation4 + $0x2e8] sm:$0xff]
      %v2127 = vld [vmem:[#allocation4 + $0x2f0] sm:$0xff]
      %v2128 = vld [vmem:[#allocation4 + $0x2f8] sm:$0xff]
      %v2129 = vld [vmem:[#allocation4 + $0x300] sm:$0xff]
      %v2130 = vld [vmem:[#allocation4 + $0x308] sm:$0xff]
      %v2131 = vld [vmem:[#allocation4 + $0x310] sm:$0xff]
      %v2132 = vld [vmem:[#allocation4 + $0x318] sm:$0xff]
      %v2133 = vld [vmem:[#allocation4 + $0x320] sm:$0xff]
      %v2134 = vld [vmem:[#allocation4 + $0x328] sm:$0xff]
      %v2135 = vld [vmem:[#allocation4 + $0x330] sm:$0xff]
      %v2136 = vld [vmem:[#allocation4 + $0x338] sm:$0xff]
      %v2137 = vld [vmem:[#allocation4 + $0x340] sm:$0xff]
      %v2138 = vld [vmem:[#allocation4 + $0x348] sm:$0xff]
      %v2139 = vld [vmem:[#allocation4 + $0x350] sm:$0xff]
      %v2140 = vld [vmem:[#allocation4 + $0x358] sm:$0xff]
      %v2141 = vld [vmem:[#allocation4 + $0x360] sm:$0xff]
      %v2142 = vld [vmem:[#allocation4 + $0x368] sm:$0xff]
      %v2143 = vld [vmem:[#allocation4 + $0x370] sm:$0xff]
      %v2144 = vld [vmem:[#allocation4 + $0x378] sm:$0xff]
      %v2145 = vld [vmem:[#allocation4 + $0x380] sm:$0xff]
      %v2146 = vld [vmem:[#allocation4 + $0x388] sm:$0xff]
      %v2147 = vld [vmem:[#allocation4 + $0x390] sm:$0xff]
      %v2148 = vld [vmem:[#allocation4 + $0x398] sm:$0xff]
      %v2149 = vld [vmem:[#allocation4 + $0x3a0] sm:$0xff]
      %v2150 = vld [vmem:[#allocation4 + $0x3a8] sm:$0xff]
      %v2151 = vld [vmem:[#allocation4 + $0x3b0] sm:$0xff]
      %v2152 = vld [vmem:[#allocation4 + $0x3b8] sm:$0xff]
      %v2153 = vld [vmem:[#allocation4 + $0x3c0] sm:$0xff]
      %v2154 = vld [vmem:[#allocation4 + $0x3c8] sm:$0xff]
      %v2155 = vld [vmem:[#allocation4 + $0x3d0] sm:$0xff]
      %v2156 = vld [vmem:[#allocation4 + $0x3d8] sm:$0xff]
      %v2157 = vld [vmem:[#allocation4 + $0x3e0] sm:$0xff]
      %v2158 = vld [vmem:[#allocation4 + $0x3e8] sm:$0xff]
      %v2159 = vld [vmem:[#allocation4 + $0x3f0] sm:$0xff]
      %v2160 = vld [vmem:[#allocation4 + $0x3f8] sm:$0xff]
      %v2161 = vld [vmem:[%s3] sm:$0xff]
      %v2162 = vld [vmem:[%s3 + $0x8] sm:$0xff]
      %v2163 = vld [vmem:[%s3 + $0x10] sm:$0xff]
      %v2164 = vld [vmem:[%s3 + $0x18] sm:$0xff]
      %v2165 = vld [vmem:[%s3 + $0x20] sm:$0xff]
      %v2166 = vld [vmem:[%s3 + $0x28] sm:$0xff]
      %v2167 = vld [vmem:[%s3 + $0x30] sm:$0xff]
      %v2168 = vld [vmem:[%s3 + $0x38] sm:$0xff]
      %v2169 = vld [vmem:[%s3 + $0x40] sm:$0xff]
      %v2170 = vld [vmem:[%s3 + $0x48] sm:$0xff]
      %v2171 = vld [vmem:[%s3 + $0x50] sm:$0xff]
      %v2172 = vld [vmem:[%s3 + $0x58] sm:$0xff]
      %v2173 = vld [vmem:[%s3 + $0x60] sm:$0xff]
      %v2174 = vld [vmem:[%s3 + $0x68] sm:$0xff]
      %v2175 = vld [vmem:[%s3 + $0x70] sm:$0xff]
      %v2176 = vld [vmem:[%s3 + $0x78] sm:$0xff]
      %v2177 = vld [vmem:[%s3 + $0x80] sm:$0xff]
      %v2178 = vld [vmem:[%s3 + $0x88] sm:$0xff]
      %v2179 = vld [vmem:[%s3 + $0x90] sm:$0xff]
      %v2180 = vld [vmem:[%s3 + $0x98] sm:$0xff]
      %v2181 = vld [vmem:[%s3 + $0xa0] sm:$0xff]
      %v2182 = vld [vmem:[%s3 + $0xa8] sm:$0xff]
      %v2183 = vld [vmem:[%s3 + $0xb0] sm:$0xff]
      %v2184 = vld [vmem:[%s3 + $0xb8] sm:$0xff]
      %v2185 = vld [vmem:[%s3 + $0xc0] sm:$0xff]
      %v2186 = vld [vmem:[%s3 + $0xc8] sm:$0xff]
      %v2187 = vld [vmem:[%s3 + $0xd0] sm:$0xff]
      %v2188 = vld [vmem:[%s3 + $0xd8] sm:$0xff]
      %v2189 = vld [vmem:[%s3 + $0xe0] sm:$0xff]
      %v2190 = vld [vmem:[%s3 + $0xe8] sm:$0xff]
      %v2191 = vld [vmem:[%s3 + $0xf0] sm:$0xff]
      %v2192 = vld [vmem:[%s3 + $0xf8] sm:$0xff]
      %v2193 = vld [vmem:[%s3 + $0x100] sm:$0xff]
      %v2194 = vld [vmem:[%s3 + $0x108] sm:$0xff]
      %v2195 = vld [vmem:[%s3 + $0x110] sm:$0xff]
      %v2196 = vld [vmem:[%s3 + $0x118] sm:$0xff]
      %v2197 = vld [vmem:[%s3 + $0x120] sm:$0xff]
      %v2198 = vld [vmem:[%s3 + $0x128] sm:$0xff]
      %v2199 = vld [vmem:[%s3 + $0x130] sm:$0xff]
      %v2200 = vld [vmem:[%s3 + $0x138] sm:$0xff]
      %v2201 = vld [vmem:[%s3 + $0x140] sm:$0xff]
      %v2202 = vld [vmem:[%s3 + $0x148] sm:$0xff]
      %v2203 = vld [vmem:[%s3 + $0x150] sm:$0xff]
      %v2204 = vld [vmem:[%s3 + $0x158] sm:$0xff]
      %v2205 = vld [vmem:[%s3 + $0x160] sm:$0xff]
      %v2206 = vld [vmem:[%s3 + $0x168] sm:$0xff]
      %v2207 = vld [vmem:[%s3 + $0x170] sm:$0xff]
      %v2208 = vld [vmem:[%s3 + $0x178] sm:$0xff]
      %v2209 = vld [vmem:[%s3 + $0x180] sm:$0xff]
      %v2210 = vld [vmem:[%s3 + $0x188] sm:$0xff]
      %v2211 = vld [vmem:[%s3 + $0x190] sm:$0xff]
      %v2212 = vld [vmem:[%s3 + $0x198] sm:$0xff]
      %v2213 = vld [vmem:[%s3 + $0x1a0] sm:$0xff]
      %v2214 = vld [vmem:[%s3 + $0x1a8] sm:$0xff]
      %v2215 = vld [vmem:[%s3 + $0x1b0] sm:$0xff]
      %v2216 = vld [vmem:[%s3 + $0x1b8] sm:$0xff]
      %v2217 = vld [vmem:[%s3 + $0x1c0] sm:$0xff]
      %v2218 = vld [vmem:[%s3 + $0x1c8] sm:$0xff]
      %v2219 = vld [vmem:[%s3 + $0x1d0] sm:$0xff]
      %v2220 = vld [vmem:[%s3 + $0x1d8] sm:$0xff]
      %v2221 = vld [vmem:[%s3 + $0x1e0] sm:$0xff]
      %v2222 = vld [vmem:[%s3 + $0x1e8] sm:$0xff]
      %v2223 = vld [vmem:[%s3 + $0x1f0] sm:$0xff]
      %v2224 = vld [vmem:[%s3 + $0x1f8] sm:$0xff]
      %s2225 = scalar_lea.vmem [#allocation2], 24
      %v2226 = vld [vmem:[%s2225] ss:$2 sm:$0xff]
      %s2227 = scalar_lea.vmem %s2225, 48 [#allocation2]
      %v2228 = vld [vmem:[%s2227] ss:$2 sm:$0xff]
      %s2229 = scalar_lea.vmem %s2225, 96 [#allocation2]
      %v2230 = vld [vmem:[%s2229] ss:$2 sm:$0xff]
      %s2231 = scalar_lea.vmem %s2225, 144 [#allocation2]
      %v2232 = vld [vmem:[%s2231] ss:$2 sm:$0xff]
      %s2233 = scalar_lea.vmem %s2225, 192 [#allocation2]
      %v2234 = vld [vmem:[%s2233] ss:$2 sm:$0xff]
      %s2235 = scalar_lea.vmem %s2225, 240 [#allocation2]
      %v2236 = vld [vmem:[%s2235] ss:$2 sm:$0xff]
      %s2237 = scalar_lea.vmem %s2225, 288 [#allocation2]
      %v2238 = vld [vmem:[%s2237] ss:$2 sm:$0xff]
      %s2239 = scalar_lea.vmem %s2225, 336 [#allocation2]
      %v2240 = vld [vmem:[%s2239] ss:$2 sm:$0xff]
      %s2241 = scalar_lea.vmem %s2225, 432 [#allocation2]
      %v2242 = vld [vmem:[%s2241] ss:$2 sm:$0xff]
      %s2243 = scalar_lea.vmem %s2225, 480 [#allocation2]
      %v2244 = vld [vmem:[%s2243] ss:$2 sm:$0xff]
      %s2245 = scalar_lea.vmem %s2225, 528 [#allocation2]
      %v2246 = vld [vmem:[%s2245] ss:$2 sm:$0xff]
      %s2247 = scalar_lea.vmem %s2225, 576 [#allocation2]
      %v2248 = vld [vmem:[%s2247] ss:$2 sm:$0xff]
      %s2249 = scalar_lea.vmem %s2225, 624 [#allocation2]
      %v2250 = vld [vmem:[%s2249] ss:$2 sm:$0xff]
      %s2251 = scalar_lea.vmem %s2225, 672 [#allocation2]
      %v2252 = vld [vmem:[%s2251] ss:$2 sm:$0xff]
      %s2253 = scalar_lea.vmem %s2225, 720 [#allocation2]
      %v2254 = vld [vmem:[%s2253] ss:$2 sm:$0xff]
      %s2255 = scalar_lea.vmem %s2225, 768 [#allocation2]
      %v2256 = vld [vmem:[%s2255] ss:$2 sm:$0xff]
      %s2257 = scalar_lea.vmem %s2225, 864 [#allocation2]
      %v2258 = vld [vmem:[%s2257] ss:$2 sm:$0xff]
      %s2259 = scalar_lea.vmem %s2225, 912 [#allocation2]
      %v2260 = vld [vmem:[%s2259] ss:$2 sm:$0xff]
      %s2261 = scalar_lea.vmem %s2225, 960 [#allocation2]
      %v2262 = vld [vmem:[%s2261] ss:$2 sm:$0xff]
      %s2263 = scalar_lea.vmem %s2225, 1008 [#allocation2]
      %v2264 = vld [vmem:[%s2263] ss:$2 sm:$0xff]
      %s2265 = scalar_lea.vmem %s2225, 1056 [#allocation2]
      %v2266 = vld [vmem:[%s2265] ss:$2 sm:$0xff]
      %s2267 = scalar_lea.vmem %s2225, 1104 [#allocation2]
      %v2268 = vld [vmem:[%s2267] ss:$2 sm:$0xff]
      %s2269 = scalar_lea.vmem %s2225, 1152 [#allocation2]
      %v2270 = vld [vmem:[%s2269] ss:$2 sm:$0xff]
      %s2271 = scalar_lea.vmem %s2225, 1200 [#allocation2]
      %v2272 = vld [vmem:[%s2271] ss:$2 sm:$0xff]
      %s2273 = scalar_lea.vmem %s2225, 1296 [#allocation2]
      %v2274 = vld [vmem:[%s2273] ss:$2 sm:$0xff]
      %s2275 = scalar_lea.vmem %s2225, 1344 [#allocation2]
      %v2276 = vld [vmem:[%s2275] ss:$2 sm:$0xff]
      %s2277 = scalar_lea.vmem %s2225, 1392 [#allocation2]
      %v2278 = vld [vmem:[%s2277] ss:$2 sm:$0xff]
      %s2279 = scalar_lea.vmem %s2225, 1440 [#allocation2]
      %v2280 = vld [vmem:[%s2279] ss:$2 sm:$0xff]
      %s2281 = scalar_lea.vmem %s2225, 1488 [#allocation2]
      %v2282 = vld [vmem:[%s2281] ss:$2 sm:$0xff]
      %s2283 = scalar_lea.vmem %s2225, 1536 [#allocation2]
      %v2284 = vld [vmem:[%s2283] ss:$2 sm:$0xff]
      %s2285 = scalar_lea.vmem %s2225, 1584 [#allocation2]
      %v2286 = vld [vmem:[%s2285] ss:$2 sm:$0xff]
      %s2287 = scalar_lea.vmem %s2225, 1632 [#allocation2]
      %v2288 = vld [vmem:[%s2287] ss:$2 sm:$0xff]
      %2289 = vst [vmem:[#allocation4] sm:$0xff] %v2226
      %2290 = vst [vmem:[#allocation4 + $0x20] sm:$0xff] %v2228
      %2291 = vst [vmem:[#allocation4 + $0x40] sm:$0xff] %v2230
      %2292 = vst [vmem:[#allocation4 + $0x60] sm:$0xff] %v2232
      %2293 = vst [vmem:[#allocation4 + $0x80] sm:$0xff] %v2234
      %2294 = vst [vmem:[#allocation4 + $0xa0] sm:$0xff] %v2236
      %2295 = vst [vmem:[#allocation4 + $0xc0] sm:$0xff] %v2238
      %2296 = vst [vmem:[#allocation4 + $0xe0] sm:$0xff] %v2240
      %2297 = vst [vmem:[#allocation4 + $0x100] sm:$0xff] %v2242
      %2298 = vst [vmem:[#allocation4 + $0x120] sm:$0xff] %v2244
      %2299 = vst [vmem:[#allocation4 + $0x140] sm:$0xff] %v2246
      %2300 = vst [vmem:[#allocation4 + $0x160] sm:$0xff] %v2248
      %2301 = vst [vmem:[#allocation4 + $0x180] sm:$0xff] %v2250
      %2302 = vst [vmem:[#allocation4 + $0x1a0] sm:$0xff] %v2252
      %2303 = vst [vmem:[#allocation4 + $0x1c0] sm:$0xff] %v2254
      %2304 = vst [vmem:[#allocation4 + $0x1e0] sm:$0xff] %v2256
      %2305 = vst [vmem:[#allocation4 + $0x200] sm:$0xff] %v2258
      %2306 = vst [vmem:[#allocation4 + $0x220] sm:$0xff] %v2260
      %2307 = vst [vmem:[#allocation4 + $0x240] sm:$0xff] %v2262
      %2308 = vst [vmem:[#allocation4 + $0x260] sm:$0xff] %v2264
      %2309 = vst [vmem:[#allocation4 + $0x280] sm:$0xff] %v2266
      %2310 = vst [vmem:[#allocation4 + $0x2a0] sm:$0xff] %v2268
      %2311 = vst [vmem:[#allocation4 + $0x2c0] sm:$0xff] %v2270
      %2312 = vst [vmem:[#allocation4 + $0x2e0] sm:$0xff] %v2272
      %2313 = vst [vmem:[#allocation4 + $0x300] sm:$0xff] %v2274
      %2314 = vst [vmem:[#allocation4 + $0x320] sm:$0xff] %v2276
      %2315 = vst [vmem:[#allocation4 + $0x340] sm:$0xff] %v2278
      %2316 = vst [vmem:[#allocation4 + $0x360] sm:$0xff] %v2280
      %2317 = vst [vmem:[#allocation4 + $0x380] sm:$0xff] %v2282
      %2318 = vst [vmem:[#allocation4 + $0x3a0] sm:$0xff] %v2284
      %2319 = vst [vmem:[#allocation4 + $0x3c0] sm:$0xff] %v2286
      %2320 = vst [vmem:[#allocation4 + $0x3e0] sm:$0xff] %v2288
      %s2321 = scalar_lea.vmem %s2225, 1 [#allocation2]
      %v2322 = vld [vmem:[%s2321] ss:$2 sm:$0xff]
      %s2323 = scalar_lea.vmem %s2225, 49 [#allocation2]
      %v2324 = vld [vmem:[%s2323] ss:$2 sm:$0xff]
      %s2325 = scalar_lea.vmem %s2225, 97 [#allocation2]
      %v2326 = vld [vmem:[%s2325] ss:$2 sm:$0xff]
      %s2327 = scalar_lea.vmem %s2225, 145 [#allocation2]
      %v2328 = vld [vmem:[%s2327] ss:$2 sm:$0xff]
      %s2329 = scalar_lea.vmem %s2225, 193 [#allocation2]
      %v2330 = vld [vmem:[%s2329] ss:$2 sm:$0xff]
      %s2331 = scalar_lea.vmem %s2225, 241 [#allocation2]
      %v2332 = vld [vmem:[%s2331] ss:$2 sm:$0xff]
      %s2333 = scalar_lea.vmem %s2225, 289 [#allocation2]
      %v2334 = vld [vmem:[%s2333] ss:$2 sm:$0xff]
      %s2335 = scalar_lea.vmem %s2225, 337 [#allocation2]
      %v2336 = vld [vmem:[%s2335] ss:$2 sm:$0xff]
      %s2337 = scalar_lea.vmem %s2225, 433 [#allocation2]
      %v2338 = vld [vmem:[%s2337] ss:$2 sm:$0xff]
      %s2339 = scalar_lea.vmem %s2225, 481 [#allocation2]
      %v2340 = vld [vmem:[%s2339] ss:$2 sm:$0xff]
      %s2341 = scalar_lea.vmem %s2225, 529 [#allocation2]
      %v2342 = vld [vmem:[%s2341] ss:$2 sm:$0xff]
      %s2343 = scalar_lea.vmem %s2225, 577 [#allocation2]
      %v2344 = vld [vmem:[%s2343] ss:$2 sm:$0xff]
      %s2345 = scalar_lea.vmem %s2225, 625 [#allocation2]
      %v2346 = vld [vmem:[%s2345] ss:$2 sm:$0xff]
      %s2347 = scalar_lea.vmem %s2225, 673 [#allocation2]
      %v2348 = vld [vmem:[%s2347] ss:$2 sm:$0xff]
      %s2349 = scalar_lea.vmem %s2225, 721 [#allocation2]
      %v2350 = vld [vmem:[%s2349] ss:$2 sm:$0xff]
      %s2351 = scalar_lea.vmem %s2225, 769 [#allocation2]
      %v2352 = vld [vmem:[%s2351] ss:$2 sm:$0xff]
      %s2353 = scalar_lea.vmem %s2225, 865 [#allocation2]
      %v2354 = vld [vmem:[%s2353] ss:$2 sm:$0xff]
      %s2355 = scalar_lea.vmem %s2225, 913 [#allocation2]
      %v2356 = vld [vmem:[%s2355] ss:$2 sm:$0xff]
      %s2357 = scalar_lea.vmem %s2225, 961 [#allocation2]
      %v2358 = vld [vmem:[%s2357] ss:$2 sm:$0xff]
      %s2359 = scalar_lea.vmem %s2225, 1009 [#allocation2]
      %v2360 = vld [vmem:[%s2359] ss:$2 sm:$0xff]
      %s2361 = scalar_lea.vmem %s2225, 1057 [#allocation2]
      %v2362 = vld [vmem:[%s2361] ss:$2 sm:$0xff]
      %s2363 = scalar_lea.vmem %s2225, 1105 [#allocation2]
      %v2364 = vld [vmem:[%s2363] ss:$2 sm:$0xff]
      %s2365 = scalar_lea.vmem %s2225, 1153 [#allocation2]
      %v2366 = vld [vmem:[%s2365] ss:$2 sm:$0xff]
      %s2367 = scalar_lea.vmem %s2225, 1201 [#allocation2]
      %v2368 = vld [vmem:[%s2367] ss:$2 sm:$0xff]
      %s2369 = scalar_lea.vmem %s2225, 1297 [#allocation2]
      %v2370 = vld [vmem:[%s2369] ss:$2 sm:$0xff]
      %s2371 = scalar_lea.vmem %s2225, 1345 [#allocation2]
      %v2372 = vld [vmem:[%s2371] ss:$2 sm:$0xff]
      %s2373 = scalar_lea.vmem %s2225, 1393 [#allocation2]
      %v2374 = vld [vmem:[%s2373] ss:$2 sm:$0xff]
      %s2375 = scalar_lea.vmem %s2225, 1441 [#allocation2]
      %v2376 = vld [vmem:[%s2375] ss:$2 sm:$0xff]
      %s2377 = scalar_lea.vmem %s2225, 1489 [#allocation2]
      %v2378 = vld [vmem:[%s2377] ss:$2 sm:$0xff]
      %s2379 = scalar_lea.vmem %s2225, 1537 [#allocation2]
      %v2380 = vld [vmem:[%s2379] ss:$2 sm:$0xff]
      %s2381 = scalar_lea.vmem %s2225, 1585 [#allocation2]
      %v2382 = vld [vmem:[%s2381] ss:$2 sm:$0xff]
      %s2383 = scalar_lea.vmem %s2225, 1633 [#allocation2]
      %v2384 = vld [vmem:[%s2383] ss:$2 sm:$0xff]
      %2385 = vst [vmem:[#allocation4 + $0x8] sm:$0xff] %v2322
      %2386 = vst [vmem:[#allocation4 + $0x28] sm:$0xff] %v2324
      %2387 = vst [vmem:[#allocation4 + $0x48] sm:$0xff] %v2326
      %2388 = vst [vmem:[#allocation4 + $0x68] sm:$0xff] %v2328
      %2389 = vst [vmem:[#allocation4 + $0x88] sm:$0xff] %v2330
      %2390 = vst [vmem:[#allocation4 + $0xa8] sm:$0xff] %v2332
      %2391 = vst [vmem:[#allocation4 + $0xc8] sm:$0xff] %v2334
      %2392 = vst [vmem:[#allocation4 + $0xe8] sm:$0xff] %v2336
      %2393 = vst [vmem:[#allocation4 + $0x108] sm:$0xff] %v2338
      %2394 = vst [vmem:[#allocation4 + $0x128] sm:$0xff] %v2340
      %2395 = vst [vmem:[#allocation4 + $0x148] sm:$0xff] %v2342
      %2396 = vst [vmem:[#allocation4 + $0x168] sm:$0xff] %v2344
      %2397 = vst [vmem:[#allocation4 + $0x188] sm:$0xff] %v2346
      %2398 = vst [vmem:[#allocation4 + $0x1a8] sm:$0xff] %v2348
      %2399 = vst [vmem:[#allocation4 + $0x1c8] sm:$0xff] %v2350
      %2400 = vst [vmem:[#allocation4 + $0x1e8] sm:$0xff] %v2352
      %2401 = vst [vmem:[#allocation4 + $0x208] sm:$0xff] %v2354
      %2402 = vst [vmem:[#allocation4 + $0x228] sm:$0xff] %v2356
      %2403 = vst [vmem:[#allocation4 + $0x248] sm:$0xff] %v2358
      %2404 = vst [vmem:[#allocation4 + $0x268] sm:$0xff] %v2360
      %2405 = vst [vmem:[#allocation4 + $0x288] sm:$0xff] %v2362
      %2406 = vst [vmem:[#allocation4 + $0x2a8] sm:$0xff] %v2364
      %2407 = vst [vmem:[#allocation4 + $0x2c8] sm:$0xff] %v2366
      %2408 = vst [vmem:[#allocation4 + $0x2e8] sm:$0xff] %v2368
      %2409 = vst [vmem:[#allocation4 + $0x308] sm:$0xff] %v2370
      %2410 = vst [vmem:[#allocation4 + $0x328] sm:$0xff] %v2372
      %2411 = vst [vmem:[#allocation4 + $0x348] sm:$0xff] %v2374
      %2412 = vst [vmem:[#allocation4 + $0x368] sm:$0xff] %v2376
      %2413 = vst [vmem:[#allocation4 + $0x388] sm:$0xff] %v2378
      %2414 = vst [vmem:[#allocation4 + $0x3a8] sm:$0xff] %v2380
      %2415 = vst [vmem:[#allocation4 + $0x3c8] sm:$0xff] %v2382
      %2416 = vst [vmem:[#allocation4 + $0x3e8] sm:$0xff] %v2384
      %s2417 = scalar_lea.vmem %s2225, 2 [#allocation2]
      %v2418 = vld [vmem:[%s2417] ss:$2 sm:$0xff]
      %s2419 = scalar_lea.vmem %s2225, 50 [#allocation2]
      %v2420 = vld [vmem:[%s2419] ss:$2 sm:$0xff]
      %s2421 = scalar_lea.vmem %s2225, 98 [#allocation2]
      %v2422 = vld [vmem:[%s2421] ss:$2 sm:$0xff]
      %s2423 = scalar_lea.vmem %s2225, 146 [#allocation2]
      %v2424 = vld [vmem:[%s2423] ss:$2 sm:$0xff]
      %s2425 = scalar_lea.vmem %s2225, 194 [#allocation2]
      %v2426 = vld [vmem:[%s2425] ss:$2 sm:$0xff]
      %s2427 = scalar_lea.vmem %s2225, 242 [#allocation2]
      %v2428 = vld [vmem:[%s2427] ss:$2 sm:$0xff]
      %s2429 = scalar_lea.vmem %s2225, 290 [#allocation2]
      %v2430 = vld [vmem:[%s2429] ss:$2 sm:$0xff]
      %s2431 = scalar_lea.vmem %s2225, 338 [#allocation2]
      %v2432 = vld [vmem:[%s2431] ss:$2 sm:$0xff]
      %s2433 = scalar_lea.vmem %s2225, 434 [#allocation2]
      %v2434 = vld [vmem:[%s2433] ss:$2 sm:$0xff]
      %s2435 = scalar_lea.vmem %s2225, 482 [#allocation2]
      %v2436 = vld [vmem:[%s2435] ss:$2 sm:$0xff]
      %s2437 = scalar_lea.vmem %s2225, 530 [#allocation2]
      %v2438 = vld [vmem:[%s2437] ss:$2 sm:$0xff]
      %s2439 = scalar_lea.vmem %s2225, 578 [#allocation2]
      %v2440 = vld [vmem:[%s2439] ss:$2 sm:$0xff]
      %s2441 = scalar_lea.vmem %s2225, 626 [#allocation2]
      %v2442 = vld [vmem:[%s2441] ss:$2 sm:$0xff]
      %s2443 = scalar_lea.vmem %s2225, 674 [#allocation2]
      %v2444 = vld [vmem:[%s2443] ss:$2 sm:$0xff]
      %s2445 = scalar_lea.vmem %s2225, 722 [#allocation2]
      %v2446 = vld [vmem:[%s2445] ss:$2 sm:$0xff]
      %s2447 = scalar_lea.vmem %s2225, 770 [#allocation2]
      %v2448 = vld [vmem:[%s2447] ss:$2 sm:$0xff]
      %s2449 = scalar_lea.vmem %s2225, 866 [#allocation2]
      %v2450 = vld [vmem:[%s2449] ss:$2 sm:$0xff]
      %s2451 = scalar_lea.vmem %s2225, 914 [#allocation2]
      %v2452 = vld [vmem:[%s2451] ss:$2 sm:$0xff]
      %s2453 = scalar_lea.vmem %s2225, 962 [#allocation2]
      %v2454 = vld [vmem:[%s2453] ss:$2 sm:$0xff]
      %s2455 = scalar_lea.vmem %s2225, 1010 [#allocation2]
      %v2456 = vld [vmem:[%s2455] ss:$2 sm:$0xff]
      %s2457 = scalar_lea.vmem %s2225, 1058 [#allocation2]
      %v2458 = vld [vmem:[%s2457] ss:$2 sm:$0xff]
      %s2459 = scalar_lea.vmem %s2225, 1106 [#allocation2]
      %v2460 = vld [vmem:[%s2459] ss:$2 sm:$0xff]
      %s2461 = scalar_lea.vmem %s2225, 1154 [#allocation2]
      %v2462 = vld [vmem:[%s2461] ss:$2 sm:$0xff]
      %s2463 = scalar_lea.vmem %s2225, 1202 [#allocation2]
      %v2464 = vld [vmem:[%s2463] ss:$2 sm:$0xff]
      %s2465 = scalar_lea.vmem %s2225, 1298 [#allocation2]
      %v2466 = vld [vmem:[%s2465] ss:$2 sm:$0xff]
      %s2467 = scalar_lea.vmem %s2225, 1346 [#allocation2]
      %v2468 = vld [vmem:[%s2467] ss:$2 sm:$0xff]
      %s2469 = scalar_lea.vmem %s2225, 1394 [#allocation2]
      %v2470 = vld [vmem:[%s2469] ss:$2 sm:$0xff]
      %s2471 = scalar_lea.vmem %s2225, 1442 [#allocation2]
      %v2472 = vld [vmem:[%s2471] ss:$2 sm:$0xff]
      %s2473 = scalar_lea.vmem %s2225, 1490 [#allocation2]
      %v2474 = vld [vmem:[%s2473] ss:$2 sm:$0xff]
      %s2475 = scalar_lea.vmem %s2225, 1538 [#allocation2]
      %v2476 = vld [vmem:[%s2475] ss:$2 sm:$0xff]
      %s2477 = scalar_lea.vmem %s2225, 1586 [#allocation2]
      %v2478 = vld [vmem:[%s2477] ss:$2 sm:$0xff]
      %s2479 = scalar_lea.vmem %s2225, 1634 [#allocation2]
      %v2480 = vld [vmem:[%s2479] ss:$2 sm:$0xff]
      %2481 = vst [vmem:[#allocation4 + $0x10] sm:$0xff] %v2418
      %2482 = vst [vmem:[#allocation4 + $0x30] sm:$0xff] %v2420
      %2483 = vst [vmem:[#allocation4 + $0x50] sm:$0xff] %v2422
      %2484 = vst [vmem:[#allocation4 + $0x70] sm:$0xff] %v2424
      %2485 = vst [vmem:[#allocation4 + $0x90] sm:$0xff] %v2426
      %2486 = vst [vmem:[#allocation4 + $0xb0] sm:$0xff] %v2428
      %2487 = vst [vmem:[#allocation4 + $0xd0] sm:$0xff] %v2430
      %2488 = vst [vmem:[#allocation4 + $0xf0] sm:$0xff] %v2432
      %2489 = vst [vmem:[#allocation4 + $0x110] sm:$0xff] %v2434
      %2490 = vst [vmem:[#allocation4 + $0x130] sm:$0xff] %v2436
      %2491 = vst [vmem:[#allocation4 + $0x150] sm:$0xff] %v2438
      %2492 = vst [vmem:[#allocation4 + $0x170] sm:$0xff] %v2440
      %2493 = vst [vmem:[#allocation4 + $0x190] sm:$0xff] %v2442
      %2494 = vst [vmem:[#allocation4 + $0x1b0] sm:$0xff] %v2444
      %2495 = vst [vmem:[#allocation4 + $0x1d0] sm:$0xff] %v2446
      %2496 = vst [vmem:[#allocation4 + $0x1f0] sm:$0xff] %v2448
      %2497 = vst [vmem:[#allocation4 + $0x210] sm:$0xff] %v2450
      %2498 = vst [vmem:[#allocation4 + $0x230] sm:$0xff] %v2452
      %2499 = vst [vmem:[#allocation4 + $0x250] sm:$0xff] %v2454
      %2500 = vst [vmem:[#allocation4 + $0x270] sm:$0xff] %v2456
      %2501 = vst [vmem:[#allocation4 + $0x290] sm:$0xff] %v2458
      %2502 = vst [vmem:[#allocation4 + $0x2b0] sm:$0xff] %v2460
      %2503 = vst [vmem:[#allocation4 + $0x2d0] sm:$0xff] %v2462
      %2504 = vst [vmem:[#allocation4 + $0x2f0] sm:$0xff] %v2464
      %2505 = vst [vmem:[#allocation4 + $0x310] sm:$0xff] %v2466
      %2506 = vst [vmem:[#allocation4 + $0x330] sm:$0xff] %v2468
      %2507 = vst [vmem:[#allocation4 + $0x350] sm:$0xff] %v2470
      %2508 = vst [vmem:[#allocation4 + $0x370] sm:$0xff] %v2472
      %2509 = vst [vmem:[#allocation4 + $0x390] sm:$0xff] %v2474
      %2510 = vst [vmem:[#allocation4 + $0x3b0] sm:$0xff] %v2476
      %2511 = vst [vmem:[#allocation4 + $0x3d0] sm:$0xff] %v2478
      %2512 = vst [vmem:[#allocation4 + $0x3f0] sm:$0xff] %v2480
      %s2513 = scalar_lea.vmem %s2225, 3 [#allocation2]
      %v2514 = vld [vmem:[%s2513] ss:$2 sm:$0xff]
      %s2515 = scalar_lea.vmem %s2225, 51 [#allocation2]
      %v2516 = vld [vmem:[%s2515] ss:$2 sm:$0xff]
      %s2517 = scalar_lea.vmem %s2225, 99 [#allocation2]
      %v2518 = vld [vmem:[%s2517] ss:$2 sm:$0xff]
      %s2519 = scalar_lea.vmem %s2225, 147 [#allocation2]
      %v2520 = vld [vmem:[%s2519] ss:$2 sm:$0xff]
      %s2521 = scalar_lea.vmem %s2225, 195 [#allocation2]
      %v2522 = vld [vmem:[%s2521] ss:$2 sm:$0xff]
      %s2523 = scalar_lea.vmem %s2225, 243 [#allocation2]
      %v2524 = vld [vmem:[%s2523] ss:$2 sm:$0xff]
      %s2525 = scalar_lea.vmem %s2225, 291 [#allocation2]
      %v2526 = vld [vmem:[%s2525] ss:$2 sm:$0xff]
      %s2527 = scalar_lea.vmem %s2225, 339 [#allocation2]
      %v2528 = vld [vmem:[%s2527] ss:$2 sm:$0xff]
      %s2529 = scalar_lea.vmem %s2225, 435 [#allocation2]
      %v2530 = vld [vmem:[%s2529] ss:$2 sm:$0xff]
      %s2531 = scalar_lea.vmem %s2225, 483 [#allocation2]
      %v2532 = vld [vmem:[%s2531] ss:$2 sm:$0xff]
      %s2533 = scalar_lea.vmem %s2225, 531 [#allocation2]
      %v2534 = vld [vmem:[%s2533] ss:$2 sm:$0xff]
      %s2535 = scalar_lea.vmem %s2225, 579 [#allocation2]
      %v2536 = vld [vmem:[%s2535] ss:$2 sm:$0xff]
      %s2537 = scalar_lea.vmem %s2225, 627 [#allocation2]
      %v2538 = vld [vmem:[%s2537] ss:$2 sm:$0xff]
      %s2539 = scalar_lea.vmem %s2225, 675 [#allocation2]
      %v2540 = vld [vmem:[%s2539] ss:$2 sm:$0xff]
      %s2541 = scalar_lea.vmem %s2225, 723 [#allocation2]
      %v2542 = vld [vmem:[%s2541] ss:$2 sm:$0xff]
      %s2543 = scalar_lea.vmem %s2225, 771 [#allocation2]
      %v2544 = vld [vmem:[%s2543] ss:$2 sm:$0xff]
      %s2545 = scalar_lea.vmem %s2225, 867 [#allocation2]
      %v2546 = vld [vmem:[%s2545] ss:$2 sm:$0xff]
      %s2547 = scalar_lea.vmem %s2225, 915 [#allocation2]
      %v2548 = vld [vmem:[%s2547] ss:$2 sm:$0xff]
      %s2549 = scalar_lea.vmem %s2225, 963 [#allocation2]
      %v2550 = vld [vmem:[%s2549] ss:$2 sm:$0xff]
      %s2551 = scalar_lea.vmem %s2225, 1011 [#allocation2]
      %v2552 = vld [vmem:[%s2551] ss:$2 sm:$0xff]
      %s2553 = scalar_lea.vmem %s2225, 1059 [#allocation2]
      %v2554 = vld [vmem:[%s2553] ss:$2 sm:$0xff]
      %s2555 = scalar_lea.vmem %s2225, 1107 [#allocation2]
      %v2556 = vld [vmem:[%s2555] ss:$2 sm:$0xff]
      %s2557 = scalar_lea.vmem %s2225, 1155 [#allocation2]
      %v2558 = vld [vmem:[%s2557] ss:$2 sm:$0xff]
      %s2559 = scalar_lea.vmem %s2225, 1203 [#allocation2]
      %v2560 = vld [vmem:[%s2559] ss:$2 sm:$0xff]
      %s2561 = scalar_lea.vmem %s2225, 1299 [#allocation2]
      %v2562 = vld [vmem:[%s2561] ss:$2 sm:$0xff]
      %s2563 = scalar_lea.vmem %s2225, 1347 [#allocation2]
      %v2564 = vld [vmem:[%s2563] ss:$2 sm:$0xff]
      %s2565 = scalar_lea.vmem %s2225, 1395 [#allocation2]
      %v2566 = vld [vmem:[%s2565] ss:$2 sm:$0xff]
      %s2567 = scalar_lea.vmem %s2225, 1443 [#allocation2]
      %v2568 = vld [vmem:[%s2567] ss:$2 sm:$0xff]
      %s2569 = scalar_lea.vmem %s2225, 1491 [#allocation2]
      %v2570 = vld [vmem:[%s2569] ss:$2 sm:$0xff]
      %s2571 = scalar_lea.vmem %s2225, 1539 [#allocation2]
      %v2572 = vld [vmem:[%s2571] ss:$2 sm:$0xff]
      %s2573 = scalar_lea.vmem %s2225, 1587 [#allocation2]
      %v2574 = vld [vmem:[%s2573] ss:$2 sm:$0xff]
      %s2575 = scalar_lea.vmem %s2225, 1635 [#allocation2]
      %v2576 = vld [vmem:[%s2575] ss:$2 sm:$0xff]
      %2577 = vst [vmem:[#allocation4 + $0x18] sm:$0xff] %v2514
      %2578 = vst [vmem:[#allocation4 + $0x38] sm:$0xff] %v2516
      %2579 = vst [vmem:[#allocation4 + $0x58] sm:$0xff] %v2518
      %2580 = vst [vmem:[#allocation4 + $0x78] sm:$0xff] %v2520
      %2581 = vst [vmem:[#allocation4 + $0x98] sm:$0xff] %v2522
      %2582 = vst [vmem:[#allocation4 + $0xb8] sm:$0xff] %v2524
      %2583 = vst [vmem:[#allocation4 + $0xd8] sm:$0xff] %v2526
      %2584 = vst [vmem:[#allocation4 + $0xf8] sm:$0xff] %v2528
      %2585 = vst [vmem:[#allocation4 + $0x118] sm:$0xff] %v2530
      %2586 = vst [vmem:[#allocation4 + $0x138] sm:$0xff] %v2532
      %2587 = vst [vmem:[#allocation4 + $0x158] sm:$0xff] %v2534
      %2588 = vst [vmem:[#allocation4 + $0x178] sm:$0xff] %v2536
      %2589 = vst [vmem:[#allocation4 + $0x198] sm:$0xff] %v2538
      %2590 = vst [vmem:[#allocation4 + $0x1b8] sm:$0xff] %v2540
      %2591 = vst [vmem:[#allocation4 + $0x1d8] sm:$0xff] %v2542
      %2592 = vst [vmem:[#allocation4 + $0x1f8] sm:$0xff] %v2544
      %2593 = vst [vmem:[#allocation4 + $0x218] sm:$0xff] %v2546
      %2594 = vst [vmem:[#allocation4 + $0x238] sm:$0xff] %v2548
      %2595 = vst [vmem:[#allocation4 + $0x258] sm:$0xff] %v2550
      %2596 = vst [vmem:[#allocation4 + $0x278] sm:$0xff] %v2552
      %2597 = vst [vmem:[#allocation4 + $0x298] sm:$0xff] %v2554
      %2598 = vst [vmem:[#allocation4 + $0x2b8] sm:$0xff] %v2556
      %2599 = vst [vmem:[#allocation4 + $0x2d8] sm:$0xff] %v2558
      %2600 = vst [vmem:[#allocation4 + $0x2f8] sm:$0xff] %v2560
      %2601 = vst [vmem:[#allocation4 + $0x318] sm:$0xff] %v2562
      %2602 = vst [vmem:[#allocation4 + $0x338] sm:$0xff] %v2564
      %2603 = vst [vmem:[#allocation4 + $0x358] sm:$0xff] %v2566
      %2604 = vst [vmem:[#allocation4 + $0x378] sm:$0xff] %v2568
      %2605 = vst [vmem:[#allocation4 + $0x398] sm:$0xff] %v2570
      %2606 = vst [vmem:[#allocation4 + $0x3b8] sm:$0xff] %v2572
      %2607 = vst [vmem:[#allocation4 + $0x3d8] sm:$0xff] %v2574
      %2608 = vst [vmem:[#allocation4 + $0x3f8] sm:$0xff] %v2576
      %v2609 = vld [vmem:[#allocation4] sm:$0xff]
      %v2610 = vld [vmem:[#allocation4 + $0x8] sm:$0xff]
      %v2611 = vld [vmem:[#allocation4 + $0x10] sm:$0xff]
      %v2612 = vld [vmem:[#allocation4 + $0x18] sm:$0xff]
      %v2613 = vld [vmem:[#allocation4 + $0x20] sm:$0xff]
      %v2614 = vld [vmem:[#allocation4 + $0x28] sm:$0xff]
      %v2615 = vld [vmem:[#allocation4 + $0x30] sm:$0xff]
      %v2616 = vld [vmem:[#allocation4 + $0x38] sm:$0xff]
      %v2617 = vld [vmem:[#allocation4 + $0x40] sm:$0xff]
      %v2618 = vld [vmem:[#allocation4 + $0x48] sm:$0xff]
      %v2619 = vld [vmem:[#allocation4 + $0x50] sm:$0xff]
      %v2620 = vld [vmem:[#allocation4 + $0x58] sm:$0xff]
      %v2621 = vld [vmem:[#allocation4 + $0x60] sm:$0xff]
      %v2622 = vld [vmem:[#allocation4 + $0x68] sm:$0xff]
      %v2623 = vld [vmem:[#allocation4 + $0x70] sm:$0xff]
      %v2624 = vld [vmem:[#allocation4 + $0x78] sm:$0xff]
      %v2625 = vld [vmem:[#allocation4 + $0x80] sm:$0xff]
      %v2626 = vld [vmem:[#allocation4 + $0x88] sm:$0xff]
      %v2627 = vld [vmem:[#allocation4 + $0x90] sm:$0xff]
      %v2628 = vld [vmem:[#allocation4 + $0x98] sm:$0xff]
      %v2629 = vld [vmem:[#allocation4 + $0xa0] sm:$0xff]
      %v2630 = vld [vmem:[#allocation4 + $0xa8] sm:$0xff]
      %v2631 = vld [vmem:[#allocation4 + $0xb0] sm:$0xff]
      %v2632 = vld [vmem:[#allocation4 + $0xb8] sm:$0xff]
      %v2633 = vld [vmem:[#allocation4 + $0xc0] sm:$0xff]
      %v2634 = vld [vmem:[#allocation4 + $0xc8] sm:$0xff]
      %v2635 = vld [vmem:[#allocation4 + $0xd0] sm:$0xff]
      %v2636 = vld [vmem:[#allocation4 + $0xd8] sm:$0xff]
      %v2637 = vld [vmem:[#allocation4 + $0xe0] sm:$0xff]
      %v2638 = vld [vmem:[#allocation4 + $0xe8] sm:$0xff]
      %v2639 = vld [vmem:[#allocation4 + $0xf0] sm:$0xff]
      %v2640 = vld [vmem:[#allocation4 + $0xf8] sm:$0xff]
      %v2641 = vld [vmem:[#allocation4 + $0x100] sm:$0xff]
      %v2642 = vld [vmem:[#allocation4 + $0x108] sm:$0xff]
      %v2643 = vld [vmem:[#allocation4 + $0x110] sm:$0xff]
      %v2644 = vld [vmem:[#allocation4 + $0x118] sm:$0xff]
      %v2645 = vld [vmem:[#allocation4 + $0x120] sm:$0xff]
      %v2646 = vld [vmem:[#allocation4 + $0x128] sm:$0xff]
      %v2647 = vld [vmem:[#allocation4 + $0x130] sm:$0xff]
      %v2648 = vld [vmem:[#allocation4 + $0x138] sm:$0xff]
      %v2649 = vld [vmem:[#allocation4 + $0x140] sm:$0xff]
      %v2650 = vld [vmem:[#allocation4 + $0x148] sm:$0xff]
      %v2651 = vld [vmem:[#allocation4 + $0x150] sm:$0xff]
      %v2652 = vld [vmem:[#allocation4 + $0x158] sm:$0xff]
      %v2653 = vld [vmem:[#allocation4 + $0x160] sm:$0xff]
      %v2654 = vld [vmem:[#allocation4 + $0x168] sm:$0xff]
      %v2655 = vld [vmem:[#allocation4 + $0x170] sm:$0xff]
      %v2656 = vld [vmem:[#allocation4 + $0x178] sm:$0xff]
      %v2657 = vld [vmem:[#allocation4 + $0x180] sm:$0xff]
      %v2658 = vld [vmem:[#allocation4 + $0x188] sm:$0xff]
      %v2659 = vld [vmem:[#allocation4 + $0x190] sm:$0xff]
      %v2660 = vld [vmem:[#allocation4 + $0x198] sm:$0xff]
      %v2661 = vld [vmem:[#allocation4 + $0x1a0] sm:$0xff]
      %v2662 = vld [vmem:[#allocation4 + $0x1a8] sm:$0xff]
      %v2663 = vld [vmem:[#allocation4 + $0x1b0] sm:$0xff]
      %v2664 = vld [vmem:[#allocation4 + $0x1b8] sm:$0xff]
      %v2665 = vld [vmem:[#allocation4 + $0x1c0] sm:$0xff]
      %v2666 = vld [vmem:[#allocation4 + $0x1c8] sm:$0xff]
      %v2667 = vld [vmem:[#allocation4 + $0x1d0] sm:$0xff]
      %v2668 = vld [vmem:[#allocation4 + $0x1d8] sm:$0xff]
      %v2669 = vld [vmem:[#allocation4 + $0x1e0] sm:$0xff]
      %v2670 = vld [vmem:[#allocation4 + $0x1e8] sm:$0xff]
      %v2671 = vld [vmem:[#allocation4 + $0x1f0] sm:$0xff]
      %v2672 = vld [vmem:[#allocation4 + $0x1f8] sm:$0xff]
      %v2673 = vld [vmem:[#allocation4 + $0x200] sm:$0xff]
      %v2674 = vld [vmem:[#allocation4 + $0x208] sm:$0xff]
      %v2675 = vld [vmem:[#allocation4 + $0x210] sm:$0xff]
      %v2676 = vld [vmem:[#allocation4 + $0x218] sm:$0xff]
      %v2677 = vld [vmem:[#allocation4 + $0x220] sm:$0xff]
      %v2678 = vld [vmem:[#allocation4 + $0x228] sm:$0xff]
      %v2679 = vld [vmem:[#allocation4 + $0x230] sm:$0xff]
      %v2680 = vld [vmem:[#allocation4 + $0x238] sm:$0xff]
      %v2681 = vld [vmem:[#allocation4 + $0x240] sm:$0xff]
      %v2682 = vld [vmem:[#allocation4 + $0x248] sm:$0xff]
      %v2683 = vld [vmem:[#allocation4 + $0x250] sm:$0xff]
      %v2684 = vld [vmem:[#allocation4 + $0x258] sm:$0xff]
      %v2685 = vld [vmem:[#allocation4 + $0x260] sm:$0xff]
      %v2686 = vld [vmem:[#allocation4 + $0x268] sm:$0xff]
      %v2687 = vld [vmem:[#allocation4 + $0x270] sm:$0xff]
      %v2688 = vld [vmem:[#allocation4 + $0x278] sm:$0xff]
      %v2689 = vld [vmem:[#allocation4 + $0x280] sm:$0xff]
      %v2690 = vld [vmem:[#allocation4 + $0x288] sm:$0xff]
      %v2691 = vld [vmem:[#allocation4 + $0x290] sm:$0xff]
      %v2692 = vld [vmem:[#allocation4 + $0x298] sm:$0xff]
      %v2693 = vld [vmem:[#allocation4 + $0x2a0] sm:$0xff]
      %v2694 = vld [vmem:[#allocation4 + $0x2a8] sm:$0xff]
      %v2695 = vld [vmem:[#allocation4 + $0x2b0] sm:$0xff]
      %v2696 = vld [vmem:[#allocation4 + $0x2b8] sm:$0xff]
      %v2697 = vld [vmem:[#allocation4 + $0x2c0] sm:$0xff]
      %v2698 = vld [vmem:[#allocation4 + $0x2c8] sm:$0xff]
      %v2699 = vld [vmem:[#allocation4 + $0x2d0] sm:$0xff]
      %v2700 = vld [vmem:[#allocation4 + $0x2d8] sm:$0xff]
      %v2701 = vld [vmem:[#allocation4 + $0x2e0] sm:$0xff]
      %v2702 = vld [vmem:[#allocation4 + $0x2e8] sm:$0xff]
      %v2703 = vld [vmem:[#allocation4 + $0x2f0] sm:$0xff]
      %v2704 = vld [vmem:[#allocation4 + $0x2f8] sm:$0xff]
      %v2705 = vld [vmem:[#allocation4 + $0x300] sm:$0xff]
      %v2706 = vld [vmem:[#allocation4 + $0x308] sm:$0xff]
      %v2707 = vld [vmem:[#allocation4 + $0x310] sm:$0xff]
      %v2708 = vld [vmem:[#allocation4 + $0x318] sm:$0xff]
      %v2709 = vld [vmem:[#allocation4 + $0x320] sm:$0xff]
      %v2710 = vld [vmem:[#allocation4 + $0x328] sm:$0xff]
      %v2711 = vld [vmem:[#allocation4 + $0x330] sm:$0xff]
      %v2712 = vld [vmem:[#allocation4 + $0x338] sm:$0xff]
      %v2713 = vld [vmem:[#allocation4 + $0x340] sm:$0xff]
      %v2714 = vld [vmem:[#allocation4 + $0x348] sm:$0xff]
      %v2715 = vld [vmem:[#allocation4 + $0x350] sm:$0xff]
      %v2716 = vld [vmem:[#allocation4 + $0x358] sm:$0xff]
      %v2717 = vld [vmem:[#allocation4 + $0x360] sm:$0xff]
      %v2718 = vld [vmem:[#allocation4 + $0x368] sm:$0xff]
      %v2719 = vld [vmem:[#allocation4 + $0x370] sm:$0xff]
      %v2720 = vld [vmem:[#allocation4 + $0x378] sm:$0xff]
      %v2721 = vld [vmem:[#allocation4 + $0x380] sm:$0xff]
      %v2722 = vld [vmem:[#allocation4 + $0x388] sm:$0xff]
      %v2723 = vld [vmem:[#allocation4 + $0x390] sm:$0xff]
      %v2724 = vld [vmem:[#allocation4 + $0x398] sm:$0xff]
      %v2725 = vld [vmem:[#allocation4 + $0x3a0] sm:$0xff]
      %v2726 = vld [vmem:[#allocation4 + $0x3a8] sm:$0xff]
      %v2727 = vld [vmem:[#allocation4 + $0x3b0] sm:$0xff]
      %v2728 = vld [vmem:[#allocation4 + $0x3b8] sm:$0xff]
      %v2729 = vld [vmem:[#allocation4 + $0x3c0] sm:$0xff]
      %v2730 = vld [vmem:[#allocation4 + $0x3c8] sm:$0xff]
      %v2731 = vld [vmem:[#allocation4 + $0x3d0] sm:$0xff]
      %v2732 = vld [vmem:[#allocation4 + $0x3d8] sm:$0xff]
      %v2733 = vld [vmem:[#allocation4 + $0x3e0] sm:$0xff]
      %v2734 = vld [vmem:[#allocation4 + $0x3e8] sm:$0xff]
      %v2735 = vld [vmem:[#allocation4 + $0x3f0] sm:$0xff]
      %v2736 = vld [vmem:[#allocation4 + $0x3f8] sm:$0xff]
      %s2737 = scalar_lea.vmem %s3, 512
      %v2738 = vld [vmem:[%s2737] sm:$0xff]
      %v2739 = vld [vmem:[%s2737 + $0x8] sm:$0xff]
      %v2740 = vld [vmem:[%s2737 + $0x10] sm:$0xff]
      %v2741 = vld [vmem:[%s2737 + $0x18] sm:$0xff]
      %v2742 = vld [vmem:[%s2737 + $0x20] sm:$0xff]
      %v2743 = vld [vmem:[%s2737 + $0x28] sm:$0xff]
      %v2744 = vld [vmem:[%s2737 + $0x30] sm:$0xff]
      %v2745 = vld [vmem:[%s2737 + $0x38] sm:$0xff]
      %v2746 = vld [vmem:[%s2737 + $0x40] sm:$0xff]
      %v2747 = vld [vmem:[%s2737 + $0x48] sm:$0xff]
      %v2748 = vld [vmem:[%s2737 + $0x50] sm:$0xff]
      %v2749 = vld [vmem:[%s2737 + $0x58] sm:$0xff]
      %v2750 = vld [vmem:[%s2737 + $0x60] sm:$0xff]
      %v2751 = vld [vmem:[%s2737 + $0x68] sm:$0xff]
      %v2752 = vld [vmem:[%s2737 + $0x70] sm:$0xff]
      %v2753 = vld [vmem:[%s2737 + $0x78] sm:$0xff]
      %v2754 = vld [vmem:[%s2737 + $0x80] sm:$0xff]
      %v2755 = vld [vmem:[%s2737 + $0x88] sm:$0xff]
      %v2756 = vld [vmem:[%s2737 + $0x90] sm:$0xff]
      %v2757 = vld [vmem:[%s2737 + $0x98] sm:$0xff]
      %v2758 = vld [vmem:[%s2737 + $0xa0] sm:$0xff]
      %v2759 = vld [vmem:[%s2737 + $0xa8] sm:$0xff]
      %v2760 = vld [vmem:[%s2737 + $0xb0] sm:$0xff]
      %v2761 = vld [vmem:[%s2737 + $0xb8] sm:$0xff]
      %v2762 = vld [vmem:[%s2737 + $0xc0] sm:$0xff]
      %v2763 = vld [vmem:[%s2737 + $0xc8] sm:$0xff]
      %v2764 = vld [vmem:[%s2737 + $0xd0] sm:$0xff]
      %v2765 = vld [vmem:[%s2737 + $0xd8] sm:$0xff]
      %v2766 = vld [vmem:[%s2737 + $0xe0] sm:$0xff]
      %v2767 = vld [vmem:[%s2737 + $0xe8] sm:$0xff]
      %v2768 = vld [vmem:[%s2737 + $0xf0] sm:$0xff]
      %v2769 = vld [vmem:[%s2737 + $0xf8] sm:$0xff]
      %v2770 = vld [vmem:[%s2737 + $0x100] sm:$0xff]
      %v2771 = vld [vmem:[%s2737 + $0x108] sm:$0xff]
      %v2772 = vld [vmem:[%s2737 + $0x110] sm:$0xff]
      %v2773 = vld [vmem:[%s2737 + $0x118] sm:$0xff]
      %v2774 = vld [vmem:[%s2737 + $0x120] sm:$0xff]
      %v2775 = vld [vmem:[%s2737 + $0x128] sm:$0xff]
      %v2776 = vld [vmem:[%s2737 + $0x130] sm:$0xff]
      %v2777 = vld [vmem:[%s2737 + $0x138] sm:$0xff]
      %v2778 = vld [vmem:[%s2737 + $0x140] sm:$0xff]
      %v2779 = vld [vmem:[%s2737 + $0x148] sm:$0xff]
      %v2780 = vld [vmem:[%s2737 + $0x150] sm:$0xff]
      %v2781 = vld [vmem:[%s2737 + $0x158] sm:$0xff]
      %v2782 = vld [vmem:[%s2737 + $0x160] sm:$0xff]
      %v2783 = vld [vmem:[%s2737 + $0x168] sm:$0xff]
      %v2784 = vld [vmem:[%s2737 + $0x170] sm:$0xff]
      %v2785 = vld [vmem:[%s2737 + $0x178] sm:$0xff]
      %v2786 = vld [vmem:[%s2737 + $0x180] sm:$0xff]
      %v2787 = vld [vmem:[%s2737 + $0x188] sm:$0xff]
      %v2788 = vld [vmem:[%s2737 + $0x190] sm:$0xff]
      %v2789 = vld [vmem:[%s2737 + $0x198] sm:$0xff]
      %v2790 = vld [vmem:[%s2737 + $0x1a0] sm:$0xff]
      %v2791 = vld [vmem:[%s2737 + $0x1a8] sm:$0xff]
      %v2792 = vld [vmem:[%s2737 + $0x1b0] sm:$0xff]
      %v2793 = vld [vmem:[%s2737 + $0x1b8] sm:$0xff]
      %v2794 = vld [vmem:[%s2737 + $0x1c0] sm:$0xff]
      %v2795 = vld [vmem:[%s2737 + $0x1c8] sm:$0xff]
      %v2796 = vld [vmem:[%s2737 + $0x1d0] sm:$0xff]
      %v2797 = vld [vmem:[%s2737 + $0x1d8] sm:$0xff]
      %v2798 = vld [vmem:[%s2737 + $0x1e0] sm:$0xff]
      %v2799 = vld [vmem:[%s2737 + $0x1e8] sm:$0xff]
      %v2800 = vld [vmem:[%s2737 + $0x1f0] sm:$0xff]
      %v2801 = vld [vmem:[%s2737 + $0x1f8] sm:$0xff]
      %2802 = vmatprep.subr.mxu0 0.0
      %2803 = vmatpush1.msra.mxu0 %v2738
      %2804 = vmatprep.subr.mxu0 0.0
      %2805 = vmatpush1.msra.mxu0 %v2739
      %2806 = vmatprep.subr.mxu0 0.0
      %2807 = vmatpush1.msra.mxu0 %v2740
      %2808 = vmatprep.subr.mxu0 0.0
      %2809 = vmatpush1.msra.mxu0 %v2741
      %2810 = vmatprep.subr.mxu0 0.0
      %2811 = vmatpush1.msra.mxu0 %v2742
      %2812 = vmatprep.subr.mxu0 0.0
      %2813 = vmatpush1.msra.mxu0 %v2743
      %2814 = vmatprep.subr.mxu0 0.0
      %2815 = vmatpush1.msra.mxu0 %v2744
      %2816 = vmatprep.subr.mxu0 0.0
      %2817 = vmatpush1.msra.mxu0 %v2745
      %2818 = vmatprep.subr.mxu0 0.0
      %2819 = vmatpush1.msra.mxu0 %v2746
      %2820 = vmatprep.subr.mxu0 0.0
      %2821 = vmatpush1.msra.mxu0 %v2747
      %2822 = vmatprep.subr.mxu0 0.0
      %2823 = vmatpush1.msra.mxu0 %v2748
      %2824 = vmatprep.subr.mxu0 0.0
      %2825 = vmatpush1.msra.mxu0 %v2749
      %2826 = vmatprep.subr.mxu0 0.0
      %2827 = vmatpush1.msra.mxu0 %v2750
      %2828 = vmatprep.subr.mxu0 0.0
      %2829 = vmatpush1.msra.mxu0 %v2751
      %2830 = vmatprep.subr.mxu0 0.0
      %2831 = vmatpush1.msra.mxu0 %v2752
      %2832 = vmatprep.subr.mxu0 0.0
      %2833 = vmatpush1.msra.mxu0 %v2753
      %2834 = vmatprep.subr.mxu0 0.0
      %2835 = vmatpush1.msra.mxu0 %v2754
      %2836 = vmatprep.subr.mxu0 0.0
      %2837 = vmatpush1.msra.mxu0 %v2755
      %2838 = vmatprep.subr.mxu0 0.0
      %2839 = vmatpush1.msra.mxu0 %v2756
      %2840 = vmatprep.subr.mxu0 0.0
      %2841 = vmatpush1.msra.mxu0 %v2757
      %2842 = vmatprep.subr.mxu0 0.0
      %2843 = vmatpush1.msra.mxu0 %v2758
      %2844 = vmatprep.subr.mxu0 0.0
      %2845 = vmatpush1.msra.mxu0 %v2759
      %2846 = vmatprep.subr.mxu0 0.0
      %2847 = vmatpush1.msra.mxu0 %v2760
      %2848 = vmatprep.subr.mxu0 0.0
      %2849 = vmatpush1.msra.mxu0 %v2761
      %2850 = vmatprep.subr.mxu0 0.0
      %2851 = vmatpush1.msra.mxu0 %v2762
      %2852 = vmatprep.subr.mxu0 0.0
      %2853 = vmatpush1.msra.mxu0 %v2763
      %2854 = vmatprep.subr.mxu0 0.0
      %2855 = vmatpush1.msra.mxu0 %v2764
      %2856 = vmatprep.subr.mxu0 0.0
      %2857 = vmatpush1.msra.mxu0 %v2765
      %2858 = vmatprep.subr.mxu0 0.0
      %2859 = vmatpush1.msra.mxu0 %v2766
      %2860 = vmatprep.subr.mxu0 0.0
      %2861 = vmatpush1.msra.mxu0 %v2767
      %2862 = vmatprep.subr.mxu0 0.0
      %2863 = vmatpush1.msra.mxu0 %v2768
      %2864 = vmatprep.subr.mxu0 0.0
      %2865 = vmatpush1.msra.mxu0 %v2769
      %2866 = vmatprep.mubr.f32.mxu0 %v2610
      %2867 = vmatmul.mubr.f32.gmra.mrb[0].mxu0 %v2609
      %v2868 = vpop.f32.mrb[0].mxu0
      %v2869 = vadd.f32 0.0, %v2868
      %v2870 = vpop.f32.mrb[0].mxu0
      %2871 = vmatprep.mubr.f32.mxu0 %v2614
      %2872 = vmatmul.mubr.f32.gmra.mrb[0].mxu0 %v2613
      %v2873 = vpop.f32.mrb[0].mxu0
      %v2874 = vadd.f32 0.0, %v2873
      %v2875 = vpop.f32.mrb[0].mxu0
      %2876 = vmatprep.mubr.f32.mxu0 %v2618
      %2877 = vmatmul.mubr.f32.gmra.mrb[0].mxu0 %v2617
      %v2878 = vpop.f32.mrb[0].mxu0
      %v2879 = vadd.f32 0.0, %v2878
      %v2880 = vpop.f32.mrb[0].mxu0
      %2881 = vmatprep.mubr.f32.mxu0 %v2622
      %2882 = vmatmul.mubr.f32.gmra.mrb[0].mxu0 %v2621
      %v2883 = vpop.f32.mrb[0].mxu0
      %v2884 = vadd.f32 0.0, %v2883
      %v2885 = vpop.f32.mrb[0].mxu0
      %2886 = vmatprep.mubr.f32.mxu0 %v2626
      %2887 = vmatmul.mubr.f32.gmra.mrb[0].mxu0 %v2625
      %v2888 = vpop.f32.mrb[0].mxu0
      %v2889 = vadd.f32 0.0, %v2888
      %v2890 = vpop.f32.mrb[0].mxu0
      %2891 = vmatprep.mubr.f32.mxu0 %v2630
      %2892 = vmatmul.mubr.f32.gmra.mrb[0].mxu0 %v2629
      %v2893 = vpop.f32.mrb[0].mxu0
      %v2894 = vadd.f32 0.0, %v2893
      %v2895 = vpop.f32.mrb[0].mxu0
      %2896 = vmatprep.mubr.f32.mxu0 %v2634
      %2897 = vmatmul.mubr.f32.gmra.mrb[0].mxu0 %v2633
      %v2898 = vpop.f32.mrb[0].mxu0
      %v2899 = vadd.f32 0.0, %v2898
      %v2900 = vpop.f32.mrb[0].mxu0
      %2901 = vmatprep.mubr.f32.mxu0 %v2638
      %2902 = vmatmul.mubr.f32.gmra.mrb[0].mxu0 %v2637
      %v2903 = vpop.f32.mrb[0].mxu0
      %v2904 = vadd.f32 0.0, %v2903
      %v2905 = vpop.f32.mrb[0].mxu0
      %2906 = vmatprep.mubr.f32.mxu0 %v2642
      %2907 = vmatmul.mubr.f32.gmra.mrb[0].mxu0 %v2641
      %v2908 = vpop.f32.mrb[0].mxu0
      %v2909 = vadd.f32 0.0, %v2908
      %v2910 = vpop.f32.mrb[0].mxu0
      %2911 = vmatprep.mubr.f32.mxu0 %v2646
      %2912 = vmatmul.mubr.f32.gmra.mrb[0].mxu0 %v2645
      %v2913 = vpop.f32.mrb[0].mxu0
      %v2914 = vadd.f32 0.0, %v2913
      %v2915 = vpop.f32.mrb[0].mxu0
      %2916 = vmatprep.mubr.f32.mxu0 %v2650
      %2917 = vmatmul.mubr.f32.gmra.mrb[0].mxu0 %v2649
      %v2918 = vpop.f32.mrb[0].mxu0
      %v2919 = vadd.f32 0.0, %v2918
      %v2920 = vpop.f32.mrb[0].mxu0
      %2921 = vmatprep.mubr.f32.mxu0 %v2654
      %2922 = vmatmul.mubr.f32.gmra.mrb[0].mxu0 %v2653
      %v2923 = vpop.f32.mrb[0].mxu0
      %v2924 = vadd.f32 0.0, %v2923
      %v2925 = vpop.f32.mrb[0].mxu0
      %2926 = vmatprep.mubr.f32.mxu0 %v2658
      %2927 = vmatmul.mubr.f32.gmra.mrb[0].mxu0 %v2657
      %v2928 = vpop.f32.mrb[0].mxu0
      %v2929 = vadd.f32 0.0, %v2928
      %v2930 = vpop.f32.mrb[0].mxu0
      %2931 = vmatprep.mubr.f32.mxu0 %v2662
      %2932 = vmatmul.mubr.f32.gmra.mrb[0].mxu0 %v2661
      %v2933 = vpop.f32.mrb[0].mxu0
      %v2934 = vadd.f32 0.0, %v2933
      %v2935 = vpop.f32.mrb[0].mxu0
      %2936 = vmatprep.mubr.f32.mxu0 %v2666
      %2937 = vmatmul.mubr.f32.gmra.mrb[0].mxu0 %v2665
      %v2938 = vpop.f32.mrb[0].mxu0
      %v2939 = vadd.f32 0.0, %v2938
      %v2940 = vpop.f32.mrb[0].mxu0
      %2941 = vmatprep.mubr.f32.mxu0 %v2670
      %2942 = vmatmul.mubr.f32.gmra.mrb[0].mxu0 %v2669
      %v2943 = vpop.f32.mrb[0].mxu0
      %v2944 = vadd.f32 0.0, %v2943
      %v2945 = vpop.f32.mrb[0].mxu0
      %2946 = vmatprep.mubr.f32.mxu0 %v2674
      %2947 = vmatmul.mubr.f32.gmra.mrb[0].mxu0 %v2673
      %v2948 = vpop.f32.mrb[0].mxu0
      %v2949 = vadd.f32 0.0, %v2948
      %v2950 = vpop.f32.mrb[0].mxu0
      %2951 = vmatprep.mubr.f32.mxu0 %v2678
      %2952 = vmatmul.mubr.f32.gmra.mrb[0].mxu0 %v2677
      %v2953 = vpop.f32.mrb[0].mxu0
      %v2954 = vadd.f32 0.0, %v2953
      %v2955 = vpop.f32.mrb[0].mxu0
      %2956 = vmatprep.mubr.f32.mxu0 %v2682
      %2957 = vmatmul.mubr.f32.gmra.mrb[0].mxu0 %v2681
      %v2958 = vpop.f32.mrb[0].mxu0
      %v2959 = vadd.f32 0.0, %v2958
      %v2960 = vpop.f32.mrb[0].mxu0
      %2961 = vmatprep.mubr.f32.mxu0 %v2686
      %2962 = vmatmul.mubr.f32.gmra.mrb[0].mxu0 %v2685
      %v2963 = vpop.f32.mrb[0].mxu0
      %v2964 = vadd.f32 0.0, %v2963
      %v2965 = vpop.f32.mrb[0].mxu0
      %2966 = vmatprep.mubr.f32.mxu0 %v2690
      %2967 = vmatmul.mubr.f32.gmra.mrb[0].mxu0 %v2689
      %v2968 = vpop.f32.mrb[0].mxu0
      %v2969 = vadd.f32 0.0, %v2968
      %v2970 = vpop.f32.mrb[0].mxu0
      %2971 = vmatprep.mubr.f32.mxu0 %v2694
      %2972 = vmatmul.mubr.f32.gmra.mrb[0].mxu0 %v2693
      %v2973 = vpop.f32.mrb[0].mxu0
      %v2974 = vadd.f32 0.0, %v2973
      %v2975 = vpop.f32.mrb[0].mxu0
      %2976 = vmatprep.mubr.f32.mxu0 %v2698
      %2977 = vmatmul.mubr.f32.gmra.mrb[0].mxu0 %v2697
      %v2978 = vpop.f32.mrb[0].mxu0
      %v2979 = vadd.f32 0.0, %v2978
      %v2980 = vpop.f32.mrb[0].mxu0
      %2981 = vmatprep.mubr.f32.mxu0 %v2702
      %2982 = vmatmul.mubr.f32.gmra.mrb[0].mxu0 %v2701
      %v2983 = vpop.f32.mrb[0].mxu0
      %v2984 = vadd.f32 0.0, %v2983
      %v2985 = vpop.f32.mrb[0].mxu0
      %2986 = vmatprep.mubr.f32.mxu0 %v2706
      %2987 = vmatmul.mubr.f32.gmra.mrb[0].mxu0 %v2705
      %v2988 = vpop.f32.mrb[0].mxu0
      %v2989 = vadd.f32 0.0, %v2988
      %v2990 = vpop.f32.mrb[0].mxu0
      %2991 = vmatprep.mubr.f32.mxu0 %v2710
      %2992 = vmatmul.mubr.f32.gmra.mrb[0].mxu0 %v2709
      %v2993 = vpop.f32.mrb[0].mxu0
      %v2994 = vadd.f32 0.0, %v2993
      %v2995 = vpop.f32.mrb[0].mxu0
      %2996 = vmatprep.mubr.f32.mxu0 %v2714
      %2997 = vmatmul.mubr.f32.gmra.mrb[0].mxu0 %v2713
      %v2998 = vpop.f32.mrb[0].mxu0
      %v2999 = vadd.f32 0.0, %v2998
      %v3000 = vpop.f32.mrb[0].mxu0
      %3001 = vmatprep.mubr.f32.mxu0 %v2718
      %3002 = vmatmul.mubr.f32.gmra.mrb[0].mxu0 %v2717
      %v3003 = vpop.f32.mrb[0].mxu0
      %v3004 = vadd.f32 0.0, %v3003
      %v3005 = vpop.f32.mrb[0].mxu0
      %3006 = vmatprep.mubr.f32.mxu0 %v2722
      %3007 = vmatmul.mubr.f32.gmra.mrb[0].mxu0 %v2721
      %v3008 = vpop.f32.mrb[0].mxu0
      %v3009 = vadd.f32 0.0, %v3008
      %v3010 = vpop.f32.mrb[0].mxu0
      %3011 = vmatprep.mubr.f32.mxu0 %v2726
      %3012 = vmatmul.mubr.f32.gmra.mrb[0].mxu0 %v2725
      %v3013 = vpop.f32.mrb[0].mxu0
      %v3014 = vadd.f32 0.0, %v3013
      %v3015 = vpop.f32.mrb[0].mxu0
      %3016 = vmatprep.mubr.f32.mxu0 %v2730
      %3017 = vmatmul.mubr.f32.gmra.mrb[0].mxu0 %v2729
      %v3018 = vpop.f32.mrb[0].mxu0
      %v3019 = vadd.f32 0.0, %v3018
      %v3020 = vpop.f32.mrb[0].mxu0
      %3021 = vmatprep.mubr.f32.mxu0 %v2734
      %3022 = vmatmul.mubr.f32.gmra.mrb[0].mxu0 %v2733
      %v3023 = vpop.f32.mrb[0].mxu0
      %v3024 = vadd.f32 0.0, %v3023
      %v3025 = vpop.f32.mrb[0].mxu0
      %3026 = vdwg.mxu0
      %3027 = vmatprep.subr.mxu0 0.0
      %3028 = vmatpush1.msra.mxu0 %v2770
      %3029 = vmatprep.subr.mxu0 0.0
      %3030 = vmatpush1.msra.mxu0 %v2771
      %3031 = vmatprep.subr.mxu0 0.0
      %3032 = vmatpush1.msra.mxu0 %v2772
      %3033 = vmatprep.subr.mxu0 0.0
      %3034 = vmatpush1.msra.mxu0 %v2773
      %3035 = vmatprep.subr.mxu0 0.0
      %3036 = vmatpush1.msra.mxu0 %v2774
      %3037 = vmatprep.subr.mxu0 0.0
      %3038 = vmatpush1.msra.mxu0 %v2775
      %3039 = vmatprep.subr.mxu0 0.0
      %3040 = vmatpush1.msra.mxu0 %v2776
      %3041 = vmatprep.subr.mxu0 0.0
      %3042 = vmatpush1.msra.mxu0 %v2777
      %3043 = vmatprep.subr.mxu0 0.0
      %3044 = vmatpush1.msra.mxu0 %v2778
      %3045 = vmatprep.subr.mxu0 0.0
      %3046 = vmatpush1.msra.mxu0 %v2779
      %3047 = vmatprep.subr.mxu0 0.0
      %3048 = vmatpush1.msra.mxu0 %v2780
      %3049 = vmatprep.subr.mxu0 0.0
      %3050 = vmatpush1.msra.mxu0 %v2781
      %3051 = vmatprep.subr.mxu0 0.0
      %3052 = vmatpush1.msra.mxu0 %v2782
      %3053 = vmatprep.subr.mxu0 0.0
      %3054 = vmatpush1.msra.mxu0 %v2783
      %3055 = vmatprep.subr.mxu0 0.0
      %3056 = vmatpush1.msra.mxu0 %v2784
      %3057 = vmatprep.subr.mxu0 0.0
      %3058 = vmatpush1.msra.mxu0 %v2785
      %3059 = vmatprep.subr.mxu0 0.0
      %3060 = vmatpush1.msra.mxu0 %v2786
      %3061 = vmatprep.subr.mxu0 0.0
      %3062 = vmatpush1.msra.mxu0 %v2787
      %3063 = vmatprep.subr.mxu0 0.0
      %3064 = vmatpush1.msra.mxu0 %v2788
      %3065 = vmatprep.subr.mxu0 0.0
      %3066 = vmatpush1.msra.mxu0 %v2789
      %3067 = vmatprep.subr.mxu0 0.0
      %3068 = vmatpush1.msra.mxu0 %v2790
      %3069 = vmatprep.subr.mxu0 0.0
      %3070 = vmatpush1.msra.mxu0 %v2791
      %3071 = vmatprep.subr.mxu0 0.0
      %3072 = vmatpush1.msra.mxu0 %v2792
      %3073 = vmatprep.subr.mxu0 0.0
      %3074 = vmatpush1.msra.mxu0 %v2793
      %3075 = vmatprep.subr.mxu0 0.0
      %3076 = vmatpush1.msra.mxu0 %v2794
      %3077 = vmatprep.subr.mxu0 0.0
      %3078 = vmatpush1.msra.mxu0 %v2795
      %3079 = vmatprep.subr.mxu0 0.0
      %3080 = vmatpush1.msra.mxu0 %v2796
      %3081 = vmatprep.subr.mxu0 0.0
      %3082 = vmatpush1.msra.mxu0 %v2797
      %3083 = vmatprep.subr.mxu0 0.0
      %3084 = vmatpush1.msra.mxu0 %v2798
      %3085 = vmatprep.subr.mxu0 0.0
      %3086 = vmatpush1.msra.mxu0 %v2799
      %3087 = vmatprep.subr.mxu0 0.0
      %3088 = vmatpush1.msra.mxu0 %v2800
      %3089 = vmatprep.subr.mxu0 0.0
      %3090 = vmatpush1.msra.mxu0 %v2801
      %3091 = vmatprep.mubr.f32.mxu0 %v2612
      %3092 = vmatmul.mubr.f32.gmra.mrb[0].mxu0 %v2611
      %v3093 = vpop.f32.mrb[0].mxu0
      %v3094 = vadd.f32 %v2869, %v3093
      %v3095 = vpop.f32.mrb[0].mxu0
      %3096 = vmatprep.mubr.f32.mxu0 %v2616
      %3097 = vmatmul.mubr.f32.gmra.mrb[0].mxu0 %v2615
      %v3098 = vpop.f32.mrb[0].mxu0
      %v3099 = vadd.f32 %v2874, %v3098
      %v3100 = vpop.f32.mrb[0].mxu0
      %3101 = vmatprep.mubr.f32.mxu0 %v2620
      %3102 = vmatmul.mubr.f32.gmra.mrb[0].mxu0 %v2619
      %v3103 = vpop.f32.mrb[0].mxu0
      %v3104 = vadd.f32 %v2879, %v3103
      %v3105 = vpop.f32.mrb[0].mxu0
      %3106 = vmatprep.mubr.f32.mxu0 %v2624
      %3107 = vmatmul.mubr.f32.gmra.mrb[0].mxu0 %v2623
      %v3108 = vpop.f32.mrb[0].mxu0
      %v3109 = vadd.f32 %v2884, %v3108
      %v3110 = vpop.f32.mrb[0].mxu0
      %3111 = vmatprep.mubr.f32.mxu0 %v2628
      %3112 = vmatmul.mubr.f32.gmra.mrb[0].mxu0 %v2627
      %v3113 = vpop.f32.mrb[0].mxu0
      %v3114 = vadd.f32 %v2889, %v3113
      %v3115 = vpop.f32.mrb[0].mxu0
      %3116 = vmatprep.mubr.f32.mxu0 %v2632
      %3117 = vmatmul.mubr.f32.gmra.mrb[0].mxu0 %v2631
      %v3118 = vpop.f32.mrb[0].mxu0
      %v3119 = vadd.f32 %v2894, %v3118
      %v3120 = vpop.f32.mrb[0].mxu0
      %3121 = vmatprep.mubr.f32.mxu0 %v2636
      %3122 = vmatmul.mubr.f32.gmra.mrb[0].mxu0 %v2635
      %v3123 = vpop.f32.mrb[0].mxu0
      %v3124 = vadd.f32 %v2899, %v3123
      %v3125 = vpop.f32.mrb[0].mxu0
      %3126 = vmatprep.mubr.f32.mxu0 %v2640
      %3127 = vmatmul.mubr.f32.gmra.mrb[0].mxu0 %v2639
      %v3128 = vpop.f32.mrb[0].mxu0
      %v3129 = vadd.f32 %v2904, %v3128
      %v3130 = vpop.f32.mrb[0].mxu0
      %3131 = vmatprep.mubr.f32.mxu0 %v2644
      %3132 = vmatmul.mubr.f32.gmra.mrb[0].mxu0 %v2643
      %v3133 = vpop.f32.mrb[0].mxu0
      %v3134 = vadd.f32 %v2909, %v3133
      %v3135 = vpop.f32.mrb[0].mxu0
      %3136 = vmatprep.mubr.f32.mxu0 %v2648
      %3137 = vmatmul.mubr.f32.gmra.mrb[0].mxu0 %v2647
      %v3138 = vpop.f32.mrb[0].mxu0
      %v3139 = vadd.f32 %v2914, %v3138
      %v3140 = vpop.f32.mrb[0].mxu0
      %3141 = vmatprep.mubr.f32.mxu0 %v2652
      %3142 = vmatmul.mubr.f32.gmra.mrb[0].mxu0 %v2651
      %v3143 = vpop.f32.mrb[0].mxu0
      %v3144 = vadd.f32 %v2919, %v3143
      %v3145 = vpop.f32.mrb[0].mxu0
      %3146 = vmatprep.mubr.f32.mxu0 %v2656
      %3147 = vmatmul.mubr.f32.gmra.mrb[0].mxu0 %v2655
      %v3148 = vpop.f32.mrb[0].mxu0
      %v3149 = vadd.f32 %v2924, %v3148
      %v3150 = vpop.f32.mrb[0].mxu0
      %3151 = vmatprep.mubr.f32.mxu0 %v2660
      %3152 = vmatmul.mubr.f32.gmra.mrb[0].mxu0 %v2659
      %v3153 = vpop.f32.mrb[0].mxu0
      %v3154 = vadd.f32 %v2929, %v3153
      %v3155 = vpop.f32.mrb[0].mxu0
      %3156 = vmatprep.mubr.f32.mxu0 %v2664
      %3157 = vmatmul.mubr.f32.gmra.mrb[0].mxu0 %v2663
      %v3158 = vpop.f32.mrb[0].mxu0
      %v3159 = vadd.f32 %v2934, %v3158
      %v3160 = vpop.f32.mrb[0].mxu0
      %3161 = vmatprep.mubr.f32.mxu0 %v2668
      %3162 = vmatmul.mubr.f32.gmra.mrb[0].mxu0 %v2667
      %v3163 = vpop.f32.mrb[0].mxu0
      %v3164 = vadd.f32 %v2939, %v3163
      %v3165 = vpop.f32.mrb[0].mxu0
      %3166 = vmatprep.mubr.f32.mxu0 %v2672
      %3167 = vmatmul.mubr.f32.gmra.mrb[0].mxu0 %v2671
      %v3168 = vpop.f32.mrb[0].mxu0
      %v3169 = vadd.f32 %v2944, %v3168
      %v3170 = vpop.f32.mrb[0].mxu0
      %3171 = vmatprep.mubr.f32.mxu0 %v2676
      %3172 = vmatmul.mubr.f32.gmra.mrb[0].mxu0 %v2675
      %v3173 = vpop.f32.mrb[0].mxu0
      %v3174 = vadd.f32 %v2949, %v3173
      %v3175 = vpop.f32.mrb[0].mxu0
      %3176 = vmatprep.mubr.f32.mxu0 %v2680
      %3177 = vmatmul.mubr.f32.gmra.mrb[0].mxu0 %v2679
      %v3178 = vpop.f32.mrb[0].mxu0
      %v3179 = vadd.f32 %v2954, %v3178
      %v3180 = vpop.f32.mrb[0].mxu0
      %3181 = vmatprep.mubr.f32.mxu0 %v2684
      %3182 = vmatmul.mubr.f32.gmra.mrb[0].mxu0 %v2683
      %v3183 = vpop.f32.mrb[0].mxu0
      %v3184 = vadd.f32 %v2959, %v3183
      %v3185 = vpop.f32.mrb[0].mxu0
      %3186 = vmatprep.mubr.f32.mxu0 %v2688
      %3187 = vmatmul.mubr.f32.gmra.mrb[0].mxu0 %v2687
      %v3188 = vpop.f32.mrb[0].mxu0
      %v3189 = vadd.f32 %v2964, %v3188
      %v3190 = vpop.f32.mrb[0].mxu0
      %3191 = vmatprep.mubr.f32.mxu0 %v2692
      %3192 = vmatmul.mubr.f32.gmra.mrb[0].mxu0 %v2691
      %v3193 = vpop.f32.mrb[0].mxu0
      %v3194 = vadd.f32 %v2969, %v3193
      %v3195 = vpop.f32.mrb[0].mxu0
      %3196 = vmatprep.mubr.f32.mxu0 %v2696
      %3197 = vmatmul.mubr.f32.gmra.mrb[0].mxu0 %v2695
      %v3198 = vpop.f32.mrb[0].mxu0
      %v3199 = vadd.f32 %v2974, %v3198
      %v3200 = vpop.f32.mrb[0].mxu0
      %3201 = vmatprep.mubr.f32.mxu0 %v2700
      %3202 = vmatmul.mubr.f32.gmra.mrb[0].mxu0 %v2699
      %v3203 = vpop.f32.mrb[0].mxu0
      %v3204 = vadd.f32 %v2979, %v3203
      %v3205 = vpop.f32.mrb[0].mxu0
      %3206 = vmatprep.mubr.f32.mxu0 %v2704
      %3207 = vmatmul.mubr.f32.gmra.mrb[0].mxu0 %v2703
      %v3208 = vpop.f32.mrb[0].mxu0
      %v3209 = vadd.f32 %v2984, %v3208
      %v3210 = vpop.f32.mrb[0].mxu0
      %3211 = vmatprep.mubr.f32.mxu0 %v2708
      %3212 = vmatmul.mubr.f32.gmra.mrb[0].mxu0 %v2707
      %v3213 = vpop.f32.mrb[0].mxu0
      %v3214 = vadd.f32 %v2989, %v3213
      %v3215 = vpop.f32.mrb[0].mxu0
      %3216 = vmatprep.mubr.f32.mxu0 %v2712
      %3217 = vmatmul.mubr.f32.gmra.mrb[0].mxu0 %v2711
      %v3218 = vpop.f32.mrb[0].mxu0
      %v3219 = vadd.f32 %v2994, %v3218
      %v3220 = vpop.f32.mrb[0].mxu0
      %3221 = vmatprep.mubr.f32.mxu0 %v2716
      %3222 = vmatmul.mubr.f32.gmra.mrb[0].mxu0 %v2715
      %v3223 = vpop.f32.mrb[0].mxu0
      %v3224 = vadd.f32 %v2999, %v3223
      %v3225 = vpop.f32.mrb[0].mxu0
      %3226 = vmatprep.mubr.f32.mxu0 %v2720
      %3227 = vmatmul.mubr.f32.gmra.mrb[0].mxu0 %v2719
      %v3228 = vpop.f32.mrb[0].mxu0
      %v3229 = vadd.f32 %v3004, %v3228
      %v3230 = vpop.f32.mrb[0].mxu0
      %3231 = vmatprep.mubr.f32.mxu0 %v2724
      %3232 = vmatmul.mubr.f32.gmra.mrb[0].mxu0 %v2723
      %v3233 = vpop.f32.mrb[0].mxu0
      %v3234 = vadd.f32 %v3009, %v3233
      %v3235 = vpop.f32.mrb[0].mxu0
      %3236 = vmatprep.mubr.f32.mxu0 %v2728
      %3237 = vmatmul.mubr.f32.gmra.mrb[0].mxu0 %v2727
      %v3238 = vpop.f32.mrb[0].mxu0
      %v3239 = vadd.f32 %v3014, %v3238
      %v3240 = vpop.f32.mrb[0].mxu0
      %3241 = vmatprep.mubr.f32.mxu0 %v2732
      %3242 = vmatmul.mubr.f32.gmra.mrb[0].mxu0 %v2731
      %v3243 = vpop.f32.mrb[0].mxu0
      %v3244 = vadd.f32 %v3019, %v3243
      %v3245 = vpop.f32.mrb[0].mxu0
      %3246 = vmatprep.mubr.f32.mxu0 %v2736
      %3247 = vmatmul.mubr.f32.gmra.mrb[0].mxu0 %v2735
      %v3248 = vpop.f32.mrb[0].mxu0
      %v3249 = vadd.f32 %v3024, %v3248
      %v3250 = vpop.f32.mrb[0].mxu0
      %3251 = vdwg.mxu0
      %3252 = vmatprep.subr.mxu0 0.0
      %3253 = vmatpush1.msra.mxu0 %v2161
      %3254 = vmatprep.subr.mxu0 0.0
      %3255 = vmatpush1.msra.mxu0 %v2162
      %3256 = vmatprep.subr.mxu0 0.0
      %3257 = vmatpush1.msra.mxu0 %v2163
      %3258 = vmatprep.subr.mxu0 0.0
      %3259 = vmatpush1.msra.mxu0 %v2164
      %3260 = vmatprep.subr.mxu0 0.0
      %3261 = vmatpush1.msra.mxu0 %v2165
      %3262 = vmatprep.subr.mxu0 0.0
      %3263 = vmatpush1.msra.mxu0 %v2166
      %3264 = vmatprep.subr.mxu0 0.0
      %3265 = vmatpush1.msra.mxu0 %v2167
      %3266 = vmatprep.subr.mxu0 0.0
      %3267 = vmatpush1.msra.mxu0 %v2168
      %3268 = vmatprep.subr.mxu0 0.0
      %3269 = vmatpush1.msra.mxu0 %v2169
      %3270 = vmatprep.subr.mxu0 0.0
      %3271 = vmatpush1.msra.mxu0 %v2170
      %3272 = vmatprep.subr.mxu0 0.0
      %3273 = vmatpush1.msra.mxu0 %v2171
      %3274 = vmatprep.subr.mxu0 0.0
      %3275 = vmatpush1.msra.mxu0 %v2172
      %3276 = vmatprep.subr.mxu0 0.0
      %3277 = vmatpush1.msra.mxu0 %v2173
      %3278 = vmatprep.subr.mxu0 0.0
      %3279 = vmatpush1.msra.mxu0 %v2174
      %3280 = vmatprep.subr.mxu0 0.0
      %3281 = vmatpush1.msra.mxu0 %v2175
      %3282 = vmatprep.subr.mxu0 0.0
      %3283 = vmatpush1.msra.mxu0 %v2176
      %3284 = vmatprep.subr.mxu0 0.0
      %3285 = vmatpush1.msra.mxu0 %v2177
      %3286 = vmatprep.subr.mxu0 0.0
      %3287 = vmatpush1.msra.mxu0 %v2178
      %3288 = vmatprep.subr.mxu0 0.0
      %3289 = vmatpush1.msra.mxu0 %v2179
      %3290 = vmatprep.subr.mxu0 0.0
      %3291 = vmatpush1.msra.mxu0 %v2180
      %3292 = vmatprep.subr.mxu0 0.0
      %3293 = vmatpush1.msra.mxu0 %v2181
      %3294 = vmatprep.subr.mxu0 0.0
      %3295 = vmatpush1.msra.mxu0 %v2182
      %3296 = vmatprep.subr.mxu0 0.0
      %3297 = vmatpush1.msra.mxu0 %v2183
      %3298 = vmatprep.subr.mxu0 0.0
      %3299 = vmatpush1.msra.mxu0 %v2184
      %3300 = vmatprep.subr.mxu0 0.0
      %3301 = vmatpush1.msra.mxu0 %v2185
      %3302 = vmatprep.subr.mxu0 0.0
      %3303 = vmatpush1.msra.mxu0 %v2186
      %3304 = vmatprep.subr.mxu0 0.0
      %3305 = vmatpush1.msra.mxu0 %v2187
      %3306 = vmatprep.subr.mxu0 0.0
      %3307 = vmatpush1.msra.mxu0 %v2188
      %3308 = vmatprep.subr.mxu0 0.0
      %3309 = vmatpush1.msra.mxu0 %v2189
      %3310 = vmatprep.subr.mxu0 0.0
      %3311 = vmatpush1.msra.mxu0 %v2190
      %3312 = vmatprep.subr.mxu0 0.0
      %3313 = vmatpush1.msra.mxu0 %v2191
      %3314 = vmatprep.subr.mxu0 0.0
      %3315 = vmatpush1.msra.mxu0 %v2192
      %3316 = vmatprep.mubr.f32.mxu0 %v2034
      %3317 = vmatmul.mubr.f32.gmra.mrb[0].mxu0 %v2033
      %v3318 = vpop.f32.mrb[0].mxu0
      %v3319 = vadd.f32 %v3094, %v3318
      %v3320 = vpop.f32.mrb[0].mxu0
      %3321 = vmatprep.mubr.f32.mxu0 %v2038
      %3322 = vmatmul.mubr.f32.gmra.mrb[0].mxu0 %v2037
      %v3323 = vpop.f32.mrb[0].mxu0
      %v3324 = vadd.f32 %v3099, %v3323
      %v3325 = vpop.f32.mrb[0].mxu0
      %3326 = vmatprep.mubr.f32.mxu0 %v2042
      %3327 = vmatmul.mubr.f32.gmra.mrb[0].mxu0 %v2041
      %v3328 = vpop.f32.mrb[0].mxu0
      %v3329 = vadd.f32 %v3104, %v3328
      %v3330 = vpop.f32.mrb[0].mxu0
      %3331 = vmatprep.mubr.f32.mxu0 %v2046
      %3332 = vmatmul.mubr.f32.gmra.mrb[0].mxu0 %v2045
      %v3333 = vpop.f32.mrb[0].mxu0
      %v3334 = vadd.f32 %v3109, %v3333
      %v3335 = vpop.f32.mrb[0].mxu0
      %3336 = vmatprep.mubr.f32.mxu0 %v2050
      %3337 = vmatmul.mubr.f32.gmra.mrb[0].mxu0 %v2049
      %v3338 = vpop.f32.mrb[0].mxu0
      %v3339 = vadd.f32 %v3114, %v3338
      %v3340 = vpop.f32.mrb[0].mxu0
      %3341 = vmatprep.mubr.f32.mxu0 %v2054
      %3342 = vmatmul.mubr.f32.gmra.mrb[0].mxu0 %v2053
      %v3343 = vpop.f32.mrb[0].mxu0
      %v3344 = vadd.f32 %v3119, %v3343
      %v3345 = vpop.f32.mrb[0].mxu0
      %3346 = vmatprep.mubr.f32.mxu0 %v2058
      %3347 = vmatmul.mubr.f32.gmra.mrb[0].mxu0 %v2057
      %v3348 = vpop.f32.mrb[0].mxu0
      %v3349 = vadd.f32 %v3124, %v3348
      %v3350 = vpop.f32.mrb[0].mxu0
      %3351 = vmatprep.mubr.f32.mxu0 %v2062
      %3352 = vmatmul.mubr.f32.gmra.mrb[0].mxu0 %v2061
      %v3353 = vpop.f32.mrb[0].mxu0
      %v3354 = vadd.f32 %v3129, %v3353
      %v3355 = vpop.f32.mrb[0].mxu0
      %3356 = vmatprep.mubr.f32.mxu0 %v2066
      %3357 = vmatmul.mubr.f32.gmra.mrb[0].mxu0 %v2065
      %v3358 = vpop.f32.mrb[0].mxu0
      %v3359 = vadd.f32 %v3134, %v3358
      %v3360 = vpop.f32.mrb[0].mxu0
      %3361 = vmatprep.mubr.f32.mxu0 %v2070
      %3362 = vmatmul.mubr.f32.gmra.mrb[0].mxu0 %v2069
      %v3363 = vpop.f32.mrb[0].mxu0
      %v3364 = vadd.f32 %v3139, %v3363
      %v3365 = vpop.f32.mrb[0].mxu0
      %3366 = vmatprep.mubr.f32.mxu0 %v2074
      %3367 = vmatmul.mubr.f32.gmra.mrb[0].mxu0 %v2073
      %v3368 = vpop.f32.mrb[0].mxu0
      %v3369 = vadd.f32 %v3144, %v3368
      %v3370 = vpop.f32.mrb[0].mxu0
      %3371 = vmatprep.mubr.f32.mxu0 %v2078
      %3372 = vmatmul.mubr.f32.gmra.mrb[0].mxu0 %v2077
      %v3373 = vpop.f32.mrb[0].mxu0
      %v3374 = vadd.f32 %v3149, %v3373
      %v3375 = vpop.f32.mrb[0].mxu0
      %3376 = vmatprep.mubr.f32.mxu0 %v2082
      %3377 = vmatmul.mubr.f32.gmra.mrb[0].mxu0 %v2081
      %v3378 = vpop.f32.mrb[0].mxu0
      %v3379 = vadd.f32 %v3154, %v3378
      %v3380 = vpop.f32.mrb[0].mxu0
      %3381 = vmatprep.mubr.f32.mxu0 %v2086
      %3382 = vmatmul.mubr.f32.gmra.mrb[0].mxu0 %v2085
      %v3383 = vpop.f32.mrb[0].mxu0
      %v3384 = vadd.f32 %v3159, %v3383
      %v3385 = vpop.f32.mrb[0].mxu0
      %3386 = vmatprep.mubr.f32.mxu0 %v2090
      %3387 = vmatmul.mubr.f32.gmra.mrb[0].mxu0 %v2089
      %v3388 = vpop.f32.mrb[0].mxu0
      %v3389 = vadd.f32 %v3164, %v3388
      %v3390 = vpop.f32.mrb[0].mxu0
      %3391 = vmatprep.mubr.f32.mxu0 %v2094
      %3392 = vmatmul.mubr.f32.gmra.mrb[0].mxu0 %v2093
      %v3393 = vpop.f32.mrb[0].mxu0
      %v3394 = vadd.f32 %v3169, %v3393
      %v3395 = vpop.f32.mrb[0].mxu0
      %3396 = vmatprep.mubr.f32.mxu0 %v2098
      %3397 = vmatmul.mubr.f32.gmra.mrb[0].mxu0 %v2097
      %v3398 = vpop.f32.mrb[0].mxu0
      %v3399 = vadd.f32 %v3174, %v3398
      %v3400 = vpop.f32.mrb[0].mxu0
      %3401 = vmatprep.mubr.f32.mxu0 %v2102
      %3402 = vmatmul.mubr.f32.gmra.mrb[0].mxu0 %v2101
      %v3403 = vpop.f32.mrb[0].mxu0
      %v3404 = vadd.f32 %v3179, %v3403
      %v3405 = vpop.f32.mrb[0].mxu0
      %3406 = vmatprep.mubr.f32.mxu0 %v2106
      %3407 = vmatmul.mubr.f32.gmra.mrb[0].mxu0 %v2105
      %v3408 = vpop.f32.mrb[0].mxu0
      %v3409 = vadd.f32 %v3184, %v3408
      %v3410 = vpop.f32.mrb[0].mxu0
      %3411 = vmatprep.mubr.f32.mxu0 %v2110
      %3412 = vmatmul.mubr.f32.gmra.mrb[0].mxu0 %v2109
      %v3413 = vpop.f32.mrb[0].mxu0
      %v3414 = vadd.f32 %v3189, %v3413
      %v3415 = vpop.f32.mrb[0].mxu0
      %3416 = vmatprep.mubr.f32.mxu0 %v2114
      %3417 = vmatmul.mubr.f32.gmra.mrb[0].mxu0 %v2113
      %v3418 = vpop.f32.mrb[0].mxu0
      %v3419 = vadd.f32 %v3194, %v3418
      %v3420 = vpop.f32.mrb[0].mxu0
      %3421 = vmatprep.mubr.f32.mxu0 %v2118
      %3422 = vmatmul.mubr.f32.gmra.mrb[0].mxu0 %v2117
      %v3423 = vpop.f32.mrb[0].mxu0
      %v3424 = vadd.f32 %v3199, %v3423
      %v3425 = vpop.f32.mrb[0].mxu0
      %3426 = vmatprep.mubr.f32.mxu0 %v2122
      %3427 = vmatmul.mubr.f32.gmra.mrb[0].mxu0 %v2121
      %v3428 = vpop.f32.mrb[0].mxu0
      %v3429 = vadd.f32 %v3204, %v3428
      %v3430 = vpop.f32.mrb[0].mxu0
      %3431 = vmatprep.mubr.f32.mxu0 %v2126
      %3432 = vmatmul.mubr.f32.gmra.mrb[0].mxu0 %v2125
      %v3433 = vpop.f32.mrb[0].mxu0
      %v3434 = vadd.f32 %v3209, %v3433
      %v3435 = vpop.f32.mrb[0].mxu0
      %3436 = vmatprep.mubr.f32.mxu0 %v2130
      %3437 = vmatmul.mubr.f32.gmra.mrb[0].mxu0 %v2129
      %v3438 = vpop.f32.mrb[0].mxu0
      %v3439 = vadd.f32 %v3214, %v3438
      %v3440 = vpop.f32.mrb[0].mxu0
      %3441 = vmatprep.mubr.f32.mxu0 %v2134
      %3442 = vmatmul.mubr.f32.gmra.mrb[0].mxu0 %v2133
      %v3443 = vpop.f32.mrb[0].mxu0
      %v3444 = vadd.f32 %v3219, %v3443
      %v3445 = vpop.f32.mrb[0].mxu0
      %3446 = vmatprep.mubr.f32.mxu0 %v2138
      %3447 = vmatmul.mubr.f32.gmra.mrb[0].mxu0 %v2137
      %v3448 = vpop.f32.mrb[0].mxu0
      %v3449 = vadd.f32 %v3224, %v3448
      %v3450 = vpop.f32.mrb[0].mxu0
      %3451 = vmatprep.mubr.f32.mxu0 %v2142
      %3452 = vmatmul.mubr.f32.gmra.mrb[0].mxu0 %v2141
      %v3453 = vpop.f32.mrb[0].mxu0
      %v3454 = vadd.f32 %v3229, %v3453
      %v3455 = vpop.f32.mrb[0].mxu0
      %3456 = vmatprep.mubr.f32.mxu0 %v2146
      %3457 = vmatmul.mubr.f32.gmra.mrb[0].mxu0 %v2145
      %v3458 = vpop.f32.mrb[0].mxu0
      %v3459 = vadd.f32 %v3234, %v3458
      %v3460 = vpop.f32.mrb[0].mxu0
      %3461 = vmatprep.mubr.f32.mxu0 %v2150
      %3462 = vmatmul.mubr.f32.gmra.mrb[0].mxu0 %v2149
      %v3463 = vpop.f32.mrb[0].mxu0
      %v3464 = vadd.f32 %v3239, %v3463
      %v3465 = vpop.f32.mrb[0].mxu0
      %3466 = vmatprep.mubr.f32.mxu0 %v2154
      %3467 = vmatmul.mubr.f32.gmra.mrb[0].mxu0 %v2153
      %v3468 = vpop.f32.mrb[0].mxu0
      %v3469 = vadd.f32 %v3244, %v3468
      %v3470 = vpop.f32.mrb[0].mxu0
      %3471 = vmatprep.mubr.f32.mxu0 %v2158
      %3472 = vmatmul.mubr.f32.gmra.mrb[0].mxu0 %v2157
      %v3473 = vpop.f32.mrb[0].mxu0
      %v3474 = vadd.f32 %v3249, %v3473
      %v3475 = vpop.f32.mrb[0].mxu0
      %3476 = vdwg.mxu0
      %3477 = vmatprep.subr.mxu0 0.0
      %3478 = vmatpush1.msra.mxu0 %v2193
      %3479 = vmatprep.subr.mxu0 0.0
      %3480 = vmatpush1.msra.mxu0 %v2194
      %3481 = vmatprep.subr.mxu0 0.0
      %3482 = vmatpush1.msra.mxu0 %v2195
      %3483 = vmatprep.subr.mxu0 0.0
      %3484 = vmatpush1.msra.mxu0 %v2196
      %3485 = vmatprep.subr.mxu0 0.0
      %3486 = vmatpush1.msra.mxu0 %v2197
      %3487 = vmatprep.subr.mxu0 0.0
      %3488 = vmatpush1.msra.mxu0 %v2198
      %3489 = vmatprep.subr.mxu0 0.0
      %3490 = vmatpush1.msra.mxu0 %v2199
      %3491 = vmatprep.subr.mxu0 0.0
      %3492 = vmatpush1.msra.mxu0 %v2200
      %3493 = vmatprep.subr.mxu0 0.0
      %3494 = vmatpush1.msra.mxu0 %v2201
      %3495 = vmatprep.subr.mxu0 0.0
      %3496 = vmatpush1.msra.mxu0 %v2202
      %3497 = vmatprep.subr.mxu0 0.0
      %3498 = vmatpush1.msra.mxu0 %v2203
      %3499 = vmatprep.subr.mxu0 0.0
      %3500 = vmatpush1.msra.mxu0 %v2204
      %3501 = vmatprep.subr.mxu0 0.0
      %3502 = vmatpush1.msra.mxu0 %v2205
      %3503 = vmatprep.subr.mxu0 0.0
      %3504 = vmatpush1.msra.mxu0 %v2206
      %3505 = vmatprep.subr.mxu0 0.0
      %3506 = vmatpush1.msra.mxu0 %v2207
      %3507 = vmatprep.subr.mxu0 0.0
      %3508 = vmatpush1.msra.mxu0 %v2208
      %3509 = vmatprep.subr.mxu0 0.0
      %3510 = vmatpush1.msra.mxu0 %v2209
      %3511 = vmatprep.subr.mxu0 0.0
      %3512 = vmatpush1.msra.mxu0 %v2210
      %3513 = vmatprep.subr.mxu0 0.0
      %3514 = vmatpush1.msra.mxu0 %v2211
      %3515 = vmatprep.subr.mxu0 0.0
      %3516 = vmatpush1.msra.mxu0 %v2212
      %3517 = vmatprep.subr.mxu0 0.0
      %3518 = vmatpush1.msra.mxu0 %v2213
      %3519 = vmatprep.subr.mxu0 0.0
      %3520 = vmatpush1.msra.mxu0 %v2214
      %3521 = vmatprep.subr.mxu0 0.0
      %3522 = vmatpush1.msra.mxu0 %v2215
      %3523 = vmatprep.subr.mxu0 0.0
      %3524 = vmatpush1.msra.mxu0 %v2216
      %3525 = vmatprep.subr.mxu0 0.0
      %3526 = vmatpush1.msra.mxu0 %v2217
      %3527 = vmatprep.subr.mxu0 0.0
      %3528 = vmatpush1.msra.mxu0 %v2218
      %3529 = vmatprep.subr.mxu0 0.0
      %3530 = vmatpush1.msra.mxu0 %v2219
      %3531 = vmatprep.subr.mxu0 0.0
      %3532 = vmatpush1.msra.mxu0 %v2220
      %3533 = vmatprep.subr.mxu0 0.0
      %3534 = vmatpush1.msra.mxu0 %v2221
      %3535 = vmatprep.subr.mxu0 0.0
      %3536 = vmatpush1.msra.mxu0 %v2222
      %3537 = vmatprep.subr.mxu0 0.0
      %3538 = vmatpush1.msra.mxu0 %v2223
      %3539 = vmatprep.subr.mxu0 0.0
      %3540 = vmatpush1.msra.mxu0 %v2224
      %3541 = vmatprep.mubr.f32.mxu0 %v2036
      %3542 = vmatmul.mubr.f32.gmra.mrb[0].mxu0 %v2035
      %v3543 = vpop.f32.mrb[0].mxu0
      %v3544 = vadd.f32 %v3319, %v3543
      %v3545 = vpop.f32.mrb[0].mxu0
      %3546 = vmatprep.mubr.f32.mxu0 %v2040
      %3547 = vmatmul.mubr.f32.gmra.mrb[0].mxu0 %v2039
      %v3548 = vpop.f32.mrb[0].mxu0
      %v3549 = vadd.f32 %v3324, %v3548
      %v3550 = vpop.f32.mrb[0].mxu0
      %3551 = vmatprep.mubr.f32.mxu0 %v2044
      %3552 = vmatmul.mubr.f32.gmra.mrb[0].mxu0 %v2043
      %v3553 = vpop.f32.mrb[0].mxu0
      %v3554 = vadd.f32 %v3329, %v3553
      %v3555 = vpop.f32.mrb[0].mxu0
      %3556 = vmatprep.mubr.f32.mxu0 %v2048
      %3557 = vmatmul.mubr.f32.gmra.mrb[0].mxu0 %v2047
      %v3558 = vpop.f32.mrb[0].mxu0
      %v3559 = vadd.f32 %v3334, %v3558
      %v3560 = vpop.f32.mrb[0].mxu0
      %3561 = vmatprep.mubr.f32.mxu0 %v2052
      %3562 = vmatmul.mubr.f32.gmra.mrb[0].mxu0 %v2051
      %v3563 = vpop.f32.mrb[0].mxu0
      %v3564 = vadd.f32 %v3339, %v3563
      %v3565 = vpop.f32.mrb[0].mxu0
      %3566 = vmatprep.mubr.f32.mxu0 %v2056
      %3567 = vmatmul.mubr.f32.gmra.mrb[0].mxu0 %v2055
      %v3568 = vpop.f32.mrb[0].mxu0
      %v3569 = vadd.f32 %v3344, %v3568
      %v3570 = vpop.f32.mrb[0].mxu0
      %3571 = vmatprep.mubr.f32.mxu0 %v2060
      %3572 = vmatmul.mubr.f32.gmra.mrb[0].mxu0 %v2059
      %v3573 = vpop.f32.mrb[0].mxu0
      %v3574 = vadd.f32 %v3349, %v3573
      %v3575 = vpop.f32.mrb[0].mxu0
      %3576 = vmatprep.mubr.f32.mxu0 %v2064
      %3577 = vmatmul.mubr.f32.gmra.mrb[0].mxu0 %v2063
      %v3578 = vpop.f32.mrb[0].mxu0
      %v3579 = vadd.f32 %v3354, %v3578
      %v3580 = vpop.f32.mrb[0].mxu0
      %3581 = vmatprep.mubr.f32.mxu0 %v2068
      %3582 = vmatmul.mubr.f32.gmra.mrb[0].mxu0 %v2067
      %v3583 = vpop.f32.mrb[0].mxu0
      %v3584 = vadd.f32 %v3359, %v3583
      %v3585 = vpop.f32.mrb[0].mxu0
      %3586 = vmatprep.mubr.f32.mxu0 %v2072
      %3587 = vmatmul.mubr.f32.gmra.mrb[0].mxu0 %v2071
      %v3588 = vpop.f32.mrb[0].mxu0
      %v3589 = vadd.f32 %v3364, %v3588
      %v3590 = vpop.f32.mrb[0].mxu0
      %3591 = vmatprep.mubr.f32.mxu0 %v2076
      %3592 = vmatmul.mubr.f32.gmra.mrb[0].mxu0 %v2075
      %v3593 = vpop.f32.mrb[0].mxu0
      %v3594 = vadd.f32 %v3369, %v3593
      %v3595 = vpop.f32.mrb[0].mxu0
      %3596 = vmatprep.mubr.f32.mxu0 %v2080
      %3597 = vmatmul.mubr.f32.gmra.mrb[0].mxu0 %v2079
      %v3598 = vpop.f32.mrb[0].mxu0
      %v3599 = vadd.f32 %v3374, %v3598
      %v3600 = vpop.f32.mrb[0].mxu0
      %3601 = vmatprep.mubr.f32.mxu0 %v2084
      %3602 = vmatmul.mubr.f32.gmra.mrb[0].mxu0 %v2083
      %v3603 = vpop.f32.mrb[0].mxu0
      %v3604 = vadd.f32 %v3379, %v3603
      %v3605 = vpop.f32.mrb[0].mxu0
      %3606 = vmatprep.mubr.f32.mxu0 %v2088
      %3607 = vmatmul.mubr.f32.gmra.mrb[0].mxu0 %v2087
      %v3608 = vpop.f32.mrb[0].mxu0
      %v3609 = vadd.f32 %v3384, %v3608
      %v3610 = vpop.f32.mrb[0].mxu0
      %3611 = vmatprep.mubr.f32.mxu0 %v2092
      %3612 = vmatmul.mubr.f32.gmra.mrb[0].mxu0 %v2091
      %v3613 = vpop.f32.mrb[0].mxu0
      %v3614 = vadd.f32 %v3389, %v3613
      %v3615 = vpop.f32.mrb[0].mxu0
      %3616 = vmatprep.mubr.f32.mxu0 %v2096
      %3617 = vmatmul.mubr.f32.gmra.mrb[0].mxu0 %v2095
      %v3618 = vpop.f32.mrb[0].mxu0
      %v3619 = vadd.f32 %v3394, %v3618
      %v3620 = vpop.f32.mrb[0].mxu0
      %3621 = vmatprep.mubr.f32.mxu0 %v2100
      %3622 = vmatmul.mubr.f32.gmra.mrb[0].mxu0 %v2099
      %v3623 = vpop.f32.mrb[0].mxu0
      %v3624 = vadd.f32 %v3399, %v3623
      %v3625 = vpop.f32.mrb[0].mxu0
      %3626 = vmatprep.mubr.f32.mxu0 %v2104
      %3627 = vmatmul.mubr.f32.gmra.mrb[0].mxu0 %v2103
      %v3628 = vpop.f32.mrb[0].mxu0
      %v3629 = vadd.f32 %v3404, %v3628
      %v3630 = vpop.f32.mrb[0].mxu0
      %3631 = vmatprep.mubr.f32.mxu0 %v2108
      %3632 = vmatmul.mubr.f32.gmra.mrb[0].mxu0 %v2107
      %v3633 = vpop.f32.mrb[0].mxu0
      %v3634 = vadd.f32 %v3409, %v3633
      %v3635 = vpop.f32.mrb[0].mxu0
      %3636 = vmatprep.mubr.f32.mxu0 %v2112
      %3637 = vmatmul.mubr.f32.gmra.mrb[0].mxu0 %v2111
      %v3638 = vpop.f32.mrb[0].mxu0
      %v3639 = vadd.f32 %v3414, %v3638
      %v3640 = vpop.f32.mrb[0].mxu0
      %3641 = vmatprep.mubr.f32.mxu0 %v2116
      %3642 = vmatmul.mubr.f32.gmra.mrb[0].mxu0 %v2115
      %v3643 = vpop.f32.mrb[0].mxu0
      %v3644 = vadd.f32 %v3419, %v3643
      %v3645 = vpop.f32.mrb[0].mxu0
      %3646 = vmatprep.mubr.f32.mxu0 %v2120
      %3647 = vmatmul.mubr.f32.gmra.mrb[0].mxu0 %v2119
      %v3648 = vpop.f32.mrb[0].mxu0
      %v3649 = vadd.f32 %v3424, %v3648
      %v3650 = vpop.f32.mrb[0].mxu0
      %3651 = vmatprep.mubr.f32.mxu0 %v2124
      %3652 = vmatmul.mubr.f32.gmra.mrb[0].mxu0 %v2123
      %v3653 = vpop.f32.mrb[0].mxu0
      %v3654 = vadd.f32 %v3429, %v3653
      %v3655 = vpop.f32.mrb[0].mxu0
      %3656 = vmatprep.mubr.f32.mxu0 %v2128
      %3657 = vmatmul.mubr.f32.gmra.mrb[0].mxu0 %v2127
      %v3658 = vpop.f32.mrb[0].mxu0
      %v3659 = vadd.f32 %v3434, %v3658
      %v3660 = vpop.f32.mrb[0].mxu0
      %3661 = vmatprep.mubr.f32.mxu0 %v2132
      %3662 = vmatmul.mubr.f32.gmra.mrb[0].mxu0 %v2131
      %v3663 = vpop.f32.mrb[0].mxu0
      %v3664 = vadd.f32 %v3439, %v3663
      %v3665 = vpop.f32.mrb[0].mxu0
      %3666 = vmatprep.mubr.f32.mxu0 %v2136
      %3667 = vmatmul.mubr.f32.gmra.mrb[0].mxu0 %v2135
      %v3668 = vpop.f32.mrb[0].mxu0
      %v3669 = vadd.f32 %v3444, %v3668
      %v3670 = vpop.f32.mrb[0].mxu0
      %3671 = vmatprep.mubr.f32.mxu0 %v2140
      %3672 = vmatmul.mubr.f32.gmra.mrb[0].mxu0 %v2139
      %v3673 = vpop.f32.mrb[0].mxu0
      %v3674 = vadd.f32 %v3449, %v3673
      %v3675 = vpop.f32.mrb[0].mxu0
      %3676 = vmatprep.mubr.f32.mxu0 %v2144
      %3677 = vmatmul.mubr.f32.gmra.mrb[0].mxu0 %v2143
      %v3678 = vpop.f32.mrb[0].mxu0
      %v3679 = vadd.f32 %v3454, %v3678
      %v3680 = vpop.f32.mrb[0].mxu0
      %3681 = vmatprep.mubr.f32.mxu0 %v2148
      %3682 = vmatmul.mubr.f32.gmra.mrb[0].mxu0 %v2147
      %v3683 = vpop.f32.mrb[0].mxu0
      %v3684 = vadd.f32 %v3459, %v3683
      %v3685 = vpop.f32.mrb[0].mxu0
      %3686 = vmatprep.mubr.f32.mxu0 %v2152
      %3687 = vmatmul.mubr.f32.gmra.mrb[0].mxu0 %v2151
      %v3688 = vpop.f32.mrb[0].mxu0
      %v3689 = vadd.f32 %v3464, %v3688
      %v3690 = vpop.f32.mrb[0].mxu0
      %3691 = vmatprep.mubr.f32.mxu0 %v2156
      %3692 = vmatmul.mubr.f32.gmra.mrb[0].mxu0 %v2155
      %v3693 = vpop.f32.mrb[0].mxu0
      %v3694 = vadd.f32 %v3469, %v3693
      %v3695 = vpop.f32.mrb[0].mxu0
      %3696 = vmatprep.mubr.f32.mxu0 %v2160
      %3697 = vmatmul.mubr.f32.gmra.mrb[0].mxu0 %v2159
      %v3698 = vpop.f32.mrb[0].mxu0
      %v3699 = vadd.f32 %v3474, %v3698
      %v3700 = vpop.f32.mrb[0].mxu0
      %3701 = vdwg.mxu0
      %s3702 = scalar_lea.vmem [#allocation2], 48
      %v3703 = vld [vmem:[%s3702] ss:$2 sm:$0xff]
      %s3704 = scalar_lea.vmem %s3702, 48 [#allocation2]
      %v3705 = vld [vmem:[%s3704] ss:$2 sm:$0xff]
      %s3706 = scalar_lea.vmem %s3702, 96 [#allocation2]
      %v3707 = vld [vmem:[%s3706] ss:$2 sm:$0xff]
      %s3708 = scalar_lea.vmem %s3702, 144 [#allocation2]
      %v3709 = vld [vmem:[%s3708] ss:$2 sm:$0xff]
      %s3710 = scalar_lea.vmem %s3702, 192 [#allocation2]
      %v3711 = vld [vmem:[%s3710] ss:$2 sm:$0xff]
      %s3712 = scalar_lea.vmem %s3702, 240 [#allocation2]
      %v3713 = vld [vmem:[%s3712] ss:$2 sm:$0xff]
      %s3714 = scalar_lea.vmem %s3702, 288 [#allocation2]
      %v3715 = vld [vmem:[%s3714] ss:$2 sm:$0xff]
      %s3716 = scalar_lea.vmem %s3702, 336 [#allocation2]
      %v3717 = vld [vmem:[%s3716] ss:$2 sm:$0xff]
      %s3718 = scalar_lea.vmem %s3702, 432 [#allocation2]
      %v3719 = vld [vmem:[%s3718] ss:$2 sm:$0xff]
      %s3720 = scalar_lea.vmem %s3702, 480 [#allocation2]
      %v3721 = vld [vmem:[%s3720] ss:$2 sm:$0xff]
      %s3722 = scalar_lea.vmem %s3702, 528 [#allocation2]
      %v3723 = vld [vmem:[%s3722] ss:$2 sm:$0xff]
      %s3724 = scalar_lea.vmem %s3702, 576 [#allocation2]
      %v3725 = vld [vmem:[%s3724] ss:$2 sm:$0xff]
      %s3726 = scalar_lea.vmem %s3702, 624 [#allocation2]
      %v3727 = vld [vmem:[%s3726] ss:$2 sm:$0xff]
      %s3728 = scalar_lea.vmem %s3702, 672 [#allocation2]
      %v3729 = vld [vmem:[%s3728] ss:$2 sm:$0xff]
      %s3730 = scalar_lea.vmem %s3702, 720 [#allocation2]
      %v3731 = vld [vmem:[%s3730] ss:$2 sm:$0xff]
      %s3732 = scalar_lea.vmem %s3702, 768 [#allocation2]
      %v3733 = vld [vmem:[%s3732] ss:$2 sm:$0xff]
      %s3734 = scalar_lea.vmem %s3702, 864 [#allocation2]
      %v3735 = vld [vmem:[%s3734] ss:$2 sm:$0xff]
      %s3736 = scalar_lea.vmem %s3702, 912 [#allocation2]
      %v3737 = vld [vmem:[%s3736] ss:$2 sm:$0xff]
      %s3738 = scalar_lea.vmem %s3702, 960 [#allocation2]
      %v3739 = vld [vmem:[%s3738] ss:$2 sm:$0xff]
      %s3740 = scalar_lea.vmem %s3702, 1008 [#allocation2]
      %v3741 = vld [vmem:[%s3740] ss:$2 sm:$0xff]
      %s3742 = scalar_lea.vmem %s3702, 1056 [#allocation2]
      %v3743 = vld [vmem:[%s3742] ss:$2 sm:$0xff]
      %s3744 = scalar_lea.vmem %s3702, 1104 [#allocation2]
      %v3745 = vld [vmem:[%s3744] ss:$2 sm:$0xff]
      %s3746 = scalar_lea.vmem %s3702, 1152 [#allocation2]
      %v3747 = vld [vmem:[%s3746] ss:$2 sm:$0xff]
      %s3748 = scalar_lea.vmem %s3702, 1200 [#allocation2]
      %v3749 = vld [vmem:[%s3748] ss:$2 sm:$0xff]
      %s3750 = scalar_lea.vmem %s3702, 1296 [#allocation2]
      %v3751 = vld [vmem:[%s3750] ss:$2 sm:$0xff]
      %s3752 = scalar_lea.vmem %s3702, 1344 [#allocation2]
      %v3753 = vld [vmem:[%s3752] ss:$2 sm:$0xff]
      %s3754 = scalar_lea.vmem %s3702, 1392 [#allocation2]
      %v3755 = vld [vmem:[%s3754] ss:$2 sm:$0xff]
      %s3756 = scalar_lea.vmem %s3702, 1440 [#allocation2]
      %v3757 = vld [vmem:[%s3756] ss:$2 sm:$0xff]
      %s3758 = scalar_lea.vmem %s3702, 1488 [#allocation2]
      %v3759 = vld [vmem:[%s3758] ss:$2 sm:$0xff]
      %s3760 = scalar_lea.vmem %s3702, 1536 [#allocation2]
      %v3761 = vld [vmem:[%s3760] ss:$2 sm:$0xff]
      %s3762 = scalar_lea.vmem %s3702, 1584 [#allocation2]
      %v3763 = vld [vmem:[%s3762] ss:$2 sm:$0xff]
      %s3764 = scalar_lea.vmem %s3702, 1632 [#allocation2]
      %v3765 = vld [vmem:[%s3764] ss:$2 sm:$0xff]
      %3766 = vst [vmem:[#allocation4] sm:$0xff] %v3703
      %3767 = vst [vmem:[#allocation4 + $0x20] sm:$0xff] %v3705
      %3768 = vst [vmem:[#allocation4 + $0x40] sm:$0xff] %v3707
      %3769 = vst [vmem:[#allocation4 + $0x60] sm:$0xff] %v3709
      %3770 = vst [vmem:[#allocation4 + $0x80] sm:$0xff] %v3711
      %3771 = vst [vmem:[#allocation4 + $0xa0] sm:$0xff] %v3713
      %3772 = vst [vmem:[#allocation4 + $0xc0] sm:$0xff] %v3715
      %3773 = vst [vmem:[#allocation4 + $0xe0] sm:$0xff] %v3717
      %3774 = vst [vmem:[#allocation4 + $0x100] sm:$0xff] %v3719
      %3775 = vst [vmem:[#allocation4 + $0x120] sm:$0xff] %v3721
      %3776 = vst [vmem:[#allocation4 + $0x140] sm:$0xff] %v3723
      %3777 = vst [vmem:[#allocation4 + $0x160] sm:$0xff] %v3725
      %3778 = vst [vmem:[#allocation4 + $0x180] sm:$0xff] %v3727
      %3779 = vst [vmem:[#allocation4 + $0x1a0] sm:$0xff] %v3729
      %3780 = vst [vmem:[#allocation4 + $0x1c0] sm:$0xff] %v3731
      %3781 = vst [vmem:[#allocation4 + $0x1e0] sm:$0xff] %v3733
      %3782 = vst [vmem:[#allocation4 + $0x200] sm:$0xff] %v3735
      %3783 = vst [vmem:[#allocation4 + $0x220] sm:$0xff] %v3737
      %3784 = vst [vmem:[#allocation4 + $0x240] sm:$0xff] %v3739
      %3785 = vst [vmem:[#allocation4 + $0x260] sm:$0xff] %v3741
      %3786 = vst [vmem:[#allocation4 + $0x280] sm:$0xff] %v3743
      %3787 = vst [vmem:[#allocation4 + $0x2a0] sm:$0xff] %v3745
      %3788 = vst [vmem:[#allocation4 + $0x2c0] sm:$0xff] %v3747
      %3789 = vst [vmem:[#allocation4 + $0x2e0] sm:$0xff] %v3749
      %3790 = vst [vmem:[#allocation4 + $0x300] sm:$0xff] %v3751
      %3791 = vst [vmem:[#allocation4 + $0x320] sm:$0xff] %v3753
      %3792 = vst [vmem:[#allocation4 + $0x340] sm:$0xff] %v3755
      %3793 = vst [vmem:[#allocation4 + $0x360] sm:$0xff] %v3757
      %3794 = vst [vmem:[#allocation4 + $0x380] sm:$0xff] %v3759
      %3795 = vst [vmem:[#allocation4 + $0x3a0] sm:$0xff] %v3761
      %3796 = vst [vmem:[#allocation4 + $0x3c0] sm:$0xff] %v3763
      %3797 = vst [vmem:[#allocation4 + $0x3e0] sm:$0xff] %v3765
      %s3798 = scalar_lea.vmem %s3702, 1 [#allocation2]
      %v3799 = vld [vmem:[%s3798] ss:$2 sm:$0xff]
      %s3800 = scalar_lea.vmem %s3702, 49 [#allocation2]
      %v3801 = vld [vmem:[%s3800] ss:$2 sm:$0xff]
      %s3802 = scalar_lea.vmem %s3702, 97 [#allocation2]
      %v3803 = vld [vmem:[%s3802] ss:$2 sm:$0xff]
      %s3804 = scalar_lea.vmem %s3702, 145 [#allocation2]
      %v3805 = vld [vmem:[%s3804] ss:$2 sm:$0xff]
      %s3806 = scalar_lea.vmem %s3702, 193 [#allocation2]
      %v3807 = vld [vmem:[%s3806] ss:$2 sm:$0xff]
      %s3808 = scalar_lea.vmem %s3702, 241 [#allocation2]
      %v3809 = vld [vmem:[%s3808] ss:$2 sm:$0xff]
      %s3810 = scalar_lea.vmem %s3702, 289 [#allocation2]
      %v3811 = vld [vmem:[%s3810] ss:$2 sm:$0xff]
      %s3812 = scalar_lea.vmem %s3702, 337 [#allocation2]
      %v3813 = vld [vmem:[%s3812] ss:$2 sm:$0xff]
      %s3814 = scalar_lea.vmem %s3702, 433 [#allocation2]
      %v3815 = vld [vmem:[%s3814] ss:$2 sm:$0xff]
      %s3816 = scalar_lea.vmem %s3702, 481 [#allocation2]
      %v3817 = vld [vmem:[%s3816] ss:$2 sm:$0xff]
      %s3818 = scalar_lea.vmem %s3702, 529 [#allocation2]
      %v3819 = vld [vmem:[%s3818] ss:$2 sm:$0xff]
      %s3820 = scalar_lea.vmem %s3702, 577 [#allocation2]
      %v3821 = vld [vmem:[%s3820] ss:$2 sm:$0xff]
      %s3822 = scalar_lea.vmem %s3702, 625 [#allocation2]
      %v3823 = vld [vmem:[%s3822] ss:$2 sm:$0xff]
      %s3824 = scalar_lea.vmem %s3702, 673 [#allocation2]
      %v3825 = vld [vmem:[%s3824] ss:$2 sm:$0xff]
      %s3826 = scalar_lea.vmem %s3702, 721 [#allocation2]
      %v3827 = vld [vmem:[%s3826] ss:$2 sm:$0xff]
      %s3828 = scalar_lea.vmem %s3702, 769 [#allocation2]
      %v3829 = vld [vmem:[%s3828] ss:$2 sm:$0xff]
      %s3830 = scalar_lea.vmem %s3702, 865 [#allocation2]
      %v3831 = vld [vmem:[%s3830] ss:$2 sm:$0xff]
      %s3832 = scalar_lea.vmem %s3702, 913 [#allocation2]
      %v3833 = vld [vmem:[%s3832] ss:$2 sm:$0xff]
      %s3834 = scalar_lea.vmem %s3702, 961 [#allocation2]
      %v3835 = vld [vmem:[%s3834] ss:$2 sm:$0xff]
      %s3836 = scalar_lea.vmem %s3702, 1009 [#allocation2]
      %v3837 = vld [vmem:[%s3836] ss:$2 sm:$0xff]
      %s3838 = scalar_lea.vmem %s3702, 1057 [#allocation2]
      %v3839 = vld [vmem:[%s3838] ss:$2 sm:$0xff]
      %s3840 = scalar_lea.vmem %s3702, 1105 [#allocation2]
      %v3841 = vld [vmem:[%s3840] ss:$2 sm:$0xff]
      %s3842 = scalar_lea.vmem %s3702, 1153 [#allocation2]
      %v3843 = vld [vmem:[%s3842] ss:$2 sm:$0xff]
      %s3844 = scalar_lea.vmem %s3702, 1201 [#allocation2]
      %v3845 = vld [vmem:[%s3844] ss:$2 sm:$0xff]
      %s3846 = scalar_lea.vmem %s3702, 1297 [#allocation2]
      %v3847 = vld [vmem:[%s3846] ss:$2 sm:$0xff]
      %s3848 = scalar_lea.vmem %s3702, 1345 [#allocation2]
      %v3849 = vld [vmem:[%s3848] ss:$2 sm:$0xff]
      %s3850 = scalar_lea.vmem %s3702, 1393 [#allocation2]
      %v3851 = vld [vmem:[%s3850] ss:$2 sm:$0xff]
      %s3852 = scalar_lea.vmem %s3702, 1441 [#allocation2]
      %v3853 = vld [vmem:[%s3852] ss:$2 sm:$0xff]
      %s3854 = scalar_lea.vmem %s3702, 1489 [#allocation2]
      %v3855 = vld [vmem:[%s3854] ss:$2 sm:$0xff]
      %s3856 = scalar_lea.vmem %s3702, 1537 [#allocation2]
      %v3857 = vld [vmem:[%s3856] ss:$2 sm:$0xff]
      %s3858 = scalar_lea.vmem %s3702, 1585 [#allocation2]
      %v3859 = vld [vmem:[%s3858] ss:$2 sm:$0xff]
      %s3860 = scalar_lea.vmem %s3702, 1633 [#allocation2]
      %v3861 = vld [vmem:[%s3860] ss:$2 sm:$0xff]
      %3862 = vst [vmem:[#allocation4 + $0x8] sm:$0xff] %v3799
      %3863 = vst [vmem:[#allocation4 + $0x28] sm:$0xff] %v3801
      %3864 = vst [vmem:[#allocation4 + $0x48] sm:$0xff] %v3803
      %3865 = vst [vmem:[#allocation4 + $0x68] sm:$0xff] %v3805
      %3866 = vst [vmem:[#allocation4 + $0x88] sm:$0xff] %v3807
      %3867 = vst [vmem:[#allocation4 + $0xa8] sm:$0xff] %v3809
      %3868 = vst [vmem:[#allocation4 + $0xc8] sm:$0xff] %v3811
      %3869 = vst [vmem:[#allocation4 + $0xe8] sm:$0xff] %v3813
      %3870 = vst [vmem:[#allocation4 + $0x108] sm:$0xff] %v3815
      %3871 = vst [vmem:[#allocation4 + $0x128] sm:$0xff] %v3817
      %3872 = vst [vmem:[#allocation4 + $0x148] sm:$0xff] %v3819
      %3873 = vst [vmem:[#allocation4 + $0x168] sm:$0xff] %v3821
      %3874 = vst [vmem:[#allocation4 + $0x188] sm:$0xff] %v3823
      %3875 = vst [vmem:[#allocation4 + $0x1a8] sm:$0xff] %v3825
      %3876 = vst [vmem:[#allocation4 + $0x1c8] sm:$0xff] %v3827
      %3877 = vst [vmem:[#allocation4 + $0x1e8] sm:$0xff] %v3829
      %3878 = vst [vmem:[#allocation4 + $0x208] sm:$0xff] %v3831
      %3879 = vst [vmem:[#allocation4 + $0x228] sm:$0xff] %v3833
      %3880 = vst [vmem:[#allocation4 + $0x248] sm:$0xff] %v3835
      %3881 = vst [vmem:[#allocation4 + $0x268] sm:$0xff] %v3837
      %3882 = vst [vmem:[#allocation4 + $0x288] sm:$0xff] %v3839
      %3883 = vst [vmem:[#allocation4 + $0x2a8] sm:$0xff] %v3841
      %3884 = vst [vmem:[#allocation4 + $0x2c8] sm:$0xff] %v3843
      %3885 = vst [vmem:[#allocation4 + $0x2e8] sm:$0xff] %v3845
      %3886 = vst [vmem:[#allocation4 + $0x308] sm:$0xff] %v3847
      %3887 = vst [vmem:[#allocation4 + $0x328] sm:$0xff] %v3849
      %3888 = vst [vmem:[#allocation4 + $0x348] sm:$0xff] %v3851
      %3889 = vst [vmem:[#allocation4 + $0x368] sm:$0xff] %v3853
      %3890 = vst [vmem:[#allocation4 + $0x388] sm:$0xff] %v3855
      %3891 = vst [vmem:[#allocation4 + $0x3a8] sm:$0xff] %v3857
      %3892 = vst [vmem:[#allocation4 + $0x3c8] sm:$0xff] %v3859
      %3893 = vst [vmem:[#allocation4 + $0x3e8] sm:$0xff] %v3861
      %s3894 = scalar_lea.vmem %s3702, 2 [#allocation2]
      %v3895 = vld [vmem:[%s3894] ss:$2 sm:$0xff]
      %s3896 = scalar_lea.vmem %s3702, 50 [#allocation2]
      %v3897 = vld [vmem:[%s3896] ss:$2 sm:$0xff]
      %s3898 = scalar_lea.vmem %s3702, 98 [#allocation2]
      %v3899 = vld [vmem:[%s3898] ss:$2 sm:$0xff]
      %s3900 = scalar_lea.vmem %s3702, 146 [#allocation2]
      %v3901 = vld [vmem:[%s3900] ss:$2 sm:$0xff]
      %s3902 = scalar_lea.vmem %s3702, 194 [#allocation2]
      %v3903 = vld [vmem:[%s3902] ss:$2 sm:$0xff]
      %s3904 = scalar_lea.vmem %s3702, 242 [#allocation2]
      %v3905 = vld [vmem:[%s3904] ss:$2 sm:$0xff]
      %s3906 = scalar_lea.vmem %s3702, 290 [#allocation2]
      %v3907 = vld [vmem:[%s3906] ss:$2 sm:$0xff]
      %s3908 = scalar_lea.vmem %s3702, 338 [#allocation2]
      %v3909 = vld [vmem:[%s3908] ss:$2 sm:$0xff]
      %s3910 = scalar_lea.vmem %s3702, 434 [#allocation2]
      %v3911 = vld [vmem:[%s3910] ss:$2 sm:$0xff]
      %s3912 = scalar_lea.vmem %s3702, 482 [#allocation2]
      %v3913 = vld [vmem:[%s3912] ss:$2 sm:$0xff]
      %s3914 = scalar_lea.vmem %s3702, 530 [#allocation2]
      %v3915 = vld [vmem:[%s3914] ss:$2 sm:$0xff]
      %s3916 = scalar_lea.vmem %s3702, 578 [#allocation2]
      %v3917 = vld [vmem:[%s3916] ss:$2 sm:$0xff]
      %s3918 = scalar_lea.vmem %s3702, 626 [#allocation2]
      %v3919 = vld [vmem:[%s3918] ss:$2 sm:$0xff]
      %s3920 = scalar_lea.vmem %s3702, 674 [#allocation2]
      %v3921 = vld [vmem:[%s3920] ss:$2 sm:$0xff]
      %s3922 = scalar_lea.vmem %s3702, 722 [#allocation2]
      %v3923 = vld [vmem:[%s3922] ss:$2 sm:$0xff]
      %s3924 = scalar_lea.vmem %s3702, 770 [#allocation2]
      %v3925 = vld [vmem:[%s3924] ss:$2 sm:$0xff]
      %s3926 = scalar_lea.vmem %s3702, 866 [#allocation2]
      %v3927 = vld [vmem:[%s3926] ss:$2 sm:$0xff]
      %s3928 = scalar_lea.vmem %s3702, 914 [#allocation2]
      %v3929 = vld [vmem:[%s3928] ss:$2 sm:$0xff]
      %s3930 = scalar_lea.vmem %s3702, 962 [#allocation2]
      %v3931 = vld [vmem:[%s3930] ss:$2 sm:$0xff]
      %s3932 = scalar_lea.vmem %s3702, 1010 [#allocation2]
      %v3933 = vld [vmem:[%s3932] ss:$2 sm:$0xff]
      %s3934 = scalar_lea.vmem %s3702, 1058 [#allocation2]
      %v3935 = vld [vmem:[%s3934] ss:$2 sm:$0xff]
      %s3936 = scalar_lea.vmem %s3702, 1106 [#allocation2]
      %v3937 = vld [vmem:[%s3936] ss:$2 sm:$0xff]
      %s3938 = scalar_lea.vmem %s3702, 1154 [#allocation2]
      %v3939 = vld [vmem:[%s3938] ss:$2 sm:$0xff]
      %s3940 = scalar_lea.vmem %s3702, 1202 [#allocation2]
      %v3941 = vld [vmem:[%s3940] ss:$2 sm:$0xff]
      %s3942 = scalar_lea.vmem %s3702, 1298 [#allocation2]
      %v3943 = vld [vmem:[%s3942] ss:$2 sm:$0xff]
      %s3944 = scalar_lea.vmem %s3702, 1346 [#allocation2]
      %v3945 = vld [vmem:[%s3944] ss:$2 sm:$0xff]
      %s3946 = scalar_lea.vmem %s3702, 1394 [#allocation2]
      %v3947 = vld [vmem:[%s3946] ss:$2 sm:$0xff]
      %s3948 = scalar_lea.vmem %s3702, 1442 [#allocation2]
      %v3949 = vld [vmem:[%s3948] ss:$2 sm:$0xff]
      %s3950 = scalar_lea.vmem %s3702, 1490 [#allocation2]
      %v3951 = vld [vmem:[%s3950] ss:$2 sm:$0xff]
      %s3952 = scalar_lea.vmem %s3702, 1538 [#allocation2]
      %v3953 = vld [vmem:[%s3952] ss:$2 sm:$0xff]
      %s3954 = scalar_lea.vmem %s3702, 1586 [#allocation2]
      %v3955 = vld [vmem:[%s3954] ss:$2 sm:$0xff]
      %s3956 = scalar_lea.vmem %s3702, 1634 [#allocation2]
      %v3957 = vld [vmem:[%s3956] ss:$2 sm:$0xff]
      %3958 = vst [vmem:[#allocation4 + $0x10] sm:$0xff] %v3895
      %3959 = vst [vmem:[#allocation4 + $0x30] sm:$0xff] %v3897
      %3960 = vst [vmem:[#allocation4 + $0x50] sm:$0xff] %v3899
      %3961 = vst [vmem:[#allocation4 + $0x70] sm:$0xff] %v3901
      %3962 = vst [vmem:[#allocation4 + $0x90] sm:$0xff] %v3903
      %3963 = vst [vmem:[#allocation4 + $0xb0] sm:$0xff] %v3905
      %3964 = vst [vmem:[#allocation4 + $0xd0] sm:$0xff] %v3907
      %3965 = vst [vmem:[#allocation4 + $0xf0] sm:$0xff] %v3909
      %3966 = vst [vmem:[#allocation4 + $0x110] sm:$0xff] %v3911
      %3967 = vst [vmem:[#allocation4 + $0x130] sm:$0xff] %v3913
      %3968 = vst [vmem:[#allocation4 + $0x150] sm:$0xff] %v3915
      %3969 = vst [vmem:[#allocation4 + $0x170] sm:$0xff] %v3917
      %3970 = vst [vmem:[#allocation4 + $0x190] sm:$0xff] %v3919
      %3971 = vst [vmem:[#allocation4 + $0x1b0] sm:$0xff] %v3921
      %3972 = vst [vmem:[#allocation4 + $0x1d0] sm:$0xff] %v3923
      %3973 = vst [vmem:[#allocation4 + $0x1f0] sm:$0xff] %v3925
      %3974 = vst [vmem:[#allocation4 + $0x210] sm:$0xff] %v3927
      %3975 = vst [vmem:[#allocation4 + $0x230] sm:$0xff] %v3929
      %3976 = vst [vmem:[#allocation4 + $0x250] sm:$0xff] %v3931
      %3977 = vst [vmem:[#allocation4 + $0x270] sm:$0xff] %v3933
      %3978 = vst [vmem:[#allocation4 + $0x290] sm:$0xff] %v3935
      %3979 = vst [vmem:[#allocation4 + $0x2b0] sm:$0xff] %v3937
      %3980 = vst [vmem:[#allocation4 + $0x2d0] sm:$0xff] %v3939
      %3981 = vst [vmem:[#allocation4 + $0x2f0] sm:$0xff] %v3941
      %3982 = vst [vmem:[#allocation4 + $0x310] sm:$0xff] %v3943
      %3983 = vst [vmem:[#allocation4 + $0x330] sm:$0xff] %v3945
      %3984 = vst [vmem:[#allocation4 + $0x350] sm:$0xff] %v3947
      %3985 = vst [vmem:[#allocation4 + $0x370] sm:$0xff] %v3949
      %3986 = vst [vmem:[#allocation4 + $0x390] sm:$0xff] %v3951
      %3987 = vst [vmem:[#allocation4 + $0x3b0] sm:$0xff] %v3953
      %3988 = vst [vmem:[#allocation4 + $0x3d0] sm:$0xff] %v3955
      %3989 = vst [vmem:[#allocation4 + $0x3f0] sm:$0xff] %v3957
      %s3990 = scalar_lea.vmem %s3702, 3 [#allocation2]
      %v3991 = vld [vmem:[%s3990] ss:$2 sm:$0xff]
      %s3992 = scalar_lea.vmem %s3702, 51 [#allocation2]
      %v3993 = vld [vmem:[%s3992] ss:$2 sm:$0xff]
      %s3994 = scalar_lea.vmem %s3702, 99 [#allocation2]
      %v3995 = vld [vmem:[%s3994] ss:$2 sm:$0xff]
      %s3996 = scalar_lea.vmem %s3702, 147 [#allocation2]
      %v3997 = vld [vmem:[%s3996] ss:$2 sm:$0xff]
      %s3998 = scalar_lea.vmem %s3702, 195 [#allocation2]
      %v3999 = vld [vmem:[%s3998] ss:$2 sm:$0xff]
      %s4000 = scalar_lea.vmem %s3702, 243 [#allocation2]
      %v4001 = vld [vmem:[%s4000] ss:$2 sm:$0xff]
      %s4002 = scalar_lea.vmem %s3702, 291 [#allocation2]
      %v4003 = vld [vmem:[%s4002] ss:$2 sm:$0xff]
      %s4004 = scalar_lea.vmem %s3702, 339 [#allocation2]
      %v4005 = vld [vmem:[%s4004] ss:$2 sm:$0xff]
      %s4006 = scalar_lea.vmem %s3702, 435 [#allocation2]
      %v4007 = vld [vmem:[%s4006] ss:$2 sm:$0xff]
      %s4008 = scalar_lea.vmem %s3702, 483 [#allocation2]
      %v4009 = vld [vmem:[%s4008] ss:$2 sm:$0xff]
      %s4010 = scalar_lea.vmem %s3702, 531 [#allocation2]
      %v4011 = vld [vmem:[%s4010] ss:$2 sm:$0xff]
      %s4012 = scalar_lea.vmem %s3702, 579 [#allocation2]
      %v4013 = vld [vmem:[%s4012] ss:$2 sm:$0xff]
      %s4014 = scalar_lea.vmem %s3702, 627 [#allocation2]
      %v4015 = vld [vmem:[%s4014] ss:$2 sm:$0xff]
      %s4016 = scalar_lea.vmem %s3702, 675 [#allocation2]
      %v4017 = vld [vmem:[%s4016] ss:$2 sm:$0xff]
      %s4018 = scalar_lea.vmem %s3702, 723 [#allocation2]
      %v4019 = vld [vmem:[%s4018] ss:$2 sm:$0xff]
      %s4020 = scalar_lea.vmem %s3702, 771 [#allocation2]
      %v4021 = vld [vmem:[%s4020] ss:$2 sm:$0xff]
      %s4022 = scalar_lea.vmem %s3702, 867 [#allocation2]
      %v4023 = vld [vmem:[%s4022] ss:$2 sm:$0xff]
      %s4024 = scalar_lea.vmem %s3702, 915 [#allocation2]
      %v4025 = vld [vmem:[%s4024] ss:$2 sm:$0xff]
      %s4026 = scalar_lea.vmem %s3702, 963 [#allocation2]
      %v4027 = vld [vmem:[%s4026] ss:$2 sm:$0xff]
      %s4028 = scalar_lea.vmem %s3702, 1011 [#allocation2]
      %v4029 = vld [vmem:[%s4028] ss:$2 sm:$0xff]
      %s4030 = scalar_lea.vmem %s3702, 1059 [#allocation2]
      %v4031 = vld [vmem:[%s4030] ss:$2 sm:$0xff]
      %s4032 = scalar_lea.vmem %s3702, 1107 [#allocation2]
      %v4033 = vld [vmem:[%s4032] ss:$2 sm:$0xff]
      %s4034 = scalar_lea.vmem %s3702, 1155 [#allocation2]
      %v4035 = vld [vmem:[%s4034] ss:$2 sm:$0xff]
      %s4036 = scalar_lea.vmem %s3702, 1203 [#allocation2]
      %v4037 = vld [vmem:[%s4036] ss:$2 sm:$0xff]
      %s4038 = scalar_lea.vmem %s3702, 1299 [#allocation2]
      %v4039 = vld [vmem:[%s4038] ss:$2 sm:$0xff]
      %s4040 = scalar_lea.vmem %s3702, 1347 [#allocation2]
      %v4041 = vld [vmem:[%s4040] ss:$2 sm:$0xff]
      %s4042 = scalar_lea.vmem %s3702, 1395 [#allocation2]
      %v4043 = vld [vmem:[%s4042] ss:$2 sm:$0xff]
      %s4044 = scalar_lea.vmem %s3702, 1443 [#allocation2]
      %v4045 = vld [vmem:[%s4044] ss:$2 sm:$0xff]
      %s4046 = scalar_lea.vmem %s3702, 1491 [#allocation2]
      %v4047 = vld [vmem:[%s4046] ss:$2 sm:$0xff]
      %s4048 = scalar_lea.vmem %s3702, 1539 [#allocation2]
      %v4049 = vld [vmem:[%s4048] ss:$2 sm:$0xff]
      %s4050 = scalar_lea.vmem %s3702, 1587 [#allocation2]
      %v4051 = vld [vmem:[%s4050] ss:$2 sm:$0xff]
      %s4052 = scalar_lea.vmem %s3702, 1635 [#allocation2]
      %v4053 = vld [vmem:[%s4052] ss:$2 sm:$0xff]
      %4054 = vst [vmem:[#allocation4 + $0x18] sm:$0xff] %v3991
      %4055 = vst [vmem:[#allocation4 + $0x38] sm:$0xff] %v3993
      %4056 = vst [vmem:[#allocation4 + $0x58] sm:$0xff] %v3995
      %4057 = vst [vmem:[#allocation4 + $0x78] sm:$0xff] %v3997
      %4058 = vst [vmem:[#allocation4 + $0x98] sm:$0xff] %v3999
      %4059 = vst [vmem:[#allocation4 + $0xb8] sm:$0xff] %v4001
      %4060 = vst [vmem:[#allocation4 + $0xd8] sm:$0xff] %v4003
      %4061 = vst [vmem:[#allocation4 + $0xf8] sm:$0xff] %v4005
      %4062 = vst [vmem:[#allocation4 + $0x118] sm:$0xff] %v4007
      %4063 = vst [vmem:[#allocation4 + $0x138] sm:$0xff] %v4009
      %4064 = vst [vmem:[#allocation4 + $0x158] sm:$0xff] %v4011
      %4065 = vst [vmem:[#allocation4 + $0x178] sm:$0xff] %v4013
      %4066 = vst [vmem:[#allocation4 + $0x198] sm:$0xff] %v4015
      %4067 = vst [vmem:[#allocation4 + $0x1b8] sm:$0xff] %v4017
      %4068 = vst [vmem:[#allocation4 + $0x1d8] sm:$0xff] %v4019
      %4069 = vst [vmem:[#allocation4 + $0x1f8] sm:$0xff] %v4021
      %4070 = vst [vmem:[#allocation4 + $0x218] sm:$0xff] %v4023
      %4071 = vst [vmem:[#allocation4 + $0x238] sm:$0xff] %v4025
      %4072 = vst [vmem:[#allocation4 + $0x258] sm:$0xff] %v4027
      %4073 = vst [vmem:[#allocation4 + $0x278] sm:$0xff] %v4029
      %4074 = vst [vmem:[#allocation4 + $0x298] sm:$0xff] %v4031
      %4075 = vst [vmem:[#allocation4 + $0x2b8] sm:$0xff] %v4033
      %4076 = vst [vmem:[#allocation4 + $0x2d8] sm:$0xff] %v4035
      %4077 = vst [vmem:[#allocation4 + $0x2f8] sm:$0xff] %v4037
      %4078 = vst [vmem:[#allocation4 + $0x318] sm:$0xff] %v4039
      %4079 = vst [vmem:[#allocation4 + $0x338] sm:$0xff] %v4041
      %4080 = vst [vmem:[#allocation4 + $0x358] sm:$0xff] %v4043
      %4081 = vst [vmem:[#allocation4 + $0x378] sm:$0xff] %v4045
      %4082 = vst [vmem:[#allocation4 + $0x398] sm:$0xff] %v4047
      %4083 = vst [vmem:[#allocation4 + $0x3b8] sm:$0xff] %v4049
      %4084 = vst [vmem:[#allocation4 + $0x3d8] sm:$0xff] %v4051
      %4085 = vst [vmem:[#allocation4 + $0x3f8] sm:$0xff] %v4053
      %v4086 = vld [vmem:[#allocation4] sm:$0xff]
      %v4087 = vld [vmem:[#allocation4 + $0x8] sm:$0xff]
      %v4088 = vld [vmem:[#allocation4 + $0x10] sm:$0xff]
      %v4089 = vld [vmem:[#allocation4 + $0x18] sm:$0xff]
      %v4090 = vld [vmem:[#allocation4 + $0x20] sm:$0xff]
      %v4091 = vld [vmem:[#allocation4 + $0x28] sm:$0xff]
      %v4092 = vld [vmem:[#allocation4 + $0x30] sm:$0xff]
      %v4093 = vld [vmem:[#allocation4 + $0x38] sm:$0xff]
      %v4094 = vld [vmem:[#allocation4 + $0x40] sm:$0xff]
      %v4095 = vld [vmem:[#allocation4 + $0x48] sm:$0xff]
      %v4096 = vld [vmem:[#allocation4 + $0x50] sm:$0xff]
      %v4097 = vld [vmem:[#allocation4 + $0x58] sm:$0xff]
      %v4098 = vld [vmem:[#allocation4 + $0x60] sm:$0xff]
      %v4099 = vld [vmem:[#allocation4 + $0x68] sm:$0xff]
      %v4100 = vld [vmem:[#allocation4 + $0x70] sm:$0xff]
      %v4101 = vld [vmem:[#allocation4 + $0x78] sm:$0xff]
      %v4102 = vld [vmem:[#allocation4 + $0x80] sm:$0xff]
      %v4103 = vld [vmem:[#allocation4 + $0x88] sm:$0xff]
      %v4104 = vld [vmem:[#allocation4 + $0x90] sm:$0xff]
      %v4105 = vld [vmem:[#allocation4 + $0x98] sm:$0xff]
      %v4106 = vld [vmem:[#allocation4 + $0xa0] sm:$0xff]
      %v4107 = vld [vmem:[#allocation4 + $0xa8] sm:$0xff]
      %v4108 = vld [vmem:[#allocation4 + $0xb0] sm:$0xff]
      %v4109 = vld [vmem:[#allocation4 + $0xb8] sm:$0xff]
      %v4110 = vld [vmem:[#allocation4 + $0xc0] sm:$0xff]
      %v4111 = vld [vmem:[#allocation4 + $0xc8] sm:$0xff]
      %v4112 = vld [vmem:[#allocation4 + $0xd0] sm:$0xff]
      %v4113 = vld [vmem:[#allocation4 + $0xd8] sm:$0xff]
      %v4114 = vld [vmem:[#allocation4 + $0xe0] sm:$0xff]
      %v4115 = vld [vmem:[#allocation4 + $0xe8] sm:$0xff]
      %v4116 = vld [vmem:[#allocation4 + $0xf0] sm:$0xff]
      %v4117 = vld [vmem:[#allocation4 + $0xf8] sm:$0xff]
      %v4118 = vld [vmem:[#allocation4 + $0x100] sm:$0xff]
      %v4119 = vld [vmem:[#allocation4 + $0x108] sm:$0xff]
      %v4120 = vld [vmem:[#allocation4 + $0x110] sm:$0xff]
      %v4121 = vld [vmem:[#allocation4 + $0x118] sm:$0xff]
      %v4122 = vld [vmem:[#allocation4 + $0x120] sm:$0xff]
      %v4123 = vld [vmem:[#allocation4 + $0x128] sm:$0xff]
      %v4124 = vld [vmem:[#allocation4 + $0x130] sm:$0xff]
      %v4125 = vld [vmem:[#allocation4 + $0x138] sm:$0xff]
      %v4126 = vld [vmem:[#allocation4 + $0x140] sm:$0xff]
      %v4127 = vld [vmem:[#allocation4 + $0x148] sm:$0xff]
      %v4128 = vld [vmem:[#allocation4 + $0x150] sm:$0xff]
      %v4129 = vld [vmem:[#allocation4 + $0x158] sm:$0xff]
      %v4130 = vld [vmem:[#allocation4 + $0x160] sm:$0xff]
      %v4131 = vld [vmem:[#allocation4 + $0x168] sm:$0xff]
      %v4132 = vld [vmem:[#allocation4 + $0x170] sm:$0xff]
      %v4133 = vld [vmem:[#allocation4 + $0x178] sm:$0xff]
      %v4134 = vld [vmem:[#allocation4 + $0x180] sm:$0xff]
      %v4135 = vld [vmem:[#allocation4 + $0x188] sm:$0xff]
      %v4136 = vld [vmem:[#allocation4 + $0x190] sm:$0xff]
      %v4137 = vld [vmem:[#allocation4 + $0x198] sm:$0xff]
      %v4138 = vld [vmem:[#allocation4 + $0x1a0] sm:$0xff]
      %v4139 = vld [vmem:[#allocation4 + $0x1a8] sm:$0xff]
      %v4140 = vld [vmem:[#allocation4 + $0x1b0] sm:$0xff]
      %v4141 = vld [vmem:[#allocation4 + $0x1b8] sm:$0xff]
      %v4142 = vld [vmem:[#allocation4 + $0x1c0] sm:$0xff]
      %v4143 = vld [vmem:[#allocation4 + $0x1c8] sm:$0xff]
      %v4144 = vld [vmem:[#allocation4 + $0x1d0] sm:$0xff]
      %v4145 = vld [vmem:[#allocation4 + $0x1d8] sm:$0xff]
      %v4146 = vld [vmem:[#allocation4 + $0x1e0] sm:$0xff]
      %v4147 = vld [vmem:[#allocation4 + $0x1e8] sm:$0xff]
      %v4148 = vld [vmem:[#allocation4 + $0x1f0] sm:$0xff]
      %v4149 = vld [vmem:[#allocation4 + $0x1f8] sm:$0xff]
      %v4150 = vld [vmem:[#allocation4 + $0x200] sm:$0xff]
      %v4151 = vld [vmem:[#allocation4 + $0x208] sm:$0xff]
      %v4152 = vld [vmem:[#allocation4 + $0x210] sm:$0xff]
      %v4153 = vld [vmem:[#allocation4 + $0x218] sm:$0xff]
      %v4154 = vld [vmem:[#allocation4 + $0x220] sm:$0xff]
      %v4155 = vld [vmem:[#allocation4 + $0x228] sm:$0xff]
      %v4156 = vld [vmem:[#allocation4 + $0x230] sm:$0xff]
      %v4157 = vld [vmem:[#allocation4 + $0x238] sm:$0xff]
      %v4158 = vld [vmem:[#allocation4 + $0x240] sm:$0xff]
      %v4159 = vld [vmem:[#allocation4 + $0x248] sm:$0xff]
      %v4160 = vld [vmem:[#allocation4 + $0x250] sm:$0xff]
      %v4161 = vld [vmem:[#allocation4 + $0x258] sm:$0xff]
      %v4162 = vld [vmem:[#allocation4 + $0x260] sm:$0xff]
      %v4163 = vld [vmem:[#allocation4 + $0x268] sm:$0xff]
      %v4164 = vld [vmem:[#allocation4 + $0x270] sm:$0xff]
      %v4165 = vld [vmem:[#allocation4 + $0x278] sm:$0xff]
      %v4166 = vld [vmem:[#allocation4 + $0x280] sm:$0xff]
      %v4167 = vld [vmem:[#allocation4 + $0x288] sm:$0xff]
      %v4168 = vld [vmem:[#allocation4 + $0x290] sm:$0xff]
      %v4169 = vld [vmem:[#allocation4 + $0x298] sm:$0xff]
      %v4170 = vld [vmem:[#allocation4 + $0x2a0] sm:$0xff]
      %v4171 = vld [vmem:[#allocation4 + $0x2a8] sm:$0xff]
      %v4172 = vld [vmem:[#allocation4 + $0x2b0] sm:$0xff]
      %v4173 = vld [vmem:[#allocation4 + $0x2b8] sm:$0xff]
      %v4174 = vld [vmem:[#allocation4 + $0x2c0] sm:$0xff]
      %v4175 = vld [vmem:[#allocation4 + $0x2c8] sm:$0xff]
      %v4176 = vld [vmem:[#allocation4 + $0x2d0] sm:$0xff]
      %v4177 = vld [vmem:[#allocation4 + $0x2d8] sm:$0xff]
      %v4178 = vld [vmem:[#allocation4 + $0x2e0] sm:$0xff]
      %v4179 = vld [vmem:[#allocation4 + $0x2e8] sm:$0xff]
      %v4180 = vld [vmem:[#allocation4 + $0x2f0] sm:$0xff]
      %v4181 = vld [vmem:[#allocation4 + $0x2f8] sm:$0xff]
      %v4182 = vld [vmem:[#allocation4 + $0x300] sm:$0xff]
      %v4183 = vld [vmem:[#allocation4 + $0x308] sm:$0xff]
      %v4184 = vld [vmem:[#allocation4 + $0x310] sm:$0xff]
      %v4185 = vld [vmem:[#allocation4 + $0x318] sm:$0xff]
      %v4186 = vld [vmem:[#allocation4 + $0x320] sm:$0xff]
      %v4187 = vld [vmem:[#allocation4 + $0x328] sm:$0xff]
      %v4188 = vld [vmem:[#allocation4 + $0x330] sm:$0xff]
      %v4189 = vld [vmem:[#allocation4 + $0x338] sm:$0xff]
      %v4190 = vld [vmem:[#allocation4 + $0x340] sm:$0xff]
      %v4191 = vld [vmem:[#allocation4 + $0x348] sm:$0xff]
      %v4192 = vld [vmem:[#allocation4 + $0x350] sm:$0xff]
      %v4193 = vld [vmem:[#allocation4 + $0x358] sm:$0xff]
      %v4194 = vld [vmem:[#allocation4 + $0x360] sm:$0xff]
      %v4195 = vld [vmem:[#allocation4 + $0x368] sm:$0xff]
      %v4196 = vld [vmem:[#allocation4 + $0x370] sm:$0xff]
      %v4197 = vld [vmem:[#allocation4 + $0x378] sm:$0xff]
      %v4198 = vld [vmem:[#allocation4 + $0x380] sm:$0xff]
      %v4199 = vld [vmem:[#allocation4 + $0x388] sm:$0xff]
      %v4200 = vld [vmem:[#allocation4 + $0x390] sm:$0xff]
      %v4201 = vld [vmem:[#allocation4 + $0x398] sm:$0xff]
      %v4202 = vld [vmem:[#allocation4 + $0x3a0] sm:$0xff]
      %v4203 = vld [vmem:[#allocation4 + $0x3a8] sm:$0xff]
      %v4204 = vld [vmem:[#allocation4 + $0x3b0] sm:$0xff]
      %v4205 = vld [vmem:[#allocation4 + $0x3b8] sm:$0xff]
      %v4206 = vld [vmem:[#allocation4 + $0x3c0] sm:$0xff]
      %v4207 = vld [vmem:[#allocation4 + $0x3c8] sm:$0xff]
      %v4208 = vld [vmem:[#allocation4 + $0x3d0] sm:$0xff]
      %v4209 = vld [vmem:[#allocation4 + $0x3d8] sm:$0xff]
      %v4210 = vld [vmem:[#allocation4 + $0x3e0] sm:$0xff]
      %v4211 = vld [vmem:[#allocation4 + $0x3e8] sm:$0xff]
      %v4212 = vld [vmem:[#allocation4 + $0x3f0] sm:$0xff]
      %v4213 = vld [vmem:[#allocation4 + $0x3f8] sm:$0xff]
      %s4214 = scalar_lea.vmem %s3, 1024
      %v4215 = vld [vmem:[%s4214] sm:$0xff]
      %v4216 = vld [vmem:[%s4214 + $0x8] sm:$0xff]
      %v4217 = vld [vmem:[%s4214 + $0x10] sm:$0xff]
      %v4218 = vld [vmem:[%s4214 + $0x18] sm:$0xff]
      %v4219 = vld [vmem:[%s4214 + $0x20] sm:$0xff]
      %v4220 = vld [vmem:[%s4214 + $0x28] sm:$0xff]
      %v4221 = vld [vmem:[%s4214 + $0x30] sm:$0xff]
      %v4222 = vld [vmem:[%s4214 + $0x38] sm:$0xff]
      %v4223 = vld [vmem:[%s4214 + $0x40] sm:$0xff]
      %v4224 = vld [vmem:[%s4214 + $0x48] sm:$0xff]
      %v4225 = vld [vmem:[%s4214 + $0x50] sm:$0xff]
      %v4226 = vld [vmem:[%s4214 + $0x58] sm:$0xff]
      %v4227 = vld [vmem:[%s4214 + $0x60] sm:$0xff]
      %v4228 = vld [vmem:[%s4214 + $0x68] sm:$0xff]
      %v4229 = vld [vmem:[%s4214 + $0x70] sm:$0xff]
      %v4230 = vld [vmem:[%s4214 + $0x78] sm:$0xff]
      %v4231 = vld [vmem:[%s4214 + $0x80] sm:$0xff]
      %v4232 = vld [vmem:[%s4214 + $0x88] sm:$0xff]
      %v4233 = vld [vmem:[%s4214 + $0x90] sm:$0xff]
      %v4234 = vld [vmem:[%s4214 + $0x98] sm:$0xff]
      %v4235 = vld [vmem:[%s4214 + $0xa0] sm:$0xff]
      %v4236 = vld [vmem:[%s4214 + $0xa8] sm:$0xff]
      %v4237 = vld [vmem:[%s4214 + $0xb0] sm:$0xff]
      %v4238 = vld [vmem:[%s4214 + $0xb8] sm:$0xff]
      %v4239 = vld [vmem:[%s4214 + $0xc0] sm:$0xff]
      %v4240 = vld [vmem:[%s4214 + $0xc8] sm:$0xff]
      %v4241 = vld [vmem:[%s4214 + $0xd0] sm:$0xff]
      %v4242 = vld [vmem:[%s4214 + $0xd8] sm:$0xff]
      %v4243 = vld [vmem:[%s4214 + $0xe0] sm:$0xff]
      %v4244 = vld [vmem:[%s4214 + $0xe8] sm:$0xff]
      %v4245 = vld [vmem:[%s4214 + $0xf0] sm:$0xff]
      %v4246 = vld [vmem:[%s4214 + $0xf8] sm:$0xff]
      %v4247 = vld [vmem:[%s4214 + $0x100] sm:$0xff]
      %v4248 = vld [vmem:[%s4214 + $0x108] sm:$0xff]
      %v4249 = vld [vmem:[%s4214 + $0x110] sm:$0xff]
      %v4250 = vld [vmem:[%s4214 + $0x118] sm:$0xff]
      %v4251 = vld [vmem:[%s4214 + $0x120] sm:$0xff]
      %v4252 = vld [vmem:[%s4214 + $0x128] sm:$0xff]
      %v4253 = vld [vmem:[%s4214 + $0x130] sm:$0xff]
      %v4254 = vld [vmem:[%s4214 + $0x138] sm:$0xff]
      %v4255 = vld [vmem:[%s4214 + $0x140] sm:$0xff]
      %v4256 = vld [vmem:[%s4214 + $0x148] sm:$0xff]
      %v4257 = vld [vmem:[%s4214 + $0x150] sm:$0xff]
      %v4258 = vld [vmem:[%s4214 + $0x158] sm:$0xff]
      %v4259 = vld [vmem:[%s4214 + $0x160] sm:$0xff]
      %v4260 = vld [vmem:[%s4214 + $0x168] sm:$0xff]
      %v4261 = vld [vmem:[%s4214 + $0x170] sm:$0xff]
      %v4262 = vld [vmem:[%s4214 + $0x178] sm:$0xff]
      %v4263 = vld [vmem:[%s4214 + $0x180] sm:$0xff]
      %v4264 = vld [vmem:[%s4214 + $0x188] sm:$0xff]
      %v4265 = vld [vmem:[%s4214 + $0x190] sm:$0xff]
      %v4266 = vld [vmem:[%s4214 + $0x198] sm:$0xff]
      %v4267 = vld [vmem:[%s4214 + $0x1a0] sm:$0xff]
      %v4268 = vld [vmem:[%s4214 + $0x1a8] sm:$0xff]
      %v4269 = vld [vmem:[%s4214 + $0x1b0] sm:$0xff]
      %v4270 = vld [vmem:[%s4214 + $0x1b8] sm:$0xff]
      %v4271 = vld [vmem:[%s4214 + $0x1c0] sm:$0xff]
      %v4272 = vld [vmem:[%s4214 + $0x1c8] sm:$0xff]
      %v4273 = vld [vmem:[%s4214 + $0x1d0] sm:$0xff]
      %v4274 = vld [vmem:[%s4214 + $0x1d8] sm:$0xff]
      %v4275 = vld [vmem:[%s4214 + $0x1e0] sm:$0xff]
      %v4276 = vld [vmem:[%s4214 + $0x1e8] sm:$0xff]
      %v4277 = vld [vmem:[%s4214 + $0x1f0] sm:$0xff]
      %v4278 = vld [vmem:[%s4214 + $0x1f8] sm:$0xff]
      %4279 = vmatprep.subr.mxu0 0.0
      %4280 = vmatpush1.msra.mxu0 %v4215
      %4281 = vmatprep.subr.mxu0 0.0
      %4282 = vmatpush1.msra.mxu0 %v4216
      %4283 = vmatprep.subr.mxu0 0.0
      %4284 = vmatpush1.msra.mxu0 %v4217
      %4285 = vmatprep.subr.mxu0 0.0
      %4286 = vmatpush1.msra.mxu0 %v4218
      %4287 = vmatprep.subr.mxu0 0.0
      %4288 = vmatpush1.msra.mxu0 %v4219
      %4289 = vmatprep.subr.mxu0 0.0
      %4290 = vmatpush1.msra.mxu0 %v4220
      %4291 = vmatprep.subr.mxu0 0.0
      %4292 = vmatpush1.msra.mxu0 %v4221
      %4293 = vmatprep.subr.mxu0 0.0
      %4294 = vmatpush1.msra.mxu0 %v4222
      %4295 = vmatprep.subr.mxu0 0.0
      %4296 = vmatpush1.msra.mxu0 %v4223
      %4297 = vmatprep.subr.mxu0 0.0
      %4298 = vmatpush1.msra.mxu0 %v4224
      %4299 = vmatprep.subr.mxu0 0.0
      %4300 = vmatpush1.msra.mxu0 %v4225
      %4301 = vmatprep.subr.mxu0 0.0
      %4302 = vmatpush1.msra.mxu0 %v4226
      %4303 = vmatprep.subr.mxu0 0.0
      %4304 = vmatpush1.msra.mxu0 %v4227
      %4305 = vmatprep.subr.mxu0 0.0
      %4306 = vmatpush1.msra.mxu0 %v4228
      %4307 = vmatprep.subr.mxu0 0.0
      %4308 = vmatpush1.msra.mxu0 %v4229
      %4309 = vmatprep.subr.mxu0 0.0
      %4310 = vmatpush1.msra.mxu0 %v4230
      %4311 = vmatprep.subr.mxu0 0.0
      %4312 = vmatpush1.msra.mxu0 %v4231
      %4313 = vmatprep.subr.mxu0 0.0
      %4314 = vmatpush1.msra.mxu0 %v4232
      %4315 = vmatprep.subr.mxu0 0.0
      %4316 = vmatpush1.msra.mxu0 %v4233
      %4317 = vmatprep.subr.mxu0 0.0
      %4318 = vmatpush1.msra.mxu0 %v4234
      %4319 = vmatprep.subr.mxu0 0.0
      %4320 = vmatpush1.msra.mxu0 %v4235
      %4321 = vmatprep.subr.mxu0 0.0
      %4322 = vmatpush1.msra.mxu0 %v4236
      %4323 = vmatprep.subr.mxu0 0.0
      %4324 = vmatpush1.msra.mxu0 %v4237
      %4325 = vmatprep.subr.mxu0 0.0
      %4326 = vmatpush1.msra.mxu0 %v4238
      %4327 = vmatprep.subr.mxu0 0.0
      %4328 = vmatpush1.msra.mxu0 %v4239
      %4329 = vmatprep.subr.mxu0 0.0
      %4330 = vmatpush1.msra.mxu0 %v4240
      %4331 = vmatprep.subr.mxu0 0.0
      %4332 = vmatpush1.msra.mxu0 %v4241
      %4333 = vmatprep.subr.mxu0 0.0
      %4334 = vmatpush1.msra.mxu0 %v4242
      %4335 = vmatprep.subr.mxu0 0.0
      %4336 = vmatpush1.msra.mxu0 %v4243
      %4337 = vmatprep.subr.mxu0 0.0
      %4338 = vmatpush1.msra.mxu0 %v4244
      %4339 = vmatprep.subr.mxu0 0.0
      %4340 = vmatpush1.msra.mxu0 %v4245
      %4341 = vmatprep.subr.mxu0 0.0
      %4342 = vmatpush1.msra.mxu0 %v4246
      %4343 = vmatprep.mubr.f32.mxu0 %v4087
      %4344 = vmatmul.mubr.f32.gmra.mrb[0].mxu0 %v4086
      %v4345 = vpop.f32.mrb[0].mxu0
      %v4346 = vadd.f32 0.0, %v4345
      %v4347 = vpop.f32.mrb[0].mxu0
      %4348 = vmatprep.mubr.f32.mxu0 %v4091
      %4349 = vmatmul.mubr.f32.gmra.mrb[0].mxu0 %v4090
      %v4350 = vpop.f32.mrb[0].mxu0
      %v4351 = vadd.f32 0.0, %v4350
      %v4352 = vpop.f32.mrb[0].mxu0
      %4353 = vmatprep.mubr.f32.mxu0 %v4095
      %4354 = vmatmul.mubr.f32.gmra.mrb[0].mxu0 %v4094
      %v4355 = vpop.f32.mrb[0].mxu0
      %v4356 = vadd.f32 0.0, %v4355
      %v4357 = vpop.f32.mrb[0].mxu0
      %4358 = vmatprep.mubr.f32.mxu0 %v4099
      %4359 = vmatmul.mubr.f32.gmra.mrb[0].mxu0 %v4098
      %v4360 = vpop.f32.mrb[0].mxu0
      %v4361 = vadd.f32 0.0, %v4360
      %v4362 = vpop.f32.mrb[0].mxu0
      %4363 = vmatprep.mubr.f32.mxu0 %v4103
      %4364 = vmatmul.mubr.f32.gmra.mrb[0].mxu0 %v4102
      %v4365 = vpop.f32.mrb[0].mxu0
      %v4366 = vadd.f32 0.0, %v4365
      %v4367 = vpop.f32.mrb[0].mxu0
      %4368 = vmatprep.mubr.f32.mxu0 %v4107
      %4369 = vmatmul.mubr.f32.gmra.mrb[0].mxu0 %v4106
      %v4370 = vpop.f32.mrb[0].mxu0
      %v4371 = vadd.f32 0.0, %v4370
      %v4372 = vpop.f32.mrb[0].mxu0
      %4373 = vmatprep.mubr.f32.mxu0 %v4111
      %4374 = vmatmul.mubr.f32.gmra.mrb[0].mxu0 %v4110
      %v4375 = vpop.f32.mrb[0].mxu0
      %v4376 = vadd.f32 0.0, %v4375
      %v4377 = vpop.f32.mrb[0].mxu0
      %4378 = vmatprep.mubr.f32.mxu0 %v4115
      %4379 = vmatmul.mubr.f32.gmra.mrb[0].mxu0 %v4114
      %v4380 = vpop.f32.mrb[0].mxu0
      %v4381 = vadd.f32 0.0, %v4380
      %v4382 = vpop.f32.mrb[0].mxu0
      %4383 = vmatprep.mubr.f32.mxu0 %v4119
      %4384 = vmatmul.mubr.f32.gmra.mrb[0].mxu0 %v4118
      %v4385 = vpop.f32.mrb[0].mxu0
      %v4386 = vadd.f32 0.0, %v4385
      %v4387 = vpop.f32.mrb[0].mxu0
      %4388 = vmatprep.mubr.f32.mxu0 %v4123
      %4389 = vmatmul.mubr.f32.gmra.mrb[0].mxu0 %v4122
      %v4390 = vpop.f32.mrb[0].mxu0
      %v4391 = vadd.f32 0.0, %v4390
      %v4392 = vpop.f32.mrb[0].mxu0
      %4393 = vmatprep.mubr.f32.mxu0 %v4127
      %4394 = vmatmul.mubr.f32.gmra.mrb[0].mxu0 %v4126
      %v4395 = vpop.f32.mrb[0].mxu0
      %v4396 = vadd.f32 0.0, %v4395
      %v4397 = vpop.f32.mrb[0].mxu0
      %4398 = vmatprep.mubr.f32.mxu0 %v4131
      %4399 = vmatmul.mubr.f32.gmra.mrb[0].mxu0 %v4130
      %v4400 = vpop.f32.mrb[0].mxu0
      %v4401 = vadd.f32 0.0, %v4400
      %v4402 = vpop.f32.mrb[0].mxu0
      %4403 = vmatprep.mubr.f32.mxu0 %v4135
      %4404 = vmatmul.mubr.f32.gmra.mrb[0].mxu0 %v4134
      %v4405 = vpop.f32.mrb[0].mxu0
      %v4406 = vadd.f32 0.0, %v4405
      %v4407 = vpop.f32.mrb[0].mxu0
      %4408 = vmatprep.mubr.f32.mxu0 %v4139
      %4409 = vmatmul.mubr.f32.gmra.mrb[0].mxu0 %v4138
      %v4410 = vpop.f32.mrb[0].mxu0
      %v4411 = vadd.f32 0.0, %v4410
      %v4412 = vpop.f32.mrb[0].mxu0
      %4413 = vmatprep.mubr.f32.mxu0 %v4143
      %4414 = vmatmul.mubr.f32.gmra.mrb[0].mxu0 %v4142
      %v4415 = vpop.f32.mrb[0].mxu0
      %v4416 = vadd.f32 0.0, %v4415
      %v4417 = vpop.f32.mrb[0].mxu0
      %4418 = vmatprep.mubr.f32.mxu0 %v4147
      %4419 = vmatmul.mubr.f32.gmra.mrb[0].mxu0 %v4146
      %v4420 = vpop.f32.mrb[0].mxu0
      %v4421 = vadd.f32 0.0, %v4420
      %v4422 = vpop.f32.mrb[0].mxu0
      %4423 = vmatprep.mubr.f32.mxu0 %v4151
      %4424 = vmatmul.mubr.f32.gmra.mrb[0].mxu0 %v4150
      %v4425 = vpop.f32.mrb[0].mxu0
      %v4426 = vadd.f32 0.0, %v4425
      %v4427 = vpop.f32.mrb[0].mxu0
      %4428 = vmatprep.mubr.f32.mxu0 %v4155
      %4429 = vmatmul.mubr.f32.gmra.mrb[0].mxu0 %v4154
      %v4430 = vpop.f32.mrb[0].mxu0
      %v4431 = vadd.f32 0.0, %v4430
      %v4432 = vpop.f32.mrb[0].mxu0
      %4433 = vmatprep.mubr.f32.mxu0 %v4159
      %4434 = vmatmul.mubr.f32.gmra.mrb[0].mxu0 %v4158
      %v4435 = vpop.f32.mrb[0].mxu0
      %v4436 = vadd.f32 0.0, %v4435
      %v4437 = vpop.f32.mrb[0].mxu0
      %4438 = vmatprep.mubr.f32.mxu0 %v4163
      %4439 = vmatmul.mubr.f32.gmra.mrb[0].mxu0 %v4162
      %v4440 = vpop.f32.mrb[0].mxu0
      %v4441 = vadd.f32 0.0, %v4440
      %v4442 = vpop.f32.mrb[0].mxu0
      %4443 = vmatprep.mubr.f32.mxu0 %v4167
      %4444 = vmatmul.mubr.f32.gmra.mrb[0].mxu0 %v4166
      %v4445 = vpop.f32.mrb[0].mxu0
      %v4446 = vadd.f32 0.0, %v4445
      %v4447 = vpop.f32.mrb[0].mxu0
      %4448 = vmatprep.mubr.f32.mxu0 %v4171
      %4449 = vmatmul.mubr.f32.gmra.mrb[0].mxu0 %v4170
      %v4450 = vpop.f32.mrb[0].mxu0
      %v4451 = vadd.f32 0.0, %v4450
      %v4452 = vpop.f32.mrb[0].mxu0
      %4453 = vmatprep.mubr.f32.mxu0 %v4175
      %4454 = vmatmul.mubr.f32.gmra.mrb[0].mxu0 %v4174
      %v4455 = vpop.f32.mrb[0].mxu0
      %v4456 = vadd.f32 0.0, %v4455
      %v4457 = vpop.f32.mrb[0].mxu0
      %4458 = vmatprep.mubr.f32.mxu0 %v4179
      %4459 = vmatmul.mubr.f32.gmra.mrb[0].mxu0 %v4178
      %v4460 = vpop.f32.mrb[0].mxu0
      %v4461 = vadd.f32 0.0, %v4460
      %v4462 = vpop.f32.mrb[0].mxu0
      %4463 = vmatprep.mubr.f32.mxu0 %v4183
      %4464 = vmatmul.mubr.f32.gmra.mrb[0].mxu0 %v4182
      %v4465 = vpop.f32.mrb[0].mxu0
      %v4466 = vadd.f32 0.0, %v4465
      %v4467 = vpop.f32.mrb[0].mxu0
      %4468 = vmatprep.mubr.f32.mxu0 %v4187
      %4469 = vmatmul.mubr.f32.gmra.mrb[0].mxu0 %v4186
      %v4470 = vpop.f32.mrb[0].mxu0
      %v4471 = vadd.f32 0.0, %v4470
      %v4472 = vpop.f32.mrb[0].mxu0
      %4473 = vmatprep.mubr.f32.mxu0 %v4191
      %4474 = vmatmul.mubr.f32.gmra.mrb[0].mxu0 %v4190
      %v4475 = vpop.f32.mrb[0].mxu0
      %v4476 = vadd.f32 0.0, %v4475
      %v4477 = vpop.f32.mrb[0].mxu0
      %4478 = vmatprep.mubr.f32.mxu0 %v4195
      %4479 = vmatmul.mubr.f32.gmra.mrb[0].mxu0 %v4194
      %v4480 = vpop.f32.mrb[0].mxu0
      %v4481 = vadd.f32 0.0, %v4480
      %v4482 = vpop.f32.mrb[0].mxu0
      %4483 = vmatprep.mubr.f32.mxu0 %v4199
      %4484 = vmatmul.mubr.f32.gmra.mrb[0].mxu0 %v4198
      %v4485 = vpop.f32.mrb[0].mxu0
      %v4486 = vadd.f32 0.0, %v4485
      %v4487 = vpop.f32.mrb[0].mxu0
      %4488 = vmatprep.mubr.f32.mxu0 %v4203
      %4489 = vmatmul.mubr.f32.gmra.mrb[0].mxu0 %v4202
      %v4490 = vpop.f32.mrb[0].mxu0
      %v4491 = vadd.f32 0.0, %v4490
      %v4492 = vpop.f32.mrb[0].mxu0
      %4493 = vmatprep.mubr.f32.mxu0 %v4207
      %4494 = vmatmul.mubr.f32.gmra.mrb[0].mxu0 %v4206
      %v4495 = vpop.f32.mrb[0].mxu0
      %v4496 = vadd.f32 0.0, %v4495
      %v4497 = vpop.f32.mrb[0].mxu0
      %4498 = vmatprep.mubr.f32.mxu0 %v4211
      %4499 = vmatmul.mubr.f32.gmra.mrb[0].mxu0 %v4210
      %v4500 = vpop.f32.mrb[0].mxu0
      %v4501 = vadd.f32 0.0, %v4500
      %v4502 = vpop.f32.mrb[0].mxu0
      %4503 = vdwg.mxu0
      %4504 = vmatprep.subr.mxu0 0.0
      %4505 = vmatpush1.msra.mxu0 %v4247
      %4506 = vmatprep.subr.mxu0 0.0
      %4507 = vmatpush1.msra.mxu0 %v4248
      %4508 = vmatprep.subr.mxu0 0.0
      %4509 = vmatpush1.msra.mxu0 %v4249
      %4510 = vmatprep.subr.mxu0 0.0
      %4511 = vmatpush1.msra.mxu0 %v4250
      %4512 = vmatprep.subr.mxu0 0.0
      %4513 = vmatpush1.msra.mxu0 %v4251
      %4514 = vmatprep.subr.mxu0 0.0
      %4515 = vmatpush1.msra.mxu0 %v4252
      %4516 = vmatprep.subr.mxu0 0.0
      %4517 = vmatpush1.msra.mxu0 %v4253
      %4518 = vmatprep.subr.mxu0 0.0
      %4519 = vmatpush1.msra.mxu0 %v4254
      %4520 = vmatprep.subr.mxu0 0.0
      %4521 = vmatpush1.msra.mxu0 %v4255
      %4522 = vmatprep.subr.mxu0 0.0
      %4523 = vmatpush1.msra.mxu0 %v4256
      %4524 = vmatprep.subr.mxu0 0.0
      %4525 = vmatpush1.msra.mxu0 %v4257
      %4526 = vmatprep.subr.mxu0 0.0
      %4527 = vmatpush1.msra.mxu0 %v4258
      %4528 = vmatprep.subr.mxu0 0.0
      %4529 = vmatpush1.msra.mxu0 %v4259
      %4530 = vmatprep.subr.mxu0 0.0
      %4531 = vmatpush1.msra.mxu0 %v4260
      %4532 = vmatprep.subr.mxu0 0.0
      %4533 = vmatpush1.msra.mxu0 %v4261
      %4534 = vmatprep.subr.mxu0 0.0
      %4535 = vmatpush1.msra.mxu0 %v4262
      %4536 = vmatprep.subr.mxu0 0.0
      %4537 = vmatpush1.msra.mxu0 %v4263
      %4538 = vmatprep.subr.mxu0 0.0
      %4539 = vmatpush1.msra.mxu0 %v4264
      %4540 = vmatprep.subr.mxu0 0.0
      %4541 = vmatpush1.msra.mxu0 %v4265
      %4542 = vmatprep.subr.mxu0 0.0
      %4543 = vmatpush1.msra.mxu0 %v4266
      %4544 = vmatprep.subr.mxu0 0.0
      %4545 = vmatpush1.msra.mxu0 %v4267
      %4546 = vmatprep.subr.mxu0 0.0
      %4547 = vmatpush1.msra.mxu0 %v4268
      %4548 = vmatprep.subr.mxu0 0.0
      %4549 = vmatpush1.msra.mxu0 %v4269
      %4550 = vmatprep.subr.mxu0 0.0
      %4551 = vmatpush1.msra.mxu0 %v4270
      %4552 = vmatprep.subr.mxu0 0.0
      %4553 = vmatpush1.msra.mxu0 %v4271
      %4554 = vmatprep.subr.mxu0 0.0
      %4555 = vmatpush1.msra.mxu0 %v4272
      %4556 = vmatprep.subr.mxu0 0.0
      %4557 = vmatpush1.msra.mxu0 %v4273
      %4558 = vmatprep.subr.mxu0 0.0
      %4559 = vmatpush1.msra.mxu0 %v4274
      %4560 = vmatprep.subr.mxu0 0.0
      %4561 = vmatpush1.msra.mxu0 %v4275
      %4562 = vmatprep.subr.mxu0 0.0
      %4563 = vmatpush1.msra.mxu0 %v4276
      %4564 = vmatprep.subr.mxu0 0.0
      %4565 = vmatpush1.msra.mxu0 %v4277
      %4566 = vmatprep.subr.mxu0 0.0
      %4567 = vmatpush1.msra.mxu0 %v4278
      %4568 = vmatprep.mubr.f32.mxu0 %v4089
      %4569 = vmatmul.mubr.f32.gmra.mrb[0].mxu0 %v4088
      %v4570 = vpop.f32.mrb[0].mxu0
      %v4571 = vadd.f32 %v4346, %v4570
      %v4572 = vpop.f32.mrb[0].mxu0
      %4573 = vmatprep.mubr.f32.mxu0 %v4093
      %4574 = vmatmul.mubr.f32.gmra.mrb[0].mxu0 %v4092
      %v4575 = vpop.f32.mrb[0].mxu0
      %v4576 = vadd.f32 %v4351, %v4575
      %v4577 = vpop.f32.mrb[0].mxu0
      %4578 = vmatprep.mubr.f32.mxu0 %v4097
      %4579 = vmatmul.mubr.f32.gmra.mrb[0].mxu0 %v4096
      %v4580 = vpop.f32.mrb[0].mxu0
      %v4581 = vadd.f32 %v4356, %v4580
      %v4582 = vpop.f32.mrb[0].mxu0
      %4583 = vmatprep.mubr.f32.mxu0 %v4101
      %4584 = vmatmul.mubr.f32.gmra.mrb[0].mxu0 %v4100
      %v4585 = vpop.f32.mrb[0].mxu0
      %v4586 = vadd.f32 %v4361, %v4585
      %v4587 = vpop.f32.mrb[0].mxu0
      %4588 = vmatprep.mubr.f32.mxu0 %v4105
      %4589 = vmatmul.mubr.f32.gmra.mrb[0].mxu0 %v4104
      %v4590 = vpop.f32.mrb[0].mxu0
      %v4591 = vadd.f32 %v4366, %v4590
      %v4592 = vpop.f32.mrb[0].mxu0
      %4593 = vmatprep.mubr.f32.mxu0 %v4109
      %4594 = vmatmul.mubr.f32.gmra.mrb[0].mxu0 %v4108
      %v4595 = vpop.f32.mrb[0].mxu0
      %v4596 = vadd.f32 %v4371, %v4595
      %v4597 = vpop.f32.mrb[0].mxu0
      %4598 = vmatprep.mubr.f32.mxu0 %v4113
      %4599 = vmatmul.mubr.f32.gmra.mrb[0].mxu0 %v4112
      %v4600 = vpop.f32.mrb[0].mxu0
      %v4601 = vadd.f32 %v4376, %v4600
      %v4602 = vpop.f32.mrb[0].mxu0
      %4603 = vmatprep.mubr.f32.mxu0 %v4117
      %4604 = vmatmul.mubr.f32.gmra.mrb[0].mxu0 %v4116
      %v4605 = vpop.f32.mrb[0].mxu0
      %v4606 = vadd.f32 %v4381, %v4605
      %v4607 = vpop.f32.mrb[0].mxu0
      %4608 = vmatprep.mubr.f32.mxu0 %v4121
      %4609 = vmatmul.mubr.f32.gmra.mrb[0].mxu0 %v4120
      %v4610 = vpop.f32.mrb[0].mxu0
      %v4611 = vadd.f32 %v4386, %v4610
      %v4612 = vpop.f32.mrb[0].mxu0
      %4613 = vmatprep.mubr.f32.mxu0 %v4125
      %4614 = vmatmul.mubr.f32.gmra.mrb[0].mxu0 %v4124
      %v4615 = vpop.f32.mrb[0].mxu0
      %v4616 = vadd.f32 %v4391, %v4615
      %v4617 = vpop.f32.mrb[0].mxu0
      %4618 = vmatprep.mubr.f32.mxu0 %v4129
      %4619 = vmatmul.mubr.f32.gmra.mrb[0].mxu0 %v4128
      %v4620 = vpop.f32.mrb[0].mxu0
      %v4621 = vadd.f32 %v4396, %v4620
      %v4622 = vpop.f32.mrb[0].mxu0
      %4623 = vmatprep.mubr.f32.mxu0 %v4133
      %4624 = vmatmul.mubr.f32.gmra.mrb[0].mxu0 %v4132
      %v4625 = vpop.f32.mrb[0].mxu0
      %v4626 = vadd.f32 %v4401, %v4625
      %v4627 = vpop.f32.mrb[0].mxu0
      %4628 = vmatprep.mubr.f32.mxu0 %v4137
      %4629 = vmatmul.mubr.f32.gmra.mrb[0].mxu0 %v4136
      %v4630 = vpop.f32.mrb[0].mxu0
      %v4631 = vadd.f32 %v4406, %v4630
      %v4632 = vpop.f32.mrb[0].mxu0
      %4633 = vmatprep.mubr.f32.mxu0 %v4141
      %4634 = vmatmul.mubr.f32.gmra.mrb[0].mxu0 %v4140
      %v4635 = vpop.f32.mrb[0].mxu0
      %v4636 = vadd.f32 %v4411, %v4635
      %v4637 = vpop.f32.mrb[0].mxu0
      %4638 = vmatprep.mubr.f32.mxu0 %v4145
      %4639 = vmatmul.mubr.f32.gmra.mrb[0].mxu0 %v4144
      %v4640 = vpop.f32.mrb[0].mxu0
      %v4641 = vadd.f32 %v4416, %v4640
      %v4642 = vpop.f32.mrb[0].mxu0
      %4643 = vmatprep.mubr.f32.mxu0 %v4149
      %4644 = vmatmul.mubr.f32.gmra.mrb[0].mxu0 %v4148
      %v4645 = vpop.f32.mrb[0].mxu0
      %v4646 = vadd.f32 %v4421, %v4645
      %v4647 = vpop.f32.mrb[0].mxu0
      %4648 = vmatprep.mubr.f32.mxu0 %v4153
      %4649 = vmatmul.mubr.f32.gmra.mrb[0].mxu0 %v4152
      %v4650 = vpop.f32.mrb[0].mxu0
      %v4651 = vadd.f32 %v4426, %v4650
      %v4652 = vpop.f32.mrb[0].mxu0
      %4653 = vmatprep.mubr.f32.mxu0 %v4157
      %4654 = vmatmul.mubr.f32.gmra.mrb[0].mxu0 %v4156
      %v4655 = vpop.f32.mrb[0].mxu0
      %v4656 = vadd.f32 %v4431, %v4655
      %v4657 = vpop.f32.mrb[0].mxu0
      %4658 = vmatprep.mubr.f32.mxu0 %v4161
      %4659 = vmatmul.mubr.f32.gmra.mrb[0].mxu0 %v4160
      %v4660 = vpop.f32.mrb[0].mxu0
      %v4661 = vadd.f32 %v4436, %v4660
      %v4662 = vpop.f32.mrb[0].mxu0
      %4663 = vmatprep.mubr.f32.mxu0 %v4165
      %4664 = vmatmul.mubr.f32.gmra.mrb[0].mxu0 %v4164
      %v4665 = vpop.f32.mrb[0].mxu0
      %v4666 = vadd.f32 %v4441, %v4665
      %v4667 = vpop.f32.mrb[0].mxu0
      %4668 = vmatprep.mubr.f32.mxu0 %v4169
      %4669 = vmatmul.mubr.f32.gmra.mrb[0].mxu0 %v4168
      %v4670 = vpop.f32.mrb[0].mxu0
      %v4671 = vadd.f32 %v4446, %v4670
      %v4672 = vpop.f32.mrb[0].mxu0
      %4673 = vmatprep.mubr.f32.mxu0 %v4173
      %4674 = vmatmul.mubr.f32.gmra.mrb[0].mxu0 %v4172
      %v4675 = vpop.f32.mrb[0].mxu0
      %v4676 = vadd.f32 %v4451, %v4675
      %v4677 = vpop.f32.mrb[0].mxu0
      %4678 = vmatprep.mubr.f32.mxu0 %v4177
      %4679 = vmatmul.mubr.f32.gmra.mrb[0].mxu0 %v4176
      %v4680 = vpop.f32.mrb[0].mxu0
      %v4681 = vadd.f32 %v4456, %v4680
      %v4682 = vpop.f32.mrb[0].mxu0
      %4683 = vmatprep.mubr.f32.mxu0 %v4181
      %4684 = vmatmul.mubr.f32.gmra.mrb[0].mxu0 %v4180
      %v4685 = vpop.f32.mrb[0].mxu0
      %v4686 = vadd.f32 %v4461, %v4685
      %v4687 = vpop.f32.mrb[0].mxu0
      %4688 = vmatprep.mubr.f32.mxu0 %v4185
      %4689 = vmatmul.mubr.f32.gmra.mrb[0].mxu0 %v4184
      %v4690 = vpop.f32.mrb[0].mxu0
      %v4691 = vadd.f32 %v4466, %v4690
      %v4692 = vpop.f32.mrb[0].mxu0
      %4693 = vmatprep.mubr.f32.mxu0 %v4189
      %4694 = vmatmul.mubr.f32.gmra.mrb[0].mxu0 %v4188
      %v4695 = vpop.f32.mrb[0].mxu0
      %v4696 = vadd.f32 %v4471, %v4695
      %v4697 = vpop.f32.mrb[0].mxu0
      %4698 = vmatprep.mubr.f32.mxu0 %v4193
      %4699 = vmatmul.mubr.f32.gmra.mrb[0].mxu0 %v4192
      %v4700 = vpop.f32.mrb[0].mxu0
      %v4701 = vadd.f32 %v4476, %v4700
      %v4702 = vpop.f32.mrb[0].mxu0
      %4703 = vmatprep.mubr.f32.mxu0 %v4197
      %4704 = vmatmul.mubr.f32.gmra.mrb[0].mxu0 %v4196
      %v4705 = vpop.f32.mrb[0].mxu0
      %v4706 = vadd.f32 %v4481, %v4705
      %v4707 = vpop.f32.mrb[0].mxu0
      %4708 = vmatprep.mubr.f32.mxu0 %v4201
      %4709 = vmatmul.mubr.f32.gmra.mrb[0].mxu0 %v4200
      %v4710 = vpop.f32.mrb[0].mxu0
      %v4711 = vadd.f32 %v4486, %v4710
      %v4712 = vpop.f32.mrb[0].mxu0
      %4713 = vmatprep.mubr.f32.mxu0 %v4205
      %4714 = vmatmul.mubr.f32.gmra.mrb[0].mxu0 %v4204
      %v4715 = vpop.f32.mrb[0].mxu0
      %v4716 = vadd.f32 %v4491, %v4715
      %v4717 = vpop.f32.mrb[0].mxu0
      %4718 = vmatprep.mubr.f32.mxu0 %v4209
      %4719 = vmatmul.mubr.f32.gmra.mrb[0].mxu0 %v4208
      %v4720 = vpop.f32.mrb[0].mxu0
      %v4721 = vadd.f32 %v4496, %v4720
      %v4722 = vpop.f32.mrb[0].mxu0
      %4723 = vmatprep.mubr.f32.mxu0 %v4213
      %4724 = vmatmul.mubr.f32.gmra.mrb[0].mxu0 %v4212
      %v4725 = vpop.f32.mrb[0].mxu0
      %v4726 = vadd.f32 %v4501, %v4725
      %v4727 = vpop.f32.mrb[0].mxu0
      %4728 = vdwg.mxu0
      %v4729 = vadd.f32 %v3544, %v4571
      %v4730 = vadd.f32 %v3549, %v4576
      %v4731 = vadd.f32 %v3554, %v4581
      %v4732 = vadd.f32 %v3559, %v4586
      %v4733 = vadd.f32 %v3564, %v4591
      %v4734 = vadd.f32 %v3569, %v4596
      %v4735 = vadd.f32 %v3574, %v4601
      %v4736 = vadd.f32 %v3579, %v4606
      %v4737 = vadd.f32 %v3584, %v4611
      %v4738 = vadd.f32 %v3589, %v4616
      %v4739 = vadd.f32 %v3594, %v4621
      %v4740 = vadd.f32 %v3599, %v4626
      %v4741 = vadd.f32 %v3604, %v4631
      %v4742 = vadd.f32 %v3609, %v4636
      %v4743 = vadd.f32 %v3614, %v4641
      %v4744 = vadd.f32 %v3619, %v4646
      %v4745 = vadd.f32 %v3624, %v4651
      %v4746 = vadd.f32 %v3629, %v4656
      %v4747 = vadd.f32 %v3634, %v4661
      %v4748 = vadd.f32 %v3639, %v4666
      %v4749 = vadd.f32 %v3644, %v4671
      %v4750 = vadd.f32 %v3649, %v4676
      %v4751 = vadd.f32 %v3654, %v4681
      %v4752 = vadd.f32 %v3659, %v4686
      %v4753 = vadd.f32 %v3664, %v4691
      %v4754 = vadd.f32 %v3669, %v4696
      %v4755 = vadd.f32 %v3674, %v4701
      %v4756 = vadd.f32 %v3679, %v4706
      %v4757 = vadd.f32 %v3684, %v4711
      %v4758 = vadd.f32 %v3689, %v4716
      %v4759 = vadd.f32 %v3694, %v4721
      %v4760 = vadd.f32 %v3699, %v4726
      %s4761 = scalar_lea.vmem [#allocation2], 72
      %v4762 = vld [vmem:[%s4761] ss:$2 sm:$0xff]
      %s4763 = scalar_lea.vmem %s4761, 48 [#allocation2]
      %v4764 = vld [vmem:[%s4763] ss:$2 sm:$0xff]
      %s4765 = scalar_lea.vmem %s4761, 96 [#allocation2]
      %v4766 = vld [vmem:[%s4765] ss:$2 sm:$0xff]
      %s4767 = scalar_lea.vmem %s4761, 144 [#allocation2]
      %v4768 = vld [vmem:[%s4767] ss:$2 sm:$0xff]
      %s4769 = scalar_lea.vmem %s4761, 192 [#allocation2]
      %v4770 = vld [vmem:[%s4769] ss:$2 sm:$0xff]
      %s4771 = scalar_lea.vmem %s4761, 240 [#allocation2]
      %v4772 = vld [vmem:[%s4771] ss:$2 sm:$0xff]
      %s4773 = scalar_lea.vmem %s4761, 288 [#allocation2]
      %v4774 = vld [vmem:[%s4773] ss:$2 sm:$0xff]
      %s4775 = scalar_lea.vmem %s4761, 336 [#allocation2]
      %v4776 = vld [vmem:[%s4775] ss:$2 sm:$0xff]
      %s4777 = scalar_lea.vmem %s4761, 432 [#allocation2]
      %v4778 = vld [vmem:[%s4777] ss:$2 sm:$0xff]
      %s4779 = scalar_lea.vmem %s4761, 480 [#allocation2]
      %v4780 = vld [vmem:[%s4779] ss:$2 sm:$0xff]
      %s4781 = scalar_lea.vmem %s4761, 528 [#allocation2]
      %v4782 = vld [vmem:[%s4781] ss:$2 sm:$0xff]
      %s4783 = scalar_lea.vmem %s4761, 576 [#allocation2]
      %v4784 = vld [vmem:[%s4783] ss:$2 sm:$0xff]
      %s4785 = scalar_lea.vmem %s4761, 624 [#allocation2]
      %v4786 = vld [vmem:[%s4785] ss:$2 sm:$0xff]
      %s4787 = scalar_lea.vmem %s4761, 672 [#allocation2]
      %v4788 = vld [vmem:[%s4787] ss:$2 sm:$0xff]
      %s4789 = scalar_lea.vmem %s4761, 720 [#allocation2]
      %v4790 = vld [vmem:[%s4789] ss:$2 sm:$0xff]
      %s4791 = scalar_lea.vmem %s4761, 768 [#allocation2]
      %v4792 = vld [vmem:[%s4791] ss:$2 sm:$0xff]
      %s4793 = scalar_lea.vmem %s4761, 864 [#allocation2]
      %v4794 = vld [vmem:[%s4793] ss:$2 sm:$0xff]
      %s4795 = scalar_lea.vmem %s4761, 912 [#allocation2]
      %v4796 = vld [vmem:[%s4795] ss:$2 sm:$0xff]
      %s4797 = scalar_lea.vmem %s4761, 960 [#allocation2]
      %v4798 = vld [vmem:[%s4797] ss:$2 sm:$0xff]
      %s4799 = scalar_lea.vmem %s4761, 1008 [#allocation2]
      %v4800 = vld [vmem:[%s4799] ss:$2 sm:$0xff]
      %s4801 = scalar_lea.vmem %s4761, 1056 [#allocation2]
      %v4802 = vld [vmem:[%s4801] ss:$2 sm:$0xff]
      %s4803 = scalar_lea.vmem %s4761, 1104 [#allocation2]
      %v4804 = vld [vmem:[%s4803] ss:$2 sm:$0xff]
      %s4805 = scalar_lea.vmem %s4761, 1152 [#allocation2]
      %v4806 = vld [vmem:[%s4805] ss:$2 sm:$0xff]
      %s4807 = scalar_lea.vmem %s4761, 1200 [#allocation2]
      %v4808 = vld [vmem:[%s4807] ss:$2 sm:$0xff]
      %s4809 = scalar_lea.vmem %s4761, 1296 [#allocation2]
      %v4810 = vld [vmem:[%s4809] ss:$2 sm:$0xff]
      %s4811 = scalar_lea.vmem %s4761, 1344 [#allocation2]
      %v4812 = vld [vmem:[%s4811] ss:$2 sm:$0xff]
      %s4813 = scalar_lea.vmem %s4761, 1392 [#allocation2]
      %v4814 = vld [vmem:[%s4813] ss:$2 sm:$0xff]
      %s4815 = scalar_lea.vmem %s4761, 1440 [#allocation2]
      %v4816 = vld [vmem:[%s4815] ss:$2 sm:$0xff]
      %s4817 = scalar_lea.vmem %s4761, 1488 [#allocation2]
      %v4818 = vld [vmem:[%s4817] ss:$2 sm:$0xff]
      %s4819 = scalar_lea.vmem %s4761, 1536 [#allocation2]
      %v4820 = vld [vmem:[%s4819] ss:$2 sm:$0xff]
      %s4821 = scalar_lea.vmem %s4761, 1584 [#allocation2]
      %v4822 = vld [vmem:[%s4821] ss:$2 sm:$0xff]
      %s4823 = scalar_lea.vmem %s4761, 1632 [#allocation2]
      %v4824 = vld [vmem:[%s4823] ss:$2 sm:$0xff]
      %4825 = vst [vmem:[#allocation4] sm:$0xff] %v4762
      %4826 = vst [vmem:[#allocation4 + $0x20] sm:$0xff] %v4764
      %4827 = vst [vmem:[#allocation4 + $0x40] sm:$0xff] %v4766
      %4828 = vst [vmem:[#allocation4 + $0x60] sm:$0xff] %v4768
      %4829 = vst [vmem:[#allocation4 + $0x80] sm:$0xff] %v4770
      %4830 = vst [vmem:[#allocation4 + $0xa0] sm:$0xff] %v4772
      %4831 = vst [vmem:[#allocation4 + $0xc0] sm:$0xff] %v4774
      %4832 = vst [vmem:[#allocation4 + $0xe0] sm:$0xff] %v4776
      %4833 = vst [vmem:[#allocation4 + $0x100] sm:$0xff] %v4778
      %4834 = vst [vmem:[#allocation4 + $0x120] sm:$0xff] %v4780
      %4835 = vst [vmem:[#allocation4 + $0x140] sm:$0xff] %v4782
      %4836 = vst [vmem:[#allocation4 + $0x160] sm:$0xff] %v4784
      %4837 = vst [vmem:[#allocation4 + $0x180] sm:$0xff] %v4786
      %4838 = vst [vmem:[#allocation4 + $0x1a0] sm:$0xff] %v4788
      %4839 = vst [vmem:[#allocation4 + $0x1c0] sm:$0xff] %v4790
      %4840 = vst [vmem:[#allocation4 + $0x1e0] sm:$0xff] %v4792
      %4841 = vst [vmem:[#allocation4 + $0x200] sm:$0xff] %v4794
      %4842 = vst [vmem:[#allocation4 + $0x220] sm:$0xff] %v4796
      %4843 = vst [vmem:[#allocation4 + $0x240] sm:$0xff] %v4798
      %4844 = vst [vmem:[#allocation4 + $0x260] sm:$0xff] %v4800
      %4845 = vst [vmem:[#allocation4 + $0x280] sm:$0xff] %v4802
      %4846 = vst [vmem:[#allocation4 + $0x2a0] sm:$0xff] %v4804
      %4847 = vst [vmem:[#allocation4 + $0x2c0] sm:$0xff] %v4806
      %4848 = vst [vmem:[#allocation4 + $0x2e0] sm:$0xff] %v4808
      %4849 = vst [vmem:[#allocation4 + $0x300] sm:$0xff] %v4810
      %4850 = vst [vmem:[#allocation4 + $0x320] sm:$0xff] %v4812
      %4851 = vst [vmem:[#allocation4 + $0x340] sm:$0xff] %v4814
      %4852 = vst [vmem:[#allocation4 + $0x360] sm:$0xff] %v4816
      %4853 = vst [vmem:[#allocation4 + $0x380] sm:$0xff] %v4818
      %4854 = vst [vmem:[#allocation4 + $0x3a0] sm:$0xff] %v4820
      %4855 = vst [vmem:[#allocation4 + $0x3c0] sm:$0xff] %v4822
      %4856 = vst [vmem:[#allocation4 + $0x3e0] sm:$0xff] %v4824
      %s4857 = scalar_lea.vmem %s4761, 1 [#allocation2]
      %v4858 = vld [vmem:[%s4857] ss:$2 sm:$0xff]
      %s4859 = scalar_lea.vmem %s4761, 49 [#allocation2]
      %v4860 = vld [vmem:[%s4859] ss:$2 sm:$0xff]
      %s4861 = scalar_lea.vmem %s4761, 97 [#allocation2]
      %v4862 = vld [vmem:[%s4861] ss:$2 sm:$0xff]
      %s4863 = scalar_lea.vmem %s4761, 145 [#allocation2]
      %v4864 = vld [vmem:[%s4863] ss:$2 sm:$0xff]
      %s4865 = scalar_lea.vmem %s4761, 193 [#allocation2]
      %v4866 = vld [vmem:[%s4865] ss:$2 sm:$0xff]
      %s4867 = scalar_lea.vmem %s4761, 241 [#allocation2]
      %v4868 = vld [vmem:[%s4867] ss:$2 sm:$0xff]
      %s4869 = scalar_lea.vmem %s4761, 289 [#allocation2]
      %v4870 = vld [vmem:[%s4869] ss:$2 sm:$0xff]
      %s4871 = scalar_lea.vmem %s4761, 337 [#allocation2]
      %v4872 = vld [vmem:[%s4871] ss:$2 sm:$0xff]
      %s4873 = scalar_lea.vmem %s4761, 433 [#allocation2]
      %v4874 = vld [vmem:[%s4873] ss:$2 sm:$0xff]
      %s4875 = scalar_lea.vmem %s4761, 481 [#allocation2]
      %v4876 = vld [vmem:[%s4875] ss:$2 sm:$0xff]
      %s4877 = scalar_lea.vmem %s4761, 529 [#allocation2]
      %v4878 = vld [vmem:[%s4877] ss:$2 sm:$0xff]
      %s4879 = scalar_lea.vmem %s4761, 577 [#allocation2]
      %v4880 = vld [vmem:[%s4879] ss:$2 sm:$0xff]
      %s4881 = scalar_lea.vmem %s4761, 625 [#allocation2]
      %v4882 = vld [vmem:[%s4881] ss:$2 sm:$0xff]
      %s4883 = scalar_lea.vmem %s4761, 673 [#allocation2]
      %v4884 = vld [vmem:[%s4883] ss:$2 sm:$0xff]
      %s4885 = scalar_lea.vmem %s4761, 721 [#allocation2]
      %v4886 = vld [vmem:[%s4885] ss:$2 sm:$0xff]
      %s4887 = scalar_lea.vmem %s4761, 769 [#allocation2]
      %v4888 = vld [vmem:[%s4887] ss:$2 sm:$0xff]
      %s4889 = scalar_lea.vmem %s4761, 865 [#allocation2]
      %v4890 = vld [vmem:[%s4889] ss:$2 sm:$0xff]
      %s4891 = scalar_lea.vmem %s4761, 913 [#allocation2]
      %v4892 = vld [vmem:[%s4891] ss:$2 sm:$0xff]
      %s4893 = scalar_lea.vmem %s4761, 961 [#allocation2]
      %v4894 = vld [vmem:[%s4893] ss:$2 sm:$0xff]
      %s4895 = scalar_lea.vmem %s4761, 1009 [#allocation2]
      %v4896 = vld [vmem:[%s4895] ss:$2 sm:$0xff]
      %s4897 = scalar_lea.vmem %s4761, 1057 [#allocation2]
      %v4898 = vld [vmem:[%s4897] ss:$2 sm:$0xff]
      %s4899 = scalar_lea.vmem %s4761, 1105 [#allocation2]
      %v4900 = vld [vmem:[%s4899] ss:$2 sm:$0xff]
      %s4901 = scalar_lea.vmem %s4761, 1153 [#allocation2]
      %v4902 = vld [vmem:[%s4901] ss:$2 sm:$0xff]
      %s4903 = scalar_lea.vmem %s4761, 1201 [#allocation2]
      %v4904 = vld [vmem:[%s4903] ss:$2 sm:$0xff]
      %s4905 = scalar_lea.vmem %s4761, 1297 [#allocation2]
      %v4906 = vld [vmem:[%s4905] ss:$2 sm:$0xff]
      %s4907 = scalar_lea.vmem %s4761, 1345 [#allocation2]
      %v4908 = vld [vmem:[%s4907] ss:$2 sm:$0xff]
      %s4909 = scalar_lea.vmem %s4761, 1393 [#allocation2]
      %v4910 = vld [vmem:[%s4909] ss:$2 sm:$0xff]
      %s4911 = scalar_lea.vmem %s4761, 1441 [#allocation2]
      %v4912 = vld [vmem:[%s4911] ss:$2 sm:$0xff]
      %s4913 = scalar_lea.vmem %s4761, 1489 [#allocation2]
      %v4914 = vld [vmem:[%s4913] ss:$2 sm:$0xff]
      %s4915 = scalar_lea.vmem %s4761, 1537 [#allocation2]
      %v4916 = vld [vmem:[%s4915] ss:$2 sm:$0xff]
      %s4917 = scalar_lea.vmem %s4761, 1585 [#allocation2]
      %v4918 = vld [vmem:[%s4917] ss:$2 sm:$0xff]
      %s4919 = scalar_lea.vmem %s4761, 1633 [#allocation2]
      %v4920 = vld [vmem:[%s4919] ss:$2 sm:$0xff]
      %4921 = vst [vmem:[#allocation4 + $0x8] sm:$0xff] %v4858
      %4922 = vst [vmem:[#allocation4 + $0x28] sm:$0xff] %v4860
      %4923 = vst [vmem:[#allocation4 + $0x48] sm:$0xff] %v4862
      %4924 = vst [vmem:[#allocation4 + $0x68] sm:$0xff] %v4864
      %4925 = vst [vmem:[#allocation4 + $0x88] sm:$0xff] %v4866
      %4926 = vst [vmem:[#allocation4 + $0xa8] sm:$0xff] %v4868
      %4927 = vst [vmem:[#allocation4 + $0xc8] sm:$0xff] %v4870
      %4928 = vst [vmem:[#allocation4 + $0xe8] sm:$0xff] %v4872
      %4929 = vst [vmem:[#allocation4 + $0x108] sm:$0xff] %v4874
      %4930 = vst [vmem:[#allocation4 + $0x128] sm:$0xff] %v4876
      %4931 = vst [vmem:[#allocation4 + $0x148] sm:$0xff] %v4878
      %4932 = vst [vmem:[#allocation4 + $0x168] sm:$0xff] %v4880
      %4933 = vst [vmem:[#allocation4 + $0x188] sm:$0xff] %v4882
      %4934 = vst [vmem:[#allocation4 + $0x1a8] sm:$0xff] %v4884
      %4935 = vst [vmem:[#allocation4 + $0x1c8] sm:$0xff] %v4886
      %4936 = vst [vmem:[#allocation4 + $0x1e8] sm:$0xff] %v4888
      %4937 = vst [vmem:[#allocation4 + $0x208] sm:$0xff] %v4890
      %4938 = vst [vmem:[#allocation4 + $0x228] sm:$0xff] %v4892
      %4939 = vst [vmem:[#allocation4 + $0x248] sm:$0xff] %v4894
      %4940 = vst [vmem:[#allocation4 + $0x268] sm:$0xff] %v4896
      %4941 = vst [vmem:[#allocation4 + $0x288] sm:$0xff] %v4898
      %4942 = vst [vmem:[#allocation4 + $0x2a8] sm:$0xff] %v4900
      %4943 = vst [vmem:[#allocation4 + $0x2c8] sm:$0xff] %v4902
      %4944 = vst [vmem:[#allocation4 + $0x2e8] sm:$0xff] %v4904
      %4945 = vst [vmem:[#allocation4 + $0x308] sm:$0xff] %v4906
      %4946 = vst [vmem:[#allocation4 + $0x328] sm:$0xff] %v4908
      %4947 = vst [vmem:[#allocation4 + $0x348] sm:$0xff] %v4910
      %4948 = vst [vmem:[#allocation4 + $0x368] sm:$0xff] %v4912
      %4949 = vst [vmem:[#allocation4 + $0x388] sm:$0xff] %v4914
      %4950 = vst [vmem:[#allocation4 + $0x3a8] sm:$0xff] %v4916
      %4951 = vst [vmem:[#allocation4 + $0x3c8] sm:$0xff] %v4918
      %4952 = vst [vmem:[#allocation4 + $0x3e8] sm:$0xff] %v4920
      %s4953 = scalar_lea.vmem %s4761, 2 [#allocation2]
      %v4954 = vld [vmem:[%s4953] ss:$2 sm:$0xff]
      %s4955 = scalar_lea.vmem %s4761, 50 [#allocation2]
      %v4956 = vld [vmem:[%s4955] ss:$2 sm:$0xff]
      %s4957 = scalar_lea.vmem %s4761, 98 [#allocation2]
      %v4958 = vld [vmem:[%s4957] ss:$2 sm:$0xff]
      %s4959 = scalar_lea.vmem %s4761, 146 [#allocation2]
      %v4960 = vld [vmem:[%s4959] ss:$2 sm:$0xff]
      %s4961 = scalar_lea.vmem %s4761, 194 [#allocation2]
      %v4962 = vld [vmem:[%s4961] ss:$2 sm:$0xff]
      %s4963 = scalar_lea.vmem %s4761, 242 [#allocation2]
      %v4964 = vld [vmem:[%s4963] ss:$2 sm:$0xff]
      %s4965 = scalar_lea.vmem %s4761, 290 [#allocation2]
      %v4966 = vld [vmem:[%s4965] ss:$2 sm:$0xff]
      %s4967 = scalar_lea.vmem %s4761, 338 [#allocation2]
      %v4968 = vld [vmem:[%s4967] ss:$2 sm:$0xff]
      %s4969 = scalar_lea.vmem %s4761, 434 [#allocation2]
      %v4970 = vld [vmem:[%s4969] ss:$2 sm:$0xff]
      %s4971 = scalar_lea.vmem %s4761, 482 [#allocation2]
      %v4972 = vld [vmem:[%s4971] ss:$2 sm:$0xff]
      %s4973 = scalar_lea.vmem %s4761, 530 [#allocation2]
      %v4974 = vld [vmem:[%s4973] ss:$2 sm:$0xff]
      %s4975 = scalar_lea.vmem %s4761, 578 [#allocation2]
      %v4976 = vld [vmem:[%s4975] ss:$2 sm:$0xff]
      %s4977 = scalar_lea.vmem %s4761, 626 [#allocation2]
      %v4978 = vld [vmem:[%s4977] ss:$2 sm:$0xff]
      %s4979 = scalar_lea.vmem %s4761, 674 [#allocation2]
      %v4980 = vld [vmem:[%s4979] ss:$2 sm:$0xff]
      %s4981 = scalar_lea.vmem %s4761, 722 [#allocation2]
      %v4982 = vld [vmem:[%s4981] ss:$2 sm:$0xff]
      %s4983 = scalar_lea.vmem %s4761, 770 [#allocation2]
      %v4984 = vld [vmem:[%s4983] ss:$2 sm:$0xff]
      %s4985 = scalar_lea.vmem %s4761, 866 [#allocation2]
      %v4986 = vld [vmem:[%s4985] ss:$2 sm:$0xff]
      %s4987 = scalar_lea.vmem %s4761, 914 [#allocation2]
      %v4988 = vld [vmem:[%s4987] ss:$2 sm:$0xff]
      %s4989 = scalar_lea.vmem %s4761, 962 [#allocation2]
      %v4990 = vld [vmem:[%s4989] ss:$2 sm:$0xff]
      %s4991 = scalar_lea.vmem %s4761, 1010 [#allocation2]
      %v4992 = vld [vmem:[%s4991] ss:$2 sm:$0xff]
      %s4993 = scalar_lea.vmem %s4761, 1058 [#allocation2]
      %v4994 = vld [vmem:[%s4993] ss:$2 sm:$0xff]
      %s4995 = scalar_lea.vmem %s4761, 1106 [#allocation2]
      %v4996 = vld [vmem:[%s4995] ss:$2 sm:$0xff]
      %s4997 = scalar_lea.vmem %s4761, 1154 [#allocation2]
      %v4998 = vld [vmem:[%s4997] ss:$2 sm:$0xff]
      %s4999 = scalar_lea.vmem %s4761, 1202 [#allocation2]
      %v5000 = vld [vmem:[%s4999] ss:$2 sm:$0xff]
      %s5001 = scalar_lea.vmem %s4761, 1298 [#allocation2]
      %v5002 = vld [vmem:[%s5001] ss:$2 sm:$0xff]
      %s5003 = scalar_lea.vmem %s4761, 1346 [#allocation2]
      %v5004 = vld [vmem:[%s5003] ss:$2 sm:$0xff]
      %s5005 = scalar_lea.vmem %s4761, 1394 [#allocation2]
      %v5006 = vld [vmem:[%s5005] ss:$2 sm:$0xff]
      %s5007 = scalar_lea.vmem %s4761, 1442 [#allocation2]
      %v5008 = vld [vmem:[%s5007] ss:$2 sm:$0xff]
      %s5009 = scalar_lea.vmem %s4761, 1490 [#allocation2]
      %v5010 = vld [vmem:[%s5009] ss:$2 sm:$0xff]
      %s5011 = scalar_lea.vmem %s4761, 1538 [#allocation2]
      %v5012 = vld [vmem:[%s5011] ss:$2 sm:$0xff]
      %s5013 = scalar_lea.vmem %s4761, 1586 [#allocation2]
      %v5014 = vld [vmem:[%s5013] ss:$2 sm:$0xff]
      %s5015 = scalar_lea.vmem %s4761, 1634 [#allocation2]
      %v5016 = vld [vmem:[%s5015] ss:$2 sm:$0xff]
      %5017 = vst [vmem:[#allocation4 + $0x10] sm:$0xff] %v4954
      %5018 = vst [vmem:[#allocation4 + $0x30] sm:$0xff] %v4956
      %5019 = vst [vmem:[#allocation4 + $0x50] sm:$0xff] %v4958
      %5020 = vst [vmem:[#allocation4 + $0x70] sm:$0xff] %v4960
      %5021 = vst [vmem:[#allocation4 + $0x90] sm:$0xff] %v4962
      %5022 = vst [vmem:[#allocation4 + $0xb0] sm:$0xff] %v4964
      %5023 = vst [vmem:[#allocation4 + $0xd0] sm:$0xff] %v4966
      %5024 = vst [vmem:[#allocation4 + $0xf0] sm:$0xff] %v4968
      %5025 = vst [vmem:[#allocation4 + $0x110] sm:$0xff] %v4970
      %5026 = vst [vmem:[#allocation4 + $0x130] sm:$0xff] %v4972
      %5027 = vst [vmem:[#allocation4 + $0x150] sm:$0xff] %v4974
      %5028 = vst [vmem:[#allocation4 + $0x170] sm:$0xff] %v4976
      %5029 = vst [vmem:[#allocation4 + $0x190] sm:$0xff] %v4978
      %5030 = vst [vmem:[#allocation4 + $0x1b0] sm:$0xff] %v4980
      %5031 = vst [vmem:[#allocation4 + $0x1d0] sm:$0xff] %v4982
      %5032 = vst [vmem:[#allocation4 + $0x1f0] sm:$0xff] %v4984
      %5033 = vst [vmem:[#allocation4 + $0x210] sm:$0xff] %v4986
      %5034 = vst [vmem:[#allocation4 + $0x230] sm:$0xff] %v4988
      %5035 = vst [vmem:[#allocation4 + $0x250] sm:$0xff] %v4990
      %5036 = vst [vmem:[#allocation4 + $0x270] sm:$0xff] %v4992
      %5037 = vst [vmem:[#allocation4 + $0x290] sm:$0xff] %v4994
      %5038 = vst [vmem:[#allocation4 + $0x2b0] sm:$0xff] %v4996
      %5039 = vst [vmem:[#allocation4 + $0x2d0] sm:$0xff] %v4998
      %5040 = vst [vmem:[#allocation4 + $0x2f0] sm:$0xff] %v5000
      %5041 = vst [vmem:[#allocation4 + $0x310] sm:$0xff] %v5002
      %5042 = vst [vmem:[#allocation4 + $0x330] sm:$0xff] %v5004
      %5043 = vst [vmem:[#allocation4 + $0x350] sm:$0xff] %v5006
      %5044 = vst [vmem:[#allocation4 + $0x370] sm:$0xff] %v5008
      %5045 = vst [vmem:[#allocation4 + $0x390] sm:$0xff] %v5010
      %5046 = vst [vmem:[#allocation4 + $0x3b0] sm:$0xff] %v5012
      %5047 = vst [vmem:[#allocation4 + $0x3d0] sm:$0xff] %v5014
      %5048 = vst [vmem:[#allocation4 + $0x3f0] sm:$0xff] %v5016
      %s5049 = scalar_lea.vmem %s4761, 3 [#allocation2]
      %v5050 = vld [vmem:[%s5049] ss:$2 sm:$0xff]
      %s5051 = scalar_lea.vmem %s4761, 51 [#allocation2]
      %v5052 = vld [vmem:[%s5051] ss:$2 sm:$0xff]
      %s5053 = scalar_lea.vmem %s4761, 99 [#allocation2]
      %v5054 = vld [vmem:[%s5053] ss:$2 sm:$0xff]
      %s5055 = scalar_lea.vmem %s4761, 147 [#allocation2]
      %v5056 = vld [vmem:[%s5055] ss:$2 sm:$0xff]
      %s5057 = scalar_lea.vmem %s4761, 195 [#allocation2]
      %v5058 = vld [vmem:[%s5057] ss:$2 sm:$0xff]
      %s5059 = scalar_lea.vmem %s4761, 243 [#allocation2]
      %v5060 = vld [vmem:[%s5059] ss:$2 sm:$0xff]
      %s5061 = scalar_lea.vmem %s4761, 291 [#allocation2]
      %v5062 = vld [vmem:[%s5061] ss:$2 sm:$0xff]
      %s5063 = scalar_lea.vmem %s4761, 339 [#allocation2]
      %v5064 = vld [vmem:[%s5063] ss:$2 sm:$0xff]
      %s5065 = scalar_lea.vmem %s4761, 435 [#allocation2]
      %v5066 = vld [vmem:[%s5065] ss:$2 sm:$0xff]
      %s5067 = scalar_lea.vmem %s4761, 483 [#allocation2]
      %v5068 = vld [vmem:[%s5067] ss:$2 sm:$0xff]
      %s5069 = scalar_lea.vmem %s4761, 531 [#allocation2]
      %v5070 = vld [vmem:[%s5069] ss:$2 sm:$0xff]
      %s5071 = scalar_lea.vmem %s4761, 579 [#allocation2]
      %v5072 = vld [vmem:[%s5071] ss:$2 sm:$0xff]
      %s5073 = scalar_lea.vmem %s4761, 627 [#allocation2]
      %v5074 = vld [vmem:[%s5073] ss:$2 sm:$0xff]
      %s5075 = scalar_lea.vmem %s4761, 675 [#allocation2]
      %v5076 = vld [vmem:[%s5075] ss:$2 sm:$0xff]
      %s5077 = scalar_lea.vmem %s4761, 723 [#allocation2]
      %v5078 = vld [vmem:[%s5077] ss:$2 sm:$0xff]
      %s5079 = scalar_lea.vmem %s4761, 771 [#allocation2]
      %v5080 = vld [vmem:[%s5079] ss:$2 sm:$0xff]
      %s5081 = scalar_lea.vmem %s4761, 867 [#allocation2]
      %v5082 = vld [vmem:[%s5081] ss:$2 sm:$0xff]
      %s5083 = scalar_lea.vmem %s4761, 915 [#allocation2]
      %v5084 = vld [vmem:[%s5083] ss:$2 sm:$0xff]
      %s5085 = scalar_lea.vmem %s4761, 963 [#allocation2]
      %v5086 = vld [vmem:[%s5085] ss:$2 sm:$0xff]
      %s5087 = scalar_lea.vmem %s4761, 1011 [#allocation2]
      %v5088 = vld [vmem:[%s5087] ss:$2 sm:$0xff]
      %s5089 = scalar_lea.vmem %s4761, 1059 [#allocation2]
      %v5090 = vld [vmem:[%s5089] ss:$2 sm:$0xff]
      %s5091 = scalar_lea.vmem %s4761, 1107 [#allocation2]
      %v5092 = vld [vmem:[%s5091] ss:$2 sm:$0xff]
      %s5093 = scalar_lea.vmem %s4761, 1155 [#allocation2]
      %v5094 = vld [vmem:[%s5093] ss:$2 sm:$0xff]
      %s5095 = scalar_lea.vmem %s4761, 1203 [#allocation2]
      %v5096 = vld [vmem:[%s5095] ss:$2 sm:$0xff]
      %s5097 = scalar_lea.vmem %s4761, 1299 [#allocation2]
      %v5098 = vld [vmem:[%s5097] ss:$2 sm:$0xff]
      %s5099 = scalar_lea.vmem %s4761, 1347 [#allocation2]
      %v5100 = vld [vmem:[%s5099] ss:$2 sm:$0xff]
      %s5101 = scalar_lea.vmem %s4761, 1395 [#allocation2]
      %v5102 = vld [vmem:[%s5101] ss:$2 sm:$0xff]
      %s5103 = scalar_lea.vmem %s4761, 1443 [#allocation2]
      %v5104 = vld [vmem:[%s5103] ss:$2 sm:$0xff]
      %s5105 = scalar_lea.vmem %s4761, 1491 [#allocation2]
      %v5106 = vld [vmem:[%s5105] ss:$2 sm:$0xff]
      %s5107 = scalar_lea.vmem %s4761, 1539 [#allocation2]
      %v5108 = vld [vmem:[%s5107] ss:$2 sm:$0xff]
      %s5109 = scalar_lea.vmem %s4761, 1587 [#allocation2]
      %v5110 = vld [vmem:[%s5109] ss:$2 sm:$0xff]
      %s5111 = scalar_lea.vmem %s4761, 1635 [#allocation2]
      %v5112 = vld [vmem:[%s5111] ss:$2 sm:$0xff]
      %5113 = vst [vmem:[#allocation4 + $0x18] sm:$0xff] %v5050
      %5114 = vst [vmem:[#allocation4 + $0x38] sm:$0xff] %v5052
      %5115 = vst [vmem:[#allocation4 + $0x58] sm:$0xff] %v5054
      %5116 = vst [vmem:[#allocation4 + $0x78] sm:$0xff] %v5056
      %5117 = vst [vmem:[#allocation4 + $0x98] sm:$0xff] %v5058
      %5118 = vst [vmem:[#allocation4 + $0xb8] sm:$0xff] %v5060
      %5119 = vst [vmem:[#allocation4 + $0xd8] sm:$0xff] %v5062
      %5120 = vst [vmem:[#allocation4 + $0xf8] sm:$0xff] %v5064
      %5121 = vst [vmem:[#allocation4 + $0x118] sm:$0xff] %v5066
      %5122 = vst [vmem:[#allocation4 + $0x138] sm:$0xff] %v5068
      %5123 = vst [vmem:[#allocation4 + $0x158] sm:$0xff] %v5070
      %5124 = vst [vmem:[#allocation4 + $0x178] sm:$0xff] %v5072
      %5125 = vst [vmem:[#allocation4 + $0x198] sm:$0xff] %v5074
      %5126 = vst [vmem:[#allocation4 + $0x1b8] sm:$0xff] %v5076
      %5127 = vst [vmem:[#allocation4 + $0x1d8] sm:$0xff] %v5078
      %5128 = vst [vmem:[#allocation4 + $0x1f8] sm:$0xff] %v5080
      %5129 = vst [vmem:[#allocation4 + $0x218] sm:$0xff] %v5082
      %5130 = vst [vmem:[#allocation4 + $0x238] sm:$0xff] %v5084
      %5131 = vst [vmem:[#allocation4 + $0x258] sm:$0xff] %v5086
      %5132 = vst [vmem:[#allocation4 + $0x278] sm:$0xff] %v5088
      %5133 = vst [vmem:[#allocation4 + $0x298] sm:$0xff] %v5090
      %5134 = vst [vmem:[#allocation4 + $0x2b8] sm:$0xff] %v5092
      %5135 = vst [vmem:[#allocation4 + $0x2d8] sm:$0xff] %v5094
      %5136 = vst [vmem:[#allocation4 + $0x2f8] sm:$0xff] %v5096
      %5137 = vst [vmem:[#allocation4 + $0x318] sm:$0xff] %v5098
      %5138 = vst [vmem:[#allocation4 + $0x338] sm:$0xff] %v5100
      %5139 = vst [vmem:[#allocation4 + $0x358] sm:$0xff] %v5102
      %5140 = vst [vmem:[#allocation4 + $0x378] sm:$0xff] %v5104
      %5141 = vst [vmem:[#allocation4 + $0x398] sm:$0xff] %v5106
      %5142 = vst [vmem:[#allocation4 + $0x3b8] sm:$0xff] %v5108
      %5143 = vst [vmem:[#allocation4 + $0x3d8] sm:$0xff] %v5110
      %5144 = vst [vmem:[#allocation4 + $0x3f8] sm:$0xff] %v5112
      %v5145 = vld [vmem:[#allocation4] sm:$0xff]
      %v5146 = vld [vmem:[#allocation4 + $0x8] sm:$0xff]
      %v5147 = vld [vmem:[#allocation4 + $0x10] sm:$0xff]
      %v5148 = vld [vmem:[#allocation4 + $0x18] sm:$0xff]
      %v5149 = vld [vmem:[#allocation4 + $0x20] sm:$0xff]
      %v5150 = vld [vmem:[#allocation4 + $0x28] sm:$0xff]
      %v5151 = vld [vmem:[#allocation4 + $0x30] sm:$0xff]
      %v5152 = vld [vmem:[#allocation4 + $0x38] sm:$0xff]
      %v5153 = vld [vmem:[#allocation4 + $0x40] sm:$0xff]
      %v5154 = vld [vmem:[#allocation4 + $0x48] sm:$0xff]
      %v5155 = vld [vmem:[#allocation4 + $0x50] sm:$0xff]
      %v5156 = vld [vmem:[#allocation4 + $0x58] sm:$0xff]
      %v5157 = vld [vmem:[#allocation4 + $0x60] sm:$0xff]
      %v5158 = vld [vmem:[#allocation4 + $0x68] sm:$0xff]
      %v5159 = vld [vmem:[#allocation4 + $0x70] sm:$0xff]
      %v5160 = vld [vmem:[#allocation4 + $0x78] sm:$0xff]
      %v5161 = vld [vmem:[#allocation4 + $0x80] sm:$0xff]
      %v5162 = vld [vmem:[#allocation4 + $0x88] sm:$0xff]
      %v5163 = vld [vmem:[#allocation4 + $0x90] sm:$0xff]
      %v5164 = vld [vmem:[#allocation4 + $0x98] sm:$0xff]
      %v5165 = vld [vmem:[#allocation4 + $0xa0] sm:$0xff]
      %v5166 = vld [vmem:[#allocation4 + $0xa8] sm:$0xff]
      %v5167 = vld [vmem:[#allocation4 + $0xb0] sm:$0xff]
      %v5168 = vld [vmem:[#allocation4 + $0xb8] sm:$0xff]
      %v5169 = vld [vmem:[#allocation4 + $0xc0] sm:$0xff]
      %v5170 = vld [vmem:[#allocation4 + $0xc8] sm:$0xff]
      %v5171 = vld [vmem:[#allocation4 + $0xd0] sm:$0xff]
      %v5172 = vld [vmem:[#allocation4 + $0xd8] sm:$0xff]
      %v5173 = vld [vmem:[#allocation4 + $0xe0] sm:$0xff]
      %v5174 = vld [vmem:[#allocation4 + $0xe8] sm:$0xff]
      %v5175 = vld [vmem:[#allocation4 + $0xf0] sm:$0xff]
      %v5176 = vld [vmem:[#allocation4 + $0xf8] sm:$0xff]
      %v5177 = vld [vmem:[#allocation4 + $0x100] sm:$0xff]
      %v5178 = vld [vmem:[#allocation4 + $0x108] sm:$0xff]
      %v5179 = vld [vmem:[#allocation4 + $0x110] sm:$0xff]
      %v5180 = vld [vmem:[#allocation4 + $0x118] sm:$0xff]
      %v5181 = vld [vmem:[#allocation4 + $0x120] sm:$0xff]
      %v5182 = vld [vmem:[#allocation4 + $0x128] sm:$0xff]
      %v5183 = vld [vmem:[#allocation4 + $0x130] sm:$0xff]
      %v5184 = vld [vmem:[#allocation4 + $0x138] sm:$0xff]
      %v5185 = vld [vmem:[#allocation4 + $0x140] sm:$0xff]
      %v5186 = vld [vmem:[#allocation4 + $0x148] sm:$0xff]
      %v5187 = vld [vmem:[#allocation4 + $0x150] sm:$0xff]
      %v5188 = vld [vmem:[#allocation4 + $0x158] sm:$0xff]
      %v5189 = vld [vmem:[#allocation4 + $0x160] sm:$0xff]
      %v5190 = vld [vmem:[#allocation4 + $0x168] sm:$0xff]
      %v5191 = vld [vmem:[#allocation4 + $0x170] sm:$0xff]
      %v5192 = vld [vmem:[#allocation4 + $0x178] sm:$0xff]
      %v5193 = vld [vmem:[#allocation4 + $0x180] sm:$0xff]
      %v5194 = vld [vmem:[#allocation4 + $0x188] sm:$0xff]
      %v5195 = vld [vmem:[#allocation4 + $0x190] sm:$0xff]
      %v5196 = vld [vmem:[#allocation4 + $0x198] sm:$0xff]
      %v5197 = vld [vmem:[#allocation4 + $0x1a0] sm:$0xff]
      %v5198 = vld [vmem:[#allocation4 + $0x1a8] sm:$0xff]
      %v5199 = vld [vmem:[#allocation4 + $0x1b0] sm:$0xff]
      %v5200 = vld [vmem:[#allocation4 + $0x1b8] sm:$0xff]
      %v5201 = vld [vmem:[#allocation4 + $0x1c0] sm:$0xff]
      %v5202 = vld [vmem:[#allocation4 + $0x1c8] sm:$0xff]
      %v5203 = vld [vmem:[#allocation4 + $0x1d0] sm:$0xff]
      %v5204 = vld [vmem:[#allocation4 + $0x1d8] sm:$0xff]
      %v5205 = vld [vmem:[#allocation4 + $0x1e0] sm:$0xff]
      %v5206 = vld [vmem:[#allocation4 + $0x1e8] sm:$0xff]
      %v5207 = vld [vmem:[#allocation4 + $0x1f0] sm:$0xff]
      %v5208 = vld [vmem:[#allocation4 + $0x1f8] sm:$0xff]
      %v5209 = vld [vmem:[#allocation4 + $0x200] sm:$0xff]
      %v5210 = vld [vmem:[#allocation4 + $0x208] sm:$0xff]
      %v5211 = vld [vmem:[#allocation4 + $0x210] sm:$0xff]
      %v5212 = vld [vmem:[#allocation4 + $0x218] sm:$0xff]
      %v5213 = vld [vmem:[#allocation4 + $0x220] sm:$0xff]
      %v5214 = vld [vmem:[#allocation4 + $0x228] sm:$0xff]
      %v5215 = vld [vmem:[#allocation4 + $0x230] sm:$0xff]
      %v5216 = vld [vmem:[#allocation4 + $0x238] sm:$0xff]
      %v5217 = vld [vmem:[#allocation4 + $0x240] sm:$0xff]
      %v5218 = vld [vmem:[#allocation4 + $0x248] sm:$0xff]
      %v5219 = vld [vmem:[#allocation4 + $0x250] sm:$0xff]
      %v5220 = vld [vmem:[#allocation4 + $0x258] sm:$0xff]
      %v5221 = vld [vmem:[#allocation4 + $0x260] sm:$0xff]
      %v5222 = vld [vmem:[#allocation4 + $0x268] sm:$0xff]
      %v5223 = vld [vmem:[#allocation4 + $0x270] sm:$0xff]
      %v5224 = vld [vmem:[#allocation4 + $0x278] sm:$0xff]
      %v5225 = vld [vmem:[#allocation4 + $0x280] sm:$0xff]
      %v5226 = vld [vmem:[#allocation4 + $0x288] sm:$0xff]
      %v5227 = vld [vmem:[#allocation4 + $0x290] sm:$0xff]
      %v5228 = vld [vmem:[#allocation4 + $0x298] sm:$0xff]
      %v5229 = vld [vmem:[#allocation4 + $0x2a0] sm:$0xff]
      %v5230 = vld [vmem:[#allocation4 + $0x2a8] sm:$0xff]
      %v5231 = vld [vmem:[#allocation4 + $0x2b0] sm:$0xff]
      %v5232 = vld [vmem:[#allocation4 + $0x2b8] sm:$0xff]
      %v5233 = vld [vmem:[#allocation4 + $0x2c0] sm:$0xff]
      %v5234 = vld [vmem:[#allocation4 + $0x2c8] sm:$0xff]
      %v5235 = vld [vmem:[#allocation4 + $0x2d0] sm:$0xff]
      %v5236 = vld [vmem:[#allocation4 + $0x2d8] sm:$0xff]
      %v5237 = vld [vmem:[#allocation4 + $0x2e0] sm:$0xff]
      %v5238 = vld [vmem:[#allocation4 + $0x2e8] sm:$0xff]
      %v5239 = vld [vmem:[#allocation4 + $0x2f0] sm:$0xff]
      %v5240 = vld [vmem:[#allocation4 + $0x2f8] sm:$0xff]
      %v5241 = vld [vmem:[#allocation4 + $0x300] sm:$0xff]
      %v5242 = vld [vmem:[#allocation4 + $0x308] sm:$0xff]
      %v5243 = vld [vmem:[#allocation4 + $0x310] sm:$0xff]
      %v5244 = vld [vmem:[#allocation4 + $0x318] sm:$0xff]
      %v5245 = vld [vmem:[#allocation4 + $0x320] sm:$0xff]
      %v5246 = vld [vmem:[#allocation4 + $0x328] sm:$0xff]
      %v5247 = vld [vmem:[#allocation4 + $0x330] sm:$0xff]
      %v5248 = vld [vmem:[#allocation4 + $0x338] sm:$0xff]
      %v5249 = vld [vmem:[#allocation4 + $0x340] sm:$0xff]
      %v5250 = vld [vmem:[#allocation4 + $0x348] sm:$0xff]
      %v5251 = vld [vmem:[#allocation4 + $0x350] sm:$0xff]
      %v5252 = vld [vmem:[#allocation4 + $0x358] sm:$0xff]
      %v5253 = vld [vmem:[#allocation4 + $0x360] sm:$0xff]
      %v5254 = vld [vmem:[#allocation4 + $0x368] sm:$0xff]
      %v5255 = vld [vmem:[#allocation4 + $0x370] sm:$0xff]
      %v5256 = vld [vmem:[#allocation4 + $0x378] sm:$0xff]
      %v5257 = vld [vmem:[#allocation4 + $0x380] sm:$0xff]
      %v5258 = vld [vmem:[#allocation4 + $0x388] sm:$0xff]
      %v5259 = vld [vmem:[#allocation4 + $0x390] sm:$0xff]
      %v5260 = vld [vmem:[#allocation4 + $0x398] sm:$0xff]
      %v5261 = vld [vmem:[#allocation4 + $0x3a0] sm:$0xff]
      %v5262 = vld [vmem:[#allocation4 + $0x3a8] sm:$0xff]
      %v5263 = vld [vmem:[#allocation4 + $0x3b0] sm:$0xff]
      %v5264 = vld [vmem:[#allocation4 + $0x3b8] sm:$0xff]
      %v5265 = vld [vmem:[#allocation4 + $0x3c0] sm:$0xff]
      %v5266 = vld [vmem:[#allocation4 + $0x3c8] sm:$0xff]
      %v5267 = vld [vmem:[#allocation4 + $0x3d0] sm:$0xff]
      %v5268 = vld [vmem:[#allocation4 + $0x3d8] sm:$0xff]
      %v5269 = vld [vmem:[#allocation4 + $0x3e0] sm:$0xff]
      %v5270 = vld [vmem:[#allocation4 + $0x3e8] sm:$0xff]
      %v5271 = vld [vmem:[#allocation4 + $0x3f0] sm:$0xff]
      %v5272 = vld [vmem:[#allocation4 + $0x3f8] sm:$0xff]
      %s5273 = scalar_lea.vmem %s3, 1536
      %v5274 = vld [vmem:[%s5273] sm:$0xff]
      %v5275 = vld [vmem:[%s5273 + $0x8] sm:$0xff]
      %v5276 = vld [vmem:[%s5273 + $0x10] sm:$0xff]
      %v5277 = vld [vmem:[%s5273 + $0x18] sm:$0xff]
      %v5278 = vld [vmem:[%s5273 + $0x20] sm:$0xff]
      %v5279 = vld [vmem:[%s5273 + $0x28] sm:$0xff]
      %v5280 = vld [vmem:[%s5273 + $0x30] sm:$0xff]
      %v5281 = vld [vmem:[%s5273 + $0x38] sm:$0xff]
      %v5282 = vld [vmem:[%s5273 + $0x40] sm:$0xff]
      %v5283 = vld [vmem:[%s5273 + $0x48] sm:$0xff]
      %v5284 = vld [vmem:[%s5273 + $0x50] sm:$0xff]
      %v5285 = vld [vmem:[%s5273 + $0x58] sm:$0xff]
      %v5286 = vld [vmem:[%s5273 + $0x60] sm:$0xff]
      %v5287 = vld [vmem:[%s5273 + $0x68] sm:$0xff]
      %v5288 = vld [vmem:[%s5273 + $0x70] sm:$0xff]
      %v5289 = vld [vmem:[%s5273 + $0x78] sm:$0xff]
      %v5290 = vld [vmem:[%s5273 + $0x80] sm:$0xff]
      %v5291 = vld [vmem:[%s5273 + $0x88] sm:$0xff]
      %v5292 = vld [vmem:[%s5273 + $0x90] sm:$0xff]
      %v5293 = vld [vmem:[%s5273 + $0x98] sm:$0xff]
      %v5294 = vld [vmem:[%s5273 + $0xa0] sm:$0xff]
      %v5295 = vld [vmem:[%s5273 + $0xa8] sm:$0xff]
      %v5296 = vld [vmem:[%s5273 + $0xb0] sm:$0xff]
      %v5297 = vld [vmem:[%s5273 + $0xb8] sm:$0xff]
      %v5298 = vld [vmem:[%s5273 + $0xc0] sm:$0xff]
      %v5299 = vld [vmem:[%s5273 + $0xc8] sm:$0xff]
      %v5300 = vld [vmem:[%s5273 + $0xd0] sm:$0xff]
      %v5301 = vld [vmem:[%s5273 + $0xd8] sm:$0xff]
      %v5302 = vld [vmem:[%s5273 + $0xe0] sm:$0xff]
      %v5303 = vld [vmem:[%s5273 + $0xe8] sm:$0xff]
      %v5304 = vld [vmem:[%s5273 + $0xf0] sm:$0xff]
      %v5305 = vld [vmem:[%s5273 + $0xf8] sm:$0xff]
      %v5306 = vld [vmem:[%s5273 + $0x100] sm:$0xff]
      %v5307 = vld [vmem:[%s5273 + $0x108] sm:$0xff]
      %v5308 = vld [vmem:[%s5273 + $0x110] sm:$0xff]
      %v5309 = vld [vmem:[%s5273 + $0x118] sm:$0xff]
      %v5310 = vld [vmem:[%s5273 + $0x120] sm:$0xff]
      %v5311 = vld [vmem:[%s5273 + $0x128] sm:$0xff]
      %v5312 = vld [vmem:[%s5273 + $0x130] sm:$0xff]
      %v5313 = vld [vmem:[%s5273 + $0x138] sm:$0xff]
      %v5314 = vld [vmem:[%s5273 + $0x140] sm:$0xff]
      %v5315 = vld [vmem:[%s5273 + $0x148] sm:$0xff]
      %v5316 = vld [vmem:[%s5273 + $0x150] sm:$0xff]
      %v5317 = vld [vmem:[%s5273 + $0x158] sm:$0xff]
      %v5318 = vld [vmem:[%s5273 + $0x160] sm:$0xff]
      %v5319 = vld [vmem:[%s5273 + $0x168] sm:$0xff]
      %v5320 = vld [vmem:[%s5273 + $0x170] sm:$0xff]
      %v5321 = vld [vmem:[%s5273 + $0x178] sm:$0xff]
      %v5322 = vld [vmem:[%s5273 + $0x180] sm:$0xff]
      %v5323 = vld [vmem:[%s5273 + $0x188] sm:$0xff]
      %v5324 = vld [vmem:[%s5273 + $0x190] sm:$0xff]
      %v5325 = vld [vmem:[%s5273 + $0x198] sm:$0xff]
      %v5326 = vld [vmem:[%s5273 + $0x1a0] sm:$0xff]
      %v5327 = vld [vmem:[%s5273 + $0x1a8] sm:$0xff]
      %v5328 = vld [vmem:[%s5273 + $0x1b0] sm:$0xff]
      %v5329 = vld [vmem:[%s5273 + $0x1b8] sm:$0xff]
      %v5330 = vld [vmem:[%s5273 + $0x1c0] sm:$0xff]
      %v5331 = vld [vmem:[%s5273 + $0x1c8] sm:$0xff]
      %v5332 = vld [vmem:[%s5273 + $0x1d0] sm:$0xff]
      %v5333 = vld [vmem:[%s5273 + $0x1d8] sm:$0xff]
      %v5334 = vld [vmem:[%s5273 + $0x1e0] sm:$0xff]
      %v5335 = vld [vmem:[%s5273 + $0x1e8] sm:$0xff]
      %v5336 = vld [vmem:[%s5273 + $0x1f0] sm:$0xff]
      %v5337 = vld [vmem:[%s5273 + $0x1f8] sm:$0xff]
      %5338 = vmatprep.subr.mxu0 0.0
      %5339 = vmatpush1.msra.mxu0 %v5274
      %5340 = vmatprep.subr.mxu0 0.0
      %5341 = vmatpush1.msra.mxu0 %v5275
      %5342 = vmatprep.subr.mxu0 0.0
      %5343 = vmatpush1.msra.mxu0 %v5276
      %5344 = vmatprep.subr.mxu0 0.0
      %5345 = vmatpush1.msra.mxu0 %v5277
      %5346 = vmatprep.subr.mxu0 0.0
      %5347 = vmatpush1.msra.mxu0 %v5278
      %5348 = vmatprep.subr.mxu0 0.0
      %5349 = vmatpush1.msra.mxu0 %v5279
      %5350 = vmatprep.subr.mxu0 0.0
      %5351 = vmatpush1.msra.mxu0 %v5280
      %5352 = vmatprep.subr.mxu0 0.0
      %5353 = vmatpush1.msra.mxu0 %v5281
      %5354 = vmatprep.subr.mxu0 0.0
      %5355 = vmatpush1.msra.mxu0 %v5282
      %5356 = vmatprep.subr.mxu0 0.0
      %5357 = vmatpush1.msra.mxu0 %v5283
      %5358 = vmatprep.subr.mxu0 0.0
      %5359 = vmatpush1.msra.mxu0 %v5284
      %5360 = vmatprep.subr.mxu0 0.0
      %5361 = vmatpush1.msra.mxu0 %v5285
      %5362 = vmatprep.subr.mxu0 0.0
      %5363 = vmatpush1.msra.mxu0 %v5286
      %5364 = vmatprep.subr.mxu0 0.0
      %5365 = vmatpush1.msra.mxu0 %v5287
      %5366 = vmatprep.subr.mxu0 0.0
      %5367 = vmatpush1.msra.mxu0 %v5288
      %5368 = vmatprep.subr.mxu0 0.0
      %5369 = vmatpush1.msra.mxu0 %v5289
      %5370 = vmatprep.subr.mxu0 0.0
      %5371 = vmatpush1.msra.mxu0 %v5290
      %5372 = vmatprep.subr.mxu0 0.0
      %5373 = vmatpush1.msra.mxu0 %v5291
      %5374 = vmatprep.subr.mxu0 0.0
      %5375 = vmatpush1.msra.mxu0 %v5292
      %5376 = vmatprep.subr.mxu0 0.0
      %5377 = vmatpush1.msra.mxu0 %v5293
      %5378 = vmatprep.subr.mxu0 0.0
      %5379 = vmatpush1.msra.mxu0 %v5294
      %5380 = vmatprep.subr.mxu0 0.0
      %5381 = vmatpush1.msra.mxu0 %v5295
      %5382 = vmatprep.subr.mxu0 0.0
      %5383 = vmatpush1.msra.mxu0 %v5296
      %5384 = vmatprep.subr.mxu0 0.0
      %5385 = vmatpush1.msra.mxu0 %v5297
      %5386 = vmatprep.subr.mxu0 0.0
      %5387 = vmatpush1.msra.mxu0 %v5298
      %5388 = vmatprep.subr.mxu0 0.0
      %5389 = vmatpush1.msra.mxu0 %v5299
      %5390 = vmatprep.subr.mxu0 0.0
      %5391 = vmatpush1.msra.mxu0 %v5300
      %5392 = vmatprep.subr.mxu0 0.0
      %5393 = vmatpush1.msra.mxu0 %v5301
      %5394 = vmatprep.subr.mxu0 0.0
      %5395 = vmatpush1.msra.mxu0 %v5302
      %5396 = vmatprep.subr.mxu0 0.0
      %5397 = vmatpush1.msra.mxu0 %v5303
      %5398 = vmatprep.subr.mxu0 0.0
      %5399 = vmatpush1.msra.mxu0 %v5304
      %5400 = vmatprep.subr.mxu0 0.0
      %5401 = vmatpush1.msra.mxu0 %v5305
      %5402 = vmatprep.mubr.f32.mxu0 %v5146
      %5403 = vmatmul.mubr.f32.gmra.mrb[0].mxu0 %v5145
      %v5404 = vpop.f32.mrb[0].mxu0
      %v5405 = vadd.f32 0.0, %v5404
      %v5406 = vpop.f32.mrb[0].mxu0
      %5407 = vmatprep.mubr.f32.mxu0 %v5150
      %5408 = vmatmul.mubr.f32.gmra.mrb[0].mxu0 %v5149
      %v5409 = vpop.f32.mrb[0].mxu0
      %v5410 = vadd.f32 0.0, %v5409
      %v5411 = vpop.f32.mrb[0].mxu0
      %5412 = vmatprep.mubr.f32.mxu0 %v5154
      %5413 = vmatmul.mubr.f32.gmra.mrb[0].mxu0 %v5153
      %v5414 = vpop.f32.mrb[0].mxu0
      %v5415 = vadd.f32 0.0, %v5414
      %v5416 = vpop.f32.mrb[0].mxu0
      %5417 = vmatprep.mubr.f32.mxu0 %v5158
      %5418 = vmatmul.mubr.f32.gmra.mrb[0].mxu0 %v5157
      %v5419 = vpop.f32.mrb[0].mxu0
      %v5420 = vadd.f32 0.0, %v5419
      %v5421 = vpop.f32.mrb[0].mxu0
      %5422 = vmatprep.mubr.f32.mxu0 %v5162
      %5423 = vmatmul.mubr.f32.gmra.mrb[0].mxu0 %v5161
      %v5424 = vpop.f32.mrb[0].mxu0
      %v5425 = vadd.f32 0.0, %v5424
      %v5426 = vpop.f32.mrb[0].mxu0
      %5427 = vmatprep.mubr.f32.mxu0 %v5166
      %5428 = vmatmul.mubr.f32.gmra.mrb[0].mxu0 %v5165
      %v5429 = vpop.f32.mrb[0].mxu0
      %v5430 = vadd.f32 0.0, %v5429
      %v5431 = vpop.f32.mrb[0].mxu0
      %5432 = vmatprep.mubr.f32.mxu0 %v5170
      %5433 = vmatmul.mubr.f32.gmra.mrb[0].mxu0 %v5169
      %v5434 = vpop.f32.mrb[0].mxu0
      %v5435 = vadd.f32 0.0, %v5434
      %v5436 = vpop.f32.mrb[0].mxu0
      %5437 = vmatprep.mubr.f32.mxu0 %v5174
      %5438 = vmatmul.mubr.f32.gmra.mrb[0].mxu0 %v5173
      %v5439 = vpop.f32.mrb[0].mxu0
      %v5440 = vadd.f32 0.0, %v5439
      %v5441 = vpop.f32.mrb[0].mxu0
      %5442 = vmatprep.mubr.f32.mxu0 %v5178
      %5443 = vmatmul.mubr.f32.gmra.mrb[0].mxu0 %v5177
      %v5444 = vpop.f32.mrb[0].mxu0
      %v5445 = vadd.f32 0.0, %v5444
      %v5446 = vpop.f32.mrb[0].mxu0
      %5447 = vmatprep.mubr.f32.mxu0 %v5182
      %5448 = vmatmul.mubr.f32.gmra.mrb[0].mxu0 %v5181
      %v5449 = vpop.f32.mrb[0].mxu0
      %v5450 = vadd.f32 0.0, %v5449
      %v5451 = vpop.f32.mrb[0].mxu0
      %5452 = vmatprep.mubr.f32.mxu0 %v5186
      %5453 = vmatmul.mubr.f32.gmra.mrb[0].mxu0 %v5185
      %v5454 = vpop.f32.mrb[0].mxu0
      %v5455 = vadd.f32 0.0, %v5454
      %v5456 = vpop.f32.mrb[0].mxu0
      %5457 = vmatprep.mubr.f32.mxu0 %v5190
      %5458 = vmatmul.mubr.f32.gmra.mrb[0].mxu0 %v5189
      %v5459 = vpop.f32.mrb[0].mxu0
      %v5460 = vadd.f32 0.0, %v5459
      %v5461 = vpop.f32.mrb[0].mxu0
      %5462 = vmatprep.mubr.f32.mxu0 %v5194
      %5463 = vmatmul.mubr.f32.gmra.mrb[0].mxu0 %v5193
      %v5464 = vpop.f32.mrb[0].mxu0
      %v5465 = vadd.f32 0.0, %v5464
      %v5466 = vpop.f32.mrb[0].mxu0
      %5467 = vmatprep.mubr.f32.mxu0 %v5198
      %5468 = vmatmul.mubr.f32.gmra.mrb[0].mxu0 %v5197
      %v5469 = vpop.f32.mrb[0].mxu0
      %v5470 = vadd.f32 0.0, %v5469
      %v5471 = vpop.f32.mrb[0].mxu0
      %5472 = vmatprep.mubr.f32.mxu0 %v5202
      %5473 = vmatmul.mubr.f32.gmra.mrb[0].mxu0 %v5201
      %v5474 = vpop.f32.mrb[0].mxu0
      %v5475 = vadd.f32 0.0, %v5474
      %v5476 = vpop.f32.mrb[0].mxu0
      %5477 = vmatprep.mubr.f32.mxu0 %v5206
      %5478 = vmatmul.mubr.f32.gmra.mrb[0].mxu0 %v5205
      %v5479 = vpop.f32.mrb[0].mxu0
      %v5480 = vadd.f32 0.0, %v5479
      %v5481 = vpop.f32.mrb[0].mxu0
      %5482 = vmatprep.mubr.f32.mxu0 %v5210
      %5483 = vmatmul.mubr.f32.gmra.mrb[0].mxu0 %v5209
      %v5484 = vpop.f32.mrb[0].mxu0
      %v5485 = vadd.f32 0.0, %v5484
      %v5486 = vpop.f32.mrb[0].mxu0
      %5487 = vmatprep.mubr.f32.mxu0 %v5214
      %5488 = vmatmul.mubr.f32.gmra.mrb[0].mxu0 %v5213
      %v5489 = vpop.f32.mrb[0].mxu0
      %v5490 = vadd.f32 0.0, %v5489
      %v5491 = vpop.f32.mrb[0].mxu0
      %5492 = vmatprep.mubr.f32.mxu0 %v5218
      %5493 = vmatmul.mubr.f32.gmra.mrb[0].mxu0 %v5217
      %v5494 = vpop.f32.mrb[0].mxu0
      %v5495 = vadd.f32 0.0, %v5494
      %v5496 = vpop.f32.mrb[0].mxu0
      %5497 = vmatprep.mubr.f32.mxu0 %v5222
      %5498 = vmatmul.mubr.f32.gmra.mrb[0].mxu0 %v5221
      %v5499 = vpop.f32.mrb[0].mxu0
      %v5500 = vadd.f32 0.0, %v5499
      %v5501 = vpop.f32.mrb[0].mxu0
      %5502 = vmatprep.mubr.f32.mxu0 %v5226
      %5503 = vmatmul.mubr.f32.gmra.mrb[0].mxu0 %v5225
      %v5504 = vpop.f32.mrb[0].mxu0
      %v5505 = vadd.f32 0.0, %v5504
      %v5506 = vpop.f32.mrb[0].mxu0
      %5507 = vmatprep.mubr.f32.mxu0 %v5230
      %5508 = vmatmul.mubr.f32.gmra.mrb[0].mxu0 %v5229
      %v5509 = vpop.f32.mrb[0].mxu0
      %v5510 = vadd.f32 0.0, %v5509
      %v5511 = vpop.f32.mrb[0].mxu0
      %5512 = vmatprep.mubr.f32.mxu0 %v5234
      %5513 = vmatmul.mubr.f32.gmra.mrb[0].mxu0 %v5233
      %v5514 = vpop.f32.mrb[0].mxu0
      %v5515 = vadd.f32 0.0, %v5514
      %v5516 = vpop.f32.mrb[0].mxu0
      %5517 = vmatprep.mubr.f32.mxu0 %v5238
      %5518 = vmatmul.mubr.f32.gmra.mrb[0].mxu0 %v5237
      %v5519 = vpop.f32.mrb[0].mxu0
      %v5520 = vadd.f32 0.0, %v5519
      %v5521 = vpop.f32.mrb[0].mxu0
      %5522 = vmatprep.mubr.f32.mxu0 %v5242
      %5523 = vmatmul.mubr.f32.gmra.mrb[0].mxu0 %v5241
      %v5524 = vpop.f32.mrb[0].mxu0
      %v5525 = vadd.f32 0.0, %v5524
      %v5526 = vpop.f32.mrb[0].mxu0
      %5527 = vmatprep.mubr.f32.mxu0 %v5246
      %5528 = vmatmul.mubr.f32.gmra.mrb[0].mxu0 %v5245
      %v5529 = vpop.f32.mrb[0].mxu0
      %v5530 = vadd.f32 0.0, %v5529
      %v5531 = vpop.f32.mrb[0].mxu0
      %5532 = vmatprep.mubr.f32.mxu0 %v5250
      %5533 = vmatmul.mubr.f32.gmra.mrb[0].mxu0 %v5249
      %v5534 = vpop.f32.mrb[0].mxu0
      %v5535 = vadd.f32 0.0, %v5534
      %v5536 = vpop.f32.mrb[0].mxu0
      %5537 = vmatprep.mubr.f32.mxu0 %v5254
      %5538 = vmatmul.mubr.f32.gmra.mrb[0].mxu0 %v5253
      %v5539 = vpop.f32.mrb[0].mxu0
      %v5540 = vadd.f32 0.0, %v5539
      %v5541 = vpop.f32.mrb[0].mxu0
      %5542 = vmatprep.mubr.f32.mxu0 %v5258
      %5543 = vmatmul.mubr.f32.gmra.mrb[0].mxu0 %v5257
      %v5544 = vpop.f32.mrb[0].mxu0
      %v5545 = vadd.f32 0.0, %v5544
      %v5546 = vpop.f32.mrb[0].mxu0
      %5547 = vmatprep.mubr.f32.mxu0 %v5262
      %5548 = vmatmul.mubr.f32.gmra.mrb[0].mxu0 %v5261
      %v5549 = vpop.f32.mrb[0].mxu0
      %v5550 = vadd.f32 0.0, %v5549
      %v5551 = vpop.f32.mrb[0].mxu0
      %5552 = vmatprep.mubr.f32.mxu0 %v5266
      %5553 = vmatmul.mubr.f32.gmra.mrb[0].mxu0 %v5265
      %v5554 = vpop.f32.mrb[0].mxu0
      %v5555 = vadd.f32 0.0, %v5554
      %v5556 = vpop.f32.mrb[0].mxu0
      %5557 = vmatprep.mubr.f32.mxu0 %v5270
      %5558 = vmatmul.mubr.f32.gmra.mrb[0].mxu0 %v5269
      %v5559 = vpop.f32.mrb[0].mxu0
      %v5560 = vadd.f32 0.0, %v5559
      %v5561 = vpop.f32.mrb[0].mxu0
      %5562 = vdwg.mxu0
      %5563 = vmatprep.subr.mxu0 0.0
      %5564 = vmatpush1.msra.mxu0 %v5306
      %5565 = vmatprep.subr.mxu0 0.0
      %5566 = vmatpush1.msra.mxu0 %v5307
      %5567 = vmatprep.subr.mxu0 0.0
      %5568 = vmatpush1.msra.mxu0 %v5308
      %5569 = vmatprep.subr.mxu0 0.0
      %5570 = vmatpush1.msra.mxu0 %v5309
      %5571 = vmatprep.subr.mxu0 0.0
      %5572 = vmatpush1.msra.mxu0 %v5310
      %5573 = vmatprep.subr.mxu0 0.0
      %5574 = vmatpush1.msra.mxu0 %v5311
      %5575 = vmatprep.subr.mxu0 0.0
      %5576 = vmatpush1.msra.mxu0 %v5312
      %5577 = vmatprep.subr.mxu0 0.0
      %5578 = vmatpush1.msra.mxu0 %v5313
      %5579 = vmatprep.subr.mxu0 0.0
      %5580 = vmatpush1.msra.mxu0 %v5314
      %5581 = vmatprep.subr.mxu0 0.0
      %5582 = vmatpush1.msra.mxu0 %v5315
      %5583 = vmatprep.subr.mxu0 0.0
      %5584 = vmatpush1.msra.mxu0 %v5316
      %5585 = vmatprep.subr.mxu0 0.0
      %5586 = vmatpush1.msra.mxu0 %v5317
      %5587 = vmatprep.subr.mxu0 0.0
      %5588 = vmatpush1.msra.mxu0 %v5318
      %5589 = vmatprep.subr.mxu0 0.0
      %5590 = vmatpush1.msra.mxu0 %v5319
      %5591 = vmatprep.subr.mxu0 0.0
      %5592 = vmatpush1.msra.mxu0 %v5320
      %5593 = vmatprep.subr.mxu0 0.0
      %5594 = vmatpush1.msra.mxu0 %v5321
      %5595 = vmatprep.subr.mxu0 0.0
      %5596 = vmatpush1.msra.mxu0 %v5322
      %5597 = vmatprep.subr.mxu0 0.0
      %5598 = vmatpush1.msra.mxu0 %v5323
      %5599 = vmatprep.subr.mxu0 0.0
      %5600 = vmatpush1.msra.mxu0 %v5324
      %5601 = vmatprep.subr.mxu0 0.0
      %5602 = vmatpush1.msra.mxu0 %v5325
      %5603 = vmatprep.subr.mxu0 0.0
      %5604 = vmatpush1.msra.mxu0 %v5326
      %5605 = vmatprep.subr.mxu0 0.0
      %5606 = vmatpush1.msra.mxu0 %v5327
      %5607 = vmatprep.subr.mxu0 0.0
      %5608 = vmatpush1.msra.mxu0 %v5328
      %5609 = vmatprep.subr.mxu0 0.0
      %5610 = vmatpush1.msra.mxu0 %v5329
      %5611 = vmatprep.subr.mxu0 0.0
      %5612 = vmatpush1.msra.mxu0 %v5330
      %5613 = vmatprep.subr.mxu0 0.0
      %5614 = vmatpush1.msra.mxu0 %v5331
      %5615 = vmatprep.subr.mxu0 0.0
      %5616 = vmatpush1.msra.mxu0 %v5332
      %5617 = vmatprep.subr.mxu0 0.0
      %5618 = vmatpush1.msra.mxu0 %v5333
      %5619 = vmatprep.subr.mxu0 0.0
      %5620 = vmatpush1.msra.mxu0 %v5334
      %5621 = vmatprep.subr.mxu0 0.0
      %5622 = vmatpush1.msra.mxu0 %v5335
      %5623 = vmatprep.subr.mxu0 0.0
      %5624 = vmatpush1.msra.mxu0 %v5336
      %5625 = vmatprep.subr.mxu0 0.0
      %5626 = vmatpush1.msra.mxu0 %v5337
      %5627 = vmatprep.mubr.f32.mxu0 %v5148
      %5628 = vmatmul.mubr.f32.gmra.mrb[0].mxu0 %v5147
      %v5629 = vpop.f32.mrb[0].mxu0
      %v5630 = vadd.f32 %v5405, %v5629
      %v5631 = vpop.f32.mrb[0].mxu0
      %5632 = vmatprep.mubr.f32.mxu0 %v5152
      %5633 = vmatmul.mubr.f32.gmra.mrb[0].mxu0 %v5151
      %v5634 = vpop.f32.mrb[0].mxu0
      %v5635 = vadd.f32 %v5410, %v5634
      %v5636 = vpop.f32.mrb[0].mxu0
      %5637 = vmatprep.mubr.f32.mxu0 %v5156
      %5638 = vmatmul.mubr.f32.gmra.mrb[0].mxu0 %v5155
      %v5639 = vpop.f32.mrb[0].mxu0
      %v5640 = vadd.f32 %v5415, %v5639
      %v5641 = vpop.f32.mrb[0].mxu0
      %5642 = vmatprep.mubr.f32.mxu0 %v5160
      %5643 = vmatmul.mubr.f32.gmra.mrb[0].mxu0 %v5159
      %v5644 = vpop.f32.mrb[0].mxu0
      %v5645 = vadd.f32 %v5420, %v5644
      %v5646 = vpop.f32.mrb[0].mxu0
      %5647 = vmatprep.mubr.f32.mxu0 %v5164
      %5648 = vmatmul.mubr.f32.gmra.mrb[0].mxu0 %v5163
      %v5649 = vpop.f32.mrb[0].mxu0
      %v5650 = vadd.f32 %v5425, %v5649
      %v5651 = vpop.f32.mrb[0].mxu0
      %5652 = vmatprep.mubr.f32.mxu0 %v5168
      %5653 = vmatmul.mubr.f32.gmra.mrb[0].mxu0 %v5167
      %v5654 = vpop.f32.mrb[0].mxu0
      %v5655 = vadd.f32 %v5430, %v5654
      %v5656 = vpop.f32.mrb[0].mxu0
      %5657 = vmatprep.mubr.f32.mxu0 %v5172
      %5658 = vmatmul.mubr.f32.gmra.mrb[0].mxu0 %v5171
      %v5659 = vpop.f32.mrb[0].mxu0
      %v5660 = vadd.f32 %v5435, %v5659
      %v5661 = vpop.f32.mrb[0].mxu0
      %5662 = vmatprep.mubr.f32.mxu0 %v5176
      %5663 = vmatmul.mubr.f32.gmra.mrb[0].mxu0 %v5175
      %v5664 = vpop.f32.mrb[0].mxu0
      %v5665 = vadd.f32 %v5440, %v5664
      %v5666 = vpop.f32.mrb[0].mxu0
      %5667 = vmatprep.mubr.f32.mxu0 %v5180
      %5668 = vmatmul.mubr.f32.gmra.mrb[0].mxu0 %v5179
      %v5669 = vpop.f32.mrb[0].mxu0
      %v5670 = vadd.f32 %v5445, %v5669
      %v5671 = vpop.f32.mrb[0].mxu0
      %5672 = vmatprep.mubr.f32.mxu0 %v5184
      %5673 = vmatmul.mubr.f32.gmra.mrb[0].mxu0 %v5183
      %v5674 = vpop.f32.mrb[0].mxu0
      %v5675 = vadd.f32 %v5450, %v5674
      %v5676 = vpop.f32.mrb[0].mxu0
      %5677 = vmatprep.mubr.f32.mxu0 %v5188
      %5678 = vmatmul.mubr.f32.gmra.mrb[0].mxu0 %v5187
      %v5679 = vpop.f32.mrb[0].mxu0
      %v5680 = vadd.f32 %v5455, %v5679
      %v5681 = vpop.f32.mrb[0].mxu0
      %5682 = vmatprep.mubr.f32.mxu0 %v5192
      %5683 = vmatmul.mubr.f32.gmra.mrb[0].mxu0 %v5191
      %v5684 = vpop.f32.mrb[0].mxu0
      %v5685 = vadd.f32 %v5460, %v5684
      %v5686 = vpop.f32.mrb[0].mxu0
      %5687 = vmatprep.mubr.f32.mxu0 %v5196
      %5688 = vmatmul.mubr.f32.gmra.mrb[0].mxu0 %v5195
      %v5689 = vpop.f32.mrb[0].mxu0
      %v5690 = vadd.f32 %v5465, %v5689
      %v5691 = vpop.f32.mrb[0].mxu0
      %5692 = vmatprep.mubr.f32.mxu0 %v5200
      %5693 = vmatmul.mubr.f32.gmra.mrb[0].mxu0 %v5199
      %v5694 = vpop.f32.mrb[0].mxu0
      %v5695 = vadd.f32 %v5470, %v5694
      %v5696 = vpop.f32.mrb[0].mxu0
      %5697 = vmatprep.mubr.f32.mxu0 %v5204
      %5698 = vmatmul.mubr.f32.gmra.mrb[0].mxu0 %v5203
      %v5699 = vpop.f32.mrb[0].mxu0
      %v5700 = vadd.f32 %v5475, %v5699
      %v5701 = vpop.f32.mrb[0].mxu0
      %5702 = vmatprep.mubr.f32.mxu0 %v5208
      %5703 = vmatmul.mubr.f32.gmra.mrb[0].mxu0 %v5207
      %v5704 = vpop.f32.mrb[0].mxu0
      %v5705 = vadd.f32 %v5480, %v5704
      %v5706 = vpop.f32.mrb[0].mxu0
      %5707 = vmatprep.mubr.f32.mxu0 %v5212
      %5708 = vmatmul.mubr.f32.gmra.mrb[0].mxu0 %v5211
      %v5709 = vpop.f32.mrb[0].mxu0
      %v5710 = vadd.f32 %v5485, %v5709
      %v5711 = vpop.f32.mrb[0].mxu0
      %5712 = vmatprep.mubr.f32.mxu0 %v5216
      %5713 = vmatmul.mubr.f32.gmra.mrb[0].mxu0 %v5215
      %v5714 = vpop.f32.mrb[0].mxu0
      %v5715 = vadd.f32 %v5490, %v5714
      %v5716 = vpop.f32.mrb[0].mxu0
      %5717 = vmatprep.mubr.f32.mxu0 %v5220
      %5718 = vmatmul.mubr.f32.gmra.mrb[0].mxu0 %v5219
      %v5719 = vpop.f32.mrb[0].mxu0
      %v5720 = vadd.f32 %v5495, %v5719
      %v5721 = vpop.f32.mrb[0].mxu0
      %5722 = vmatprep.mubr.f32.mxu0 %v5224
      %5723 = vmatmul.mubr.f32.gmra.mrb[0].mxu0 %v5223
      %v5724 = vpop.f32.mrb[0].mxu0
      %v5725 = vadd.f32 %v5500, %v5724
      %v5726 = vpop.f32.mrb[0].mxu0
      %5727 = vmatprep.mubr.f32.mxu0 %v5228
      %5728 = vmatmul.mubr.f32.gmra.mrb[0].mxu0 %v5227
      %v5729 = vpop.f32.mrb[0].mxu0
      %v5730 = vadd.f32 %v5505, %v5729
      %v5731 = vpop.f32.mrb[0].mxu0
      %5732 = vmatprep.mubr.f32.mxu0 %v5232
      %5733 = vmatmul.mubr.f32.gmra.mrb[0].mxu0 %v5231
      %v5734 = vpop.f32.mrb[0].mxu0
      %v5735 = vadd.f32 %v5510, %v5734
      %v5736 = vpop.f32.mrb[0].mxu0
      %5737 = vmatprep.mubr.f32.mxu0 %v5236
      %5738 = vmatmul.mubr.f32.gmra.mrb[0].mxu0 %v5235
      %v5739 = vpop.f32.mrb[0].mxu0
      %v5740 = vadd.f32 %v5515, %v5739
      %v5741 = vpop.f32.mrb[0].mxu0
      %5742 = vmatprep.mubr.f32.mxu0 %v5240
      %5743 = vmatmul.mubr.f32.gmra.mrb[0].mxu0 %v5239
      %v5744 = vpop.f32.mrb[0].mxu0
      %v5745 = vadd.f32 %v5520, %v5744
      %v5746 = vpop.f32.mrb[0].mxu0
      %5747 = vmatprep.mubr.f32.mxu0 %v5244
      %5748 = vmatmul.mubr.f32.gmra.mrb[0].mxu0 %v5243
      %v5749 = vpop.f32.mrb[0].mxu0
      %v5750 = vadd.f32 %v5525, %v5749
      %v5751 = vpop.f32.mrb[0].mxu0
      %5752 = vmatprep.mubr.f32.mxu0 %v5248
      %5753 = vmatmul.mubr.f32.gmra.mrb[0].mxu0 %v5247
      %v5754 = vpop.f32.mrb[0].mxu0
      %v5755 = vadd.f32 %v5530, %v5754
      %v5756 = vpop.f32.mrb[0].mxu0
      %5757 = vmatprep.mubr.f32.mxu0 %v5252
      %5758 = vmatmul.mubr.f32.gmra.mrb[0].mxu0 %v5251
      %v5759 = vpop.f32.mrb[0].mxu0
      %v5760 = vadd.f32 %v5535, %v5759
      %v5761 = vpop.f32.mrb[0].mxu0
      %5762 = vmatprep.mubr.f32.mxu0 %v5256
      %5763 = vmatmul.mubr.f32.gmra.mrb[0].mxu0 %v5255
      %v5764 = vpop.f32.mrb[0].mxu0
      %v5765 = vadd.f32 %v5540, %v5764
      %v5766 = vpop.f32.mrb[0].mxu0
      %5767 = vmatprep.mubr.f32.mxu0 %v5260
      %5768 = vmatmul.mubr.f32.gmra.mrb[0].mxu0 %v5259
      %v5769 = vpop.f32.mrb[0].mxu0
      %v5770 = vadd.f32 %v5545, %v5769
      %v5771 = vpop.f32.mrb[0].mxu0
      %5772 = vmatprep.mubr.f32.mxu0 %v5264
      %5773 = vmatmul.mubr.f32.gmra.mrb[0].mxu0 %v5263
      %v5774 = vpop.f32.mrb[0].mxu0
      %v5775 = vadd.f32 %v5550, %v5774
      %v5776 = vpop.f32.mrb[0].mxu0
      %5777 = vmatprep.mubr.f32.mxu0 %v5268
      %5778 = vmatmul.mubr.f32.gmra.mrb[0].mxu0 %v5267
      %v5779 = vpop.f32.mrb[0].mxu0
      %v5780 = vadd.f32 %v5555, %v5779
      %v5781 = vpop.f32.mrb[0].mxu0
      %5782 = vmatprep.mubr.f32.mxu0 %v5272
      %5783 = vmatmul.mubr.f32.gmra.mrb[0].mxu0 %v5271
      %v5784 = vpop.f32.mrb[0].mxu0
      %v5785 = vadd.f32 %v5560, %v5784
      %v5786 = vpop.f32.mrb[0].mxu0
      %5787 = vdwg.mxu0
      %v5788 = vadd.f32 %v4729, %v5630
      %v5789 = vadd.f32 %v4730, %v5635
      %v5790 = vadd.f32 %v4731, %v5640
      %v5791 = vadd.f32 %v4732, %v5645
      %v5792 = vadd.f32 %v4733, %v5650
      %v5793 = vadd.f32 %v4734, %v5655
      %v5794 = vadd.f32 %v4735, %v5660
      %v5795 = vadd.f32 %v4736, %v5665
      %v5796 = vadd.f32 %v4737, %v5670
      %v5797 = vadd.f32 %v4738, %v5675
      %v5798 = vadd.f32 %v4739, %v5680
      %v5799 = vadd.f32 %v4740, %v5685
      %v5800 = vadd.f32 %v4741, %v5690
      %v5801 = vadd.f32 %v4742, %v5695
      %v5802 = vadd.f32 %v4743, %v5700
      %v5803 = vadd.f32 %v4744, %v5705
      %v5804 = vadd.f32 %v4745, %v5710
      %v5805 = vadd.f32 %v4746, %v5715
      %v5806 = vadd.f32 %v4747, %v5720
      %v5807 = vadd.f32 %v4748, %v5725
      %v5808 = vadd.f32 %v4749, %v5730
      %v5809 = vadd.f32 %v4750, %v5735
      %v5810 = vadd.f32 %v4751, %v5740
      %v5811 = vadd.f32 %v4752, %v5745
      %v5812 = vadd.f32 %v4753, %v5750
      %v5813 = vadd.f32 %v4754, %v5755
      %v5814 = vadd.f32 %v4755, %v5760
      %v5815 = vadd.f32 %v4756, %v5765
      %v5816 = vadd.f32 %v4757, %v5770
      %v5817 = vadd.f32 %v4758, %v5775
      %v5818 = vadd.f32 %v4759, %v5780
      %v5819 = vadd.f32 %v4760, %v5785
      %v5820 = vld [vmem:[%s4] sm:$0x1]
      %v5822 = vlaneseq
      %v5823 = vshrl.u32 %v5822, 7
      %v5824 = vsub.s32 0, %v5823
      %v5825 = vrot.slane %v5820, %v5824
      %v5827 = vadd.f32 %v5788, %v5825
      %v5828 = vadd.f32 %v5789, %v5825
      %v5829 = vadd.f32 %v5790, %v5825
      %v5830 = vadd.f32 %v5791, %v5825
      %v5831 = vadd.f32 %v5792, %v5825
      %v5832 = vadd.f32 %v5793, %v5825
      %v5833 = vadd.f32 %v5794, %v5825
      %v5834 = vadd.f32 %v5795, %v5825
      %v5835 = vadd.f32 %v5796, %v5825
      %v5836 = vadd.f32 %v5797, %v5825
      %v5837 = vadd.f32 %v5798, %v5825
      %v5838 = vadd.f32 %v5799, %v5825
      %v5839 = vadd.f32 %v5800, %v5825
      %v5840 = vadd.f32 %v5801, %v5825
      %v5841 = vadd.f32 %v5802, %v5825
      %v5842 = vadd.f32 %v5803, %v5825
      %v5843 = vadd.f32 %v5804, %v5825
      %v5844 = vadd.f32 %v5805, %v5825
      %v5845 = vadd.f32 %v5806, %v5825
      %v5846 = vadd.f32 %v5807, %v5825
      %v5847 = vadd.f32 %v5808, %v5825
      %v5848 = vadd.f32 %v5809, %v5825
      %v5849 = vadd.f32 %v5810, %v5825
      %v5850 = vadd.f32 %v5811, %v5825
      %v5851 = vadd.f32 %v5812, %v5825
      %v5852 = vadd.f32 %v5813, %v5825
      %v5853 = vadd.f32 %v5814, %v5825
      %v5854 = vadd.f32 %v5815, %v5825
      %v5855 = vadd.f32 %v5816, %v5825
      %v5856 = vadd.f32 %v5817, %v5825
      %v5857 = vadd.f32 %v5818, %v5825
      %v5858 = vadd.f32 %v5819, %v5825
      %v5859 = vmax.f32 %v5827, 0.0
      %v5860 = vmax.f32 %v5828, 0.0
      %v5861 = vmax.f32 %v5829, 0.0
      %v5862 = vmax.f32 %v5830, 0.0
      %v5863 = vmax.f32 %v5831, 0.0
      %v5864 = vmax.f32 %v5832, 0.0
      %v5865 = vmax.f32 %v5833, 0.0
      %v5866 = vmax.f32 %v5834, 0.0
      %v5867 = vmax.f32 %v5835, 0.0
      %v5868 = vmax.f32 %v5836, 0.0
      %v5869 = vmax.f32 %v5837, 0.0
      %v5870 = vmax.f32 %v5838, 0.0
      %v5871 = vmax.f32 %v5839, 0.0
      %v5872 = vmax.f32 %v5840, 0.0
      %v5873 = vmax.f32 %v5841, 0.0
      %v5874 = vmax.f32 %v5842, 0.0
      %v5875 = vmax.f32 %v5843, 0.0
      %v5876 = vmax.f32 %v5844, 0.0
      %v5877 = vmax.f32 %v5845, 0.0
      %v5878 = vmax.f32 %v5846, 0.0
      %v5879 = vmax.f32 %v5847, 0.0
      %v5880 = vmax.f32 %v5848, 0.0
      %v5881 = vmax.f32 %v5849, 0.0
      %v5882 = vmax.f32 %v5850, 0.0
      %v5883 = vmax.f32 %v5851, 0.0
      %v5884 = vmax.f32 %v5852, 0.0
      %v5885 = vmax.f32 %v5853, 0.0
      %v5886 = vmax.f32 %v5854, 0.0
      %v5887 = vmax.f32 %v5855, 0.0
      %v5888 = vmax.f32 %v5856, 0.0
      %v5889 = vmax.f32 %v5857, 0.0
      %v5890 = vmax.f32 %v5858, 0.0
      %5891 = vst [vmem:[#allocation3] sm:$0xff] %v5859
      %5892 = vst [vmem:[#allocation3 + $0x18] sm:$0xff] %v5860
      %5893 = vst [vmem:[#allocation3 + $0x30] sm:$0xff] %v5861
      %5894 = vst [vmem:[#allocation3 + $0x48] sm:$0xff] %v5862
      %5895 = vst [vmem:[#allocation3 + $0x60] sm:$0xff] %v5863
      %5896 = vst [vmem:[#allocation3 + $0x78] sm:$0xff] %v5864
      %5897 = vst [vmem:[#allocation3 + $0x90] sm:$0xff] %v5865
      %5898 = vst [vmem:[#allocation3 + $0xa8] sm:$0xff] %v5866
      %5899 = vst [vmem:[#allocation3 + $0xf0] sm:$0xff] %v5867
      %5900 = vst [vmem:[#allocation3 + $0x108] sm:$0xff] %v5868
      %5901 = vst [vmem:[#allocation3 + $0x120] sm:$0xff] %v5869
      %5902 = vst [vmem:[#allocation3 + $0x138] sm:$0xff] %v5870
      %5903 = vst [vmem:[#allocation3 + $0x150] sm:$0xff] %v5871
      %5904 = vst [vmem:[#allocation3 + $0x168] sm:$0xff] %v5872
      %5905 = vst [vmem:[#allocation3 + $0x180] sm:$0xff] %v5873
      %5906 = vst [vmem:[#allocation3 + $0x198] sm:$0xff] %v5874
      %5907 = vst [vmem:[#allocation3 + $0x1e0] sm:$0xff] %v5875
      %5908 = vst [vmem:[#allocation3 + $0x1f8] sm:$0xff] %v5876
      %5909 = vst [vmem:[#allocation3 + $0x210] sm:$0xff] %v5877
      %5910 = vst [vmem:[#allocation3 + $0x228] sm:$0xff] %v5878
      %5911 = vst [vmem:[#allocation3 + $0x240] sm:$0xff] %v5879
      %5912 = vst [vmem:[#allocation3 + $0x258] sm:$0xff] %v5880
      %5913 = vst [vmem:[#allocation3 + $0x270] sm:$0xff] %v5881
      %5914 = vst [vmem:[#allocation3 + $0x288] sm:$0xff] %v5882
      %5915 = vst [vmem:[#allocation3 + $0x2d0] sm:$0xff] %v5883
      %5916 = vst [vmem:[#allocation3 + $0x2e8] sm:$0xff] %v5884
      %5917 = vst [vmem:[#allocation3 + $0x300] sm:$0xff] %v5885
      %5918 = vst [vmem:[#allocation3 + $0x318] sm:$0xff] %v5886
      %5919 = vst [vmem:[#allocation3 + $0x330] sm:$0xff] %v5887
      %5920 = vst [vmem:[#allocation3 + $0x348] sm:$0xff] %v5888
      %5921 = vst [vmem:[#allocation3 + $0x360] sm:$0xff] %v5889
      %5922 = vst [vmem:[#allocation3 + $0x378] sm:$0xff] %v5890
      %s5923 = scalar_lea.vmem [#allocation3], 192
      %5924 = vst [vmem:[%s5923] sm:$0xff] 0.0
      %5925 = vst [vmem:[%s5923 + $0x8] sm:$0x3] 0.0
      %5926 = vst [vmem:[%s5923 + $0x18] sm:$0xff] 0.0
      %5927 = vst [vmem:[%s5923 + $0x20] sm:$0x3] 0.0
      %5928 = vst [vmem:[%s5923 + $0xf0] sm:$0xff] 0.0
      %5929 = vst [vmem:[%s5923 + $0xf8] sm:$0x3] 0.0
      %5930 = vst [vmem:[%s5923 + $0x108] sm:$0xff] 0.0
      %5931 = vst [vmem:[%s5923 + $0x110] sm:$0x3] 0.0
      %5932 = vst [vmem:[%s5923 + $0x1e0] sm:$0xff] 0.0
      %5933 = vst [vmem:[%s5923 + $0x1e8] sm:$0x3] 0.0
      %5934 = vst [vmem:[%s5923 + $0x1f8] sm:$0xff] 0.0
      %5935 = vst [vmem:[%s5923 + $0x200] sm:$0x3] 0.0
      %5936 = vst [vmem:[%s5923 + $0x2d0] sm:$0xff] 0.0
      %5937 = vst [vmem:[%s5923 + $0x2d8] sm:$0x3] 0.0
      %5938 = vst [vmem:[%s5923 + $0x2e8] sm:$0xff] 0.0
      %5939 = vst [vmem:[%s5923 + $0x2f0] sm:$0x3] 0.0
      %5940 = vst [vmem:[#allocation3 + $0x8] sm:$0x3] 0.0
      %5941 = vst [vmem:[#allocation3 + $0x20] sm:$0x3] 0.0
      %5942 = vst [vmem:[#allocation3 + $0x38] sm:$0x3] 0.0
      %5943 = vst [vmem:[#allocation3 + $0x50] sm:$0x3] 0.0
      %5944 = vst [vmem:[#allocation3 + $0x68] sm:$0x3] 0.0
      %5945 = vst [vmem:[#allocation3 + $0x80] sm:$0x3] 0.0
      %5946 = vst [vmem:[#allocation3 + $0x98] sm:$0x3] 0.0
      %5947 = vst [vmem:[#allocation3 + $0xb0] sm:$0x3] 0.0
      %5948 = vst [vmem:[#allocation3 + $0xf8] sm:$0x3] 0.0
      %5949 = vst [vmem:[#allocation3 + $0x110] sm:$0x3] 0.0
      %5950 = vst [vmem:[#allocation3 + $0x128] sm:$0x3] 0.0
      %5951 = vst [vmem:[#allocation3 + $0x140] sm:$0x3] 0.0
      %5952 = vst [vmem:[#allocation3 + $0x158] sm:$0x3] 0.0
      %5953 = vst [vmem:[#allocation3 + $0x170] sm:$0x3] 0.0
      %5954 = vst [vmem:[#allocation3 + $0x188] sm:$0x3] 0.0
      %5955 = vst [vmem:[#allocation3 + $0x1a0] sm:$0x3] 0.0
      %5956 = vst [vmem:[#allocation3 + $0x1e8] sm:$0x3] 0.0
      %5957 = vst [vmem:[#allocation3 + $0x200] sm:$0x3] 0.0
      %5958 = vst [vmem:[#allocation3 + $0x218] sm:$0x3] 0.0
      %5959 = vst [vmem:[#allocation3 + $0x230] sm:$0x3] 0.0
      %5960 = vst [vmem:[#allocation3 + $0x248] sm:$0x3] 0.0
      %5961 = vst [vmem:[#allocation3 + $0x260] sm:$0x3] 0.0
      %5962 = vst [vmem:[#allocation3 + $0x278] sm:$0x3] 0.0
      %5963 = vst [vmem:[#allocation3 + $0x290] sm:$0x3] 0.0
      %5964 = vst [vmem:[#allocation3 + $0x2d8] sm:$0x3] 0.0
      %5965 = vst [vmem:[#allocation3 + $0x2f0] sm:$0x3] 0.0
      %5966 = vst [vmem:[#allocation3 + $0x308] sm:$0x3] 0.0
      %5967 = vst [vmem:[#allocation3 + $0x320] sm:$0x3] 0.0
      %5968 = vst [vmem:[#allocation3 + $0x338] sm:$0x3] 0.0
      %5969 = vst [vmem:[#allocation3 + $0x350] sm:$0x3] 0.0
      %5970 = vst [vmem:[#allocation3 + $0x368] sm:$0x3] 0.0
      %5971 = vst [vmem:[#allocation3 + $0x380] sm:$0x3] 0.0
      %v5972 = vld [vmem:[#allocation3] ss:$2 sm:$0xff]
      %s5973 = scalar_lea.vmem [#allocation3], 48
      %v5974 = vld [vmem:[%s5973] ss:$2 sm:$0xff]
      %s5975 = scalar_lea.vmem [#allocation3], 96
      %v5976 = vld [vmem:[%s5975] ss:$2 sm:$0xff]
      %s5977 = scalar_lea.vmem [#allocation3], 144
      %v5978 = vld [vmem:[%s5977] ss:$2 sm:$0xff]
      %s5979 = scalar_lea.vmem [#allocation3], 240
      %v5980 = vld [vmem:[%s5979] ss:$2 sm:$0xff]
      %s5981 = scalar_lea.vmem [#allocation3], 288
      %v5982 = vld [vmem:[%s5981] ss:$2 sm:$0xff]
      %s5983 = scalar_lea.vmem [#allocation3], 336
      %v5984 = vld [vmem:[%s5983] ss:$2 sm:$0xff]
      %s5985 = scalar_lea.vmem [#allocation3], 384
      %v5986 = vld [vmem:[%s5985] ss:$2 sm:$0xff]
      %s5987 = scalar_lea.vmem [#allocation3], 480
      %v5988 = vld [vmem:[%s5987] ss:$2 sm:$0xff]
      %s5989 = scalar_lea.vmem [#allocation3], 528
      %v5990 = vld [vmem:[%s5989] ss:$2 sm:$0xff]
      %s5991 = scalar_lea.vmem [#allocation3], 576
      %v5992 = vld [vmem:[%s5991] ss:$2 sm:$0xff]
      %s5993 = scalar_lea.vmem [#allocation3], 624
      %v5994 = vld [vmem:[%s5993] ss:$2 sm:$0xff]
      %s5995 = scalar_lea.vmem [#allocation3], 720
      %v5996 = vld [vmem:[%s5995] ss:$2 sm:$0xff]
      %s5997 = scalar_lea.vmem [#allocation3], 768
      %v5998 = vld [vmem:[%s5997] ss:$2 sm:$0xff]
      %s5999 = scalar_lea.vmem [#allocation3], 816
      %v6000 = vld [vmem:[%s5999] ss:$2 sm:$0xff]
      %s6001 = scalar_lea.vmem [#allocation3], 864
      %v6002 = vld [vmem:[%s6001] ss:$2 sm:$0xff]
      %6003 = vst [vmem:[#allocation4] sm:$0xff] %v5972
      %6004 = vst [vmem:[#allocation4 + $0x20] sm:$0xff] %v5974
      %6005 = vst [vmem:[#allocation4 + $0x40] sm:$0xff] %v5976
      %6006 = vst [vmem:[#allocation4 + $0x60] sm:$0xff] %v5978
      %6007 = vst [vmem:[#allocation4 + $0x80] sm:$0xff] %v5980
      %6008 = vst [vmem:[#allocation4 + $0xa0] sm:$0xff] %v5982
      %6009 = vst [vmem:[#allocation4 + $0xc0] sm:$0xff] %v5984
      %6010 = vst [vmem:[#allocation4 + $0xe0] sm:$0xff] %v5986
      %6011 = vst [vmem:[#allocation4 + $0x100] sm:$0xff] %v5988
      %6012 = vst [vmem:[#allocation4 + $0x120] sm:$0xff] %v5990
      %6013 = vst [vmem:[#allocation4 + $0x140] sm:$0xff] %v5992
      %6014 = vst [vmem:[#allocation4 + $0x160] sm:$0xff] %v5994
      %6015 = vst [vmem:[#allocation4 + $0x180] sm:$0xff] %v5996
      %6016 = vst [vmem:[#allocation4 + $0x1a0] sm:$0xff] %v5998
      %6017 = vst [vmem:[#allocation4 + $0x1c0] sm:$0xff] %v6000
      %6018 = vst [vmem:[#allocation4 + $0x1e0] sm:$0xff] %v6002
      %s6019 = scalar_lea.vmem [#allocation3], 1
      %v6020 = vld [vmem:[%s6019] ss:$2 sm:$0xff]
      %s6021 = scalar_lea.vmem [#allocation3], 49
      %v6022 = vld [vmem:[%s6021] ss:$2 sm:$0xff]
      %s6023 = scalar_lea.vmem [#allocation3], 97
      %v6024 = vld [vmem:[%s6023] ss:$2 sm:$0xff]
      %s6025 = scalar_lea.vmem [#allocation3], 145
      %v6026 = vld [vmem:[%s6025] ss:$2 sm:$0xff]
      %s6027 = scalar_lea.vmem [#allocation3], 241
      %v6028 = vld [vmem:[%s6027] ss:$2 sm:$0xff]
      %s6029 = scalar_lea.vmem [#allocation3], 289
      %v6030 = vld [vmem:[%s6029] ss:$2 sm:$0xff]
      %s6031 = scalar_lea.vmem [#allocation3], 337
      %v6032 = vld [vmem:[%s6031] ss:$2 sm:$0xff]
      %s6033 = scalar_lea.vmem [#allocation3], 385
      %v6034 = vld [vmem:[%s6033] ss:$2 sm:$0xff]
      %s6035 = scalar_lea.vmem [#allocation3], 481
      %v6036 = vld [vmem:[%s6035] ss:$2 sm:$0xff]
      %s6037 = scalar_lea.vmem [#allocation3], 529
      %v6038 = vld [vmem:[%s6037] ss:$2 sm:$0xff]
      %s6039 = scalar_lea.vmem [#allocation3], 577
      %v6040 = vld [vmem:[%s6039] ss:$2 sm:$0xff]
      %s6041 = scalar_lea.vmem [#allocation3], 625
      %v6042 = vld [vmem:[%s6041] ss:$2 sm:$0xff]
      %s6043 = scalar_lea.vmem [#allocation3], 721
      %v6044 = vld [vmem:[%s6043] ss:$2 sm:$0xff]
      %s6045 = scalar_lea.vmem [#allocation3], 769
      %v6046 = vld [vmem:[%s6045] ss:$2 sm:$0xff]
      %s6047 = scalar_lea.vmem [#allocation3], 817
      %v6048 = vld [vmem:[%s6047] ss:$2 sm:$0xff]
      %s6049 = scalar_lea.vmem [#allocation3], 865
      %v6050 = vld [vmem:[%s6049] ss:$2 sm:$0xff]
      %6051 = vst [vmem:[#allocation4 + $0x8] sm:$0xff] %v6020
      %6052 = vst [vmem:[#allocation4 + $0x28] sm:$0xff] %v6022
      %6053 = vst [vmem:[#allocation4 + $0x48] sm:$0xff] %v6024
      %6054 = vst [vmem:[#allocation4 + $0x68] sm:$0xff] %v6026
      %6055 = vst [vmem:[#allocation4 + $0x88] sm:$0xff] %v6028
      %6056 = vst [vmem:[#allocation4 + $0xa8] sm:$0xff] %v6030
      %6057 = vst [vmem:[#allocation4 + $0xc8] sm:$0xff] %v6032
      %6058 = vst [vmem:[#allocation4 + $0xe8] sm:$0xff] %v6034
      %6059 = vst [vmem:[#allocation4 + $0x108] sm:$0xff] %v6036
      %6060 = vst [vmem:[#allocation4 + $0x128] sm:$0xff] %v6038
      %6061 = vst [vmem:[#allocation4 + $0x148] sm:$0xff] %v6040
      %6062 = vst [vmem:[#allocation4 + $0x168] sm:$0xff] %v6042
      %6063 = vst [vmem:[#allocation4 + $0x188] sm:$0xff] %v6044
      %6064 = vst [vmem:[#allocation4 + $0x1a8] sm:$0xff] %v6046
      %6065 = vst [vmem:[#allocation4 + $0x1c8] sm:$0xff] %v6048
      %6066 = vst [vmem:[#allocation4 + $0x1e8] sm:$0xff] %v6050
      %s6067 = scalar_lea.vmem [#allocation3], 2
      %v6068 = vld [vmem:[%s6067] ss:$2 sm:$0xff]
      %s6069 = scalar_lea.vmem [#allocation3], 50
      %v6070 = vld [vmem:[%s6069] ss:$2 sm:$0xff]
      %s6071 = scalar_lea.vmem [#allocation3], 98
      %v6072 = vld [vmem:[%s6071] ss:$2 sm:$0xff]
      %s6073 = scalar_lea.vmem [#allocation3], 146
      %v6074 = vld [vmem:[%s6073] ss:$2 sm:$0xff]
      %s6075 = scalar_lea.vmem [#allocation3], 242
      %v6076 = vld [vmem:[%s6075] ss:$2 sm:$0xff]
      %s6077 = scalar_lea.vmem [#allocation3], 290
      %v6078 = vld [vmem:[%s6077] ss:$2 sm:$0xff]
      %s6079 = scalar_lea.vmem [#allocation3], 338
      %v6080 = vld [vmem:[%s6079] ss:$2 sm:$0xff]
      %s6081 = scalar_lea.vmem [#allocation3], 386
      %v6082 = vld [vmem:[%s6081] ss:$2 sm:$0xff]
      %s6083 = scalar_lea.vmem [#allocation3], 482
      %v6084 = vld [vmem:[%s6083] ss:$2 sm:$0xff]
      %s6085 = scalar_lea.vmem [#allocation3], 530
      %v6086 = vld [vmem:[%s6085] ss:$2 sm:$0xff]
      %s6087 = scalar_lea.vmem [#allocation3], 578
      %v6088 = vld [vmem:[%s6087] ss:$2 sm:$0xff]
      %s6089 = scalar_lea.vmem [#allocation3], 626
      %v6090 = vld [vmem:[%s6089] ss:$2 sm:$0xff]
      %s6091 = scalar_lea.vmem [#allocation3], 722
      %v6092 = vld [vmem:[%s6091] ss:$2 sm:$0xff]
      %s6093 = scalar_lea.vmem [#allocation3], 770
      %v6094 = vld [vmem:[%s6093] ss:$2 sm:$0xff]
      %s6095 = scalar_lea.vmem [#allocation3], 818
      %v6096 = vld [vmem:[%s6095] ss:$2 sm:$0xff]
      %s6097 = scalar_lea.vmem [#allocation3], 866
      %v6098 = vld [vmem:[%s6097] ss:$2 sm:$0xff]
      %6099 = vst [vmem:[#allocation4 + $0x10] sm:$0xff] %v6068
      %6100 = vst [vmem:[#allocation4 + $0x30] sm:$0xff] %v6070
      %6101 = vst [vmem:[#allocation4 + $0x50] sm:$0xff] %v6072
      %6102 = vst [vmem:[#allocation4 + $0x70] sm:$0xff] %v6074
      %6103 = vst [vmem:[#allocation4 + $0x90] sm:$0xff] %v6076
      %6104 = vst [vmem:[#allocation4 + $0xb0] sm:$0xff] %v6078
      %6105 = vst [vmem:[#allocation4 + $0xd0] sm:$0xff] %v6080
      %6106 = vst [vmem:[#allocation4 + $0xf0] sm:$0xff] %v6082
      %6107 = vst [vmem:[#allocation4 + $0x110] sm:$0xff] %v6084
      %6108 = vst [vmem:[#allocation4 + $0x130] sm:$0xff] %v6086
      %6109 = vst [vmem:[#allocation4 + $0x150] sm:$0xff] %v6088
      %6110 = vst [vmem:[#allocation4 + $0x170] sm:$0xff] %v6090
      %6111 = vst [vmem:[#allocation4 + $0x190] sm:$0xff] %v6092
      %6112 = vst [vmem:[#allocation4 + $0x1b0] sm:$0xff] %v6094
      %6113 = vst [vmem:[#allocation4 + $0x1d0] sm:$0xff] %v6096
      %6114 = vst [vmem:[#allocation4 + $0x1f0] sm:$0xff] %v6098
      %s6115 = scalar_lea.vmem [#allocation3], 3
      %v6116 = vld [vmem:[%s6115] ss:$2 sm:$0xff]
      %s6117 = scalar_lea.vmem [#allocation3], 51
      %v6118 = vld [vmem:[%s6117] ss:$2 sm:$0xff]
      %s6119 = scalar_lea.vmem [#allocation3], 99
      %v6120 = vld [vmem:[%s6119] ss:$2 sm:$0xff]
      %s6121 = scalar_lea.vmem [#allocation3], 147
      %v6122 = vld [vmem:[%s6121] ss:$2 sm:$0xff]
      %s6123 = scalar_lea.vmem [#allocation3], 243
      %v6124 = vld [vmem:[%s6123] ss:$2 sm:$0xff]
      %s6125 = scalar_lea.vmem [#allocation3], 291
      %v6126 = vld [vmem:[%s6125] ss:$2 sm:$0xff]
      %s6127 = scalar_lea.vmem [#allocation3], 339
      %v6128 = vld [vmem:[%s6127] ss:$2 sm:$0xff]
      %s6129 = scalar_lea.vmem [#allocation3], 387
      %v6130 = vld [vmem:[%s6129] ss:$2 sm:$0xff]
      %s6131 = scalar_lea.vmem [#allocation3], 483
      %v6132 = vld [vmem:[%s6131] ss:$2 sm:$0xff]
      %s6133 = scalar_lea.vmem [#allocation3], 531
      %v6134 = vld [vmem:[%s6133] ss:$2 sm:$0xff]
      %s6135 = scalar_lea.vmem [#allocation3], 579
      %v6136 = vld [vmem:[%s6135] ss:$2 sm:$0xff]
      %s6137 = scalar_lea.vmem [#allocation3], 627
      %v6138 = vld [vmem:[%s6137] ss:$2 sm:$0xff]
      %s6139 = scalar_lea.vmem [#allocation3], 723
      %v6140 = vld [vmem:[%s6139] ss:$2 sm:$0xff]
      %s6141 = scalar_lea.vmem [#allocation3], 771
      %v6142 = vld [vmem:[%s6141] ss:$2 sm:$0xff]
      %s6143 = scalar_lea.vmem [#allocation3], 819
      %v6144 = vld [vmem:[%s6143] ss:$2 sm:$0xff]
      %s6145 = scalar_lea.vmem [#allocation3], 867
      %v6146 = vld [vmem:[%s6145] ss:$2 sm:$0xff]
      %6147 = vst [vmem:[#allocation4 + $0x18] sm:$0xff] %v6116
      %6148 = vst [vmem:[#allocation4 + $0x38] sm:$0xff] %v6118
      %6149 = vst [vmem:[#allocation4 + $0x58] sm:$0xff] %v6120
      %6150 = vst [vmem:[#allocation4 + $0x78] sm:$0xff] %v6122
      %6151 = vst [vmem:[#allocation4 + $0x98] sm:$0xff] %v6124
      %6152 = vst [vmem:[#allocation4 + $0xb8] sm:$0xff] %v6126
      %6153 = vst [vmem:[#allocation4 + $0xd8] sm:$0xff] %v6128
      %6154 = vst [vmem:[#allocation4 + $0xf8] sm:$0xff] %v6130
      %6155 = vst [vmem:[#allocation4 + $0x118] sm:$0xff] %v6132
      %6156 = vst [vmem:[#allocation4 + $0x138] sm:$0xff] %v6134
      %6157 = vst [vmem:[#allocation4 + $0x158] sm:$0xff] %v6136
      %6158 = vst [vmem:[#allocation4 + $0x178] sm:$0xff] %v6138
      %6159 = vst [vmem:[#allocation4 + $0x198] sm:$0xff] %v6140
      %6160 = vst [vmem:[#allocation4 + $0x1b8] sm:$0xff] %v6142
      %6161 = vst [vmem:[#allocation4 + $0x1d8] sm:$0xff] %v6144
      %6162 = vst [vmem:[#allocation4 + $0x1f8] sm:$0xff] %v6146
      %v6163 = vld [vmem:[#allocation4] sm:$0xff]
      %v6164 = vld [vmem:[#allocation4 + $0x8] sm:$0xff]
      %v6165 = vld [vmem:[#allocation4 + $0x10] sm:$0xff]
      %v6166 = vld [vmem:[#allocation4 + $0x18] sm:$0xff]
      %v6167 = vld [vmem:[#allocation4 + $0x20] sm:$0xff]
      %v6168 = vld [vmem:[#allocation4 + $0x28] sm:$0xff]
      %v6169 = vld [vmem:[#allocation4 + $0x30] sm:$0xff]
      %v6170 = vld [vmem:[#allocation4 + $0x38] sm:$0xff]
      %v6171 = vld [vmem:[#allocation4 + $0x40] sm:$0xff]
      %v6172 = vld [vmem:[#allocation4 + $0x48] sm:$0xff]
      %v6173 = vld [vmem:[#allocation4 + $0x50] sm:$0xff]
      %v6174 = vld [vmem:[#allocation4 + $0x58] sm:$0xff]
      %v6175 = vld [vmem:[#allocation4 + $0x60] sm:$0xff]
      %v6176 = vld [vmem:[#allocation4 + $0x68] sm:$0xff]
      %v6177 = vld [vmem:[#allocation4 + $0x70] sm:$0xff]
      %v6178 = vld [vmem:[#allocation4 + $0x78] sm:$0xff]
      %v6179 = vld [vmem:[#allocation4 + $0x80] sm:$0xff]
      %v6180 = vld [vmem:[#allocation4 + $0x88] sm:$0xff]
      %v6181 = vld [vmem:[#allocation4 + $0x90] sm:$0xff]
      %v6182 = vld [vmem:[#allocation4 + $0x98] sm:$0xff]
      %v6183 = vld [vmem:[#allocation4 + $0xa0] sm:$0xff]
      %v6184 = vld [vmem:[#allocation4 + $0xa8] sm:$0xff]
      %v6185 = vld [vmem:[#allocation4 + $0xb0] sm:$0xff]
      %v6186 = vld [vmem:[#allocation4 + $0xb8] sm:$0xff]
      %v6187 = vld [vmem:[#allocation4 + $0xc0] sm:$0xff]
      %v6188 = vld [vmem:[#allocation4 + $0xc8] sm:$0xff]
      %v6189 = vld [vmem:[#allocation4 + $0xd0] sm:$0xff]
      %v6190 = vld [vmem:[#allocation4 + $0xd8] sm:$0xff]
      %v6191 = vld [vmem:[#allocation4 + $0xe0] sm:$0xff]
      %v6192 = vld [vmem:[#allocation4 + $0xe8] sm:$0xff]
      %v6193 = vld [vmem:[#allocation4 + $0xf0] sm:$0xff]
      %v6194 = vld [vmem:[#allocation4 + $0xf8] sm:$0xff]
      %v6195 = vld [vmem:[#allocation4 + $0x100] sm:$0xff]
      %v6196 = vld [vmem:[#allocation4 + $0x108] sm:$0xff]
      %v6197 = vld [vmem:[#allocation4 + $0x110] sm:$0xff]
      %v6198 = vld [vmem:[#allocation4 + $0x118] sm:$0xff]
      %v6199 = vld [vmem:[#allocation4 + $0x120] sm:$0xff]
      %v6200 = vld [vmem:[#allocation4 + $0x128] sm:$0xff]
      %v6201 = vld [vmem:[#allocation4 + $0x130] sm:$0xff]
      %v6202 = vld [vmem:[#allocation4 + $0x138] sm:$0xff]
      %v6203 = vld [vmem:[#allocation4 + $0x140] sm:$0xff]
      %v6204 = vld [vmem:[#allocation4 + $0x148] sm:$0xff]
      %v6205 = vld [vmem:[#allocation4 + $0x150] sm:$0xff]
      %v6206 = vld [vmem:[#allocation4 + $0x158] sm:$0xff]
      %v6207 = vld [vmem:[#allocation4 + $0x160] sm:$0xff]
      %v6208 = vld [vmem:[#allocation4 + $0x168] sm:$0xff]
      %v6209 = vld [vmem:[#allocation4 + $0x170] sm:$0xff]
      %v6210 = vld [vmem:[#allocation4 + $0x178] sm:$0xff]
      %v6211 = vld [vmem:[#allocation4 + $0x180] sm:$0xff]
      %v6212 = vld [vmem:[#allocation4 + $0x188] sm:$0xff]
      %v6213 = vld [vmem:[#allocation4 + $0x190] sm:$0xff]
      %v6214 = vld [vmem:[#allocation4 + $0x198] sm:$0xff]
      %v6215 = vld [vmem:[#allocation4 + $0x1a0] sm:$0xff]
      %v6216 = vld [vmem:[#allocation4 + $0x1a8] sm:$0xff]
      %v6217 = vld [vmem:[#allocation4 + $0x1b0] sm:$0xff]
      %v6218 = vld [vmem:[#allocation4 + $0x1b8] sm:$0xff]
      %v6219 = vld [vmem:[#allocation4 + $0x1c0] sm:$0xff]
      %v6220 = vld [vmem:[#allocation4 + $0x1c8] sm:$0xff]
      %v6221 = vld [vmem:[#allocation4 + $0x1d0] sm:$0xff]
      %v6222 = vld [vmem:[#allocation4 + $0x1d8] sm:$0xff]
      %v6223 = vld [vmem:[#allocation4 + $0x1e0] sm:$0xff]
      %v6224 = vld [vmem:[#allocation4 + $0x1e8] sm:$0xff]
      %v6225 = vld [vmem:[#allocation4 + $0x1f0] sm:$0xff]
      %v6226 = vld [vmem:[#allocation4 + $0x1f8] sm:$0xff]
      %v6227 = vld [vmem:[%s5] sm:$0xff]
      %v6228 = vld [vmem:[%s5 + $0x8] sm:$0xff]
      %v6229 = vld [vmem:[%s5 + $0x10] sm:$0xff]
      %v6230 = vld [vmem:[%s5 + $0x18] sm:$0xff]
      %v6231 = vld [vmem:[%s5 + $0x20] sm:$0xff]
      %v6232 = vld [vmem:[%s5 + $0x28] sm:$0xff]
      %v6233 = vld [vmem:[%s5 + $0x30] sm:$0xff]
      %v6234 = vld [vmem:[%s5 + $0x38] sm:$0xff]
      %v6235 = vld [vmem:[%s5 + $0x40] sm:$0xff]
      %v6236 = vld [vmem:[%s5 + $0x48] sm:$0xff]
      %v6237 = vld [vmem:[%s5 + $0x50] sm:$0xff]
      %v6238 = vld [vmem:[%s5 + $0x58] sm:$0xff]
      %v6239 = vld [vmem:[%s5 + $0x60] sm:$0xff]
      %v6240 = vld [vmem:[%s5 + $0x68] sm:$0xff]
      %v6241 = vld [vmem:[%s5 + $0x70] sm:$0xff]
      %v6242 = vld [vmem:[%s5 + $0x78] sm:$0xff]
      %v6243 = vld [vmem:[%s5 + $0x80] sm:$0xff]
      %v6244 = vld [vmem:[%s5 + $0x88] sm:$0xff]
      %v6245 = vld [vmem:[%s5 + $0x90] sm:$0xff]
      %v6246 = vld [vmem:[%s5 + $0x98] sm:$0xff]
      %v6247 = vld [vmem:[%s5 + $0xa0] sm:$0xff]
      %v6248 = vld [vmem:[%s5 + $0xa8] sm:$0xff]
      %v6249 = vld [vmem:[%s5 + $0xb0] sm:$0xff]
      %v6250 = vld [vmem:[%s5 + $0xb8] sm:$0xff]
      %v6251 = vld [vmem:[%s5 + $0xc0] sm:$0xff]
      %v6252 = vld [vmem:[%s5 + $0xc8] sm:$0xff]
      %v6253 = vld [vmem:[%s5 + $0xd0] sm:$0xff]
      %v6254 = vld [vmem:[%s5 + $0xd8] sm:$0xff]
      %v6255 = vld [vmem:[%s5 + $0xe0] sm:$0xff]
      %v6256 = vld [vmem:[%s5 + $0xe8] sm:$0xff]
      %v6257 = vld [vmem:[%s5 + $0xf0] sm:$0xff]
      %v6258 = vld [vmem:[%s5 + $0xf8] sm:$0xff]
      %v6259 = vld [vmem:[%s5 + $0x100] sm:$0xff]
      %v6260 = vld [vmem:[%s5 + $0x108] sm:$0xff]
      %v6261 = vld [vmem:[%s5 + $0x110] sm:$0xff]
      %v6262 = vld [vmem:[%s5 + $0x118] sm:$0xff]
      %v6263 = vld [vmem:[%s5 + $0x120] sm:$0xff]
      %v6264 = vld [vmem:[%s5 + $0x128] sm:$0xff]
      %v6265 = vld [vmem:[%s5 + $0x130] sm:$0xff]
      %v6266 = vld [vmem:[%s5 + $0x138] sm:$0xff]
      %v6267 = vld [vmem:[%s5 + $0x140] sm:$0xff]
      %v6268 = vld [vmem:[%s5 + $0x148] sm:$0xff]
      %v6269 = vld [vmem:[%s5 + $0x150] sm:$0xff]
      %v6270 = vld [vmem:[%s5 + $0x158] sm:$0xff]
      %v6271 = vld [vmem:[%s5 + $0x160] sm:$0xff]
      %v6272 = vld [vmem:[%s5 + $0x168] sm:$0xff]
      %v6273 = vld [vmem:[%s5 + $0x170] sm:$0xff]
      %v6274 = vld [vmem:[%s5 + $0x178] sm:$0xff]
      %v6275 = vld [vmem:[%s5 + $0x180] sm:$0xff]
      %v6276 = vld [vmem:[%s5 + $0x188] sm:$0xff]
      %v6277 = vld [vmem:[%s5 + $0x190] sm:$0xff]
      %v6278 = vld [vmem:[%s5 + $0x198] sm:$0xff]
      %v6279 = vld [vmem:[%s5 + $0x1a0] sm:$0xff]
      %v6280 = vld [vmem:[%s5 + $0x1a8] sm:$0xff]
      %v6281 = vld [vmem:[%s5 + $0x1b0] sm:$0xff]
      %v6282 = vld [vmem:[%s5 + $0x1b8] sm:$0xff]
      %v6283 = vld [vmem:[%s5 + $0x1c0] sm:$0xff]
      %v6284 = vld [vmem:[%s5 + $0x1c8] sm:$0xff]
      %v6285 = vld [vmem:[%s5 + $0x1d0] sm:$0xff]
      %v6286 = vld [vmem:[%s5 + $0x1d8] sm:$0xff]
      %v6287 = vld [vmem:[%s5 + $0x1e0] sm:$0xff]
      %v6288 = vld [vmem:[%s5 + $0x1e8] sm:$0xff]
      %v6289 = vld [vmem:[%s5 + $0x1f0] sm:$0xff]
      %v6290 = vld [vmem:[%s5 + $0x1f8] sm:$0xff]
      %s6291 = scalar_lea.vmem [#allocation3], 24
      %v6292 = vld [vmem:[%s6291] ss:$2 sm:$0xff]
      %s6293 = scalar_lea.vmem %s6291, 48 [#allocation3]
      %v6294 = vld [vmem:[%s6293] ss:$2 sm:$0xff]
      %s6295 = scalar_lea.vmem %s6291, 96 [#allocation3]
      %v6296 = vld [vmem:[%s6295] ss:$2 sm:$0xff]
      %s6297 = scalar_lea.vmem %s6291, 144 [#allocation3]
      %v6298 = vld [vmem:[%s6297] ss:$2 sm:$0xff]
      %s6299 = scalar_lea.vmem %s6291, 240 [#allocation3]
      %v6300 = vld [vmem:[%s6299] ss:$2 sm:$0xff]
      %s6301 = scalar_lea.vmem %s6291, 288 [#allocation3]
      %v6302 = vld [vmem:[%s6301] ss:$2 sm:$0xff]
      %s6303 = scalar_lea.vmem %s6291, 336 [#allocation3]
      %v6304 = vld [vmem:[%s6303] ss:$2 sm:$0xff]
      %s6305 = scalar_lea.vmem %s6291, 384 [#allocation3]
      %v6306 = vld [vmem:[%s6305] ss:$2 sm:$0xff]
      %s6307 = scalar_lea.vmem %s6291, 480 [#allocation3]
      %v6308 = vld [vmem:[%s6307] ss:$2 sm:$0xff]
      %s6309 = scalar_lea.vmem %s6291, 528 [#allocation3]
      %v6310 = vld [vmem:[%s6309] ss:$2 sm:$0xff]
      %s6311 = scalar_lea.vmem %s6291, 576 [#allocation3]
      %v6312 = vld [vmem:[%s6311] ss:$2 sm:$0xff]
      %s6313 = scalar_lea.vmem %s6291, 624 [#allocation3]
      %v6314 = vld [vmem:[%s6313] ss:$2 sm:$0xff]
      %s6315 = scalar_lea.vmem %s6291, 720 [#allocation3]
      %v6316 = vld [vmem:[%s6315] ss:$2 sm:$0xff]
      %s6317 = scalar_lea.vmem %s6291, 768 [#allocation3]
      %v6318 = vld [vmem:[%s6317] ss:$2 sm:$0xff]
      %s6319 = scalar_lea.vmem %s6291, 816 [#allocation3]
      %v6320 = vld [vmem:[%s6319] ss:$2 sm:$0xff]
      %s6321 = scalar_lea.vmem %s6291, 864 [#allocation3]
      %v6322 = vld [vmem:[%s6321] ss:$2 sm:$0xff]
      %6323 = vst [vmem:[#allocation4] sm:$0xff] %v6292
      %6324 = vst [vmem:[#allocation4 + $0x20] sm:$0xff] %v6294
      %6325 = vst [vmem:[#allocation4 + $0x40] sm:$0xff] %v6296
      %6326 = vst [vmem:[#allocation4 + $0x60] sm:$0xff] %v6298
      %6327 = vst [vmem:[#allocation4 + $0x80] sm:$0xff] %v6300
      %6328 = vst [vmem:[#allocation4 + $0xa0] sm:$0xff] %v6302
      %6329 = vst [vmem:[#allocation4 + $0xc0] sm:$0xff] %v6304
      %6330 = vst [vmem:[#allocation4 + $0xe0] sm:$0xff] %v6306
      %6331 = vst [vmem:[#allocation4 + $0x100] sm:$0xff] %v6308
      %6332 = vst [vmem:[#allocation4 + $0x120] sm:$0xff] %v6310
      %6333 = vst [vmem:[#allocation4 + $0x140] sm:$0xff] %v6312
      %6334 = vst [vmem:[#allocation4 + $0x160] sm:$0xff] %v6314
      %6335 = vst [vmem:[#allocation4 + $0x180] sm:$0xff] %v6316
      %6336 = vst [vmem:[#allocation4 + $0x1a0] sm:$0xff] %v6318
      %6337 = vst [vmem:[#allocation4 + $0x1c0] sm:$0xff] %v6320
      %6338 = vst [vmem:[#allocation4 + $0x1e0] sm:$0xff] %v6322
      %s6339 = scalar_lea.vmem %s6291, 1 [#allocation3]
      %v6340 = vld [vmem:[%s6339] ss:$2 sm:$0xff]
      %s6341 = scalar_lea.vmem %s6291, 49 [#allocation3]
      %v6342 = vld [vmem:[%s6341] ss:$2 sm:$0xff]
      %s6343 = scalar_lea.vmem %s6291, 97 [#allocation3]
      %v6344 = vld [vmem:[%s6343] ss:$2 sm:$0xff]
      %s6345 = scalar_lea.vmem %s6291, 145 [#allocation3]
      %v6346 = vld [vmem:[%s6345] ss:$2 sm:$0xff]
      %s6347 = scalar_lea.vmem %s6291, 241 [#allocation3]
      %v6348 = vld [vmem:[%s6347] ss:$2 sm:$0xff]
      %s6349 = scalar_lea.vmem %s6291, 289 [#allocation3]
      %v6350 = vld [vmem:[%s6349] ss:$2 sm:$0xff]
      %s6351 = scalar_lea.vmem %s6291, 337 [#allocation3]
      %v6352 = vld [vmem:[%s6351] ss:$2 sm:$0xff]
      %s6353 = scalar_lea.vmem %s6291, 385 [#allocation3]
      %v6354 = vld [vmem:[%s6353] ss:$2 sm:$0xff]
      %s6355 = scalar_lea.vmem %s6291, 481 [#allocation3]
      %v6356 = vld [vmem:[%s6355] ss:$2 sm:$0xff]
      %s6357 = scalar_lea.vmem %s6291, 529 [#allocation3]
      %v6358 = vld [vmem:[%s6357] ss:$2 sm:$0xff]
      %s6359 = scalar_lea.vmem %s6291, 577 [#allocation3]
      %v6360 = vld [vmem:[%s6359] ss:$2 sm:$0xff]
      %s6361 = scalar_lea.vmem %s6291, 625 [#allocation3]
      %v6362 = vld [vmem:[%s6361] ss:$2 sm:$0xff]
      %s6363 = scalar_lea.vmem %s6291, 721 [#allocation3]
      %v6364 = vld [vmem:[%s6363] ss:$2 sm:$0xff]
      %s6365 = scalar_lea.vmem %s6291, 769 [#allocation3]
      %v6366 = vld [vmem:[%s6365] ss:$2 sm:$0xff]
      %s6367 = scalar_lea.vmem %s6291, 817 [#allocation3]
      %v6368 = vld [vmem:[%s6367] ss:$2 sm:$0xff]
      %s6369 = scalar_lea.vmem %s6291, 865 [#allocation3]
      %v6370 = vld [vmem:[%s6369] ss:$2 sm:$0xff]
      %6371 = vst [vmem:[#allocation4 + $0x8] sm:$0xff] %v6340
      %6372 = vst [vmem:[#allocation4 + $0x28] sm:$0xff] %v6342
      %6373 = vst [vmem:[#allocation4 + $0x48] sm:$0xff] %v6344
      %6374 = vst [vmem:[#allocation4 + $0x68] sm:$0xff] %v6346
      %6375 = vst [vmem:[#allocation4 + $0x88] sm:$0xff] %v6348
      %6376 = vst [vmem:[#allocation4 + $0xa8] sm:$0xff] %v6350
      %6377 = vst [vmem:[#allocation4 + $0xc8] sm:$0xff] %v6352
      %6378 = vst [vmem:[#allocation4 + $0xe8] sm:$0xff] %v6354
      %6379 = vst [vmem:[#allocation4 + $0x108] sm:$0xff] %v6356
      %6380 = vst [vmem:[#allocation4 + $0x128] sm:$0xff] %v6358
      %6381 = vst [vmem:[#allocation4 + $0x148] sm:$0xff] %v6360
      %6382 = vst [vmem:[#allocation4 + $0x168] sm:$0xff] %v6362
      %6383 = vst [vmem:[#allocation4 + $0x188] sm:$0xff] %v6364
      %6384 = vst [vmem:[#allocation4 + $0x1a8] sm:$0xff] %v6366
      %6385 = vst [vmem:[#allocation4 + $0x1c8] sm:$0xff] %v6368
      %6386 = vst [vmem:[#allocation4 + $0x1e8] sm:$0xff] %v6370
      %s6387 = scalar_lea.vmem %s6291, 2 [#allocation3]
      %v6388 = vld [vmem:[%s6387] ss:$2 sm:$0xff]
      %s6389 = scalar_lea.vmem %s6291, 50 [#allocation3]
      %v6390 = vld [vmem:[%s6389] ss:$2 sm:$0xff]
      %s6391 = scalar_lea.vmem %s6291, 98 [#allocation3]
      %v6392 = vld [vmem:[%s6391] ss:$2 sm:$0xff]
      %s6393 = scalar_lea.vmem %s6291, 146 [#allocation3]
      %v6394 = vld [vmem:[%s6393] ss:$2 sm:$0xff]
      %s6395 = scalar_lea.vmem %s6291, 242 [#allocation3]
      %v6396 = vld [vmem:[%s6395] ss:$2 sm:$0xff]
      %s6397 = scalar_lea.vmem %s6291, 290 [#allocation3]
      %v6398 = vld [vmem:[%s6397] ss:$2 sm:$0xff]
      %s6399 = scalar_lea.vmem %s6291, 338 [#allocation3]
      %v6400 = vld [vmem:[%s6399] ss:$2 sm:$0xff]
      %s6401 = scalar_lea.vmem %s6291, 386 [#allocation3]
      %v6402 = vld [vmem:[%s6401] ss:$2 sm:$0xff]
      %s6403 = scalar_lea.vmem %s6291, 482 [#allocation3]
      %v6404 = vld [vmem:[%s6403] ss:$2 sm:$0xff]
      %s6405 = scalar_lea.vmem %s6291, 530 [#allocation3]
      %v6406 = vld [vmem:[%s6405] ss:$2 sm:$0xff]
      %s6407 = scalar_lea.vmem %s6291, 578 [#allocation3]
      %v6408 = vld [vmem:[%s6407] ss:$2 sm:$0xff]
      %s6409 = scalar_lea.vmem %s6291, 626 [#allocation3]
      %v6410 = vld [vmem:[%s6409] ss:$2 sm:$0xff]
      %s6411 = scalar_lea.vmem %s6291, 722 [#allocation3]
      %v6412 = vld [vmem:[%s6411] ss:$2 sm:$0xff]
      %s6413 = scalar_lea.vmem %s6291, 770 [#allocation3]
      %v6414 = vld [vmem:[%s6413] ss:$2 sm:$0xff]
      %s6415 = scalar_lea.vmem %s6291, 818 [#allocation3]
      %v6416 = vld [vmem:[%s6415] ss:$2 sm:$0xff]
      %s6417 = scalar_lea.vmem %s6291, 866 [#allocation3]
      %v6418 = vld [vmem:[%s6417] ss:$2 sm:$0xff]
      %6419 = vst [vmem:[#allocation4 + $0x10] sm:$0xff] %v6388
      %6420 = vst [vmem:[#allocation4 + $0x30] sm:$0xff] %v6390
      %6421 = vst [vmem:[#allocation4 + $0x50] sm:$0xff] %v6392
      %6422 = vst [vmem:[#allocation4 + $0x70] sm:$0xff] %v6394
      %6423 = vst [vmem:[#allocation4 + $0x90] sm:$0xff] %v6396
      %6424 = vst [vmem:[#allocation4 + $0xb0] sm:$0xff] %v6398
      %6425 = vst [vmem:[#allocation4 + $0xd0] sm:$0xff] %v6400
      %6426 = vst [vmem:[#allocation4 + $0xf0] sm:$0xff] %v6402
      %6427 = vst [vmem:[#allocation4 + $0x110] sm:$0xff] %v6404
      %6428 = vst [vmem:[#allocation4 + $0x130] sm:$0xff] %v6406
      %6429 = vst [vmem:[#allocation4 + $0x150] sm:$0xff] %v6408
      %6430 = vst [vmem:[#allocation4 + $0x170] sm:$0xff] %v6410
      %6431 = vst [vmem:[#allocation4 + $0x190] sm:$0xff] %v6412
      %6432 = vst [vmem:[#allocation4 + $0x1b0] sm:$0xff] %v6414
      %6433 = vst [vmem:[#allocation4 + $0x1d0] sm:$0xff] %v6416
      %6434 = vst [vmem:[#allocation4 + $0x1f0] sm:$0xff] %v6418
      %s6435 = scalar_lea.vmem %s6291, 3 [#allocation3]
      %v6436 = vld [vmem:[%s6435] ss:$2 sm:$0xff]
      %s6437 = scalar_lea.vmem %s6291, 51 [#allocation3]
      %v6438 = vld [vmem:[%s6437] ss:$2 sm:$0xff]
      %s6439 = scalar_lea.vmem %s6291, 99 [#allocation3]
      %v6440 = vld [vmem:[%s6439] ss:$2 sm:$0xff]
      %s6441 = scalar_lea.vmem %s6291, 147 [#allocation3]
      %v6442 = vld [vmem:[%s6441] ss:$2 sm:$0xff]
      %s6443 = scalar_lea.vmem %s6291, 243 [#allocation3]
      %v6444 = vld [vmem:[%s6443] ss:$2 sm:$0xff]
      %s6445 = scalar_lea.vmem %s6291, 291 [#allocation3]
      %v6446 = vld [vmem:[%s6445] ss:$2 sm:$0xff]
      %s6447 = scalar_lea.vmem %s6291, 339 [#allocation3]
      %v6448 = vld [vmem:[%s6447] ss:$2 sm:$0xff]
      %s6449 = scalar_lea.vmem %s6291, 387 [#allocation3]
      %v6450 = vld [vmem:[%s6449] ss:$2 sm:$0xff]
      %s6451 = scalar_lea.vmem %s6291, 483 [#allocation3]
      %v6452 = vld [vmem:[%s6451] ss:$2 sm:$0xff]
      %s6453 = scalar_lea.vmem %s6291, 531 [#allocation3]
      %v6454 = vld [vmem:[%s6453] ss:$2 sm:$0xff]
      %s6455 = scalar_lea.vmem %s6291, 579 [#allocation3]
      %v6456 = vld [vmem:[%s6455] ss:$2 sm:$0xff]
      %s6457 = scalar_lea.vmem %s6291, 627 [#allocation3]
      %v6458 = vld [vmem:[%s6457] ss:$2 sm:$0xff]
      %s6459 = scalar_lea.vmem %s6291, 723 [#allocation3]
      %v6460 = vld [vmem:[%s6459] ss:$2 sm:$0xff]
      %s6461 = scalar_lea.vmem %s6291, 771 [#allocation3]
      %v6462 = vld [vmem:[%s6461] ss:$2 sm:$0xff]
      %s6463 = scalar_lea.vmem %s6291, 819 [#allocation3]
      %v6464 = vld [vmem:[%s6463] ss:$2 sm:$0xff]
      %s6465 = scalar_lea.vmem %s6291, 867 [#allocation3]
      %v6466 = vld [vmem:[%s6465] ss:$2 sm:$0xff]
      %6467 = vst [vmem:[#allocation4 + $0x18] sm:$0xff] %v6436
      %6468 = vst [vmem:[#allocation4 + $0x38] sm:$0xff] %v6438
      %6469 = vst [vmem:[#allocation4 + $0x58] sm:$0xff] %v6440
      %6470 = vst [vmem:[#allocation4 + $0x78] sm:$0xff] %v6442
      %6471 = vst [vmem:[#allocation4 + $0x98] sm:$0xff] %v6444
      %6472 = vst [vmem:[#allocation4 + $0xb8] sm:$0xff] %v6446
      %6473 = vst [vmem:[#allocation4 + $0xd8] sm:$0xff] %v6448
      %6474 = vst [vmem:[#allocation4 + $0xf8] sm:$0xff] %v6450
      %6475 = vst [vmem:[#allocation4 + $0x118] sm:$0xff] %v6452
      %6476 = vst [vmem:[#allocation4 + $0x138] sm:$0xff] %v6454
      %6477 = vst [vmem:[#allocation4 + $0x158] sm:$0xff] %v6456
      %6478 = vst [vmem:[#allocation4 + $0x178] sm:$0xff] %v6458
      %6479 = vst [vmem:[#allocation4 + $0x198] sm:$0xff] %v6460
      %6480 = vst [vmem:[#allocation4 + $0x1b8] sm:$0xff] %v6462
      %6481 = vst [vmem:[#allocation4 + $0x1d8] sm:$0xff] %v6464
      %6482 = vst [vmem:[#allocation4 + $0x1f8] sm:$0xff] %v6466
      %v6483 = vld [vmem:[#allocation4] sm:$0xff]
      %v6484 = vld [vmem:[#allocation4 + $0x8] sm:$0xff]
      %v6485 = vld [vmem:[#allocation4 + $0x10] sm:$0xff]
      %v6486 = vld [vmem:[#allocation4 + $0x18] sm:$0xff]
      %v6487 = vld [vmem:[#allocation4 + $0x20] sm:$0xff]
      %v6488 = vld [vmem:[#allocation4 + $0x28] sm:$0xff]
      %v6489 = vld [vmem:[#allocation4 + $0x30] sm:$0xff]
      %v6490 = vld [vmem:[#allocation4 + $0x38] sm:$0xff]
      %v6491 = vld [vmem:[#allocation4 + $0x40] sm:$0xff]
      %v6492 = vld [vmem:[#allocation4 + $0x48] sm:$0xff]
      %v6493 = vld [vmem:[#allocation4 + $0x50] sm:$0xff]
      %v6494 = vld [vmem:[#allocation4 + $0x58] sm:$0xff]
      %v6495 = vld [vmem:[#allocation4 + $0x60] sm:$0xff]
      %v6496 = vld [vmem:[#allocation4 + $0x68] sm:$0xff]
      %v6497 = vld [vmem:[#allocation4 + $0x70] sm:$0xff]
      %v6498 = vld [vmem:[#allocation4 + $0x78] sm:$0xff]
      %v6499 = vld [vmem:[#allocation4 + $0x80] sm:$0xff]
      %v6500 = vld [vmem:[#allocation4 + $0x88] sm:$0xff]
      %v6501 = vld [vmem:[#allocation4 + $0x90] sm:$0xff]
      %v6502 = vld [vmem:[#allocation4 + $0x98] sm:$0xff]
      %v6503 = vld [vmem:[#allocation4 + $0xa0] sm:$0xff]
      %v6504 = vld [vmem:[#allocation4 + $0xa8] sm:$0xff]
      %v6505 = vld [vmem:[#allocation4 + $0xb0] sm:$0xff]
      %v6506 = vld [vmem:[#allocation4 + $0xb8] sm:$0xff]
      %v6507 = vld [vmem:[#allocation4 + $0xc0] sm:$0xff]
      %v6508 = vld [vmem:[#allocation4 + $0xc8] sm:$0xff]
      %v6509 = vld [vmem:[#allocation4 + $0xd0] sm:$0xff]
      %v6510 = vld [vmem:[#allocation4 + $0xd8] sm:$0xff]
      %v6511 = vld [vmem:[#allocation4 + $0xe0] sm:$0xff]
      %v6512 = vld [vmem:[#allocation4 + $0xe8] sm:$0xff]
      %v6513 = vld [vmem:[#allocation4 + $0xf0] sm:$0xff]
      %v6514 = vld [vmem:[#allocation4 + $0xf8] sm:$0xff]
      %v6515 = vld [vmem:[#allocation4 + $0x100] sm:$0xff]
      %v6516 = vld [vmem:[#allocation4 + $0x108] sm:$0xff]
      %v6517 = vld [vmem:[#allocation4 + $0x110] sm:$0xff]
      %v6518 = vld [vmem:[#allocation4 + $0x118] sm:$0xff]
      %v6519 = vld [vmem:[#allocation4 + $0x120] sm:$0xff]
      %v6520 = vld [vmem:[#allocation4 + $0x128] sm:$0xff]
      %v6521 = vld [vmem:[#allocation4 + $0x130] sm:$0xff]
      %v6522 = vld [vmem:[#allocation4 + $0x138] sm:$0xff]
      %v6523 = vld [vmem:[#allocation4 + $0x140] sm:$0xff]
      %v6524 = vld [vmem:[#allocation4 + $0x148] sm:$0xff]
      %v6525 = vld [vmem:[#allocation4 + $0x150] sm:$0xff]
      %v6526 = vld [vmem:[#allocation4 + $0x158] sm:$0xff]
      %v6527 = vld [vmem:[#allocation4 + $0x160] sm:$0xff]
      %v6528 = vld [vmem:[#allocation4 + $0x168] sm:$0xff]
      %v6529 = vld [vmem:[#allocation4 + $0x170] sm:$0xff]
      %v6530 = vld [vmem:[#allocation4 + $0x178] sm:$0xff]
      %v6531 = vld [vmem:[#allocation4 + $0x180] sm:$0xff]
      %v6532 = vld [vmem:[#allocation4 + $0x188] sm:$0xff]
      %v6533 = vld [vmem:[#allocation4 + $0x190] sm:$0xff]
      %v6534 = vld [vmem:[#allocation4 + $0x198] sm:$0xff]
      %v6535 = vld [vmem:[#allocation4 + $0x1a0] sm:$0xff]
      %v6536 = vld [vmem:[#allocation4 + $0x1a8] sm:$0xff]
      %v6537 = vld [vmem:[#allocation4 + $0x1b0] sm:$0xff]
      %v6538 = vld [vmem:[#allocation4 + $0x1b8] sm:$0xff]
      %v6539 = vld [vmem:[#allocation4 + $0x1c0] sm:$0xff]
      %v6540 = vld [vmem:[#allocation4 + $0x1c8] sm:$0xff]
      %v6541 = vld [vmem:[#allocation4 + $0x1d0] sm:$0xff]
      %v6542 = vld [vmem:[#allocation4 + $0x1d8] sm:$0xff]
      %v6543 = vld [vmem:[#allocation4 + $0x1e0] sm:$0xff]
      %v6544 = vld [vmem:[#allocation4 + $0x1e8] sm:$0xff]
      %v6545 = vld [vmem:[#allocation4 + $0x1f0] sm:$0xff]
      %v6546 = vld [vmem:[#allocation4 + $0x1f8] sm:$0xff]
      %s6547 = scalar_lea.vmem %s5, 512
      %v6548 = vld [vmem:[%s6547] sm:$0xff]
      %v6549 = vld [vmem:[%s6547 + $0x8] sm:$0xff]
      %v6550 = vld [vmem:[%s6547 + $0x10] sm:$0xff]
      %v6551 = vld [vmem:[%s6547 + $0x18] sm:$0xff]
      %v6552 = vld [vmem:[%s6547 + $0x20] sm:$0xff]
      %v6553 = vld [vmem:[%s6547 + $0x28] sm:$0xff]
      %v6554 = vld [vmem:[%s6547 + $0x30] sm:$0xff]
      %v6555 = vld [vmem:[%s6547 + $0x38] sm:$0xff]
      %v6556 = vld [vmem:[%s6547 + $0x40] sm:$0xff]
      %v6557 = vld [vmem:[%s6547 + $0x48] sm:$0xff]
      %v6558 = vld [vmem:[%s6547 + $0x50] sm:$0xff]
      %v6559 = vld [vmem:[%s6547 + $0x58] sm:$0xff]
      %v6560 = vld [vmem:[%s6547 + $0x60] sm:$0xff]
      %v6561 = vld [vmem:[%s6547 + $0x68] sm:$0xff]
      %v6562 = vld [vmem:[%s6547 + $0x70] sm:$0xff]
      %v6563 = vld [vmem:[%s6547 + $0x78] sm:$0xff]
      %v6564 = vld [vmem:[%s6547 + $0x80] sm:$0xff]
      %v6565 = vld [vmem:[%s6547 + $0x88] sm:$0xff]
      %v6566 = vld [vmem:[%s6547 + $0x90] sm:$0xff]
      %v6567 = vld [vmem:[%s6547 + $0x98] sm:$0xff]
      %v6568 = vld [vmem:[%s6547 + $0xa0] sm:$0xff]
      %v6569 = vld [vmem:[%s6547 + $0xa8] sm:$0xff]
      %v6570 = vld [vmem:[%s6547 + $0xb0] sm:$0xff]
      %v6571 = vld [vmem:[%s6547 + $0xb8] sm:$0xff]
      %v6572 = vld [vmem:[%s6547 + $0xc0] sm:$0xff]
      %v6573 = vld [vmem:[%s6547 + $0xc8] sm:$0xff]
      %v6574 = vld [vmem:[%s6547 + $0xd0] sm:$0xff]
      %v6575 = vld [vmem:[%s6547 + $0xd8] sm:$0xff]
      %v6576 = vld [vmem:[%s6547 + $0xe0] sm:$0xff]
      %v6577 = vld [vmem:[%s6547 + $0xe8] sm:$0xff]
      %v6578 = vld [vmem:[%s6547 + $0xf0] sm:$0xff]
      %v6579 = vld [vmem:[%s6547 + $0xf8] sm:$0xff]
      %v6580 = vld [vmem:[%s6547 + $0x100] sm:$0xff]
      %v6581 = vld [vmem:[%s6547 + $0x108] sm:$0xff]
      %v6582 = vld [vmem:[%s6547 + $0x110] sm:$0xff]
      %v6583 = vld [vmem:[%s6547 + $0x118] sm:$0xff]
      %v6584 = vld [vmem:[%s6547 + $0x120] sm:$0xff]
      %v6585 = vld [vmem:[%s6547 + $0x128] sm:$0xff]
      %v6586 = vld [vmem:[%s6547 + $0x130] sm:$0xff]
      %v6587 = vld [vmem:[%s6547 + $0x138] sm:$0xff]
      %v6588 = vld [vmem:[%s6547 + $0x140] sm:$0xff]
      %v6589 = vld [vmem:[%s6547 + $0x148] sm:$0xff]
      %v6590 = vld [vmem:[%s6547 + $0x150] sm:$0xff]
      %v6591 = vld [vmem:[%s6547 + $0x158] sm:$0xff]
      %v6592 = vld [vmem:[%s6547 + $0x160] sm:$0xff]
      %v6593 = vld [vmem:[%s6547 + $0x168] sm:$0xff]
      %v6594 = vld [vmem:[%s6547 + $0x170] sm:$0xff]
      %v6595 = vld [vmem:[%s6547 + $0x178] sm:$0xff]
      %v6596 = vld [vmem:[%s6547 + $0x180] sm:$0xff]
      %v6597 = vld [vmem:[%s6547 + $0x188] sm:$0xff]
      %v6598 = vld [vmem:[%s6547 + $0x190] sm:$0xff]
      %v6599 = vld [vmem:[%s6547 + $0x198] sm:$0xff]
      %v6600 = vld [vmem:[%s6547 + $0x1a0] sm:$0xff]
      %v6601 = vld [vmem:[%s6547 + $0x1a8] sm:$0xff]
      %v6602 = vld [vmem:[%s6547 + $0x1b0] sm:$0xff]
      %v6603 = vld [vmem:[%s6547 + $0x1b8] sm:$0xff]
      %v6604 = vld [vmem:[%s6547 + $0x1c0] sm:$0xff]
      %v6605 = vld [vmem:[%s6547 + $0x1c8] sm:$0xff]
      %v6606 = vld [vmem:[%s6547 + $0x1d0] sm:$0xff]
      %v6607 = vld [vmem:[%s6547 + $0x1d8] sm:$0xff]
      %v6608 = vld [vmem:[%s6547 + $0x1e0] sm:$0xff]
      %v6609 = vld [vmem:[%s6547 + $0x1e8] sm:$0xff]
      %v6610 = vld [vmem:[%s6547 + $0x1f0] sm:$0xff]
      %v6611 = vld [vmem:[%s6547 + $0x1f8] sm:$0xff]
      %6612 = vmatprep.subr.mxu0 0.0
      %6613 = vmatpush1.msra.mxu0 %v6548
      %6614 = vmatprep.subr.mxu0 0.0
      %6615 = vmatpush1.msra.mxu0 %v6549
      %6616 = vmatprep.subr.mxu0 0.0
      %6617 = vmatpush1.msra.mxu0 %v6550
      %6618 = vmatprep.subr.mxu0 0.0
      %6619 = vmatpush1.msra.mxu0 %v6551
      %6620 = vmatprep.subr.mxu0 0.0
      %6621 = vmatpush1.msra.mxu0 %v6552
      %6622 = vmatprep.subr.mxu0 0.0
      %6623 = vmatpush1.msra.mxu0 %v6553
      %6624 = vmatprep.subr.mxu0 0.0
      %6625 = vmatpush1.msra.mxu0 %v6554
      %6626 = vmatprep.subr.mxu0 0.0
      %6627 = vmatpush1.msra.mxu0 %v6555
      %6628 = vmatprep.subr.mxu0 0.0
      %6629 = vmatpush1.msra.mxu0 %v6556
      %6630 = vmatprep.subr.mxu0 0.0
      %6631 = vmatpush1.msra.mxu0 %v6557
      %6632 = vmatprep.subr.mxu0 0.0
      %6633 = vmatpush1.msra.mxu0 %v6558
      %6634 = vmatprep.subr.mxu0 0.0
      %6635 = vmatpush1.msra.mxu0 %v6559
      %6636 = vmatprep.subr.mxu0 0.0
      %6637 = vmatpush1.msra.mxu0 %v6560
      %6638 = vmatprep.subr.mxu0 0.0
      %6639 = vmatpush1.msra.mxu0 %v6561
      %6640 = vmatprep.subr.mxu0 0.0
      %6641 = vmatpush1.msra.mxu0 %v6562
      %6642 = vmatprep.subr.mxu0 0.0
      %6643 = vmatpush1.msra.mxu0 %v6563
      %6644 = vmatprep.subr.mxu0 0.0
      %6645 = vmatpush1.msra.mxu0 %v6564
      %6646 = vmatprep.subr.mxu0 0.0
      %6647 = vmatpush1.msra.mxu0 %v6565
      %6648 = vmatprep.subr.mxu0 0.0
      %6649 = vmatpush1.msra.mxu0 %v6566
      %6650 = vmatprep.subr.mxu0 0.0
      %6651 = vmatpush1.msra.mxu0 %v6567
      %6652 = vmatprep.subr.mxu0 0.0
      %6653 = vmatpush1.msra.mxu0 %v6568
      %6654 = vmatprep.subr.mxu0 0.0
      %6655 = vmatpush1.msra.mxu0 %v6569
      %6656 = vmatprep.subr.mxu0 0.0
      %6657 = vmatpush1.msra.mxu0 %v6570
      %6658 = vmatprep.subr.mxu0 0.0
      %6659 = vmatpush1.msra.mxu0 %v6571
      %6660 = vmatprep.subr.mxu0 0.0
      %6661 = vmatpush1.msra.mxu0 %v6572
      %6662 = vmatprep.subr.mxu0 0.0
      %6663 = vmatpush1.msra.mxu0 %v6573
      %6664 = vmatprep.subr.mxu0 0.0
      %6665 = vmatpush1.msra.mxu0 %v6574
      %6666 = vmatprep.subr.mxu0 0.0
      %6667 = vmatpush1.msra.mxu0 %v6575
      %6668 = vmatprep.subr.mxu0 0.0
      %6669 = vmatpush1.msra.mxu0 %v6576
      %6670 = vmatprep.subr.mxu0 0.0
      %6671 = vmatpush1.msra.mxu0 %v6577
      %6672 = vmatprep.subr.mxu0 0.0
      %6673 = vmatpush1.msra.mxu0 %v6578
      %6674 = vmatprep.subr.mxu0 0.0
      %6675 = vmatpush1.msra.mxu0 %v6579
      %6676 = vmatprep.mubr.f32.mxu0 %v6484
      %6677 = vmatmul.mubr.f32.gmra.mrb[0].mxu0 %v6483
      %v6678 = vpop.f32.mrb[0].mxu0
      %v6679 = vadd.f32 0.0, %v6678
      %v6680 = vpop.f32.mrb[0].mxu0
      %6681 = vmatprep.mubr.f32.mxu0 %v6488
      %6682 = vmatmul.mubr.f32.gmra.mrb[0].mxu0 %v6487
      %v6683 = vpop.f32.mrb[0].mxu0
      %v6684 = vadd.f32 0.0, %v6683
      %v6685 = vpop.f32.mrb[0].mxu0
      %6686 = vmatprep.mubr.f32.mxu0 %v6492
      %6687 = vmatmul.mubr.f32.gmra.mrb[0].mxu0 %v6491
      %v6688 = vpop.f32.mrb[0].mxu0
      %v6689 = vadd.f32 0.0, %v6688
      %v6690 = vpop.f32.mrb[0].mxu0
      %6691 = vmatprep.mubr.f32.mxu0 %v6496
      %6692 = vmatmul.mubr.f32.gmra.mrb[0].mxu0 %v6495
      %v6693 = vpop.f32.mrb[0].mxu0
      %v6694 = vadd.f32 0.0, %v6693
      %v6695 = vpop.f32.mrb[0].mxu0
      %6696 = vmatprep.mubr.f32.mxu0 %v6500
      %6697 = vmatmul.mubr.f32.gmra.mrb[0].mxu0 %v6499
      %v6698 = vpop.f32.mrb[0].mxu0
      %v6699 = vadd.f32 0.0, %v6698
      %v6700 = vpop.f32.mrb[0].mxu0
      %6701 = vmatprep.mubr.f32.mxu0 %v6504
      %6702 = vmatmul.mubr.f32.gmra.mrb[0].mxu0 %v6503
      %v6703 = vpop.f32.mrb[0].mxu0
      %v6704 = vadd.f32 0.0, %v6703
      %v6705 = vpop.f32.mrb[0].mxu0
      %6706 = vmatprep.mubr.f32.mxu0 %v6508
      %6707 = vmatmul.mubr.f32.gmra.mrb[0].mxu0 %v6507
      %v6708 = vpop.f32.mrb[0].mxu0
      %v6709 = vadd.f32 0.0, %v6708
      %v6710 = vpop.f32.mrb[0].mxu0
      %6711 = vmatprep.mubr.f32.mxu0 %v6512
      %6712 = vmatmul.mubr.f32.gmra.mrb[0].mxu0 %v6511
      %v6713 = vpop.f32.mrb[0].mxu0
      %v6714 = vadd.f32 0.0, %v6713
      %v6715 = vpop.f32.mrb[0].mxu0
      %6716 = vmatprep.mubr.f32.mxu0 %v6516
      %6717 = vmatmul.mubr.f32.gmra.mrb[0].mxu0 %v6515
      %v6718 = vpop.f32.mrb[0].mxu0
      %v6719 = vadd.f32 0.0, %v6718
      %v6720 = vpop.f32.mrb[0].mxu0
      %6721 = vmatprep.mubr.f32.mxu0 %v6520
      %6722 = vmatmul.mubr.f32.gmra.mrb[0].mxu0 %v6519
      %v6723 = vpop.f32.mrb[0].mxu0
      %v6724 = vadd.f32 0.0, %v6723
      %v6725 = vpop.f32.mrb[0].mxu0
      %6726 = vmatprep.mubr.f32.mxu0 %v6524
      %6727 = vmatmul.mubr.f32.gmra.mrb[0].mxu0 %v6523
      %v6728 = vpop.f32.mrb[0].mxu0
      %v6729 = vadd.f32 0.0, %v6728
      %v6730 = vpop.f32.mrb[0].mxu0
      %6731 = vmatprep.mubr.f32.mxu0 %v6528
      %6732 = vmatmul.mubr.f32.gmra.mrb[0].mxu0 %v6527
      %v6733 = vpop.f32.mrb[0].mxu0
      %v6734 = vadd.f32 0.0, %v6733
      %v6735 = vpop.f32.mrb[0].mxu0
      %6736 = vmatprep.mubr.f32.mxu0 %v6532
      %6737 = vmatmul.mubr.f32.gmra.mrb[0].mxu0 %v6531
      %v6738 = vpop.f32.mrb[0].mxu0
      %v6739 = vadd.f32 0.0, %v6738
      %v6740 = vpop.f32.mrb[0].mxu0
      %6741 = vmatprep.mubr.f32.mxu0 %v6536
      %6742 = vmatmul.mubr.f32.gmra.mrb[0].mxu0 %v6535
      %v6743 = vpop.f32.mrb[0].mxu0
      %v6744 = vadd.f32 0.0, %v6743
      %v6745 = vpop.f32.mrb[0].mxu0
      %6746 = vmatprep.mubr.f32.mxu0 %v6540
      %6747 = vmatmul.mubr.f32.gmra.mrb[0].mxu0 %v6539
      %v6748 = vpop.f32.mrb[0].mxu0
      %v6749 = vadd.f32 0.0, %v6748
      %v6750 = vpop.f32.mrb[0].mxu0
      %6751 = vmatprep.mubr.f32.mxu0 %v6544
      %6752 = vmatmul.mubr.f32.gmra.mrb[0].mxu0 %v6543
      %v6753 = vpop.f32.mrb[0].mxu0
      %v6754 = vadd.f32 0.0, %v6753
      %v6755 = vpop.f32.mrb[0].mxu0
      %6756 = vdwg.mxu0
      %6757 = vmatprep.subr.mxu0 0.0
      %6758 = vmatpush1.msra.mxu0 %v6580
      %6759 = vmatprep.subr.mxu0 0.0
      %6760 = vmatpush1.msra.mxu0 %v6581
      %6761 = vmatprep.subr.mxu0 0.0
      %6762 = vmatpush1.msra.mxu0 %v6582
      %6763 = vmatprep.subr.mxu0 0.0
      %6764 = vmatpush1.msra.mxu0 %v6583
      %6765 = vmatprep.subr.mxu0 0.0
      %6766 = vmatpush1.msra.mxu0 %v6584
      %6767 = vmatprep.subr.mxu0 0.0
      %6768 = vmatpush1.msra.mxu0 %v6585
      %6769 = vmatprep.subr.mxu0 0.0
      %6770 = vmatpush1.msra.mxu0 %v6586
      %6771 = vmatprep.subr.mxu0 0.0
      %6772 = vmatpush1.msra.mxu0 %v6587
      %6773 = vmatprep.subr.mxu0 0.0
      %6774 = vmatpush1.msra.mxu0 %v6588
      %6775 = vmatprep.subr.mxu0 0.0
      %6776 = vmatpush1.msra.mxu0 %v6589
      %6777 = vmatprep.subr.mxu0 0.0
      %6778 = vmatpush1.msra.mxu0 %v6590
      %6779 = vmatprep.subr.mxu0 0.0
      %6780 = vmatpush1.msra.mxu0 %v6591
      %6781 = vmatprep.subr.mxu0 0.0
      %6782 = vmatpush1.msra.mxu0 %v6592
      %6783 = vmatprep.subr.mxu0 0.0
      %6784 = vmatpush1.msra.mxu0 %v6593
      %6785 = vmatprep.subr.mxu0 0.0
      %6786 = vmatpush1.msra.mxu0 %v6594
      %6787 = vmatprep.subr.mxu0 0.0
      %6788 = vmatpush1.msra.mxu0 %v6595
      %6789 = vmatprep.subr.mxu0 0.0
      %6790 = vmatpush1.msra.mxu0 %v6596
      %6791 = vmatprep.subr.mxu0 0.0
      %6792 = vmatpush1.msra.mxu0 %v6597
      %6793 = vmatprep.subr.mxu0 0.0
      %6794 = vmatpush1.msra.mxu0 %v6598
      %6795 = vmatprep.subr.mxu0 0.0
      %6796 = vmatpush1.msra.mxu0 %v6599
      %6797 = vmatprep.subr.mxu0 0.0
      %6798 = vmatpush1.msra.mxu0 %v6600
      %6799 = vmatprep.subr.mxu0 0.0
      %6800 = vmatpush1.msra.mxu0 %v6601
      %6801 = vmatprep.subr.mxu0 0.0
      %6802 = vmatpush1.msra.mxu0 %v6602
      %6803 = vmatprep.subr.mxu0 0.0
      %6804 = vmatpush1.msra.mxu0 %v6603
      %6805 = vmatprep.subr.mxu0 0.0
      %6806 = vmatpush1.msra.mxu0 %v6604
      %6807 = vmatprep.subr.mxu0 0.0
      %6808 = vmatpush1.msra.mxu0 %v6605
      %6809 = vmatprep.subr.mxu0 0.0
      %6810 = vmatpush1.msra.mxu0 %v6606
      %6811 = vmatprep.subr.mxu0 0.0
      %6812 = vmatpush1.msra.mxu0 %v6607
      %6813 = vmatprep.subr.mxu0 0.0
      %6814 = vmatpush1.msra.mxu0 %v6608
      %6815 = vmatprep.subr.mxu0 0.0
      %6816 = vmatpush1.msra.mxu0 %v6609
      %6817 = vmatprep.subr.mxu0 0.0
      %6818 = vmatpush1.msra.mxu0 %v6610
      %6819 = vmatprep.subr.mxu0 0.0
      %6820 = vmatpush1.msra.mxu0 %v6611
      %6821 = vmatprep.mubr.f32.mxu0 %v6486
      %6822 = vmatmul.mubr.f32.gmra.mrb[0].mxu0 %v6485
      %v6823 = vpop.f32.mrb[0].mxu0
      %v6824 = vadd.f32 %v6679, %v6823
      %v6825 = vpop.f32.mrb[0].mxu0
      %6826 = vmatprep.mubr.f32.mxu0 %v6490
      %6827 = vmatmul.mubr.f32.gmra.mrb[0].mxu0 %v6489
      %v6828 = vpop.f32.mrb[0].mxu0
      %v6829 = vadd.f32 %v6684, %v6828
      %v6830 = vpop.f32.mrb[0].mxu0
      %6831 = vmatprep.mubr.f32.mxu0 %v6494
      %6832 = vmatmul.mubr.f32.gmra.mrb[0].mxu0 %v6493
      %v6833 = vpop.f32.mrb[0].mxu0
      %v6834 = vadd.f32 %v6689, %v6833
      %v6835 = vpop.f32.mrb[0].mxu0
      %6836 = vmatprep.mubr.f32.mxu0 %v6498
      %6837 = vmatmul.mubr.f32.gmra.mrb[0].mxu0 %v6497
      %v6838 = vpop.f32.mrb[0].mxu0
      %v6839 = vadd.f32 %v6694, %v6838
      %v6840 = vpop.f32.mrb[0].mxu0
      %6841 = vmatprep.mubr.f32.mxu0 %v6502
      %6842 = vmatmul.mubr.f32.gmra.mrb[0].mxu0 %v6501
      %v6843 = vpop.f32.mrb[0].mxu0
      %v6844 = vadd.f32 %v6699, %v6843
      %v6845 = vpop.f32.mrb[0].mxu0
      %6846 = vmatprep.mubr.f32.mxu0 %v6506
      %6847 = vmatmul.mubr.f32.gmra.mrb[0].mxu0 %v6505
      %v6848 = vpop.f32.mrb[0].mxu0
      %v6849 = vadd.f32 %v6704, %v6848
      %v6850 = vpop.f32.mrb[0].mxu0
      %6851 = vmatprep.mubr.f32.mxu0 %v6510
      %6852 = vmatmul.mubr.f32.gmra.mrb[0].mxu0 %v6509
      %v6853 = vpop.f32.mrb[0].mxu0
      %v6854 = vadd.f32 %v6709, %v6853
      %v6855 = vpop.f32.mrb[0].mxu0
      %6856 = vmatprep.mubr.f32.mxu0 %v6514
      %6857 = vmatmul.mubr.f32.gmra.mrb[0].mxu0 %v6513
      %v6858 = vpop.f32.mrb[0].mxu0
      %v6859 = vadd.f32 %v6714, %v6858
      %v6860 = vpop.f32.mrb[0].mxu0
      %6861 = vmatprep.mubr.f32.mxu0 %v6518
      %6862 = vmatmul.mubr.f32.gmra.mrb[0].mxu0 %v6517
      %v6863 = vpop.f32.mrb[0].mxu0
      %v6864 = vadd.f32 %v6719, %v6863
      %v6865 = vpop.f32.mrb[0].mxu0
      %6866 = vmatprep.mubr.f32.mxu0 %v6522
      %6867 = vmatmul.mubr.f32.gmra.mrb[0].mxu0 %v6521
      %v6868 = vpop.f32.mrb[0].mxu0
      %v6869 = vadd.f32 %v6724, %v6868
      %v6870 = vpop.f32.mrb[0].mxu0
      %6871 = vmatprep.mubr.f32.mxu0 %v6526
      %6872 = vmatmul.mubr.f32.gmra.mrb[0].mxu0 %v6525
      %v6873 = vpop.f32.mrb[0].mxu0
      %v6874 = vadd.f32 %v6729, %v6873
      %v6875 = vpop.f32.mrb[0].mxu0
      %6876 = vmatprep.mubr.f32.mxu0 %v6530
      %6877 = vmatmul.mubr.f32.gmra.mrb[0].mxu0 %v6529
      %v6878 = vpop.f32.mrb[0].mxu0
      %v6879 = vadd.f32 %v6734, %v6878
      %v6880 = vpop.f32.mrb[0].mxu0
      %6881 = vmatprep.mubr.f32.mxu0 %v6534
      %6882 = vmatmul.mubr.f32.gmra.mrb[0].mxu0 %v6533
      %v6883 = vpop.f32.mrb[0].mxu0
      %v6884 = vadd.f32 %v6739, %v6883
      %v6885 = vpop.f32.mrb[0].mxu0
      %6886 = vmatprep.mubr.f32.mxu0 %v6538
      %6887 = vmatmul.mubr.f32.gmra.mrb[0].mxu0 %v6537
      %v6888 = vpop.f32.mrb[0].mxu0
      %v6889 = vadd.f32 %v6744, %v6888
      %v6890 = vpop.f32.mrb[0].mxu0
      %6891 = vmatprep.mubr.f32.mxu0 %v6542
      %6892 = vmatmul.mubr.f32.gmra.mrb[0].mxu0 %v6541
      %v6893 = vpop.f32.mrb[0].mxu0
      %v6894 = vadd.f32 %v6749, %v6893
      %v6895 = vpop.f32.mrb[0].mxu0
      %6896 = vmatprep.mubr.f32.mxu0 %v6546
      %6897 = vmatmul.mubr.f32.gmra.mrb[0].mxu0 %v6545
      %v6898 = vpop.f32.mrb[0].mxu0
      %v6899 = vadd.f32 %v6754, %v6898
      %v6900 = vpop.f32.mrb[0].mxu0
      %6901 = vdwg.mxu0
      %6902 = vmatprep.subr.mxu0 0.0
      %6903 = vmatpush1.msra.mxu0 %v6227
      %6904 = vmatprep.subr.mxu0 0.0
      %6905 = vmatpush1.msra.mxu0 %v6228
      %6906 = vmatprep.subr.mxu0 0.0
      %6907 = vmatpush1.msra.mxu0 %v6229
      %6908 = vmatprep.subr.mxu0 0.0
      %6909 = vmatpush1.msra.mxu0 %v6230
      %6910 = vmatprep.subr.mxu0 0.0
      %6911 = vmatpush1.msra.mxu0 %v6231
      %6912 = vmatprep.subr.mxu0 0.0
      %6913 = vmatpush1.msra.mxu0 %v6232
      %6914 = vmatprep.subr.mxu0 0.0
      %6915 = vmatpush1.msra.mxu0 %v6233
      %6916 = vmatprep.subr.mxu0 0.0
      %6917 = vmatpush1.msra.mxu0 %v6234
      %6918 = vmatprep.subr.mxu0 0.0
      %6919 = vmatpush1.msra.mxu0 %v6235
      %6920 = vmatprep.subr.mxu0 0.0
      %6921 = vmatpush1.msra.mxu0 %v6236
      %6922 = vmatprep.subr.mxu0 0.0
      %6923 = vmatpush1.msra.mxu0 %v6237
      %6924 = vmatprep.subr.mxu0 0.0
      %6925 = vmatpush1.msra.mxu0 %v6238
      %6926 = vmatprep.subr.mxu0 0.0
      %6927 = vmatpush1.msra.mxu0 %v6239
      %6928 = vmatprep.subr.mxu0 0.0
      %6929 = vmatpush1.msra.mxu0 %v6240
      %6930 = vmatprep.subr.mxu0 0.0
      %6931 = vmatpush1.msra.mxu0 %v6241
      %6932 = vmatprep.subr.mxu0 0.0
      %6933 = vmatpush1.msra.mxu0 %v6242
      %6934 = vmatprep.subr.mxu0 0.0
      %6935 = vmatpush1.msra.mxu0 %v6243
      %6936 = vmatprep.subr.mxu0 0.0
      %6937 = vmatpush1.msra.mxu0 %v6244
      %6938 = vmatprep.subr.mxu0 0.0
      %6939 = vmatpush1.msra.mxu0 %v6245
      %6940 = vmatprep.subr.mxu0 0.0
      %6941 = vmatpush1.msra.mxu0 %v6246
      %6942 = vmatprep.subr.mxu0 0.0
      %6943 = vmatpush1.msra.mxu0 %v6247
      %6944 = vmatprep.subr.mxu0 0.0
      %6945 = vmatpush1.msra.mxu0 %v6248
      %6946 = vmatprep.subr.mxu0 0.0
      %6947 = vmatpush1.msra.mxu0 %v6249
      %6948 = vmatprep.subr.mxu0 0.0
      %6949 = vmatpush1.msra.mxu0 %v6250
      %6950 = vmatprep.subr.mxu0 0.0
      %6951 = vmatpush1.msra.mxu0 %v6251
      %6952 = vmatprep.subr.mxu0 0.0
      %6953 = vmatpush1.msra.mxu0 %v6252
      %6954 = vmatprep.subr.mxu0 0.0
      %6955 = vmatpush1.msra.mxu0 %v6253
      %6956 = vmatprep.subr.mxu0 0.0
      %6957 = vmatpush1.msra.mxu0 %v6254
      %6958 = vmatprep.subr.mxu0 0.0
      %6959 = vmatpush1.msra.mxu0 %v6255
      %6960 = vmatprep.subr.mxu0 0.0
      %6961 = vmatpush1.msra.mxu0 %v6256
      %6962 = vmatprep.subr.mxu0 0.0
      %6963 = vmatpush1.msra.mxu0 %v6257
      %6964 = vmatprep.subr.mxu0 0.0
      %6965 = vmatpush1.msra.mxu0 %v6258
      %6966 = vmatprep.mubr.f32.mxu0 %v6164
      %6967 = vmatmul.mubr.f32.gmra.mrb[0].mxu0 %v6163
      %v6968 = vpop.f32.mrb[0].mxu0
      %v6969 = vadd.f32 %v6824, %v6968
      %v6970 = vpop.f32.mrb[0].mxu0
      %6971 = vmatprep.mubr.f32.mxu0 %v6168
      %6972 = vmatmul.mubr.f32.gmra.mrb[0].mxu0 %v6167
      %v6973 = vpop.f32.mrb[0].mxu0
      %v6974 = vadd.f32 %v6829, %v6973
      %v6975 = vpop.f32.mrb[0].mxu0
      %6976 = vmatprep.mubr.f32.mxu0 %v6172
      %6977 = vmatmul.mubr.f32.gmra.mrb[0].mxu0 %v6171
      %v6978 = vpop.f32.mrb[0].mxu0
      %v6979 = vadd.f32 %v6834, %v6978
      %v6980 = vpop.f32.mrb[0].mxu0
      %6981 = vmatprep.mubr.f32.mxu0 %v6176
      %6982 = vmatmul.mubr.f32.gmra.mrb[0].mxu0 %v6175
      %v6983 = vpop.f32.mrb[0].mxu0
      %v6984 = vadd.f32 %v6839, %v6983
      %v6985 = vpop.f32.mrb[0].mxu0
      %6986 = vmatprep.mubr.f32.mxu0 %v6180
      %6987 = vmatmul.mubr.f32.gmra.mrb[0].mxu0 %v6179
      %v6988 = vpop.f32.mrb[0].mxu0
      %v6989 = vadd.f32 %v6844, %v6988
      %v6990 = vpop.f32.mrb[0].mxu0
      %6991 = vmatprep.mubr.f32.mxu0 %v6184
      %6992 = vmatmul.mubr.f32.gmra.mrb[0].mxu0 %v6183
      %v6993 = vpop.f32.mrb[0].mxu0
      %v6994 = vadd.f32 %v6849, %v6993
      %v6995 = vpop.f32.mrb[0].mxu0
      %6996 = vmatprep.mubr.f32.mxu0 %v6188
      %6997 = vmatmul.mubr.f32.gmra.mrb[0].mxu0 %v6187
      %v6998 = vpop.f32.mrb[0].mxu0
      %v6999 = vadd.f32 %v6854, %v6998
      %v7000 = vpop.f32.mrb[0].mxu0
      %7001 = vmatprep.mubr.f32.mxu0 %v6192
      %7002 = vmatmul.mubr.f32.gmra.mrb[0].mxu0 %v6191
      %v7003 = vpop.f32.mrb[0].mxu0
      %v7004 = vadd.f32 %v6859, %v7003
      %v7005 = vpop.f32.mrb[0].mxu0
      %7006 = vmatprep.mubr.f32.mxu0 %v6196
      %7007 = vmatmul.mubr.f32.gmra.mrb[0].mxu0 %v6195
      %v7008 = vpop.f32.mrb[0].mxu0
      %v7009 = vadd.f32 %v6864, %v7008
      %v7010 = vpop.f32.mrb[0].mxu0
      %7011 = vmatprep.mubr.f32.mxu0 %v6200
      %7012 = vmatmul.mubr.f32.gmra.mrb[0].mxu0 %v6199
      %v7013 = vpop.f32.mrb[0].mxu0
      %v7014 = vadd.f32 %v6869, %v7013
      %v7015 = vpop.f32.mrb[0].mxu0
      %7016 = vmatprep.mubr.f32.mxu0 %v6204
      %7017 = vmatmul.mubr.f32.gmra.mrb[0].mxu0 %v6203
      %v7018 = vpop.f32.mrb[0].mxu0
      %v7019 = vadd.f32 %v6874, %v7018
      %v7020 = vpop.f32.mrb[0].mxu0
      %7021 = vmatprep.mubr.f32.mxu0 %v6208
      %7022 = vmatmul.mubr.f32.gmra.mrb[0].mxu0 %v6207
      %v7023 = vpop.f32.mrb[0].mxu0
      %v7024 = vadd.f32 %v6879, %v7023
      %v7025 = vpop.f32.mrb[0].mxu0
      %7026 = vmatprep.mubr.f32.mxu0 %v6212
      %7027 = vmatmul.mubr.f32.gmra.mrb[0].mxu0 %v6211
      %v7028 = vpop.f32.mrb[0].mxu0
      %v7029 = vadd.f32 %v6884, %v7028
      %v7030 = vpop.f32.mrb[0].mxu0
      %7031 = vmatprep.mubr.f32.mxu0 %v6216
      %7032 = vmatmul.mubr.f32.gmra.mrb[0].mxu0 %v6215
      %v7033 = vpop.f32.mrb[0].mxu0
      %v7034 = vadd.f32 %v6889, %v7033
      %v7035 = vpop.f32.mrb[0].mxu0
      %7036 = vmatprep.mubr.f32.mxu0 %v6220
      %7037 = vmatmul.mubr.f32.gmra.mrb[0].mxu0 %v6219
      %v7038 = vpop.f32.mrb[0].mxu0
      %v7039 = vadd.f32 %v6894, %v7038
      %v7040 = vpop.f32.mrb[0].mxu0
      %7041 = vmatprep.mubr.f32.mxu0 %v6224
      %7042 = vmatmul.mubr.f32.gmra.mrb[0].mxu0 %v6223
      %v7043 = vpop.f32.mrb[0].mxu0
      %v7044 = vadd.f32 %v6899, %v7043
      %v7045 = vpop.f32.mrb[0].mxu0
      %7046 = vdwg.mxu0
      %7047 = vmatprep.subr.mxu0 0.0
      %7048 = vmatpush1.msra.mxu0 %v6259
      %7049 = vmatprep.subr.mxu0 0.0
      %7050 = vmatpush1.msra.mxu0 %v6260
      %7051 = vmatprep.subr.mxu0 0.0
      %7052 = vmatpush1.msra.mxu0 %v6261
      %7053 = vmatprep.subr.mxu0 0.0
      %7054 = vmatpush1.msra.mxu0 %v6262
      %7055 = vmatprep.subr.mxu0 0.0
      %7056 = vmatpush1.msra.mxu0 %v6263
      %7057 = vmatprep.subr.mxu0 0.0
      %7058 = vmatpush1.msra.mxu0 %v6264
      %7059 = vmatprep.subr.mxu0 0.0
      %7060 = vmatpush1.msra.mxu0 %v6265
      %7061 = vmatprep.subr.mxu0 0.0
      %7062 = vmatpush1.msra.mxu0 %v6266
      %7063 = vmatprep.subr.mxu0 0.0
      %7064 = vmatpush1.msra.mxu0 %v6267
      %7065 = vmatprep.subr.mxu0 0.0
      %7066 = vmatpush1.msra.mxu0 %v6268
      %7067 = vmatprep.subr.mxu0 0.0
      %7068 = vmatpush1.msra.mxu0 %v6269
      %7069 = vmatprep.subr.mxu0 0.0
      %7070 = vmatpush1.msra.mxu0 %v6270
      %7071 = vmatprep.subr.mxu0 0.0
      %7072 = vmatpush1.msra.mxu0 %v6271
      %7073 = vmatprep.subr.mxu0 0.0
      %7074 = vmatpush1.msra.mxu0 %v6272
      %7075 = vmatprep.subr.mxu0 0.0
      %7076 = vmatpush1.msra.mxu0 %v6273
      %7077 = vmatprep.subr.mxu0 0.0
      %7078 = vmatpush1.msra.mxu0 %v6274
      %7079 = vmatprep.subr.mxu0 0.0
      %7080 = vmatpush1.msra.mxu0 %v6275
      %7081 = vmatprep.subr.mxu0 0.0
      %7082 = vmatpush1.msra.mxu0 %v6276
      %7083 = vmatprep.subr.mxu0 0.0
      %7084 = vmatpush1.msra.mxu0 %v6277
      %7085 = vmatprep.subr.mxu0 0.0
      %7086 = vmatpush1.msra.mxu0 %v6278
      %7087 = vmatprep.subr.mxu0 0.0
      %7088 = vmatpush1.msra.mxu0 %v6279
      %7089 = vmatprep.subr.mxu0 0.0
      %7090 = vmatpush1.msra.mxu0 %v6280
      %7091 = vmatprep.subr.mxu0 0.0
      %7092 = vmatpush1.msra.mxu0 %v6281
      %7093 = vmatprep.subr.mxu0 0.0
      %7094 = vmatpush1.msra.mxu0 %v6282
      %7095 = vmatprep.subr.mxu0 0.0
      %7096 = vmatpush1.msra.mxu0 %v6283
      %7097 = vmatprep.subr.mxu0 0.0
      %7098 = vmatpush1.msra.mxu0 %v6284
      %7099 = vmatprep.subr.mxu0 0.0
      %7100 = vmatpush1.msra.mxu0 %v6285
      %7101 = vmatprep.subr.mxu0 0.0
      %7102 = vmatpush1.msra.mxu0 %v6286
      %7103 = vmatprep.subr.mxu0 0.0
      %7104 = vmatpush1.msra.mxu0 %v6287
      %7105 = vmatprep.subr.mxu0 0.0
      %7106 = vmatpush1.msra.mxu0 %v6288
      %7107 = vmatprep.subr.mxu0 0.0
      %7108 = vmatpush1.msra.mxu0 %v6289
      %7109 = vmatprep.subr.mxu0 0.0
      %7110 = vmatpush1.msra.mxu0 %v6290
      %7111 = vmatprep.mubr.f32.mxu0 %v6166
      %7112 = vmatmul.mubr.f32.gmra.mrb[0].mxu0 %v6165
      %v7113 = vpop.f32.mrb[0].mxu0
      %v7114 = vadd.f32 %v6969, %v7113
      %v7115 = vpop.f32.mrb[0].mxu0
      %7116 = vmatprep.mubr.f32.mxu0 %v6170
      %7117 = vmatmul.mubr.f32.gmra.mrb[0].mxu0 %v6169
      %v7118 = vpop.f32.mrb[0].mxu0
      %v7119 = vadd.f32 %v6974, %v7118
      %v7120 = vpop.f32.mrb[0].mxu0
      %7121 = vmatprep.mubr.f32.mxu0 %v6174
      %7122 = vmatmul.mubr.f32.gmra.mrb[0].mxu0 %v6173
      %v7123 = vpop.f32.mrb[0].mxu0
      %v7124 = vadd.f32 %v6979, %v7123
      %v7125 = vpop.f32.mrb[0].mxu0
      %7126 = vmatprep.mubr.f32.mxu0 %v6178
      %7127 = vmatmul.mubr.f32.gmra.mrb[0].mxu0 %v6177
      %v7128 = vpop.f32.mrb[0].mxu0
      %v7129 = vadd.f32 %v6984, %v7128
      %v7130 = vpop.f32.mrb[0].mxu0
      %7131 = vmatprep.mubr.f32.mxu0 %v6182
      %7132 = vmatmul.mubr.f32.gmra.mrb[0].mxu0 %v6181
      %v7133 = vpop.f32.mrb[0].mxu0
      %v7134 = vadd.f32 %v6989, %v7133
      %v7135 = vpop.f32.mrb[0].mxu0
      %7136 = vmatprep.mubr.f32.mxu0 %v6186
      %7137 = vmatmul.mubr.f32.gmra.mrb[0].mxu0 %v6185
      %v7138 = vpop.f32.mrb[0].mxu0
      %v7139 = vadd.f32 %v6994, %v7138
      %v7140 = vpop.f32.mrb[0].mxu0
      %7141 = vmatprep.mubr.f32.mxu0 %v6190
      %7142 = vmatmul.mubr.f32.gmra.mrb[0].mxu0 %v6189
      %v7143 = vpop.f32.mrb[0].mxu0
      %v7144 = vadd.f32 %v6999, %v7143
      %v7145 = vpop.f32.mrb[0].mxu0
      %7146 = vmatprep.mubr.f32.mxu0 %v6194
      %7147 = vmatmul.mubr.f32.gmra.mrb[0].mxu0 %v6193
      %v7148 = vpop.f32.mrb[0].mxu0
      %v7149 = vadd.f32 %v7004, %v7148
      %v7150 = vpop.f32.mrb[0].mxu0
      %7151 = vmatprep.mubr.f32.mxu0 %v6198
      %7152 = vmatmul.mubr.f32.gmra.mrb[0].mxu0 %v6197
      %v7153 = vpop.f32.mrb[0].mxu0
      %v7154 = vadd.f32 %v7009, %v7153
      %v7155 = vpop.f32.mrb[0].mxu0
      %7156 = vmatprep.mubr.f32.mxu0 %v6202
      %7157 = vmatmul.mubr.f32.gmra.mrb[0].mxu0 %v6201
      %v7158 = vpop.f32.mrb[0].mxu0
      %v7159 = vadd.f32 %v7014, %v7158
      %v7160 = vpop.f32.mrb[0].mxu0
      %7161 = vmatprep.mubr.f32.mxu0 %v6206
      %7162 = vmatmul.mubr.f32.gmra.mrb[0].mxu0 %v6205
      %v7163 = vpop.f32.mrb[0].mxu0
      %v7164 = vadd.f32 %v7019, %v7163
      %v7165 = vpop.f32.mrb[0].mxu0
      %7166 = vmatprep.mubr.f32.mxu0 %v6210
      %7167 = vmatmul.mubr.f32.gmra.mrb[0].mxu0 %v6209
      %v7168 = vpop.f32.mrb[0].mxu0
      %v7169 = vadd.f32 %v7024, %v7168
      %v7170 = vpop.f32.mrb[0].mxu0
      %7171 = vmatprep.mubr.f32.mxu0 %v6214
      %7172 = vmatmul.mubr.f32.gmra.mrb[0].mxu0 %v6213
      %v7173 = vpop.f32.mrb[0].mxu0
      %v7174 = vadd.f32 %v7029, %v7173
      %v7175 = vpop.f32.mrb[0].mxu0
      %7176 = vmatprep.mubr.f32.mxu0 %v6218
      %7177 = vmatmul.mubr.f32.gmra.mrb[0].mxu0 %v6217
      %v7178 = vpop.f32.mrb[0].mxu0
      %v7179 = vadd.f32 %v7034, %v7178
      %v7180 = vpop.f32.mrb[0].mxu0
      %7181 = vmatprep.mubr.f32.mxu0 %v6222
      %7182 = vmatmul.mubr.f32.gmra.mrb[0].mxu0 %v6221
      %v7183 = vpop.f32.mrb[0].mxu0
      %v7184 = vadd.f32 %v7039, %v7183
      %v7185 = vpop.f32.mrb[0].mxu0
      %7186 = vmatprep.mubr.f32.mxu0 %v6226
      %7187 = vmatmul.mubr.f32.gmra.mrb[0].mxu0 %v6225
      %v7188 = vpop.f32.mrb[0].mxu0
      %v7189 = vadd.f32 %v7044, %v7188
      %v7190 = vpop.f32.mrb[0].mxu0
      %7191 = vdwg.mxu0
      %s7192 = scalar_lea.vmem [#allocation3], 48
      %v7193 = vld [vmem:[%s7192] ss:$2 sm:$0xff]
      %s7194 = scalar_lea.vmem %s7192, 48 [#allocation3]
      %v7195 = vld [vmem:[%s7194] ss:$2 sm:$0xff]
      %s7196 = scalar_lea.vmem %s7192, 96 [#allocation3]
      %v7197 = vld [vmem:[%s7196] ss:$2 sm:$0xff]
      %s7198 = scalar_lea.vmem %s7192, 144 [#allocation3]
      %v7199 = vld [vmem:[%s7198] ss:$2 sm:$0xff]
      %s7200 = scalar_lea.vmem %s7192, 240 [#allocation3]
      %v7201 = vld [vmem:[%s7200] ss:$2 sm:$0xff]
      %s7202 = scalar_lea.vmem %s7192, 288 [#allocation3]
      %v7203 = vld [vmem:[%s7202] ss:$2 sm:$0xff]
      %s7204 = scalar_lea.vmem %s7192, 336 [#allocation3]
      %v7205 = vld [vmem:[%s7204] ss:$2 sm:$0xff]
      %s7206 = scalar_lea.vmem %s7192, 384 [#allocation3]
      %v7207 = vld [vmem:[%s7206] ss:$2 sm:$0xff]
      %s7208 = scalar_lea.vmem %s7192, 480 [#allocation3]
      %v7209 = vld [vmem:[%s7208] ss:$2 sm:$0xff]
      %s7210 = scalar_lea.vmem %s7192, 528 [#allocation3]
      %v7211 = vld [vmem:[%s7210] ss:$2 sm:$0xff]
      %s7212 = scalar_lea.vmem %s7192, 576 [#allocation3]
      %v7213 = vld [vmem:[%s7212] ss:$2 sm:$0xff]
      %s7214 = scalar_lea.vmem %s7192, 624 [#allocation3]
      %v7215 = vld [vmem:[%s7214] ss:$2 sm:$0xff]
      %s7216 = scalar_lea.vmem %s7192, 720 [#allocation3]
      %v7217 = vld [vmem:[%s7216] ss:$2 sm:$0xff]
      %s7218 = scalar_lea.vmem %s7192, 768 [#allocation3]
      %v7219 = vld [vmem:[%s7218] ss:$2 sm:$0xff]
      %s7220 = scalar_lea.vmem %s7192, 816 [#allocation3]
      %v7221 = vld [vmem:[%s7220] ss:$2 sm:$0xff]
      %s7222 = scalar_lea.vmem %s7192, 864 [#allocation3]
      %v7223 = vld [vmem:[%s7222] ss:$2 sm:$0xff]
      %7224 = vst [vmem:[#allocation4] sm:$0xff] %v7193
      %7225 = vst [vmem:[#allocation4 + $0x20] sm:$0xff] %v7195
      %7226 = vst [vmem:[#allocation4 + $0x40] sm:$0xff] %v7197
      %7227 = vst [vmem:[#allocation4 + $0x60] sm:$0xff] %v7199
      %7228 = vst [vmem:[#allocation4 + $0x80] sm:$0xff] %v7201
      %7229 = vst [vmem:[#allocation4 + $0xa0] sm:$0xff] %v7203
      %7230 = vst [vmem:[#allocation4 + $0xc0] sm:$0xff] %v7205
      %7231 = vst [vmem:[#allocation4 + $0xe0] sm:$0xff] %v7207
      %7232 = vst [vmem:[#allocation4 + $0x100] sm:$0xff] %v7209
      %7233 = vst [vmem:[#allocation4 + $0x120] sm:$0xff] %v7211
      %7234 = vst [vmem:[#allocation4 + $0x140] sm:$0xff] %v7213
      %7235 = vst [vmem:[#allocation4 + $0x160] sm:$0xff] %v7215
      %7236 = vst [vmem:[#allocation4 + $0x180] sm:$0xff] %v7217
      %7237 = vst [vmem:[#allocation4 + $0x1a0] sm:$0xff] %v7219
      %7238 = vst [vmem:[#allocation4 + $0x1c0] sm:$0xff] %v7221
      %7239 = vst [vmem:[#allocation4 + $0x1e0] sm:$0xff] %v7223
      %s7240 = scalar_lea.vmem %s7192, 1 [#allocation3]
      %v7241 = vld [vmem:[%s7240] ss:$2 sm:$0xff]
      %s7242 = scalar_lea.vmem %s7192, 49 [#allocation3]
      %v7243 = vld [vmem:[%s7242] ss:$2 sm:$0xff]
      %s7244 = scalar_lea.vmem %s7192, 97 [#allocation3]
      %v7245 = vld [vmem:[%s7244] ss:$2 sm:$0xff]
      %s7246 = scalar_lea.vmem %s7192, 145 [#allocation3]
      %v7247 = vld [vmem:[%s7246] ss:$2 sm:$0xff]
      %s7248 = scalar_lea.vmem %s7192, 241 [#allocation3]
      %v7249 = vld [vmem:[%s7248] ss:$2 sm:$0xff]
      %s7250 = scalar_lea.vmem %s7192, 289 [#allocation3]
      %v7251 = vld [vmem:[%s7250] ss:$2 sm:$0xff]
      %s7252 = scalar_lea.vmem %s7192, 337 [#allocation3]
      %v7253 = vld [vmem:[%s7252] ss:$2 sm:$0xff]
      %s7254 = scalar_lea.vmem %s7192, 385 [#allocation3]
      %v7255 = vld [vmem:[%s7254] ss:$2 sm:$0xff]
      %s7256 = scalar_lea.vmem %s7192, 481 [#allocation3]
      %v7257 = vld [vmem:[%s7256] ss:$2 sm:$0xff]
      %s7258 = scalar_lea.vmem %s7192, 529 [#allocation3]
      %v7259 = vld [vmem:[%s7258] ss:$2 sm:$0xff]
      %s7260 = scalar_lea.vmem %s7192, 577 [#allocation3]
      %v7261 = vld [vmem:[%s7260] ss:$2 sm:$0xff]
      %s7262 = scalar_lea.vmem %s7192, 625 [#allocation3]
      %v7263 = vld [vmem:[%s7262] ss:$2 sm:$0xff]
      %s7264 = scalar_lea.vmem %s7192, 721 [#allocation3]
      %v7265 = vld [vmem:[%s7264] ss:$2 sm:$0xff]
      %s7266 = scalar_lea.vmem %s7192, 769 [#allocation3]
      %v7267 = vld [vmem:[%s7266] ss:$2 sm:$0xff]
      %s7268 = scalar_lea.vmem %s7192, 817 [#allocation3]
      %v7269 = vld [vmem:[%s7268] ss:$2 sm:$0xff]
      %s7270 = scalar_lea.vmem %s7192, 865 [#allocation3]
      %v7271 = vld [vmem:[%s7270] ss:$2 sm:$0xff]
      %7272 = vst [vmem:[#allocation4 + $0x8] sm:$0xff] %v7241
      %7273 = vst [vmem:[#allocation4 + $0x28] sm:$0xff] %v7243
      %7274 = vst [vmem:[#allocation4 + $0x48] sm:$0xff] %v7245
      %7275 = vst [vmem:[#allocation4 + $0x68] sm:$0xff] %v7247
      %7276 = vst [vmem:[#allocation4 + $0x88] sm:$0xff] %v7249
      %7277 = vst [vmem:[#allocation4 + $0xa8] sm:$0xff] %v7251
      %7278 = vst [vmem:[#allocation4 + $0xc8] sm:$0xff] %v7253
      %7279 = vst [vmem:[#allocation4 + $0xe8] sm:$0xff] %v7255
      %7280 = vst [vmem:[#allocation4 + $0x108] sm:$0xff] %v7257
      %7281 = vst [vmem:[#allocation4 + $0x128] sm:$0xff] %v7259
      %7282 = vst [vmem:[#allocation4 + $0x148] sm:$0xff] %v7261
      %7283 = vst [vmem:[#allocation4 + $0x168] sm:$0xff] %v7263
      %7284 = vst [vmem:[#allocation4 + $0x188] sm:$0xff] %v7265
      %7285 = vst [vmem:[#allocation4 + $0x1a8] sm:$0xff] %v7267
      %7286 = vst [vmem:[#allocation4 + $0x1c8] sm:$0xff] %v7269
      %7287 = vst [vmem:[#allocation4 + $0x1e8] sm:$0xff] %v7271
      %s7288 = scalar_lea.vmem %s7192, 2 [#allocation3]
      %v7289 = vld [vmem:[%s7288] ss:$2 sm:$0xff]
      %s7290 = scalar_lea.vmem %s7192, 50 [#allocation3]
      %v7291 = vld [vmem:[%s7290] ss:$2 sm:$0xff]
      %s7292 = scalar_lea.vmem %s7192, 98 [#allocation3]
      %v7293 = vld [vmem:[%s7292] ss:$2 sm:$0xff]
      %s7294 = scalar_lea.vmem %s7192, 146 [#allocation3]
      %v7295 = vld [vmem:[%s7294] ss:$2 sm:$0xff]
      %s7296 = scalar_lea.vmem %s7192, 242 [#allocation3]
      %v7297 = vld [vmem:[%s7296] ss:$2 sm:$0xff]
      %s7298 = scalar_lea.vmem %s7192, 290 [#allocation3]
      %v7299 = vld [vmem:[%s7298] ss:$2 sm:$0xff]
      %s7300 = scalar_lea.vmem %s7192, 338 [#allocation3]
      %v7301 = vld [vmem:[%s7300] ss:$2 sm:$0xff]
      %s7302 = scalar_lea.vmem %s7192, 386 [#allocation3]
      %v7303 = vld [vmem:[%s7302] ss:$2 sm:$0xff]
      %s7304 = scalar_lea.vmem %s7192, 482 [#allocation3]
      %v7305 = vld [vmem:[%s7304] ss:$2 sm:$0xff]
      %s7306 = scalar_lea.vmem %s7192, 530 [#allocation3]
      %v7307 = vld [vmem:[%s7306] ss:$2 sm:$0xff]
      %s7308 = scalar_lea.vmem %s7192, 578 [#allocation3]
      %v7309 = vld [vmem:[%s7308] ss:$2 sm:$0xff]
      %s7310 = scalar_lea.vmem %s7192, 626 [#allocation3]
      %v7311 = vld [vmem:[%s7310] ss:$2 sm:$0xff]
      %s7312 = scalar_lea.vmem %s7192, 722 [#allocation3]
      %v7313 = vld [vmem:[%s7312] ss:$2 sm:$0xff]
      %s7314 = scalar_lea.vmem %s7192, 770 [#allocation3]
      %v7315 = vld [vmem:[%s7314] ss:$2 sm:$0xff]
      %s7316 = scalar_lea.vmem %s7192, 818 [#allocation3]
      %v7317 = vld [vmem:[%s7316] ss:$2 sm:$0xff]
      %s7318 = scalar_lea.vmem %s7192, 866 [#allocation3]
      %v7319 = vld [vmem:[%s7318] ss:$2 sm:$0xff]
      %7320 = vst [vmem:[#allocation4 + $0x10] sm:$0xff] %v7289
      %7321 = vst [vmem:[#allocation4 + $0x30] sm:$0xff] %v7291
      %7322 = vst [vmem:[#allocation4 + $0x50] sm:$0xff] %v7293
      %7323 = vst [vmem:[#allocation4 + $0x70] sm:$0xff] %v7295
      %7324 = vst [vmem:[#allocation4 + $0x90] sm:$0xff] %v7297
      %7325 = vst [vmem:[#allocation4 + $0xb0] sm:$0xff] %v7299
      %7326 = vst [vmem:[#allocation4 + $0xd0] sm:$0xff] %v7301
      %7327 = vst [vmem:[#allocation4 + $0xf0] sm:$0xff] %v7303
      %7328 = vst [vmem:[#allocation4 + $0x110] sm:$0xff] %v7305
      %7329 = vst [vmem:[#allocation4 + $0x130] sm:$0xff] %v7307
      %7330 = vst [vmem:[#allocation4 + $0x150] sm:$0xff] %v7309
      %7331 = vst [vmem:[#allocation4 + $0x170] sm:$0xff] %v7311
      %7332 = vst [vmem:[#allocation4 + $0x190] sm:$0xff] %v7313
      %7333 = vst [vmem:[#allocation4 + $0x1b0] sm:$0xff] %v7315
      %7334 = vst [vmem:[#allocation4 + $0x1d0] sm:$0xff] %v7317
      %7335 = vst [vmem:[#allocation4 + $0x1f0] sm:$0xff] %v7319
      %s7336 = scalar_lea.vmem %s7192, 3 [#allocation3]
      %v7337 = vld [vmem:[%s7336] ss:$2 sm:$0xff]
      %s7338 = scalar_lea.vmem %s7192, 51 [#allocation3]
      %v7339 = vld [vmem:[%s7338] ss:$2 sm:$0xff]
      %s7340 = scalar_lea.vmem %s7192, 99 [#allocation3]
      %v7341 = vld [vmem:[%s7340] ss:$2 sm:$0xff]
      %s7342 = scalar_lea.vmem %s7192, 147 [#allocation3]
      %v7343 = vld [vmem:[%s7342] ss:$2 sm:$0xff]
      %s7344 = scalar_lea.vmem %s7192, 243 [#allocation3]
      %v7345 = vld [vmem:[%s7344] ss:$2 sm:$0xff]
      %s7346 = scalar_lea.vmem %s7192, 291 [#allocation3]
      %v7347 = vld [vmem:[%s7346] ss:$2 sm:$0xff]
      %s7348 = scalar_lea.vmem %s7192, 339 [#allocation3]
      %v7349 = vld [vmem:[%s7348] ss:$2 sm:$0xff]
      %s7350 = scalar_lea.vmem %s7192, 387 [#allocation3]
      %v7351 = vld [vmem:[%s7350] ss:$2 sm:$0xff]
      %s7352 = scalar_lea.vmem %s7192, 483 [#allocation3]
      %v7353 = vld [vmem:[%s7352] ss:$2 sm:$0xff]
      %s7354 = scalar_lea.vmem %s7192, 531 [#allocation3]
      %v7355 = vld [vmem:[%s7354] ss:$2 sm:$0xff]
      %s7356 = scalar_lea.vmem %s7192, 579 [#allocation3]
      %v7357 = vld [vmem:[%s7356] ss:$2 sm:$0xff]
      %s7358 = scalar_lea.vmem %s7192, 627 [#allocation3]
      %v7359 = vld [vmem:[%s7358] ss:$2 sm:$0xff]
      %s7360 = scalar_lea.vmem %s7192, 723 [#allocation3]
      %v7361 = vld [vmem:[%s7360] ss:$2 sm:$0xff]
      %s7362 = scalar_lea.vmem %s7192, 771 [#allocation3]
      %v7363 = vld [vmem:[%s7362] ss:$2 sm:$0xff]
      %s7364 = scalar_lea.vmem %s7192, 819 [#allocation3]
      %v7365 = vld [vmem:[%s7364] ss:$2 sm:$0xff]
      %s7366 = scalar_lea.vmem %s7192, 867 [#allocation3]
      %v7367 = vld [vmem:[%s7366] ss:$2 sm:$0xff]
      %7368 = vst [vmem:[#allocation4 + $0x18] sm:$0xff] %v7337
      %7369 = vst [vmem:[#allocation4 + $0x38] sm:$0xff] %v7339
      %7370 = vst [vmem:[#allocation4 + $0x58] sm:$0xff] %v7341
      %7371 = vst [vmem:[#allocation4 + $0x78] sm:$0xff] %v7343
      %7372 = vst [vmem:[#allocation4 + $0x98] sm:$0xff] %v7345
      %7373 = vst [vmem:[#allocation4 + $0xb8] sm:$0xff] %v7347
      %7374 = vst [vmem:[#allocation4 + $0xd8] sm:$0xff] %v7349
      %7375 = vst [vmem:[#allocation4 + $0xf8] sm:$0xff] %v7351
      %7376 = vst [vmem:[#allocation4 + $0x118] sm:$0xff] %v7353
      %7377 = vst [vmem:[#allocation4 + $0x138] sm:$0xff] %v7355
      %7378 = vst [vmem:[#allocation4 + $0x158] sm:$0xff] %v7357
      %7379 = vst [vmem:[#allocation4 + $0x178] sm:$0xff] %v7359
      %7380 = vst [vmem:[#allocation4 + $0x198] sm:$0xff] %v7361
      %7381 = vst [vmem:[#allocation4 + $0x1b8] sm:$0xff] %v7363
      %7382 = vst [vmem:[#allocation4 + $0x1d8] sm:$0xff] %v7365
      %7383 = vst [vmem:[#allocation4 + $0x1f8] sm:$0xff] %v7367
      %v7384 = vld [vmem:[#allocation4] sm:$0xff]
      %v7385 = vld [vmem:[#allocation4 + $0x8] sm:$0xff]
      %v7386 = vld [vmem:[#allocation4 + $0x10] sm:$0xff]
      %v7387 = vld [vmem:[#allocation4 + $0x18] sm:$0xff]
      %v7388 = vld [vmem:[#allocation4 + $0x20] sm:$0xff]
      %v7389 = vld [vmem:[#allocation4 + $0x28] sm:$0xff]
      %v7390 = vld [vmem:[#allocation4 + $0x30] sm:$0xff]
      %v7391 = vld [vmem:[#allocation4 + $0x38] sm:$0xff]
      %v7392 = vld [vmem:[#allocation4 + $0x40] sm:$0xff]
      %v7393 = vld [vmem:[#allocation4 + $0x48] sm:$0xff]
      %v7394 = vld [vmem:[#allocation4 + $0x50] sm:$0xff]
      %v7395 = vld [vmem:[#allocation4 + $0x58] sm:$0xff]
      %v7396 = vld [vmem:[#allocation4 + $0x60] sm:$0xff]
      %v7397 = vld [vmem:[#allocation4 + $0x68] sm:$0xff]
      %v7398 = vld [vmem:[#allocation4 + $0x70] sm:$0xff]
      %v7399 = vld [vmem:[#allocation4 + $0x78] sm:$0xff]
      %v7400 = vld [vmem:[#allocation4 + $0x80] sm:$0xff]
      %v7401 = vld [vmem:[#allocation4 + $0x88] sm:$0xff]
      %v7402 = vld [vmem:[#allocation4 + $0x90] sm:$0xff]
      %v7403 = vld [vmem:[#allocation4 + $0x98] sm:$0xff]
      %v7404 = vld [vmem:[#allocation4 + $0xa0] sm:$0xff]
      %v7405 = vld [vmem:[#allocation4 + $0xa8] sm:$0xff]
      %v7406 = vld [vmem:[#allocation4 + $0xb0] sm:$0xff]
      %v7407 = vld [vmem:[#allocation4 + $0xb8] sm:$0xff]
      %v7408 = vld [vmem:[#allocation4 + $0xc0] sm:$0xff]
      %v7409 = vld [vmem:[#allocation4 + $0xc8] sm:$0xff]
      %v7410 = vld [vmem:[#allocation4 + $0xd0] sm:$0xff]
      %v7411 = vld [vmem:[#allocation4 + $0xd8] sm:$0xff]
      %v7412 = vld [vmem:[#allocation4 + $0xe0] sm:$0xff]
      %v7413 = vld [vmem:[#allocation4 + $0xe8] sm:$0xff]
      %v7414 = vld [vmem:[#allocation4 + $0xf0] sm:$0xff]
      %v7415 = vld [vmem:[#allocation4 + $0xf8] sm:$0xff]
      %v7416 = vld [vmem:[#allocation4 + $0x100] sm:$0xff]
      %v7417 = vld [vmem:[#allocation4 + $0x108] sm:$0xff]
      %v7418 = vld [vmem:[#allocation4 + $0x110] sm:$0xff]
      %v7419 = vld [vmem:[#allocation4 + $0x118] sm:$0xff]
      %v7420 = vld [vmem:[#allocation4 + $0x120] sm:$0xff]
      %v7421 = vld [vmem:[#allocation4 + $0x128] sm:$0xff]
      %v7422 = vld [vmem:[#allocation4 + $0x130] sm:$0xff]
      %v7423 = vld [vmem:[#allocation4 + $0x138] sm:$0xff]
      %v7424 = vld [vmem:[#allocation4 + $0x140] sm:$0xff]
      %v7425 = vld [vmem:[#allocation4 + $0x148] sm:$0xff]
      %v7426 = vld [vmem:[#allocation4 + $0x150] sm:$0xff]
      %v7427 = vld [vmem:[#allocation4 + $0x158] sm:$0xff]
      %v7428 = vld [vmem:[#allocation4 + $0x160] sm:$0xff]
      %v7429 = vld [vmem:[#allocation4 + $0x168] sm:$0xff]
      %v7430 = vld [vmem:[#allocation4 + $0x170] sm:$0xff]
      %v7431 = vld [vmem:[#allocation4 + $0x178] sm:$0xff]
      %v7432 = vld [vmem:[#allocation4 + $0x180] sm:$0xff]
      %v7433 = vld [vmem:[#allocation4 + $0x188] sm:$0xff]
      %v7434 = vld [vmem:[#allocation4 + $0x190] sm:$0xff]
      %v7435 = vld [vmem:[#allocation4 + $0x198] sm:$0xff]
      %v7436 = vld [vmem:[#allocation4 + $0x1a0] sm:$0xff]
      %v7437 = vld [vmem:[#allocation4 + $0x1a8] sm:$0xff]
      %v7438 = vld [vmem:[#allocation4 + $0x1b0] sm:$0xff]
      %v7439 = vld [vmem:[#allocation4 + $0x1b8] sm:$0xff]
      %v7440 = vld [vmem:[#allocation4 + $0x1c0] sm:$0xff]
      %v7441 = vld [vmem:[#allocation4 + $0x1c8] sm:$0xff]
      %v7442 = vld [vmem:[#allocation4 + $0x1d0] sm:$0xff]
      %v7443 = vld [vmem:[#allocation4 + $0x1d8] sm:$0xff]
      %v7444 = vld [vmem:[#allocation4 + $0x1e0] sm:$0xff]
      %v7445 = vld [vmem:[#allocation4 + $0x1e8] sm:$0xff]
      %v7446 = vld [vmem:[#allocation4 + $0x1f0] sm:$0xff]
      %v7447 = vld [vmem:[#allocation4 + $0x1f8] sm:$0xff]
      %s7448 = scalar_lea.vmem %s5, 1024
      %v7449 = vld [vmem:[%s7448] sm:$0xff]
      %v7450 = vld [vmem:[%s7448 + $0x8] sm:$0xff]
      %v7451 = vld [vmem:[%s7448 + $0x10] sm:$0xff]
      %v7452 = vld [vmem:[%s7448 + $0x18] sm:$0xff]
      %v7453 = vld [vmem:[%s7448 + $0x20] sm:$0xff]
      %v7454 = vld [vmem:[%s7448 + $0x28] sm:$0xff]
      %v7455 = vld [vmem:[%s7448 + $0x30] sm:$0xff]
      %v7456 = vld [vmem:[%s7448 + $0x38] sm:$0xff]
      %v7457 = vld [vmem:[%s7448 + $0x40] sm:$0xff]
      %v7458 = vld [vmem:[%s7448 + $0x48] sm:$0xff]
      %v7459 = vld [vmem:[%s7448 + $0x50] sm:$0xff]
      %v7460 = vld [vmem:[%s7448 + $0x58] sm:$0xff]
      %v7461 = vld [vmem:[%s7448 + $0x60] sm:$0xff]
      %v7462 = vld [vmem:[%s7448 + $0x68] sm:$0xff]
      %v7463 = vld [vmem:[%s7448 + $0x70] sm:$0xff]
      %v7464 = vld [vmem:[%s7448 + $0x78] sm:$0xff]
      %v7465 = vld [vmem:[%s7448 + $0x80] sm:$0xff]
      %v7466 = vld [vmem:[%s7448 + $0x88] sm:$0xff]
      %v7467 = vld [vmem:[%s7448 + $0x90] sm:$0xff]
      %v7468 = vld [vmem:[%s7448 + $0x98] sm:$0xff]
      %v7469 = vld [vmem:[%s7448 + $0xa0] sm:$0xff]
      %v7470 = vld [vmem:[%s7448 + $0xa8] sm:$0xff]
      %v7471 = vld [vmem:[%s7448 + $0xb0] sm:$0xff]
      %v7472 = vld [vmem:[%s7448 + $0xb8] sm:$0xff]
      %v7473 = vld [vmem:[%s7448 + $0xc0] sm:$0xff]
      %v7474 = vld [vmem:[%s7448 + $0xc8] sm:$0xff]
      %v7475 = vld [vmem:[%s7448 + $0xd0] sm:$0xff]
      %v7476 = vld [vmem:[%s7448 + $0xd8] sm:$0xff]
      %v7477 = vld [vmem:[%s7448 + $0xe0] sm:$0xff]
      %v7478 = vld [vmem:[%s7448 + $0xe8] sm:$0xff]
      %v7479 = vld [vmem:[%s7448 + $0xf0] sm:$0xff]
      %v7480 = vld [vmem:[%s7448 + $0xf8] sm:$0xff]
      %v7481 = vld [vmem:[%s7448 + $0x100] sm:$0xff]
      %v7482 = vld [vmem:[%s7448 + $0x108] sm:$0xff]
      %v7483 = vld [vmem:[%s7448 + $0x110] sm:$0xff]
      %v7484 = vld [vmem:[%s7448 + $0x118] sm:$0xff]
      %v7485 = vld [vmem:[%s7448 + $0x120] sm:$0xff]
      %v7486 = vld [vmem:[%s7448 + $0x128] sm:$0xff]
      %v7487 = vld [vmem:[%s7448 + $0x130] sm:$0xff]
      %v7488 = vld [vmem:[%s7448 + $0x138] sm:$0xff]
      %v7489 = vld [vmem:[%s7448 + $0x140] sm:$0xff]
      %v7490 = vld [vmem:[%s7448 + $0x148] sm:$0xff]
      %v7491 = vld [vmem:[%s7448 + $0x150] sm:$0xff]
      %v7492 = vld [vmem:[%s7448 + $0x158] sm:$0xff]
      %v7493 = vld [vmem:[%s7448 + $0x160] sm:$0xff]
      %v7494 = vld [vmem:[%s7448 + $0x168] sm:$0xff]
      %v7495 = vld [vmem:[%s7448 + $0x170] sm:$0xff]
      %v7496 = vld [vmem:[%s7448 + $0x178] sm:$0xff]
      %v7497 = vld [vmem:[%s7448 + $0x180] sm:$0xff]
      %v7498 = vld [vmem:[%s7448 + $0x188] sm:$0xff]
      %v7499 = vld [vmem:[%s7448 + $0x190] sm:$0xff]
      %v7500 = vld [vmem:[%s7448 + $0x198] sm:$0xff]
      %v7501 = vld [vmem:[%s7448 + $0x1a0] sm:$0xff]
      %v7502 = vld [vmem:[%s7448 + $0x1a8] sm:$0xff]
      %v7503 = vld [vmem:[%s7448 + $0x1b0] sm:$0xff]
      %v7504 = vld [vmem:[%s7448 + $0x1b8] sm:$0xff]
      %v7505 = vld [vmem:[%s7448 + $0x1c0] sm:$0xff]
      %v7506 = vld [vmem:[%s7448 + $0x1c8] sm:$0xff]
      %v7507 = vld [vmem:[%s7448 + $0x1d0] sm:$0xff]
      %v7508 = vld [vmem:[%s7448 + $0x1d8] sm:$0xff]
      %v7509 = vld [vmem:[%s7448 + $0x1e0] sm:$0xff]
      %v7510 = vld [vmem:[%s7448 + $0x1e8] sm:$0xff]
      %v7511 = vld [vmem:[%s7448 + $0x1f0] sm:$0xff]
      %v7512 = vld [vmem:[%s7448 + $0x1f8] sm:$0xff]
      %7513 = vmatprep.subr.mxu0 0.0
      %7514 = vmatpush1.msra.mxu0 %v7449
      %7515 = vmatprep.subr.mxu0 0.0
      %7516 = vmatpush1.msra.mxu0 %v7450
      %7517 = vmatprep.subr.mxu0 0.0
      %7518 = vmatpush1.msra.mxu0 %v7451
      %7519 = vmatprep.subr.mxu0 0.0
      %7520 = vmatpush1.msra.mxu0 %v7452
      %7521 = vmatprep.subr.mxu0 0.0
      %7522 = vmatpush1.msra.mxu0 %v7453
      %7523 = vmatprep.subr.mxu0 0.0
      %7524 = vmatpush1.msra.mxu0 %v7454
      %7525 = vmatprep.subr.mxu0 0.0
      %7526 = vmatpush1.msra.mxu0 %v7455
      %7527 = vmatprep.subr.mxu0 0.0
      %7528 = vmatpush1.msra.mxu0 %v7456
      %7529 = vmatprep.subr.mxu0 0.0
      %7530 = vmatpush1.msra.mxu0 %v7457
      %7531 = vmatprep.subr.mxu0 0.0
      %7532 = vmatpush1.msra.mxu0 %v7458
      %7533 = vmatprep.subr.mxu0 0.0
      %7534 = vmatpush1.msra.mxu0 %v7459
      %7535 = vmatprep.subr.mxu0 0.0
      %7536 = vmatpush1.msra.mxu0 %v7460
      %7537 = vmatprep.subr.mxu0 0.0
      %7538 = vmatpush1.msra.mxu0 %v7461
      %7539 = vmatprep.subr.mxu0 0.0
      %7540 = vmatpush1.msra.mxu0 %v7462
      %7541 = vmatprep.subr.mxu0 0.0
      %7542 = vmatpush1.msra.mxu0 %v7463
      %7543 = vmatprep.subr.mxu0 0.0
      %7544 = vmatpush1.msra.mxu0 %v7464
      %7545 = vmatprep.subr.mxu0 0.0
      %7546 = vmatpush1.msra.mxu0 %v7465
      %7547 = vmatprep.subr.mxu0 0.0
      %7548 = vmatpush1.msra.mxu0 %v7466
      %7549 = vmatprep.subr.mxu0 0.0
      %7550 = vmatpush1.msra.mxu0 %v7467
      %7551 = vmatprep.subr.mxu0 0.0
      %7552 = vmatpush1.msra.mxu0 %v7468
      %7553 = vmatprep.subr.mxu0 0.0
      %7554 = vmatpush1.msra.mxu0 %v7469
      %7555 = vmatprep.subr.mxu0 0.0
      %7556 = vmatpush1.msra.mxu0 %v7470
      %7557 = vmatprep.subr.mxu0 0.0
      %7558 = vmatpush1.msra.mxu0 %v7471
      %7559 = vmatprep.subr.mxu0 0.0
      %7560 = vmatpush1.msra.mxu0 %v7472
      %7561 = vmatprep.subr.mxu0 0.0
      %7562 = vmatpush1.msra.mxu0 %v7473
      %7563 = vmatprep.subr.mxu0 0.0
      %7564 = vmatpush1.msra.mxu0 %v7474
      %7565 = vmatprep.subr.mxu0 0.0
      %7566 = vmatpush1.msra.mxu0 %v7475
      %7567 = vmatprep.subr.mxu0 0.0
      %7568 = vmatpush1.msra.mxu0 %v7476
      %7569 = vmatprep.subr.mxu0 0.0
      %7570 = vmatpush1.msra.mxu0 %v7477
      %7571 = vmatprep.subr.mxu0 0.0
      %7572 = vmatpush1.msra.mxu0 %v7478
      %7573 = vmatprep.subr.mxu0 0.0
      %7574 = vmatpush1.msra.mxu0 %v7479
      %7575 = vmatprep.subr.mxu0 0.0
      %7576 = vmatpush1.msra.mxu0 %v7480
      %7577 = vmatprep.mubr.f32.mxu0 %v7385
      %7578 = vmatmul.mubr.f32.gmra.mrb[0].mxu0 %v7384
      %v7579 = vpop.f32.mrb[0].mxu0
      %v7580 = vadd.f32 0.0, %v7579
      %v7581 = vpop.f32.mrb[0].mxu0
      %7582 = vmatprep.mubr.f32.mxu0 %v7389
      %7583 = vmatmul.mubr.f32.gmra.mrb[0].mxu0 %v7388
      %v7584 = vpop.f32.mrb[0].mxu0
      %v7585 = vadd.f32 0.0, %v7584
      %v7586 = vpop.f32.mrb[0].mxu0
      %7587 = vmatprep.mubr.f32.mxu0 %v7393
      %7588 = vmatmul.mubr.f32.gmra.mrb[0].mxu0 %v7392
      %v7589 = vpop.f32.mrb[0].mxu0
      %v7590 = vadd.f32 0.0, %v7589
      %v7591 = vpop.f32.mrb[0].mxu0
      %7592 = vmatprep.mubr.f32.mxu0 %v7397
      %7593 = vmatmul.mubr.f32.gmra.mrb[0].mxu0 %v7396
      %v7594 = vpop.f32.mrb[0].mxu0
      %v7595 = vadd.f32 0.0, %v7594
      %v7596 = vpop.f32.mrb[0].mxu0
      %7597 = vmatprep.mubr.f32.mxu0 %v7401
      %7598 = vmatmul.mubr.f32.gmra.mrb[0].mxu0 %v7400
      %v7599 = vpop.f32.mrb[0].mxu0
      %v7600 = vadd.f32 0.0, %v7599
      %v7601 = vpop.f32.mrb[0].mxu0
      %7602 = vmatprep.mubr.f32.mxu0 %v7405
      %7603 = vmatmul.mubr.f32.gmra.mrb[0].mxu0 %v7404
      %v7604 = vpop.f32.mrb[0].mxu0
      %v7605 = vadd.f32 0.0, %v7604
      %v7606 = vpop.f32.mrb[0].mxu0
      %7607 = vmatprep.mubr.f32.mxu0 %v7409
      %7608 = vmatmul.mubr.f32.gmra.mrb[0].mxu0 %v7408
      %v7609 = vpop.f32.mrb[0].mxu0
      %v7610 = vadd.f32 0.0, %v7609
      %v7611 = vpop.f32.mrb[0].mxu0
      %7612 = vmatprep.mubr.f32.mxu0 %v7413
      %7613 = vmatmul.mubr.f32.gmra.mrb[0].mxu0 %v7412
      %v7614 = vpop.f32.mrb[0].mxu0
      %v7615 = vadd.f32 0.0, %v7614
      %v7616 = vpop.f32.mrb[0].mxu0
      %7617 = vmatprep.mubr.f32.mxu0 %v7417
      %7618 = vmatmul.mubr.f32.gmra.mrb[0].mxu0 %v7416
      %v7619 = vpop.f32.mrb[0].mxu0
      %v7620 = vadd.f32 0.0, %v7619
      %v7621 = vpop.f32.mrb[0].mxu0
      %7622 = vmatprep.mubr.f32.mxu0 %v7421
      %7623 = vmatmul.mubr.f32.gmra.mrb[0].mxu0 %v7420
      %v7624 = vpop.f32.mrb[0].mxu0
      %v7625 = vadd.f32 0.0, %v7624
      %v7626 = vpop.f32.mrb[0].mxu0
      %7627 = vmatprep.mubr.f32.mxu0 %v7425
      %7628 = vmatmul.mubr.f32.gmra.mrb[0].mxu0 %v7424
      %v7629 = vpop.f32.mrb[0].mxu0
      %v7630 = vadd.f32 0.0, %v7629
      %v7631 = vpop.f32.mrb[0].mxu0
      %7632 = vmatprep.mubr.f32.mxu0 %v7429
      %7633 = vmatmul.mubr.f32.gmra.mrb[0].mxu0 %v7428
      %v7634 = vpop.f32.mrb[0].mxu0
      %v7635 = vadd.f32 0.0, %v7634
      %v7636 = vpop.f32.mrb[0].mxu0
      %7637 = vmatprep.mubr.f32.mxu0 %v7433
      %7638 = vmatmul.mubr.f32.gmra.mrb[0].mxu0 %v7432
      %v7639 = vpop.f32.mrb[0].mxu0
      %v7640 = vadd.f32 0.0, %v7639
      %v7641 = vpop.f32.mrb[0].mxu0
      %7642 = vmatprep.mubr.f32.mxu0 %v7437
      %7643 = vmatmul.mubr.f32.gmra.mrb[0].mxu0 %v7436
      %v7644 = vpop.f32.mrb[0].mxu0
      %v7645 = vadd.f32 0.0, %v7644
      %v7646 = vpop.f32.mrb[0].mxu0
      %7647 = vmatprep.mubr.f32.mxu0 %v7441
      %7648 = vmatmul.mubr.f32.gmra.mrb[0].mxu0 %v7440
      %v7649 = vpop.f32.mrb[0].mxu0
      %v7650 = vadd.f32 0.0, %v7649
      %v7651 = vpop.f32.mrb[0].mxu0
      %7652 = vmatprep.mubr.f32.mxu0 %v7445
      %7653 = vmatmul.mubr.f32.gmra.mrb[0].mxu0 %v7444
      %v7654 = vpop.f32.mrb[0].mxu0
      %v7655 = vadd.f32 0.0, %v7654
      %v7656 = vpop.f32.mrb[0].mxu0
      %7657 = vdwg.mxu0
      %7658 = vmatprep.subr.mxu0 0.0
      %7659 = vmatpush1.msra.mxu0 %v7481
      %7660 = vmatprep.subr.mxu0 0.0
      %7661 = vmatpush1.msra.mxu0 %v7482
      %7662 = vmatprep.subr.mxu0 0.0
      %7663 = vmatpush1.msra.mxu0 %v7483
      %7664 = vmatprep.subr.mxu0 0.0
      %7665 = vmatpush1.msra.mxu0 %v7484
      %7666 = vmatprep.subr.mxu0 0.0
      %7667 = vmatpush1.msra.mxu0 %v7485
      %7668 = vmatprep.subr.mxu0 0.0
      %7669 = vmatpush1.msra.mxu0 %v7486
      %7670 = vmatprep.subr.mxu0 0.0
      %7671 = vmatpush1.msra.mxu0 %v7487
      %7672 = vmatprep.subr.mxu0 0.0
      %7673 = vmatpush1.msra.mxu0 %v7488
      %7674 = vmatprep.subr.mxu0 0.0
      %7675 = vmatpush1.msra.mxu0 %v7489
      %7676 = vmatprep.subr.mxu0 0.0
      %7677 = vmatpush1.msra.mxu0 %v7490
      %7678 = vmatprep.subr.mxu0 0.0
      %7679 = vmatpush1.msra.mxu0 %v7491
      %7680 = vmatprep.subr.mxu0 0.0
      %7681 = vmatpush1.msra.mxu0 %v7492
      %7682 = vmatprep.subr.mxu0 0.0
      %7683 = vmatpush1.msra.mxu0 %v7493
      %7684 = vmatprep.subr.mxu0 0.0
      %7685 = vmatpush1.msra.mxu0 %v7494
      %7686 = vmatprep.subr.mxu0 0.0
      %7687 = vmatpush1.msra.mxu0 %v7495
      %7688 = vmatprep.subr.mxu0 0.0
      %7689 = vmatpush1.msra.mxu0 %v7496
      %7690 = vmatprep.subr.mxu0 0.0
      %7691 = vmatpush1.msra.mxu0 %v7497
      %7692 = vmatprep.subr.mxu0 0.0
      %7693 = vmatpush1.msra.mxu0 %v7498
      %7694 = vmatprep.subr.mxu0 0.0
      %7695 = vmatpush1.msra.mxu0 %v7499
      %7696 = vmatprep.subr.mxu0 0.0
      %7697 = vmatpush1.msra.mxu0 %v7500
      %7698 = vmatprep.subr.mxu0 0.0
      %7699 = vmatpush1.msra.mxu0 %v7501
      %7700 = vmatprep.subr.mxu0 0.0
      %7701 = vmatpush1.msra.mxu0 %v7502
      %7702 = vmatprep.subr.mxu0 0.0
      %7703 = vmatpush1.msra.mxu0 %v7503
      %7704 = vmatprep.subr.mxu0 0.0
      %7705 = vmatpush1.msra.mxu0 %v7504
      %7706 = vmatprep.subr.mxu0 0.0
      %7707 = vmatpush1.msra.mxu0 %v7505
      %7708 = vmatprep.subr.mxu0 0.0
      %7709 = vmatpush1.msra.mxu0 %v7506
      %7710 = vmatprep.subr.mxu0 0.0
      %7711 = vmatpush1.msra.mxu0 %v7507
      %7712 = vmatprep.subr.mxu0 0.0
      %7713 = vmatpush1.msra.mxu0 %v7508
      %7714 = vmatprep.subr.mxu0 0.0
      %7715 = vmatpush1.msra.mxu0 %v7509
      %7716 = vmatprep.subr.mxu0 0.0
      %7717 = vmatpush1.msra.mxu0 %v7510
      %7718 = vmatprep.subr.mxu0 0.0
      %7719 = vmatpush1.msra.mxu0 %v7511
      %7720 = vmatprep.subr.mxu0 0.0
      %7721 = vmatpush1.msra.mxu0 %v7512
      %7722 = vmatprep.mubr.f32.mxu0 %v7387
      %7723 = vmatmul.mubr.f32.gmra.mrb[0].mxu0 %v7386
      %v7724 = vpop.f32.mrb[0].mxu0
      %v7725 = vadd.f32 %v7580, %v7724
      %v7726 = vpop.f32.mrb[0].mxu0
      %7727 = vmatprep.mubr.f32.mxu0 %v7391
      %7728 = vmatmul.mubr.f32.gmra.mrb[0].mxu0 %v7390
      %v7729 = vpop.f32.mrb[0].mxu0
      %v7730 = vadd.f32 %v7585, %v7729
      %v7731 = vpop.f32.mrb[0].mxu0
      %7732 = vmatprep.mubr.f32.mxu0 %v7395
      %7733 = vmatmul.mubr.f32.gmra.mrb[0].mxu0 %v7394
      %v7734 = vpop.f32.mrb[0].mxu0
      %v7735 = vadd.f32 %v7590, %v7734
      %v7736 = vpop.f32.mrb[0].mxu0
      %7737 = vmatprep.mubr.f32.mxu0 %v7399
      %7738 = vmatmul.mubr.f32.gmra.mrb[0].mxu0 %v7398
      %v7739 = vpop.f32.mrb[0].mxu0
      %v7740 = vadd.f32 %v7595, %v7739
      %v7741 = vpop.f32.mrb[0].mxu0
      %7742 = vmatprep.mubr.f32.mxu0 %v7403
      %7743 = vmatmul.mubr.f32.gmra.mrb[0].mxu0 %v7402
      %v7744 = vpop.f32.mrb[0].mxu0
      %v7745 = vadd.f32 %v7600, %v7744
      %v7746 = vpop.f32.mrb[0].mxu0
      %7747 = vmatprep.mubr.f32.mxu0 %v7407
      %7748 = vmatmul.mubr.f32.gmra.mrb[0].mxu0 %v7406
      %v7749 = vpop.f32.mrb[0].mxu0
      %v7750 = vadd.f32 %v7605, %v7749
      %v7751 = vpop.f32.mrb[0].mxu0
      %7752 = vmatprep.mubr.f32.mxu0 %v7411
      %7753 = vmatmul.mubr.f32.gmra.mrb[0].mxu0 %v7410
      %v7754 = vpop.f32.mrb[0].mxu0
      %v7755 = vadd.f32 %v7610, %v7754
      %v7756 = vpop.f32.mrb[0].mxu0
      %7757 = vmatprep.mubr.f32.mxu0 %v7415
      %7758 = vmatmul.mubr.f32.gmra.mrb[0].mxu0 %v7414
      %v7759 = vpop.f32.mrb[0].mxu0
      %v7760 = vadd.f32 %v7615, %v7759
      %v7761 = vpop.f32.mrb[0].mxu0
      %7762 = vmatprep.mubr.f32.mxu0 %v7419
      %7763 = vmatmul.mubr.f32.gmra.mrb[0].mxu0 %v7418
      %v7764 = vpop.f32.mrb[0].mxu0
      %v7765 = vadd.f32 %v7620, %v7764
      %v7766 = vpop.f32.mrb[0].mxu0
      %7767 = vmatprep.mubr.f32.mxu0 %v7423
      %7768 = vmatmul.mubr.f32.gmra.mrb[0].mxu0 %v7422
      %v7769 = vpop.f32.mrb[0].mxu0
      %v7770 = vadd.f32 %v7625, %v7769
      %v7771 = vpop.f32.mrb[0].mxu0
      %7772 = vmatprep.mubr.f32.mxu0 %v7427
      %7773 = vmatmul.mubr.f32.gmra.mrb[0].mxu0 %v7426
      %v7774 = vpop.f32.mrb[0].mxu0
      %v7775 = vadd.f32 %v7630, %v7774
      %v7776 = vpop.f32.mrb[0].mxu0
      %7777 = vmatprep.mubr.f32.mxu0 %v7431
      %7778 = vmatmul.mubr.f32.gmra.mrb[0].mxu0 %v7430
      %v7779 = vpop.f32.mrb[0].mxu0
      %v7780 = vadd.f32 %v7635, %v7779
      %v7781 = vpop.f32.mrb[0].mxu0
      %7782 = vmatprep.mubr.f32.mxu0 %v7435
      %7783 = vmatmul.mubr.f32.gmra.mrb[0].mxu0 %v7434
      %v7784 = vpop.f32.mrb[0].mxu0
      %v7785 = vadd.f32 %v7640, %v7784
      %v7786 = vpop.f32.mrb[0].mxu0
      %7787 = vmatprep.mubr.f32.mxu0 %v7439
      %7788 = vmatmul.mubr.f32.gmra.mrb[0].mxu0 %v7438
      %v7789 = vpop.f32.mrb[0].mxu0
      %v7790 = vadd.f32 %v7645, %v7789
      %v7791 = vpop.f32.mrb[0].mxu0
      %7792 = vmatprep.mubr.f32.mxu0 %v7443
      %7793 = vmatmul.mubr.f32.gmra.mrb[0].mxu0 %v7442
      %v7794 = vpop.f32.mrb[0].mxu0
      %v7795 = vadd.f32 %v7650, %v7794
      %v7796 = vpop.f32.mrb[0].mxu0
      %7797 = vmatprep.mubr.f32.mxu0 %v7447
      %7798 = vmatmul.mubr.f32.gmra.mrb[0].mxu0 %v7446
      %v7799 = vpop.f32.mrb[0].mxu0
      %v7800 = vadd.f32 %v7655, %v7799
      %v7801 = vpop.f32.mrb[0].mxu0
      %7802 = vdwg.mxu0
      %v7803 = vadd.f32 %v7114, %v7725
      %v7804 = vadd.f32 %v7119, %v7730
      %v7805 = vadd.f32 %v7124, %v7735
      %v7806 = vadd.f32 %v7129, %v7740
      %v7807 = vadd.f32 %v7134, %v7745
      %v7808 = vadd.f32 %v7139, %v7750
      %v7809 = vadd.f32 %v7144, %v7755
      %v7810 = vadd.f32 %v7149, %v7760
      %v7811 = vadd.f32 %v7154, %v7765
      %v7812 = vadd.f32 %v7159, %v7770
      %v7813 = vadd.f32 %v7164, %v7775
      %v7814 = vadd.f32 %v7169, %v7780
      %v7815 = vadd.f32 %v7174, %v7785
      %v7816 = vadd.f32 %v7179, %v7790
      %v7817 = vadd.f32 %v7184, %v7795
      %v7818 = vadd.f32 %v7189, %v7800
      %s7819 = scalar_lea.vmem [#allocation3], 72
      %v7820 = vld [vmem:[%s7819] ss:$2 sm:$0xff]
      %s7821 = scalar_lea.vmem %s7819, 48 [#allocation3]
      %v7822 = vld [vmem:[%s7821] ss:$2 sm:$0xff]
      %s7823 = scalar_lea.vmem %s7819, 96 [#allocation3]
      %v7824 = vld [vmem:[%s7823] ss:$2 sm:$0xff]
      %s7825 = scalar_lea.vmem %s7819, 144 [#allocation3]
      %v7826 = vld [vmem:[%s7825] ss:$2 sm:$0xff]
      %s7827 = scalar_lea.vmem %s7819, 240 [#allocation3]
      %v7828 = vld [vmem:[%s7827] ss:$2 sm:$0xff]
      %s7829 = scalar_lea.vmem %s7819, 288 [#allocation3]
      %v7830 = vld [vmem:[%s7829] ss:$2 sm:$0xff]
      %s7831 = scalar_lea.vmem %s7819, 336 [#allocation3]
      %v7832 = vld [vmem:[%s7831] ss:$2 sm:$0xff]
      %s7833 = scalar_lea.vmem %s7819, 384 [#allocation3]
      %v7834 = vld [vmem:[%s7833] ss:$2 sm:$0xff]
      %s7835 = scalar_lea.vmem %s7819, 480 [#allocation3]
      %v7836 = vld [vmem:[%s7835] ss:$2 sm:$0xff]
      %s7837 = scalar_lea.vmem %s7819, 528 [#allocation3]
      %v7838 = vld [vmem:[%s7837] ss:$2 sm:$0xff]
      %s7839 = scalar_lea.vmem %s7819, 576 [#allocation3]
      %v7840 = vld [vmem:[%s7839] ss:$2 sm:$0xff]
      %s7841 = scalar_lea.vmem %s7819, 624 [#allocation3]
      %v7842 = vld [vmem:[%s7841] ss:$2 sm:$0xff]
      %s7843 = scalar_lea.vmem %s7819, 720 [#allocation3]
      %v7844 = vld [vmem:[%s7843] ss:$2 sm:$0xff]
      %s7845 = scalar_lea.vmem %s7819, 768 [#allocation3]
      %v7846 = vld [vmem:[%s7845] ss:$2 sm:$0xff]
      %s7847 = scalar_lea.vmem %s7819, 816 [#allocation3]
      %v7848 = vld [vmem:[%s7847] ss:$2 sm:$0xff]
      %s7849 = scalar_lea.vmem %s7819, 864 [#allocation3]
      %v7850 = vld [vmem:[%s7849] ss:$2 sm:$0xff]
      %7851 = vst [vmem:[#allocation4] sm:$0xff] %v7820
      %7852 = vst [vmem:[#allocation4 + $0x20] sm:$0xff] %v7822
      %7853 = vst [vmem:[#allocation4 + $0x40] sm:$0xff] %v7824
      %7854 = vst [vmem:[#allocation4 + $0x60] sm:$0xff] %v7826
      %7855 = vst [vmem:[#allocation4 + $0x80] sm:$0xff] %v7828
      %7856 = vst [vmem:[#allocation4 + $0xa0] sm:$0xff] %v7830
      %7857 = vst [vmem:[#allocation4 + $0xc0] sm:$0xff] %v7832
      %7858 = vst [vmem:[#allocation4 + $0xe0] sm:$0xff] %v7834
      %7859 = vst [vmem:[#allocation4 + $0x100] sm:$0xff] %v7836
      %7860 = vst [vmem:[#allocation4 + $0x120] sm:$0xff] %v7838
      %7861 = vst [vmem:[#allocation4 + $0x140] sm:$0xff] %v7840
      %7862 = vst [vmem:[#allocation4 + $0x160] sm:$0xff] %v7842
      %7863 = vst [vmem:[#allocation4 + $0x180] sm:$0xff] %v7844
      %7864 = vst [vmem:[#allocation4 + $0x1a0] sm:$0xff] %v7846
      %7865 = vst [vmem:[#allocation4 + $0x1c0] sm:$0xff] %v7848
      %7866 = vst [vmem:[#allocation4 + $0x1e0] sm:$0xff] %v7850
      %s7867 = scalar_lea.vmem %s7819, 1 [#allocation3]
      %v7868 = vld [vmem:[%s7867] ss:$2 sm:$0xff]
      %s7869 = scalar_lea.vmem %s7819, 49 [#allocation3]
      %v7870 = vld [vmem:[%s7869] ss:$2 sm:$0xff]
      %s7871 = scalar_lea.vmem %s7819, 97 [#allocation3]
      %v7872 = vld [vmem:[%s7871] ss:$2 sm:$0xff]
      %s7873 = scalar_lea.vmem %s7819, 145 [#allocation3]
      %v7874 = vld [vmem:[%s7873] ss:$2 sm:$0xff]
      %s7875 = scalar_lea.vmem %s7819, 241 [#allocation3]
      %v7876 = vld [vmem:[%s7875] ss:$2 sm:$0xff]
      %s7877 = scalar_lea.vmem %s7819, 289 [#allocation3]
      %v7878 = vld [vmem:[%s7877] ss:$2 sm:$0xff]
      %s7879 = scalar_lea.vmem %s7819, 337 [#allocation3]
      %v7880 = vld [vmem:[%s7879] ss:$2 sm:$0xff]
      %s7881 = scalar_lea.vmem %s7819, 385 [#allocation3]
      %v7882 = vld [vmem:[%s7881] ss:$2 sm:$0xff]
      %s7883 = scalar_lea.vmem %s7819, 481 [#allocation3]
      %v7884 = vld [vmem:[%s7883] ss:$2 sm:$0xff]
      %s7885 = scalar_lea.vmem %s7819, 529 [#allocation3]
      %v7886 = vld [vmem:[%s7885] ss:$2 sm:$0xff]
      %s7887 = scalar_lea.vmem %s7819, 577 [#allocation3]
      %v7888 = vld [vmem:[%s7887] ss:$2 sm:$0xff]
      %s7889 = scalar_lea.vmem %s7819, 625 [#allocation3]
      %v7890 = vld [vmem:[%s7889] ss:$2 sm:$0xff]
      %s7891 = scalar_lea.vmem %s7819, 721 [#allocation3]
      %v7892 = vld [vmem:[%s7891] ss:$2 sm:$0xff]
      %s7893 = scalar_lea.vmem %s7819, 769 [#allocation3]
      %v7894 = vld [vmem:[%s7893] ss:$2 sm:$0xff]
      %s7895 = scalar_lea.vmem %s7819, 817 [#allocation3]
      %v7896 = vld [vmem:[%s7895] ss:$2 sm:$0xff]
      %s7897 = scalar_lea.vmem %s7819, 865 [#allocation3]
      %v7898 = vld [vmem:[%s7897] ss:$2 sm:$0xff]
      %7899 = vst [vmem:[#allocation4 + $0x8] sm:$0xff] %v7868
      %7900 = vst [vmem:[#allocation4 + $0x28] sm:$0xff] %v7870
      %7901 = vst [vmem:[#allocation4 + $0x48] sm:$0xff] %v7872
      %7902 = vst [vmem:[#allocation4 + $0x68] sm:$0xff] %v7874
      %7903 = vst [vmem:[#allocation4 + $0x88] sm:$0xff] %v7876
      %7904 = vst [vmem:[#allocation4 + $0xa8] sm:$0xff] %v7878
      %7905 = vst [vmem:[#allocation4 + $0xc8] sm:$0xff] %v7880
      %7906 = vst [vmem:[#allocation4 + $0xe8] sm:$0xff] %v7882
      %7907 = vst [vmem:[#allocation4 + $0x108] sm:$0xff] %v7884
      %7908 = vst [vmem:[#allocation4 + $0x128] sm:$0xff] %v7886
      %7909 = vst [vmem:[#allocation4 + $0x148] sm:$0xff] %v7888
      %7910 = vst [vmem:[#allocation4 + $0x168] sm:$0xff] %v7890
      %7911 = vst [vmem:[#allocation4 + $0x188] sm:$0xff] %v7892
      %7912 = vst [vmem:[#allocation4 + $0x1a8] sm:$0xff] %v7894
      %7913 = vst [vmem:[#allocation4 + $0x1c8] sm:$0xff] %v7896
      %7914 = vst [vmem:[#allocation4 + $0x1e8] sm:$0xff] %v7898
      %s7915 = scalar_lea.vmem %s7819, 2 [#allocation3]
      %v7916 = vld [vmem:[%s7915] ss:$2 sm:$0xff]
      %s7917 = scalar_lea.vmem %s7819, 50 [#allocation3]
      %v7918 = vld [vmem:[%s7917] ss:$2 sm:$0xff]
      %s7919 = scalar_lea.vmem %s7819, 98 [#allocation3]
      %v7920 = vld [vmem:[%s7919] ss:$2 sm:$0xff]
      %s7921 = scalar_lea.vmem %s7819, 146 [#allocation3]
      %v7922 = vld [vmem:[%s7921] ss:$2 sm:$0xff]
      %s7923 = scalar_lea.vmem %s7819, 242 [#allocation3]
      %v7924 = vld [vmem:[%s7923] ss:$2 sm:$0xff]
      %s7925 = scalar_lea.vmem %s7819, 290 [#allocation3]
      %v7926 = vld [vmem:[%s7925] ss:$2 sm:$0xff]
      %s7927 = scalar_lea.vmem %s7819, 338 [#allocation3]
      %v7928 = vld [vmem:[%s7927] ss:$2 sm:$0xff]
      %s7929 = scalar_lea.vmem %s7819, 386 [#allocation3]
      %v7930 = vld [vmem:[%s7929] ss:$2 sm:$0xff]
      %s7931 = scalar_lea.vmem %s7819, 482 [#allocation3]
      %v7932 = vld [vmem:[%s7931] ss:$2 sm:$0xff]
      %s7933 = scalar_lea.vmem %s7819, 530 [#allocation3]
      %v7934 = vld [vmem:[%s7933] ss:$2 sm:$0xff]
      %s7935 = scalar_lea.vmem %s7819, 578 [#allocation3]
      %v7936 = vld [vmem:[%s7935] ss:$2 sm:$0xff]
      %s7937 = scalar_lea.vmem %s7819, 626 [#allocation3]
      %v7938 = vld [vmem:[%s7937] ss:$2 sm:$0xff]
      %s7939 = scalar_lea.vmem %s7819, 722 [#allocation3]
      %v7940 = vld [vmem:[%s7939] ss:$2 sm:$0xff]
      %s7941 = scalar_lea.vmem %s7819, 770 [#allocation3]
      %v7942 = vld [vmem:[%s7941] ss:$2 sm:$0xff]
      %s7943 = scalar_lea.vmem %s7819, 818 [#allocation3]
      %v7944 = vld [vmem:[%s7943] ss:$2 sm:$0xff]
      %s7945 = scalar_lea.vmem %s7819, 866 [#allocation3]
      %v7946 = vld [vmem:[%s7945] ss:$2 sm:$0xff]
      %7947 = vst [vmem:[#allocation4 + $0x10] sm:$0xff] %v7916
      %7948 = vst [vmem:[#allocation4 + $0x30] sm:$0xff] %v7918
      %7949 = vst [vmem:[#allocation4 + $0x50] sm:$0xff] %v7920
      %7950 = vst [vmem:[#allocation4 + $0x70] sm:$0xff] %v7922
      %7951 = vst [vmem:[#allocation4 + $0x90] sm:$0xff] %v7924
      %7952 = vst [vmem:[#allocation4 + $0xb0] sm:$0xff] %v7926
      %7953 = vst [vmem:[#allocation4 + $0xd0] sm:$0xff] %v7928
      %7954 = vst [vmem:[#allocation4 + $0xf0] sm:$0xff] %v7930
      %7955 = vst [vmem:[#allocation4 + $0x110] sm:$0xff] %v7932
      %7956 = vst [vmem:[#allocation4 + $0x130] sm:$0xff] %v7934
      %7957 = vst [vmem:[#allocation4 + $0x150] sm:$0xff] %v7936
      %7958 = vst [vmem:[#allocation4 + $0x170] sm:$0xff] %v7938
      %7959 = vst [vmem:[#allocation4 + $0x190] sm:$0xff] %v7940
      %7960 = vst [vmem:[#allocation4 + $0x1b0] sm:$0xff] %v7942
      %7961 = vst [vmem:[#allocation4 + $0x1d0] sm:$0xff] %v7944
      %7962 = vst [vmem:[#allocation4 + $0x1f0] sm:$0xff] %v7946
      %s7963 = scalar_lea.vmem %s7819, 3 [#allocation3]
      %v7964 = vld [vmem:[%s7963] ss:$2 sm:$0xff]
      %s7965 = scalar_lea.vmem %s7819, 51 [#allocation3]
      %v7966 = vld [vmem:[%s7965] ss:$2 sm:$0xff]
      %s7967 = scalar_lea.vmem %s7819, 99 [#allocation3]
      %v7968 = vld [vmem:[%s7967] ss:$2 sm:$0xff]
      %s7969 = scalar_lea.vmem %s7819, 147 [#allocation3]
      %v7970 = vld [vmem:[%s7969] ss:$2 sm:$0xff]
      %s7971 = scalar_lea.vmem %s7819, 243 [#allocation3]
      %v7972 = vld [vmem:[%s7971] ss:$2 sm:$0xff]
      %s7973 = scalar_lea.vmem %s7819, 291 [#allocation3]
      %v7974 = vld [vmem:[%s7973] ss:$2 sm:$0xff]
      %s7975 = scalar_lea.vmem %s7819, 339 [#allocation3]
      %v7976 = vld [vmem:[%s7975] ss:$2 sm:$0xff]
      %s7977 = scalar_lea.vmem %s7819, 387 [#allocation3]
      %v7978 = vld [vmem:[%s7977] ss:$2 sm:$0xff]
      %s7979 = scalar_lea.vmem %s7819, 483 [#allocation3]
      %v7980 = vld [vmem:[%s7979] ss:$2 sm:$0xff]
      %s7981 = scalar_lea.vmem %s7819, 531 [#allocation3]
      %v7982 = vld [vmem:[%s7981] ss:$2 sm:$0xff]
      %s7983 = scalar_lea.vmem %s7819, 579 [#allocation3]
      %v7984 = vld [vmem:[%s7983] ss:$2 sm:$0xff]
      %s7985 = scalar_lea.vmem %s7819, 627 [#allocation3]
      %v7986 = vld [vmem:[%s7985] ss:$2 sm:$0xff]
      %s7987 = scalar_lea.vmem %s7819, 723 [#allocation3]
      %v7988 = vld [vmem:[%s7987] ss:$2 sm:$0xff]
      %s7989 = scalar_lea.vmem %s7819, 771 [#allocation3]
      %v7990 = vld [vmem:[%s7989] ss:$2 sm:$0xff]
      %s7991 = scalar_lea.vmem %s7819, 819 [#allocation3]
      %v7992 = vld [vmem:[%s7991] ss:$2 sm:$0xff]
      %s7993 = scalar_lea.vmem %s7819, 867 [#allocation3]
      %v7994 = vld [vmem:[%s7993] ss:$2 sm:$0xff]
      %7995 = vst [vmem:[#allocation4 + $0x18] sm:$0xff] %v7964
      %7996 = vst [vmem:[#allocation4 + $0x38] sm:$0xff] %v7966
      %7997 = vst [vmem:[#allocation4 + $0x58] sm:$0xff] %v7968
      %7998 = vst [vmem:[#allocation4 + $0x78] sm:$0xff] %v7970
      %7999 = vst [vmem:[#allocation4 + $0x98] sm:$0xff] %v7972
      %8000 = vst [vmem:[#allocation4 + $0xb8] sm:$0xff] %v7974
      %8001 = vst [vmem:[#allocation4 + $0xd8] sm:$0xff] %v7976
      %8002 = vst [vmem:[#allocation4 + $0xf8] sm:$0xff] %v7978
      %8003 = vst [vmem:[#allocation4 + $0x118] sm:$0xff] %v7980
      %8004 = vst [vmem:[#allocation4 + $0x138] sm:$0xff] %v7982
      %8005 = vst [vmem:[#allocation4 + $0x158] sm:$0xff] %v7984
      %8006 = vst [vmem:[#allocation4 + $0x178] sm:$0xff] %v7986
      %8007 = vst [vmem:[#allocation4 + $0x198] sm:$0xff] %v7988
      %8008 = vst [vmem:[#allocation4 + $0x1b8] sm:$0xff] %v7990
      %8009 = vst [vmem:[#allocation4 + $0x1d8] sm:$0xff] %v7992
      %8010 = vst [vmem:[#allocation4 + $0x1f8] sm:$0xff] %v7994
      %v8011 = vld [vmem:[#allocation4] sm:$0xff]
      %v8012 = vld [vmem:[#allocation4 + $0x8] sm:$0xff]
      %v8013 = vld [vmem:[#allocation4 + $0x10] sm:$0xff]
      %v8014 = vld [vmem:[#allocation4 + $0x18] sm:$0xff]
      %v8015 = vld [vmem:[#allocation4 + $0x20] sm:$0xff]
      %v8016 = vld [vmem:[#allocation4 + $0x28] sm:$0xff]
      %v8017 = vld [vmem:[#allocation4 + $0x30] sm:$0xff]
      %v8018 = vld [vmem:[#allocation4 + $0x38] sm:$0xff]
      %v8019 = vld [vmem:[#allocation4 + $0x40] sm:$0xff]
      %v8020 = vld [vmem:[#allocation4 + $0x48] sm:$0xff]
      %v8021 = vld [vmem:[#allocation4 + $0x50] sm:$0xff]
      %v8022 = vld [vmem:[#allocation4 + $0x58] sm:$0xff]
      %v8023 = vld [vmem:[#allocation4 + $0x60] sm:$0xff]
      %v8024 = vld [vmem:[#allocation4 + $0x68] sm:$0xff]
      %v8025 = vld [vmem:[#allocation4 + $0x70] sm:$0xff]
      %v8026 = vld [vmem:[#allocation4 + $0x78] sm:$0xff]
      %v8027 = vld [vmem:[#allocation4 + $0x80] sm:$0xff]
      %v8028 = vld [vmem:[#allocation4 + $0x88] sm:$0xff]
      %v8029 = vld [vmem:[#allocation4 + $0x90] sm:$0xff]
      %v8030 = vld [vmem:[#allocation4 + $0x98] sm:$0xff]
      %v8031 = vld [vmem:[#allocation4 + $0xa0] sm:$0xff]
      %v8032 = vld [vmem:[#allocation4 + $0xa8] sm:$0xff]
      %v8033 = vld [vmem:[#allocation4 + $0xb0] sm:$0xff]
      %v8034 = vld [vmem:[#allocation4 + $0xb8] sm:$0xff]
      %v8035 = vld [vmem:[#allocation4 + $0xc0] sm:$0xff]
      %v8036 = vld [vmem:[#allocation4 + $0xc8] sm:$0xff]
      %v8037 = vld [vmem:[#allocation4 + $0xd0] sm:$0xff]
      %v8038 = vld [vmem:[#allocation4 + $0xd8] sm:$0xff]
      %v8039 = vld [vmem:[#allocation4 + $0xe0] sm:$0xff]
      %v8040 = vld [vmem:[#allocation4 + $0xe8] sm:$0xff]
      %v8041 = vld [vmem:[#allocation4 + $0xf0] sm:$0xff]
      %v8042 = vld [vmem:[#allocation4 + $0xf8] sm:$0xff]
      %v8043 = vld [vmem:[#allocation4 + $0x100] sm:$0xff]
      %v8044 = vld [vmem:[#allocation4 + $0x108] sm:$0xff]
      %v8045 = vld [vmem:[#allocation4 + $0x110] sm:$0xff]
      %v8046 = vld [vmem:[#allocation4 + $0x118] sm:$0xff]
      %v8047 = vld [vmem:[#allocation4 + $0x120] sm:$0xff]
      %v8048 = vld [vmem:[#allocation4 + $0x128] sm:$0xff]
      %v8049 = vld [vmem:[#allocation4 + $0x130] sm:$0xff]
      %v8050 = vld [vmem:[#allocation4 + $0x138] sm:$0xff]
      %v8051 = vld [vmem:[#allocation4 + $0x140] sm:$0xff]
      %v8052 = vld [vmem:[#allocation4 + $0x148] sm:$0xff]
      %v8053 = vld [vmem:[#allocation4 + $0x150] sm:$0xff]
      %v8054 = vld [vmem:[#allocation4 + $0x158] sm:$0xff]
      %v8055 = vld [vmem:[#allocation4 + $0x160] sm:$0xff]
      %v8056 = vld [vmem:[#allocation4 + $0x168] sm:$0xff]
      %v8057 = vld [vmem:[#allocation4 + $0x170] sm:$0xff]
      %v8058 = vld [vmem:[#allocation4 + $0x178] sm:$0xff]
      %v8059 = vld [vmem:[#allocation4 + $0x180] sm:$0xff]
      %v8060 = vld [vmem:[#allocation4 + $0x188] sm:$0xff]
      %v8061 = vld [vmem:[#allocation4 + $0x190] sm:$0xff]
      %v8062 = vld [vmem:[#allocation4 + $0x198] sm:$0xff]
      %v8063 = vld [vmem:[#allocation4 + $0x1a0] sm:$0xff]
      %v8064 = vld [vmem:[#allocation4 + $0x1a8] sm:$0xff]
      %v8065 = vld [vmem:[#allocation4 + $0x1b0] sm:$0xff]
      %v8066 = vld [vmem:[#allocation4 + $0x1b8] sm:$0xff]
      %v8067 = vld [vmem:[#allocation4 + $0x1c0] sm:$0xff]
      %v8068 = vld [vmem:[#allocation4 + $0x1c8] sm:$0xff]
      %v8069 = vld [vmem:[#allocation4 + $0x1d0] sm:$0xff]
      %v8070 = vld [vmem:[#allocation4 + $0x1d8] sm:$0xff]
      %v8071 = vld [vmem:[#allocation4 + $0x1e0] sm:$0xff]
      %v8072 = vld [vmem:[#allocation4 + $0x1e8] sm:$0xff]
      %v8073 = vld [vmem:[#allocation4 + $0x1f0] sm:$0xff]
      %v8074 = vld [vmem:[#allocation4 + $0x1f8] sm:$0xff]
      %s8075 = scalar_lea.vmem %s5, 1536
      %v8076 = vld [vmem:[%s8075] sm:$0xff]
      %v8077 = vld [vmem:[%s8075 + $0x8] sm:$0xff]
      %v8078 = vld [vmem:[%s8075 + $0x10] sm:$0xff]
      %v8079 = vld [vmem:[%s8075 + $0x18] sm:$0xff]
      %v8080 = vld [vmem:[%s8075 + $0x20] sm:$0xff]
      %v8081 = vld [vmem:[%s8075 + $0x28] sm:$0xff]
      %v8082 = vld [vmem:[%s8075 + $0x30] sm:$0xff]
      %v8083 = vld [vmem:[%s8075 + $0x38] sm:$0xff]
      %v8084 = vld [vmem:[%s8075 + $0x40] sm:$0xff]
      %v8085 = vld [vmem:[%s8075 + $0x48] sm:$0xff]
      %v8086 = vld [vmem:[%s8075 + $0x50] sm:$0xff]
      %v8087 = vld [vmem:[%s8075 + $0x58] sm:$0xff]
      %v8088 = vld [vmem:[%s8075 + $0x60] sm:$0xff]
      %v8089 = vld [vmem:[%s8075 + $0x68] sm:$0xff]
      %v8090 = vld [vmem:[%s8075 + $0x70] sm:$0xff]
      %v8091 = vld [vmem:[%s8075 + $0x78] sm:$0xff]
      %v8092 = vld [vmem:[%s8075 + $0x80] sm:$0xff]
      %v8093 = vld [vmem:[%s8075 + $0x88] sm:$0xff]
      %v8094 = vld [vmem:[%s8075 + $0x90] sm:$0xff]
      %v8095 = vld [vmem:[%s8075 + $0x98] sm:$0xff]
      %v8096 = vld [vmem:[%s8075 + $0xa0] sm:$0xff]
      %v8097 = vld [vmem:[%s8075 + $0xa8] sm:$0xff]
      %v8098 = vld [vmem:[%s8075 + $0xb0] sm:$0xff]
      %v8099 = vld [vmem:[%s8075 + $0xb8] sm:$0xff]
      %v8100 = vld [vmem:[%s8075 + $0xc0] sm:$0xff]
      %v8101 = vld [vmem:[%s8075 + $0xc8] sm:$0xff]
      %v8102 = vld [vmem:[%s8075 + $0xd0] sm:$0xff]
      %v8103 = vld [vmem:[%s8075 + $0xd8] sm:$0xff]
      %v8104 = vld [vmem:[%s8075 + $0xe0] sm:$0xff]
      %v8105 = vld [vmem:[%s8075 + $0xe8] sm:$0xff]
      %v8106 = vld [vmem:[%s8075 + $0xf0] sm:$0xff]
      %v8107 = vld [vmem:[%s8075 + $0xf8] sm:$0xff]
      %v8108 = vld [vmem:[%s8075 + $0x100] sm:$0xff]
      %v8109 = vld [vmem:[%s8075 + $0x108] sm:$0xff]
      %v8110 = vld [vmem:[%s8075 + $0x110] sm:$0xff]
      %v8111 = vld [vmem:[%s8075 + $0x118] sm:$0xff]
      %v8112 = vld [vmem:[%s8075 + $0x120] sm:$0xff]
      %v8113 = vld [vmem:[%s8075 + $0x128] sm:$0xff]
      %v8114 = vld [vmem:[%s8075 + $0x130] sm:$0xff]
      %v8115 = vld [vmem:[%s8075 + $0x138] sm:$0xff]
      %v8116 = vld [vmem:[%s8075 + $0x140] sm:$0xff]
      %v8117 = vld [vmem:[%s8075 + $0x148] sm:$0xff]
      %v8118 = vld [vmem:[%s8075 + $0x150] sm:$0xff]
      %v8119 = vld [vmem:[%s8075 + $0x158] sm:$0xff]
      %v8120 = vld [vmem:[%s8075 + $0x160] sm:$0xff]
      %v8121 = vld [vmem:[%s8075 + $0x168] sm:$0xff]
      %v8122 = vld [vmem:[%s8075 + $0x170] sm:$0xff]
      %v8123 = vld [vmem:[%s8075 + $0x178] sm:$0xff]
      %v8124 = vld [vmem:[%s8075 + $0x180] sm:$0xff]
      %v8125 = vld [vmem:[%s8075 + $0x188] sm:$0xff]
      %v8126 = vld [vmem:[%s8075 + $0x190] sm:$0xff]
      %v8127 = vld [vmem:[%s8075 + $0x198] sm:$0xff]
      %v8128 = vld [vmem:[%s8075 + $0x1a0] sm:$0xff]
      %v8129 = vld [vmem:[%s8075 + $0x1a8] sm:$0xff]
      %v8130 = vld [vmem:[%s8075 + $0x1b0] sm:$0xff]
      %v8131 = vld [vmem:[%s8075 + $0x1b8] sm:$0xff]
      %v8132 = vld [vmem:[%s8075 + $0x1c0] sm:$0xff]
      %v8133 = vld [vmem:[%s8075 + $0x1c8] sm:$0xff]
      %v8134 = vld [vmem:[%s8075 + $0x1d0] sm:$0xff]
      %v8135 = vld [vmem:[%s8075 + $0x1d8] sm:$0xff]
      %v8136 = vld [vmem:[%s8075 + $0x1e0] sm:$0xff]
      %v8137 = vld [vmem:[%s8075 + $0x1e8] sm:$0xff]
      %v8138 = vld [vmem:[%s8075 + $0x1f0] sm:$0xff]
      %v8139 = vld [vmem:[%s8075 + $0x1f8] sm:$0xff]
      %8140 = vmatprep.subr.mxu0 0.0
      %8141 = vmatpush1.msra.mxu0 %v8076
      %8142 = vmatprep.subr.mxu0 0.0
      %8143 = vmatpush1.msra.mxu0 %v8077
      %8144 = vmatprep.subr.mxu0 0.0
      %8145 = vmatpush1.msra.mxu0 %v8078
      %8146 = vmatprep.subr.mxu0 0.0
      %8147 = vmatpush1.msra.mxu0 %v8079
      %8148 = vmatprep.subr.mxu0 0.0
      %8149 = vmatpush1.msra.mxu0 %v8080
      %8150 = vmatprep.subr.mxu0 0.0
      %8151 = vmatpush1.msra.mxu0 %v8081
      %8152 = vmatprep.subr.mxu0 0.0
      %8153 = vmatpush1.msra.mxu0 %v8082
      %8154 = vmatprep.subr.mxu0 0.0
      %8155 = vmatpush1.msra.mxu0 %v8083
      %8156 = vmatprep.subr.mxu0 0.0
      %8157 = vmatpush1.msra.mxu0 %v8084
      %8158 = vmatprep.subr.mxu0 0.0
      %8159 = vmatpush1.msra.mxu0 %v8085
      %8160 = vmatprep.subr.mxu0 0.0
      %8161 = vmatpush1.msra.mxu0 %v8086
      %8162 = vmatprep.subr.mxu0 0.0
      %8163 = vmatpush1.msra.mxu0 %v8087
      %8164 = vmatprep.subr.mxu0 0.0
      %8165 = vmatpush1.msra.mxu0 %v8088
      %8166 = vmatprep.subr.mxu0 0.0
      %8167 = vmatpush1.msra.mxu0 %v8089
      %8168 = vmatprep.subr.mxu0 0.0
      %8169 = vmatpush1.msra.mxu0 %v8090
      %8170 = vmatprep.subr.mxu0 0.0
      %8171 = vmatpush1.msra.mxu0 %v8091
      %8172 = vmatprep.subr.mxu0 0.0
      %8173 = vmatpush1.msra.mxu0 %v8092
      %8174 = vmatprep.subr.mxu0 0.0
      %8175 = vmatpush1.msra.mxu0 %v8093
      %8176 = vmatprep.subr.mxu0 0.0
      %8177 = vmatpush1.msra.mxu0 %v8094
      %8178 = vmatprep.subr.mxu0 0.0
      %8179 = vmatpush1.msra.mxu0 %v8095
      %8180 = vmatprep.subr.mxu0 0.0
      %8181 = vmatpush1.msra.mxu0 %v8096
      %8182 = vmatprep.subr.mxu0 0.0
      %8183 = vmatpush1.msra.mxu0 %v8097
      %8184 = vmatprep.subr.mxu0 0.0
      %8185 = vmatpush1.msra.mxu0 %v8098
      %8186 = vmatprep.subr.mxu0 0.0
      %8187 = vmatpush1.msra.mxu0 %v8099
      %8188 = vmatprep.subr.mxu0 0.0
      %8189 = vmatpush1.msra.mxu0 %v8100
      %8190 = vmatprep.subr.mxu0 0.0
      %8191 = vmatpush1.msra.mxu0 %v8101
      %8192 = vmatprep.subr.mxu0 0.0
      %8193 = vmatpush1.msra.mxu0 %v8102
      %8194 = vmatprep.subr.mxu0 0.0
      %8195 = vmatpush1.msra.mxu0 %v8103
      %8196 = vmatprep.subr.mxu0 0.0
      %8197 = vmatpush1.msra.mxu0 %v8104
      %8198 = vmatprep.subr.mxu0 0.0
      %8199 = vmatpush1.msra.mxu0 %v8105
      %8200 = vmatprep.subr.mxu0 0.0
      %8201 = vmatpush1.msra.mxu0 %v8106
      %8202 = vmatprep.subr.mxu0 0.0
      %8203 = vmatpush1.msra.mxu0 %v8107
      %8204 = vmatprep.mubr.f32.mxu0 %v8012
      %8205 = vmatmul.mubr.f32.gmra.mrb[0].mxu0 %v8011
      %v8206 = vpop.f32.mrb[0].mxu0
      %v8207 = vadd.f32 0.0, %v8206
      %v8208 = vpop.f32.mrb[0].mxu0
      %8209 = vmatprep.mubr.f32.mxu0 %v8016
      %8210 = vmatmul.mubr.f32.gmra.mrb[0].mxu0 %v8015
      %v8211 = vpop.f32.mrb[0].mxu0
      %v8212 = vadd.f32 0.0, %v8211
      %v8213 = vpop.f32.mrb[0].mxu0
      %8214 = vmatprep.mubr.f32.mxu0 %v8020
      %8215 = vmatmul.mubr.f32.gmra.mrb[0].mxu0 %v8019
      %v8216 = vpop.f32.mrb[0].mxu0
      %v8217 = vadd.f32 0.0, %v8216
      %v8218 = vpop.f32.mrb[0].mxu0
      %8219 = vmatprep.mubr.f32.mxu0 %v8024
      %8220 = vmatmul.mubr.f32.gmra.mrb[0].mxu0 %v8023
      %v8221 = vpop.f32.mrb[0].mxu0
      %v8222 = vadd.f32 0.0, %v8221
      %v8223 = vpop.f32.mrb[0].mxu0
      %8224 = vmatprep.mubr.f32.mxu0 %v8028
      %8225 = vmatmul.mubr.f32.gmra.mrb[0].mxu0 %v8027
      %v8226 = vpop.f32.mrb[0].mxu0
      %v8227 = vadd.f32 0.0, %v8226
      %v8228 = vpop.f32.mrb[0].mxu0
      %8229 = vmatprep.mubr.f32.mxu0 %v8032
      %8230 = vmatmul.mubr.f32.gmra.mrb[0].mxu0 %v8031
      %v8231 = vpop.f32.mrb[0].mxu0
      %v8232 = vadd.f32 0.0, %v8231
      %v8233 = vpop.f32.mrb[0].mxu0
      %8234 = vmatprep.mubr.f32.mxu0 %v8036
      %8235 = vmatmul.mubr.f32.gmra.mrb[0].mxu0 %v8035
      %v8236 = vpop.f32.mrb[0].mxu0
      %v8237 = vadd.f32 0.0, %v8236
      %v8238 = vpop.f32.mrb[0].mxu0
      %8239 = vmatprep.mubr.f32.mxu0 %v8040
      %8240 = vmatmul.mubr.f32.gmra.mrb[0].mxu0 %v8039
      %v8241 = vpop.f32.mrb[0].mxu0
      %v8242 = vadd.f32 0.0, %v8241
      %v8243 = vpop.f32.mrb[0].mxu0
      %8244 = vmatprep.mubr.f32.mxu0 %v8044
      %8245 = vmatmul.mubr.f32.gmra.mrb[0].mxu0 %v8043
      %v8246 = vpop.f32.mrb[0].mxu0
      %v8247 = vadd.f32 0.0, %v8246
      %v8248 = vpop.f32.mrb[0].mxu0
      %8249 = vmatprep.mubr.f32.mxu0 %v8048
      %8250 = vmatmul.mubr.f32.gmra.mrb[0].mxu0 %v8047
      %v8251 = vpop.f32.mrb[0].mxu0
      %v8252 = vadd.f32 0.0, %v8251
      %v8253 = vpop.f32.mrb[0].mxu0
      %8254 = vmatprep.mubr.f32.mxu0 %v8052
      %8255 = vmatmul.mubr.f32.gmra.mrb[0].mxu0 %v8051
      %v8256 = vpop.f32.mrb[0].mxu0
      %v8257 = vadd.f32 0.0, %v8256
      %v8258 = vpop.f32.mrb[0].mxu0
      %8259 = vmatprep.mubr.f32.mxu0 %v8056
      %8260 = vmatmul.mubr.f32.gmra.mrb[0].mxu0 %v8055
      %v8261 = vpop.f32.mrb[0].mxu0
      %v8262 = vadd.f32 0.0, %v8261
      %v8263 = vpop.f32.mrb[0].mxu0
      %8264 = vmatprep.mubr.f32.mxu0 %v8060
      %8265 = vmatmul.mubr.f32.gmra.mrb[0].mxu0 %v8059
      %v8266 = vpop.f32.mrb[0].mxu0
      %v8267 = vadd.f32 0.0, %v8266
      %v8268 = vpop.f32.mrb[0].mxu0
      %8269 = vmatprep.mubr.f32.mxu0 %v8064
      %8270 = vmatmul.mubr.f32.gmra.mrb[0].mxu0 %v8063
      %v8271 = vpop.f32.mrb[0].mxu0
      %v8272 = vadd.f32 0.0, %v8271
      %v8273 = vpop.f32.mrb[0].mxu0
      %8274 = vmatprep.mubr.f32.mxu0 %v8068
      %8275 = vmatmul.mubr.f32.gmra.mrb[0].mxu0 %v8067
      %v8276 = vpop.f32.mrb[0].mxu0
      %v8277 = vadd.f32 0.0, %v8276
      %v8278 = vpop.f32.mrb[0].mxu0
      %8279 = vmatprep.mubr.f32.mxu0 %v8072
      %8280 = vmatmul.mubr.f32.gmra.mrb[0].mxu0 %v8071
      %v8281 = vpop.f32.mrb[0].mxu0
      %v8282 = vadd.f32 0.0, %v8281
      %v8283 = vpop.f32.mrb[0].mxu0
      %8284 = vdwg.mxu0
      %8285 = vmatprep.subr.mxu0 0.0
      %8286 = vmatpush1.msra.mxu0 %v8108
      %8287 = vmatprep.subr.mxu0 0.0
      %8288 = vmatpush1.msra.mxu0 %v8109
      %8289 = vmatprep.subr.mxu0 0.0
      %8290 = vmatpush1.msra.mxu0 %v8110
      %8291 = vmatprep.subr.mxu0 0.0
      %8292 = vmatpush1.msra.mxu0 %v8111
      %8293 = vmatprep.subr.mxu0 0.0
      %8294 = vmatpush1.msra.mxu0 %v8112
      %8295 = vmatprep.subr.mxu0 0.0
      %8296 = vmatpush1.msra.mxu0 %v8113
      %8297 = vmatprep.subr.mxu0 0.0
      %8298 = vmatpush1.msra.mxu0 %v8114
      %8299 = vmatprep.subr.mxu0 0.0
      %8300 = vmatpush1.msra.mxu0 %v8115
      %8301 = vmatprep.subr.mxu0 0.0
      %8302 = vmatpush1.msra.mxu0 %v8116
      %8303 = vmatprep.subr.mxu0 0.0
      %8304 = vmatpush1.msra.mxu0 %v8117
      %8305 = vmatprep.subr.mxu0 0.0
      %8306 = vmatpush1.msra.mxu0 %v8118
      %8307 = vmatprep.subr.mxu0 0.0
      %8308 = vmatpush1.msra.mxu0 %v8119
      %8309 = vmatprep.subr.mxu0 0.0
      %8310 = vmatpush1.msra.mxu0 %v8120
      %8311 = vmatprep.subr.mxu0 0.0
      %8312 = vmatpush1.msra.mxu0 %v8121
      %8313 = vmatprep.subr.mxu0 0.0
      %8314 = vmatpush1.msra.mxu0 %v8122
      %8315 = vmatprep.subr.mxu0 0.0
      %8316 = vmatpush1.msra.mxu0 %v8123
      %8317 = vmatprep.subr.mxu0 0.0
      %8318 = vmatpush1.msra.mxu0 %v8124
      %8319 = vmatprep.subr.mxu0 0.0
      %8320 = vmatpush1.msra.mxu0 %v8125
      %8321 = vmatprep.subr.mxu0 0.0
      %8322 = vmatpush1.msra.mxu0 %v8126
      %8323 = vmatprep.subr.mxu0 0.0
      %8324 = vmatpush1.msra.mxu0 %v8127
      %8325 = vmatprep.subr.mxu0 0.0
      %8326 = vmatpush1.msra.mxu0 %v8128
      %8327 = vmatprep.subr.mxu0 0.0
      %8328 = vmatpush1.msra.mxu0 %v8129
      %8329 = vmatprep.subr.mxu0 0.0
      %8330 = vmatpush1.msra.mxu0 %v8130
      %8331 = vmatprep.subr.mxu0 0.0
      %8332 = vmatpush1.msra.mxu0 %v8131
      %8333 = vmatprep.subr.mxu0 0.0
      %8334 = vmatpush1.msra.mxu0 %v8132
      %8335 = vmatprep.subr.mxu0 0.0
      %8336 = vmatpush1.msra.mxu0 %v8133
      %8337 = vmatprep.subr.mxu0 0.0
      %8338 = vmatpush1.msra.mxu0 %v8134
      %8339 = vmatprep.subr.mxu0 0.0
      %8340 = vmatpush1.msra.mxu0 %v8135
      %8341 = vmatprep.subr.mxu0 0.0
      %8342 = vmatpush1.msra.mxu0 %v8136
      %8343 = vmatprep.subr.mxu0 0.0
      %8344 = vmatpush1.msra.mxu0 %v8137
      %8345 = vmatprep.subr.mxu0 0.0
      %8346 = vmatpush1.msra.mxu0 %v8138
      %8347 = vmatprep.subr.mxu0 0.0
      %8348 = vmatpush1.msra.mxu0 %v8139
      %8349 = vmatprep.mubr.f32.mxu0 %v8014
      %8350 = vmatmul.mubr.f32.gmra.mrb[0].mxu0 %v8013
      %v8351 = vpop.f32.mrb[0].mxu0
      %v8352 = vadd.f32 %v8207, %v8351
      %v8353 = vpop.f32.mrb[0].mxu0
      %8354 = vmatprep.mubr.f32.mxu0 %v8018
      %8355 = vmatmul.mubr.f32.gmra.mrb[0].mxu0 %v8017
      %v8356 = vpop.f32.mrb[0].mxu0
      %v8357 = vadd.f32 %v8212, %v8356
      %v8358 = vpop.f32.mrb[0].mxu0
      %8359 = vmatprep.mubr.f32.mxu0 %v8022
      %8360 = vmatmul.mubr.f32.gmra.mrb[0].mxu0 %v8021
      %v8361 = vpop.f32.mrb[0].mxu0
      %v8362 = vadd.f32 %v8217, %v8361
      %v8363 = vpop.f32.mrb[0].mxu0
      %8364 = vmatprep.mubr.f32.mxu0 %v8026
      %8365 = vmatmul.mubr.f32.gmra.mrb[0].mxu0 %v8025
      %v8366 = vpop.f32.mrb[0].mxu0
      %v8367 = vadd.f32 %v8222, %v8366
      %v8368 = vpop.f32.mrb[0].mxu0
      %8369 = vmatprep.mubr.f32.mxu0 %v8030
      %8370 = vmatmul.mubr.f32.gmra.mrb[0].mxu0 %v8029
      %v8371 = vpop.f32.mrb[0].mxu0
      %v8372 = vadd.f32 %v8227, %v8371
      %v8373 = vpop.f32.mrb[0].mxu0
      %8374 = vmatprep.mubr.f32.mxu0 %v8034
      %8375 = vmatmul.mubr.f32.gmra.mrb[0].mxu0 %v8033
      %v8376 = vpop.f32.mrb[0].mxu0
      %v8377 = vadd.f32 %v8232, %v8376
      %v8378 = vpop.f32.mrb[0].mxu0
      %8379 = vmatprep.mubr.f32.mxu0 %v8038
      %8380 = vmatmul.mubr.f32.gmra.mrb[0].mxu0 %v8037
      %v8381 = vpop.f32.mrb[0].mxu0
      %v8382 = vadd.f32 %v8237, %v8381
      %v8383 = vpop.f32.mrb[0].mxu0
      %8384 = vmatprep.mubr.f32.mxu0 %v8042
      %8385 = vmatmul.mubr.f32.gmra.mrb[0].mxu0 %v8041
      %v8386 = vpop.f32.mrb[0].mxu0
      %v8387 = vadd.f32 %v8242, %v8386
      %v8388 = vpop.f32.mrb[0].mxu0
      %8389 = vmatprep.mubr.f32.mxu0 %v8046
      %8390 = vmatmul.mubr.f32.gmra.mrb[0].mxu0 %v8045
      %v8391 = vpop.f32.mrb[0].mxu0
      %v8392 = vadd.f32 %v8247, %v8391
      %v8393 = vpop.f32.mrb[0].mxu0
      %8394 = vmatprep.mubr.f32.mxu0 %v8050
      %8395 = vmatmul.mubr.f32.gmra.mrb[0].mxu0 %v8049
      %v8396 = vpop.f32.mrb[0].mxu0
      %v8397 = vadd.f32 %v8252, %v8396
      %v8398 = vpop.f32.mrb[0].mxu0
      %8399 = vmatprep.mubr.f32.mxu0 %v8054
      %8400 = vmatmul.mubr.f32.gmra.mrb[0].mxu0 %v8053
      %v8401 = vpop.f32.mrb[0].mxu0
      %v8402 = vadd.f32 %v8257, %v8401
      %v8403 = vpop.f32.mrb[0].mxu0
      %8404 = vmatprep.mubr.f32.mxu0 %v8058
      %8405 = vmatmul.mubr.f32.gmra.mrb[0].mxu0 %v8057
      %v8406 = vpop.f32.mrb[0].mxu0
      %v8407 = vadd.f32 %v8262, %v8406
      %v8408 = vpop.f32.mrb[0].mxu0
      %8409 = vmatprep.mubr.f32.mxu0 %v8062
      %8410 = vmatmul.mubr.f32.gmra.mrb[0].mxu0 %v8061
      %v8411 = vpop.f32.mrb[0].mxu0
      %v8412 = vadd.f32 %v8267, %v8411
      %v8413 = vpop.f32.mrb[0].mxu0
      %8414 = vmatprep.mubr.f32.mxu0 %v8066
      %8415 = vmatmul.mubr.f32.gmra.mrb[0].mxu0 %v8065
      %v8416 = vpop.f32.mrb[0].mxu0
      %v8417 = vadd.f32 %v8272, %v8416
      %v8418 = vpop.f32.mrb[0].mxu0
      %8419 = vmatprep.mubr.f32.mxu0 %v8070
      %8420 = vmatmul.mubr.f32.gmra.mrb[0].mxu0 %v8069
      %v8421 = vpop.f32.mrb[0].mxu0
      %v8422 = vadd.f32 %v8277, %v8421
      %v8423 = vpop.f32.mrb[0].mxu0
      %8424 = vmatprep.mubr.f32.mxu0 %v8074
      %8425 = vmatmul.mubr.f32.gmra.mrb[0].mxu0 %v8073
      %v8426 = vpop.f32.mrb[0].mxu0
      %v8427 = vadd.f32 %v8282, %v8426
      %v8428 = vpop.f32.mrb[0].mxu0
      %8429 = vdwg.mxu0
      %v8430 = vadd.f32 %v7803, %v8352
      %v8431 = vadd.f32 %v7804, %v8357
      %v8432 = vadd.f32 %v7805, %v8362
      %v8433 = vadd.f32 %v7806, %v8367
      %v8434 = vadd.f32 %v7807, %v8372
      %v8435 = vadd.f32 %v7808, %v8377
      %v8436 = vadd.f32 %v7809, %v8382
      %v8437 = vadd.f32 %v7810, %v8387
      %v8438 = vadd.f32 %v7811, %v8392
      %v8439 = vadd.f32 %v7812, %v8397
      %v8440 = vadd.f32 %v7813, %v8402
      %v8441 = vadd.f32 %v7814, %v8407
      %v8442 = vadd.f32 %v7815, %v8412
      %v8443 = vadd.f32 %v7816, %v8417
      %v8444 = vadd.f32 %v7817, %v8422
      %v8445 = vadd.f32 %v7818, %v8427
      %v8446 = vld [vmem:[%s6] sm:$0x1]
      %v8448 = vlaneseq
      %v8449 = vshrl.u32 %v8448, 7
      %v8450 = vsub.s32 0, %v8449
      %v8451 = vrot.slane %v8446, %v8450
      %v8453 = vadd.f32 %v8430, %v8451
      %v8454 = vadd.f32 %v8431, %v8451
      %v8455 = vadd.f32 %v8432, %v8451
      %v8456 = vadd.f32 %v8433, %v8451
      %v8457 = vadd.f32 %v8434, %v8451
      %v8458 = vadd.f32 %v8435, %v8451
      %v8459 = vadd.f32 %v8436, %v8451
      %v8460 = vadd.f32 %v8437, %v8451
      %v8461 = vadd.f32 %v8438, %v8451
      %v8462 = vadd.f32 %v8439, %v8451
      %v8463 = vadd.f32 %v8440, %v8451
      %v8464 = vadd.f32 %v8441, %v8451
      %v8465 = vadd.f32 %v8442, %v8451
      %v8466 = vadd.f32 %v8443, %v8451
      %v8467 = vadd.f32 %v8444, %v8451
      %v8468 = vadd.f32 %v8445, %v8451
      %v8469 = vmax.f32 %v8453, 0.0
      %v8470 = vmax.f32 %v8454, 0.0
      %v8471 = vmax.f32 %v8455, 0.0
      %v8472 = vmax.f32 %v8456, 0.0
      %v8473 = vmax.f32 %v8457, 0.0
      %v8474 = vmax.f32 %v8458, 0.0
      %v8475 = vmax.f32 %v8459, 0.0
      %v8476 = vmax.f32 %v8460, 0.0
      %v8477 = vmax.f32 %v8461, 0.0
      %v8478 = vmax.f32 %v8462, 0.0
      %v8479 = vmax.f32 %v8463, 0.0
      %v8480 = vmax.f32 %v8464, 0.0
      %v8481 = vmax.f32 %v8465, 0.0
      %v8482 = vmax.f32 %v8466, 0.0
      %v8483 = vmax.f32 %v8467, 0.0
      %v8484 = vmax.f32 %v8468, 0.0
      %v8485 = vld [vmem:[%s7] sm:$0xff]
      %v8486 = vld [vmem:[%s7 + $0x8] sm:$0xff]
      %v8487 = vld [vmem:[%s7 + $0x10] sm:$0xff]
      %v8488 = vld [vmem:[%s7 + $0x18] sm:$0xff]
      %v8489 = vld [vmem:[%s7 + $0x20] sm:$0xff]
      %v8490 = vld [vmem:[%s7 + $0x28] sm:$0xff]
      %v8491 = vld [vmem:[%s7 + $0x30] sm:$0xff]
      %v8492 = vld [vmem:[%s7 + $0x38] sm:$0xff]
      %v8493 = vld [vmem:[%s7 + $0x40] sm:$0xff]
      %v8494 = vld [vmem:[%s7 + $0x48] sm:$0xff]
      %v8495 = vld [vmem:[%s7 + $0x50] sm:$0xff]
      %v8496 = vld [vmem:[%s7 + $0x58] sm:$0xff]
      %v8497 = vld [vmem:[%s7 + $0x60] sm:$0xff]
      %v8498 = vld [vmem:[%s7 + $0x68] sm:$0xff]
      %v8499 = vld [vmem:[%s7 + $0x70] sm:$0xff]
      %v8500 = vld [vmem:[%s7 + $0x78] sm:$0xff]
      %v8501 = vld [vmem:[%s8] sm:$0x1]
      %v8503 = vlaneseq
      %v8504 = vshrl.u32 %v8503, 7
      %v8505 = vsub.s32 0, %v8504
      %v8506 = vrot.slane %v8501, %v8505
      %8508 = vmatprep.subr.mxu0 0.0
      %8509 = vmatpush1.msra.mxu0 %v8485
      %8510 = vmatprep.subr.mxu0 0.0
      %8511 = vmatpush1.msra.mxu0 %v8486
      %8512 = vmatprep.subr.mxu0 0.0
      %8513 = vmatpush1.msra.mxu0 %v8487
      %8514 = vmatprep.subr.mxu0 0.0
      %8515 = vmatpush1.msra.mxu0 %v8488
      %8516 = vmatprep.subr.mxu0 0.0
      %8517 = vmatpush1.msra.mxu0 %v8489
      %8518 = vmatprep.subr.mxu0 0.0
      %8519 = vmatpush1.msra.mxu0 %v8490
      %8520 = vmatprep.subr.mxu0 0.0
      %8521 = vmatpush1.msra.mxu0 %v8491
      %8522 = vmatprep.subr.mxu0 0.0
      %8523 = vmatpush1.msra.mxu0 %v8492
      %8524 = vmatprep.subr.mxu0 0.0
      %8525 = vmatpush1.msra.mxu0 %v8493
      %8526 = vmatprep.subr.mxu0 0.0
      %8527 = vmatpush1.msra.mxu0 %v8494
      %8528 = vmatprep.subr.mxu0 0.0
      %8529 = vmatpush1.msra.mxu0 %v8495
      %8530 = vmatprep.subr.mxu0 0.0
      %8531 = vmatpush1.msra.mxu0 %v8496
      %8532 = vmatprep.subr.mxu0 0.0
      %8533 = vmatpush1.msra.mxu0 %v8497
      %8534 = vmatprep.subr.mxu0 0.0
      %8535 = vmatpush1.msra.mxu0 %v8498
      %8536 = vmatprep.subr.mxu0 0.0
      %8537 = vmatpush1.msra.mxu0 %v8499
      %8538 = vmatprep.subr.mxu0 0.0
      %8539 = vmatpush1.msra.mxu0 %v8500
      %8540 = vmatprep.subr.mxu0 0.0
      %8541 = vmatpush1.msra.mxu0 0.0
      %8542 = vmatprep.subr.mxu0 0.0
      %8543 = vmatpush1.msra.mxu0 0.0
      %8544 = vmatprep.subr.mxu0 0.0
      %8545 = vmatpush1.msra.mxu0 0.0
      %8546 = vmatprep.subr.mxu0 0.0
      %8547 = vmatpush1.msra.mxu0 0.0
      %8548 = vmatprep.subr.mxu0 0.0
      %8549 = vmatpush1.msra.mxu0 0.0
      %8550 = vmatprep.subr.mxu0 0.0
      %8551 = vmatpush1.msra.mxu0 0.0
      %8552 = vmatprep.subr.mxu0 0.0
      %8553 = vmatpush1.msra.mxu0 0.0
      %8554 = vmatprep.subr.mxu0 0.0
      %8555 = vmatpush1.msra.mxu0 0.0
      %8556 = vmatprep.subr.mxu0 0.0
      %8557 = vmatpush1.msra.mxu0 0.0
      %8558 = vmatprep.subr.mxu0 0.0
      %8559 = vmatpush1.msra.mxu0 0.0
      %8560 = vmatprep.subr.mxu0 0.0
      %8561 = vmatpush1.msra.mxu0 0.0
      %8562 = vmatprep.subr.mxu0 0.0
      %8563 = vmatpush1.msra.mxu0 0.0
      %8564 = vmatprep.subr.mxu0 0.0
      %8565 = vmatpush1.msra.mxu0 0.0
      %8566 = vmatprep.subr.mxu0 0.0
      %8567 = vmatpush1.msra.mxu0 0.0
      %8568 = vmatprep.subr.mxu0 0.0
      %8569 = vmatpush1.msra.mxu0 0.0
      %8570 = vmatprep.subr.mxu0 0.0
      %8571 = vmatpush1.msra.mxu0 0.0
      %8572 = vmatprep.mubr.f32.mxu0 0.0
      %8573 = vmatmul.mubr.f32.gmra.mrb[0].mxu0 %v8469
      %v8574 = vpop.f32.mrb[0].mxu0
      %v8575 = vadd.f32 %v8506, %v8574
      %v8576 = vpop.f32.mrb[0].mxu0
      %8577 = vmatprep.mubr.f32.mxu0 0.0
      %8578 = vmatmul.mubr.f32.gmra.mrb[0].mxu0 %v8470
      %v8579 = vpop.f32.mrb[0].mxu0
      %v8580 = vadd.f32 %v8506, %v8579
      %v8581 = vpop.f32.mrb[0].mxu0
      %8582 = vmatprep.mubr.f32.mxu0 0.0
      %8583 = vmatmul.mubr.f32.gmra.mrb[0].mxu0 %v8471
      %v8584 = vpop.f32.mrb[0].mxu0
      %v8585 = vadd.f32 %v8506, %v8584
      %v8586 = vpop.f32.mrb[0].mxu0
      %8587 = vmatprep.mubr.f32.mxu0 0.0
      %8588 = vmatmul.mubr.f32.gmra.mrb[0].mxu0 %v8472
      %v8589 = vpop.f32.mrb[0].mxu0
      %v8590 = vadd.f32 %v8506, %v8589
      %v8591 = vpop.f32.mrb[0].mxu0
      %8592 = vmatprep.mubr.f32.mxu0 0.0
      %8593 = vmatmul.mubr.f32.gmra.mrb[0].mxu0 %v8473
      %v8594 = vpop.f32.mrb[0].mxu0
      %v8595 = vadd.f32 %v8506, %v8594
      %v8596 = vpop.f32.mrb[0].mxu0
      %8597 = vmatprep.mubr.f32.mxu0 0.0
      %8598 = vmatmul.mubr.f32.gmra.mrb[0].mxu0 %v8474
      %v8599 = vpop.f32.mrb[0].mxu0
      %v8600 = vadd.f32 %v8506, %v8599
      %v8601 = vpop.f32.mrb[0].mxu0
      %8602 = vmatprep.mubr.f32.mxu0 0.0
      %8603 = vmatmul.mubr.f32.gmra.mrb[0].mxu0 %v8475
      %v8604 = vpop.f32.mrb[0].mxu0
      %v8605 = vadd.f32 %v8506, %v8604
      %v8606 = vpop.f32.mrb[0].mxu0
      %8607 = vmatprep.mubr.f32.mxu0 0.0
      %8608 = vmatmul.mubr.f32.gmra.mrb[0].mxu0 %v8476
      %v8609 = vpop.f32.mrb[0].mxu0
      %v8610 = vadd.f32 %v8506, %v8609
      %v8611 = vpop.f32.mrb[0].mxu0
      %8612 = vmatprep.mubr.f32.mxu0 0.0
      %8613 = vmatmul.mubr.f32.gmra.mrb[0].mxu0 %v8477
      %v8614 = vpop.f32.mrb[0].mxu0
      %v8615 = vadd.f32 %v8506, %v8614
      %v8616 = vpop.f32.mrb[0].mxu0
      %8617 = vmatprep.mubr.f32.mxu0 0.0
      %8618 = vmatmul.mubr.f32.gmra.mrb[0].mxu0 %v8478
      %v8619 = vpop.f32.mrb[0].mxu0
      %v8620 = vadd.f32 %v8506, %v8619
      %v8621 = vpop.f32.mrb[0].mxu0
      %8622 = vmatprep.mubr.f32.mxu0 0.0
      %8623 = vmatmul.mubr.f32.gmra.mrb[0].mxu0 %v8479
      %v8624 = vpop.f32.mrb[0].mxu0
      %v8625 = vadd.f32 %v8506, %v8624
      %v8626 = vpop.f32.mrb[0].mxu0
      %8627 = vmatprep.mubr.f32.mxu0 0.0
      %8628 = vmatmul.mubr.f32.gmra.mrb[0].mxu0 %v8480
      %v8629 = vpop.f32.mrb[0].mxu0
      %v8630 = vadd.f32 %v8506, %v8629
      %v8631 = vpop.f32.mrb[0].mxu0
      %8632 = vmatprep.mubr.f32.mxu0 0.0
      %8633 = vmatmul.mubr.f32.gmra.mrb[0].mxu0 %v8481
      %v8634 = vpop.f32.mrb[0].mxu0
      %v8635 = vadd.f32 %v8506, %v8634
      %v8636 = vpop.f32.mrb[0].mxu0
      %8637 = vmatprep.mubr.f32.mxu0 0.0
      %8638 = vmatmul.mubr.f32.gmra.mrb[0].mxu0 %v8482
      %v8639 = vpop.f32.mrb[0].mxu0
      %v8640 = vadd.f32 %v8506, %v8639
      %v8641 = vpop.f32.mrb[0].mxu0
      %8642 = vmatprep.mubr.f32.mxu0 0.0
      %8643 = vmatmul.mubr.f32.gmra.mrb[0].mxu0 %v8483
      %v8644 = vpop.f32.mrb[0].mxu0
      %v8645 = vadd.f32 %v8506, %v8644
      %v8646 = vpop.f32.mrb[0].mxu0
      %8647 = vmatprep.mubr.f32.mxu0 0.0
      %8648 = vmatmul.mubr.f32.gmra.mrb[0].mxu0 %v8484
      %v8649 = vpop.f32.mrb[0].mxu0
      %v8650 = vadd.f32 %v8506, %v8649
      %v8651 = vpop.f32.mrb[0].mxu0
      %8652 = vdwg.mxu0
      %v8653 = vmax.f32 %v8575, 0.0
      %v8654 = vmax.f32 %v8580, 0.0
      %v8655 = vmax.f32 %v8585, 0.0
      %v8656 = vmax.f32 %v8590, 0.0
      %v8657 = vmax.f32 %v8595, 0.0
      %v8658 = vmax.f32 %v8600, 0.0
      %v8659 = vmax.f32 %v8605, 0.0
      %v8660 = vmax.f32 %v8610, 0.0
      %v8661 = vmax.f32 %v8615, 0.0
      %v8662 = vmax.f32 %v8620, 0.0
      %v8663 = vmax.f32 %v8625, 0.0
      %v8664 = vmax.f32 %v8630, 0.0
      %v8665 = vmax.f32 %v8635, 0.0
      %v8666 = vmax.f32 %v8640, 0.0
      %v8667 = vmax.f32 %v8645, 0.0
      %v8668 = vmax.f32 %v8650, 0.0
      %v8669 = vld [vmem:[%s9] sm:$0xff]
      %v8670 = vld [vmem:[%s9 + $0x8] sm:$0xff]
      %v8671 = vld [vmem:[%s9 + $0x10] sm:$0xff]
      %v8672 = vld [vmem:[%s9 + $0x18] sm:$0xff]
      %v8673 = vld [vmem:[%s9 + $0x20] sm:$0xff]
      %v8674 = vld [vmem:[%s9 + $0x28] sm:$0xff]
      %v8675 = vld [vmem:[%s9 + $0x30] sm:$0xff]
      %v8676 = vld [vmem:[%s9 + $0x38] sm:$0xff]
      %v8677 = vld [vmem:[%s9 + $0x40] sm:$0xff]
      %v8678 = vld [vmem:[%s9 + $0x48] sm:$0xff]
      %v8679 = vld [vmem:[%s9 + $0x50] sm:$0xff]
      %v8680 = vld [vmem:[%s9 + $0x58] sm:$0xff]
      %v8681 = vld [vmem:[%s9 + $0x60] sm:$0xff]
      %v8682 = vld [vmem:[%s9 + $0x68] sm:$0xff]
      %v8683 = vld [vmem:[%s9 + $0x70] sm:$0xff]
      %v8684 = vld [vmem:[%s9 + $0x78] sm:$0xff]
      %v8685 = vld [vmem:[%s10] sm:$0x1]
      %v8687 = vlaneseq
      %v8688 = vshrl.u32 %v8687, 7
      %v8689 = vsub.s32 0, %v8688
      %v8690 = vrot.slane %v8685, %v8689
      %8692 = vmatprep.subr.mxu0 0.0
      %8693 = vmatpush1.msra.mxu0 %v8669
      %8694 = vmatprep.subr.mxu0 0.0
      %8695 = vmatpush1.msra.mxu0 %v8670
      %8696 = vmatprep.subr.mxu0 0.0
      %8697 = vmatpush1.msra.mxu0 %v8671
      %8698 = vmatprep.subr.mxu0 0.0
      %8699 = vmatpush1.msra.mxu0 %v8672
      %8700 = vmatprep.subr.mxu0 0.0
      %8701 = vmatpush1.msra.mxu0 %v8673
      %8702 = vmatprep.subr.mxu0 0.0
      %8703 = vmatpush1.msra.mxu0 %v8674
      %8704 = vmatprep.subr.mxu0 0.0
      %8705 = vmatpush1.msra.mxu0 %v8675
      %8706 = vmatprep.subr.mxu0 0.0
      %8707 = vmatpush1.msra.mxu0 %v8676
      %8708 = vmatprep.subr.mxu0 0.0
      %8709 = vmatpush1.msra.mxu0 %v8677
      %8710 = vmatprep.subr.mxu0 0.0
      %8711 = vmatpush1.msra.mxu0 %v8678
      %8712 = vmatprep.subr.mxu0 0.0
      %8713 = vmatpush1.msra.mxu0 %v8679
      %8714 = vmatprep.subr.mxu0 0.0
      %8715 = vmatpush1.msra.mxu0 %v8680
      %8716 = vmatprep.subr.mxu0 0.0
      %8717 = vmatpush1.msra.mxu0 %v8681
      %8718 = vmatprep.subr.mxu0 0.0
      %8719 = vmatpush1.msra.mxu0 %v8682
      %8720 = vmatprep.subr.mxu0 0.0
      %8721 = vmatpush1.msra.mxu0 %v8683
      %8722 = vmatprep.subr.mxu0 0.0
      %8723 = vmatpush1.msra.mxu0 %v8684
      %8724 = vmatprep.subr.mxu0 0.0
      %8725 = vmatpush1.msra.mxu0 0.0
      %8726 = vmatprep.subr.mxu0 0.0
      %8727 = vmatpush1.msra.mxu0 0.0
      %8728 = vmatprep.subr.mxu0 0.0
      %8729 = vmatpush1.msra.mxu0 0.0
      %8730 = vmatprep.subr.mxu0 0.0
      %8731 = vmatpush1.msra.mxu0 0.0
      %8732 = vmatprep.subr.mxu0 0.0
      %8733 = vmatpush1.msra.mxu0 0.0
      %8734 = vmatprep.subr.mxu0 0.0
      %8735 = vmatpush1.msra.mxu0 0.0
      %8736 = vmatprep.subr.mxu0 0.0
      %8737 = vmatpush1.msra.mxu0 0.0
      %8738 = vmatprep.subr.mxu0 0.0
      %8739 = vmatpush1.msra.mxu0 0.0
      %8740 = vmatprep.subr.mxu0 0.0
      %8741 = vmatpush1.msra.mxu0 0.0
      %8742 = vmatprep.subr.mxu0 0.0
      %8743 = vmatpush1.msra.mxu0 0.0
      %8744 = vmatprep.subr.mxu0 0.0
      %8745 = vmatpush1.msra.mxu0 0.0
      %8746 = vmatprep.subr.mxu0 0.0
      %8747 = vmatpush1.msra.mxu0 0.0
      %8748 = vmatprep.subr.mxu0 0.0
      %8749 = vmatpush1.msra.mxu0 0.0
      %8750 = vmatprep.subr.mxu0 0.0
      %8751 = vmatpush1.msra.mxu0 0.0
      %8752 = vmatprep.subr.mxu0 0.0
      %8753 = vmatpush1.msra.mxu0 0.0
      %8754 = vmatprep.subr.mxu0 0.0
      %8755 = vmatpush1.msra.mxu0 0.0
      %8756 = vmatprep.mubr.f32.mxu0 0.0
      %8757 = vmatmul.mubr.f32.gmra.mrb[0].mxu0 %v8653
      %v8758 = vpop.f32.mrb[0].mxu0
      %v8759 = vadd.f32 %v8690, %v8758
      %v8760 = vpop.f32.mrb[0].mxu0
      %8761 = vmatprep.mubr.f32.mxu0 0.0
      %8762 = vmatmul.mubr.f32.gmra.mrb[0].mxu0 %v8654
      %v8763 = vpop.f32.mrb[0].mxu0
      %v8764 = vadd.f32 %v8690, %v8763
      %v8765 = vpop.f32.mrb[0].mxu0
      %8766 = vmatprep.mubr.f32.mxu0 0.0
      %8767 = vmatmul.mubr.f32.gmra.mrb[0].mxu0 %v8655
      %v8768 = vpop.f32.mrb[0].mxu0
      %v8769 = vadd.f32 %v8690, %v8768
      %v8770 = vpop.f32.mrb[0].mxu0
      %8771 = vmatprep.mubr.f32.mxu0 0.0
      %8772 = vmatmul.mubr.f32.gmra.mrb[0].mxu0 %v8656
      %v8773 = vpop.f32.mrb[0].mxu0
      %v8774 = vadd.f32 %v8690, %v8773
      %v8775 = vpop.f32.mrb[0].mxu0
      %8776 = vmatprep.mubr.f32.mxu0 0.0
      %8777 = vmatmul.mubr.f32.gmra.mrb[0].mxu0 %v8657
      %v8778 = vpop.f32.mrb[0].mxu0
      %v8779 = vadd.f32 %v8690, %v8778
      %v8780 = vpop.f32.mrb[0].mxu0
      %8781 = vmatprep.mubr.f32.mxu0 0.0
      %8782 = vmatmul.mubr.f32.gmra.mrb[0].mxu0 %v8658
      %v8783 = vpop.f32.mrb[0].mxu0
      %v8784 = vadd.f32 %v8690, %v8783
      %v8785 = vpop.f32.mrb[0].mxu0
      %8786 = vmatprep.mubr.f32.mxu0 0.0
      %8787 = vmatmul.mubr.f32.gmra.mrb[0].mxu0 %v8659
      %v8788 = vpop.f32.mrb[0].mxu0
      %v8789 = vadd.f32 %v8690, %v8788
      %v8790 = vpop.f32.mrb[0].mxu0
      %8791 = vmatprep.mubr.f32.mxu0 0.0
      %8792 = vmatmul.mubr.f32.gmra.mrb[0].mxu0 %v8660
      %v8793 = vpop.f32.mrb[0].mxu0
      %v8794 = vadd.f32 %v8690, %v8793
      %v8795 = vpop.f32.mrb[0].mxu0
      %8796 = vmatprep.mubr.f32.mxu0 0.0
      %8797 = vmatmul.mubr.f32.gmra.mrb[0].mxu0 %v8661
      %v8798 = vpop.f32.mrb[0].mxu0
      %v8799 = vadd.f32 %v8690, %v8798
      %v8800 = vpop.f32.mrb[0].mxu0
      %8801 = vmatprep.mubr.f32.mxu0 0.0
      %8802 = vmatmul.mubr.f32.gmra.mrb[0].mxu0 %v8662
      %v8803 = vpop.f32.mrb[0].mxu0
      %v8804 = vadd.f32 %v8690, %v8803
      %v8805 = vpop.f32.mrb[0].mxu0
      %8806 = vmatprep.mubr.f32.mxu0 0.0
      %8807 = vmatmul.mubr.f32.gmra.mrb[0].mxu0 %v8663
      %v8808 = vpop.f32.mrb[0].mxu0
      %v8809 = vadd.f32 %v8690, %v8808
      %v8810 = vpop.f32.mrb[0].mxu0
      %8811 = vmatprep.mubr.f32.mxu0 0.0
      %8812 = vmatmul.mubr.f32.gmra.mrb[0].mxu0 %v8664
      %v8813 = vpop.f32.mrb[0].mxu0
      %v8814 = vadd.f32 %v8690, %v8813
      %v8815 = vpop.f32.mrb[0].mxu0
      %8816 = vmatprep.mubr.f32.mxu0 0.0
      %8817 = vmatmul.mubr.f32.gmra.mrb[0].mxu0 %v8665
      %v8818 = vpop.f32.mrb[0].mxu0
      %v8819 = vadd.f32 %v8690, %v8818
      %v8820 = vpop.f32.mrb[0].mxu0
      %8821 = vmatprep.mubr.f32.mxu0 0.0
      %8822 = vmatmul.mubr.f32.gmra.mrb[0].mxu0 %v8666
      %v8823 = vpop.f32.mrb[0].mxu0
      %v8824 = vadd.f32 %v8690, %v8823
      %v8825 = vpop.f32.mrb[0].mxu0
      %8826 = vmatprep.mubr.f32.mxu0 0.0
      %8827 = vmatmul.mubr.f32.gmra.mrb[0].mxu0 %v8667
      %v8828 = vpop.f32.mrb[0].mxu0
      %v8829 = vadd.f32 %v8690, %v8828
      %v8830 = vpop.f32.mrb[0].mxu0
      %8831 = vmatprep.mubr.f32.mxu0 0.0
      %8832 = vmatmul.mubr.f32.gmra.mrb[0].mxu0 %v8668
      %v8833 = vpop.f32.mrb[0].mxu0
      %v8834 = vadd.f32 %v8690, %v8833
      %v8835 = vpop.f32.mrb[0].mxu0
      %8836 = vdwg.mxu0
      %v8837 = vmax.f32 %v8759, 0.0
      %v8838 = vmax.f32 %v8764, 0.0
      %v8839 = vmax.f32 %v8769, 0.0
      %v8840 = vmax.f32 %v8774, 0.0
      %v8841 = vmax.f32 %v8779, 0.0
      %v8842 = vmax.f32 %v8784, 0.0
      %v8843 = vmax.f32 %v8789, 0.0
      %v8844 = vmax.f32 %v8794, 0.0
      %v8845 = vmax.f32 %v8799, 0.0
      %v8846 = vmax.f32 %v8804, 0.0
      %v8847 = vmax.f32 %v8809, 0.0
      %v8848 = vmax.f32 %v8814, 0.0
      %v8849 = vmax.f32 %v8819, 0.0
      %v8850 = vmax.f32 %v8824, 0.0
      %v8851 = vmax.f32 %v8829, 0.0
      %v8852 = vmax.f32 %v8834, 0.0
      %v8853 = vld [vmem:[%s11] sm:$0xff]
      %v8854 = vld [vmem:[%s11 + $0x8] sm:$0xff]
      %v8855 = vld [vmem:[%s11 + $0x10] sm:$0xff]
      %v8856 = vld [vmem:[%s11 + $0x18] sm:$0xff]
      %v8857 = vld [vmem:[%s11 + $0x20] sm:$0xff]
      %v8858 = vld [vmem:[%s11 + $0x28] sm:$0xff]
      %v8859 = vld [vmem:[%s11 + $0x30] sm:$0xff]
      %v8860 = vld [vmem:[%s11 + $0x38] sm:$0xff]
      %v8861 = vld [vmem:[%s11 + $0x40] sm:$0xff]
      %v8862 = vld [vmem:[%s11 + $0x48] sm:$0xff]
      %v8863 = vld [vmem:[%s11 + $0x50] sm:$0xff]
      %v8864 = vld [vmem:[%s11 + $0x58] sm:$0xff]
      %v8865 = vld [vmem:[%s11 + $0x60] sm:$0xff]
      %v8866 = vld [vmem:[%s11 + $0x68] sm:$0xff]
      %v8867 = vld [vmem:[%s11 + $0x70] sm:$0xff]
      %v8868 = vld [vmem:[%s11 + $0x78] sm:$0xff]
      %v8869 = vld [vmem:[%s12] sm:$0x1]
      %v8871 = vlaneseq
      %v8872 = vshrl.u32 %v8871, 7
      %v8873 = vsub.s32 0, %v8872
      %v8874 = vrot.slane %v8869, %v8873
      %8876 = vmatprep.subr.mxu0 0.0
      %8877 = vmatpush1.msra.mxu0 %v8853
      %8878 = vmatprep.subr.mxu0 0.0
      %8879 = vmatpush1.msra.mxu0 %v8854
      %8880 = vmatprep.subr.mxu0 0.0
      %8881 = vmatpush1.msra.mxu0 %v8855
      %8882 = vmatprep.subr.mxu0 0.0
      %8883 = vmatpush1.msra.mxu0 %v8856
      %8884 = vmatprep.subr.mxu0 0.0
      %8885 = vmatpush1.msra.mxu0 %v8857
      %8886 = vmatprep.subr.mxu0 0.0
      %8887 = vmatpush1.msra.mxu0 %v8858
      %8888 = vmatprep.subr.mxu0 0.0
      %8889 = vmatpush1.msra.mxu0 %v8859
      %8890 = vmatprep.subr.mxu0 0.0
      %8891 = vmatpush1.msra.mxu0 %v8860
      %8892 = vmatprep.subr.mxu0 0.0
      %8893 = vmatpush1.msra.mxu0 %v8861
      %8894 = vmatprep.subr.mxu0 0.0
      %8895 = vmatpush1.msra.mxu0 %v8862
      %8896 = vmatprep.subr.mxu0 0.0
      %8897 = vmatpush1.msra.mxu0 %v8863
      %8898 = vmatprep.subr.mxu0 0.0
      %8899 = vmatpush1.msra.mxu0 %v8864
      %8900 = vmatprep.subr.mxu0 0.0
      %8901 = vmatpush1.msra.mxu0 %v8865
      %8902 = vmatprep.subr.mxu0 0.0
      %8903 = vmatpush1.msra.mxu0 %v8866
      %8904 = vmatprep.subr.mxu0 0.0
      %8905 = vmatpush1.msra.mxu0 %v8867
      %8906 = vmatprep.subr.mxu0 0.0
      %8907 = vmatpush1.msra.mxu0 %v8868
      %8908 = vmatprep.subr.mxu0 0.0
      %8909 = vmatpush1.msra.mxu0 0.0
      %8910 = vmatprep.subr.mxu0 0.0
      %8911 = vmatpush1.msra.mxu0 0.0
      %8912 = vmatprep.subr.mxu0 0.0
      %8913 = vmatpush1.msra.mxu0 0.0
      %8914 = vmatprep.subr.mxu0 0.0
      %8915 = vmatpush1.msra.mxu0 0.0
      %8916 = vmatprep.subr.mxu0 0.0
      %8917 = vmatpush1.msra.mxu0 0.0
      %8918 = vmatprep.subr.mxu0 0.0
      %8919 = vmatpush1.msra.mxu0 0.0
      %8920 = vmatprep.subr.mxu0 0.0
      %8921 = vmatpush1.msra.mxu0 0.0
      %8922 = vmatprep.subr.mxu0 0.0
      %8923 = vmatpush1.msra.mxu0 0.0
      %8924 = vmatprep.subr.mxu0 0.0
      %8925 = vmatpush1.msra.mxu0 0.0
      %8926 = vmatprep.subr.mxu0 0.0
      %8927 = vmatpush1.msra.mxu0 0.0
      %8928 = vmatprep.subr.mxu0 0.0
      %8929 = vmatpush1.msra.mxu0 0.0
      %8930 = vmatprep.subr.mxu0 0.0
      %8931 = vmatpush1.msra.mxu0 0.0
      %8932 = vmatprep.subr.mxu0 0.0
      %8933 = vmatpush1.msra.mxu0 0.0
      %8934 = vmatprep.subr.mxu0 0.0
      %8935 = vmatpush1.msra.mxu0 0.0
      %8936 = vmatprep.subr.mxu0 0.0
      %8937 = vmatpush1.msra.mxu0 0.0
      %8938 = vmatprep.subr.mxu0 0.0
      %8939 = vmatpush1.msra.mxu0 0.0
      %8940 = vmatprep.mubr.f32.mxu0 0.0
      %8941 = vmatmul.mubr.f32.gmra.mrb[0].mxu0 %v8837
      %v8942 = vpop.f32.mrb[0].mxu0
      %v8943 = vadd.f32 %v8874, %v8942
      %v8944 = vpop.f32.mrb[0].mxu0
      %8945 = vmatprep.mubr.f32.mxu0 0.0
      %8946 = vmatmul.mubr.f32.gmra.mrb[0].mxu0 %v8838
      %v8947 = vpop.f32.mrb[0].mxu0
      %v8948 = vadd.f32 %v8874, %v8947
      %v8949 = vpop.f32.mrb[0].mxu0
      %8950 = vmatprep.mubr.f32.mxu0 0.0
      %8951 = vmatmul.mubr.f32.gmra.mrb[0].mxu0 %v8839
      %v8952 = vpop.f32.mrb[0].mxu0
      %v8953 = vadd.f32 %v8874, %v8952
      %v8954 = vpop.f32.mrb[0].mxu0
      %8955 = vmatprep.mubr.f32.mxu0 0.0
      %8956 = vmatmul.mubr.f32.gmra.mrb[0].mxu0 %v8840
      %v8957 = vpop.f32.mrb[0].mxu0
      %v8958 = vadd.f32 %v8874, %v8957
      %v8959 = vpop.f32.mrb[0].mxu0
      %8960 = vmatprep.mubr.f32.mxu0 0.0
      %8961 = vmatmul.mubr.f32.gmra.mrb[0].mxu0 %v8841
      %v8962 = vpop.f32.mrb[0].mxu0
      %v8963 = vadd.f32 %v8874, %v8962
      %v8964 = vpop.f32.mrb[0].mxu0
      %8965 = vmatprep.mubr.f32.mxu0 0.0
      %8966 = vmatmul.mubr.f32.gmra.mrb[0].mxu0 %v8842
      %v8967 = vpop.f32.mrb[0].mxu0
      %v8968 = vadd.f32 %v8874, %v8967
      %v8969 = vpop.f32.mrb[0].mxu0
      %8970 = vmatprep.mubr.f32.mxu0 0.0
      %8971 = vmatmul.mubr.f32.gmra.mrb[0].mxu0 %v8843
      %v8972 = vpop.f32.mrb[0].mxu0
      %v8973 = vadd.f32 %v8874, %v8972
      %v8974 = vpop.f32.mrb[0].mxu0
      %8975 = vmatprep.mubr.f32.mxu0 0.0
      %8976 = vmatmul.mubr.f32.gmra.mrb[0].mxu0 %v8844
      %v8977 = vpop.f32.mrb[0].mxu0
      %v8978 = vadd.f32 %v8874, %v8977
      %v8979 = vpop.f32.mrb[0].mxu0
      %8980 = vmatprep.mubr.f32.mxu0 0.0
      %8981 = vmatmul.mubr.f32.gmra.mrb[0].mxu0 %v8845
      %v8982 = vpop.f32.mrb[0].mxu0
      %v8983 = vadd.f32 %v8874, %v8982
      %v8984 = vpop.f32.mrb[0].mxu0
      %8985 = vmatprep.mubr.f32.mxu0 0.0
      %8986 = vmatmul.mubr.f32.gmra.mrb[0].mxu0 %v8846
      %v8987 = vpop.f32.mrb[0].mxu0
      %v8988 = vadd.f32 %v8874, %v8987
      %v8989 = vpop.f32.mrb[0].mxu0
      %8990 = vmatprep.mubr.f32.mxu0 0.0
      %8991 = vmatmul.mubr.f32.gmra.mrb[0].mxu0 %v8847
      %v8992 = vpop.f32.mrb[0].mxu0
      %v8993 = vadd.f32 %v8874, %v8992
      %v8994 = vpop.f32.mrb[0].mxu0
      %8995 = vmatprep.mubr.f32.mxu0 0.0
      %8996 = vmatmul.mubr.f32.gmra.mrb[0].mxu0 %v8848
      %v8997 = vpop.f32.mrb[0].mxu0
      %v8998 = vadd.f32 %v8874, %v8997
      %v8999 = vpop.f32.mrb[0].mxu0
      %9000 = vmatprep.mubr.f32.mxu0 0.0
      %9001 = vmatmul.mubr.f32.gmra.mrb[0].mxu0 %v8849
      %v9002 = vpop.f32.mrb[0].mxu0
      %v9003 = vadd.f32 %v8874, %v9002
      %v9004 = vpop.f32.mrb[0].mxu0
      %9005 = vmatprep.mubr.f32.mxu0 0.0
      %9006 = vmatmul.mubr.f32.gmra.mrb[0].mxu0 %v8850
      %v9007 = vpop.f32.mrb[0].mxu0
      %v9008 = vadd.f32 %v8874, %v9007
      %v9009 = vpop.f32.mrb[0].mxu0
      %9010 = vmatprep.mubr.f32.mxu0 0.0
      %9011 = vmatmul.mubr.f32.gmra.mrb[0].mxu0 %v8851
      %v9012 = vpop.f32.mrb[0].mxu0
      %v9013 = vadd.f32 %v8874, %v9012
      %v9014 = vpop.f32.mrb[0].mxu0
      %9015 = vmatprep.mubr.f32.mxu0 0.0
      %9016 = vmatmul.mubr.f32.gmra.mrb[0].mxu0 %v8852
      %v9017 = vpop.f32.mrb[0].mxu0
      %v9018 = vadd.f32 %v8874, %v9017
      %v9019 = vpop.f32.mrb[0].mxu0
      %9020 = vdwg.mxu0
      %v9021 = vmax.f32 %v8943, 0.0
      %v9022 = vmax.f32 %v8948, 0.0
      %v9023 = vmax.f32 %v8953, 0.0
      %v9024 = vmax.f32 %v8958, 0.0
      %v9025 = vmax.f32 %v8963, 0.0
      %v9026 = vmax.f32 %v8968, 0.0
      %v9027 = vmax.f32 %v8973, 0.0
      %v9028 = vmax.f32 %v8978, 0.0
      %v9029 = vmax.f32 %v8983, 0.0
      %v9030 = vmax.f32 %v8988, 0.0
      %v9031 = vmax.f32 %v8993, 0.0
      %v9032 = vmax.f32 %v8998, 0.0
      %v9033 = vmax.f32 %v9003, 0.0
      %v9034 = vmax.f32 %v9008, 0.0
      %v9035 = vmax.f32 %v9013, 0.0
      %v9036 = vmax.f32 %v9018, 0.0
      %9037 = vst [vmem:[%s447] sm:$0xff] %v9021
      %9038 = vst [vmem:[%s447 + $0x8] sm:$0xff] %v9022
      %9039 = vst [vmem:[%s447 + $0x10] sm:$0xff] %v9023
      %9040 = vst [vmem:[%s447 + $0x18] sm:$0xff] %v9024
      %9041 = vst [vmem:[%s447 + $0x20] sm:$0xff] %v9025
      %9042 = vst [vmem:[%s447 + $0x28] sm:$0xff] %v9026
      %9043 = vst [vmem:[%s447 + $0x30] sm:$0xff] %v9027
      %9044 = vst [vmem:[%s447 + $0x38] sm:$0xff] %v9028
      %9045 = vst [vmem:[%s447 + $0x40] sm:$0xff] %v9029
      %9046 = vst [vmem:[%s447 + $0x48] sm:$0xff] %v9030
      %9047 = vst [vmem:[%s447 + $0x50] sm:$0xff] %v9031
      %9048 = vst [vmem:[%s447 + $0x58] sm:$0xff] %v9032
      %9049 = vst [vmem:[%s447 + $0x60] sm:$0xff] %v9033
      %9050 = vst [vmem:[%s447 + $0x68] sm:$0xff] %v9034
      %9051 = vst [vmem:[%s447 + $0x70] sm:$0xff] %v9035
      %9052 = vst [vmem:[%s447 + $0x78] sm:$0xff] %v9036
      %s9053 = smul.u32 4, %s24
      %p9054 = scmp.lt.s32.totalorder %s9053, 7
      %s9055 = scalar_select %p9054, %s9053, 7
      %s9056 = smul.addr %s9055, 4
      %s9057 = smul.addr %s9056, 8
      %s9058 = scalar_lea.vmem %s13, %s9057
      // Predicated region
      $region73: #{_lambda_.1} parent=71 // pred_check
        %p9059 = pneg %p320
      $region74: #{_lambda_.1} parent=71 // pred_check_branch
        %9061 = sbr.rel (%p9059) target = $region76
      $region75: #{_lambda_.1} parent=71 // pred_region
        %s9062 = smul.u32 4, %s24
      $region76: #{_lambda_.1} parent=71 // pred_fallthru
        _
    $region72: #{_lambda_.1} parent=5 // pred_fallthru
      _
    %p9063 = scmp.le.s32.totalorder 2, %s19
    // Predicated region
    $region77: #{_lambda_.1} parent=5 // pred_check
      %p9064 = pneg %p9063
    $region78: #{_lambda_.1} parent=5 // pred_check_branch
      %9066 = sbr.rel (%p9064) target = $region80
    $region79: #{_lambda_.1} parent=5 // pred_region
      %s9067 = ssub.s32 %s19, 2
      // Predicated region
      $region81: #{_lambda_.1} parent=79 // pred_check
        %p9068 = pneg %p326
      $region82: #{_lambda_.1} parent=79 // pred_check_branch
        %9070 = sbr.rel (%p9068) target = $region84
      $region83: #{_lambda_.1} parent=79 // pred_region
        %s9071 = smul.u32 4, %s25
        %p9072 = scmp.lt.s32.totalorder %s9071, 7
        %s9073 = scalar_select %p9072, %s9071, 7
        %s9074 = smul.addr %s9073, 4
        %s9075 = smul.addr %s9074, 8
        %s9076 = scalar_lea.vmem %s13, %s9075
      $region84: #{_lambda_.1} parent=79 // pred_fallthru
        _
    $region80: #{_lambda_.1} parent=5 // pred_fallthru
      _
  $region6: #{_lambda_.1} parent=0 // loop_footer
    %s23 = sadd.s32 1, %s19
  $region7: #{_lambda_.1} parent=0 // loop_footer_branch
    %18 = sbr.rel target = $region3
  $region8: #{_lambda_.1} parent=0 // loop_exit
    _

</llo_original>
